<compile_context>
chip_gen: v7x
topology: tpu7x:2x2x1
jax: 0.10.0
libtpu: 0.0.40
codegen_flags: <defaults>
</compile_context>

<pallas_src>
import math

import jax
import jax.numpy as jnp
from jax.experimental import pallas as pl
from jax.experimental.pallas import tpu as pltpu

# ---------------- small config (consistent with the forward pass) -----------
D_MODEL      = 128            # "input_dim" (chosen so fc(128 -> 10) is valid)
NUM_HEADS    = 4
HEAD_DIM     = D_MODEL // NUM_HEADS
DIM_FF       = 256
NUM_LAYERS   = 2              # layers per TransformerEncoder (shrunk from 4)
TOTAL_LAYERS = 2 * NUM_LAYERS # two stacked TransformerEncoders
NUM_CLASSES  = 10
FC_PAD       = 128            # lane-dense fc output slab; first 10 cols real
SEQ          = 8
BATCH        = 2
LN_EPS       = 1e-5


# ----------------------------- kernel ----------------------------------------
def _layernorm(x, gamma, beta):
    mean = jnp.mean(x, axis=-1, keepdims=True)
    var = jnp.mean((x - mean) ** 2, axis=-1, keepdims=True)
    inv = jax.lax.rsqrt(var + LN_EPS)
    return (x - mean) * inv * gamma + beta


def fused_transformer_kernel(x_ref,
                             wqkv_ref, bqkv_ref, wo_ref, bo_ref,
                             ln1_g_ref, ln1_b_ref,
                             w1_ref, b1_ref, w2_ref, b2_ref,
                             ln2_g_ref, ln2_b_ref,
                             fcw_ref, fcb_ref,
                             out_ref):
    """All encoder layers + fc head fused; activations never leave registers.

    x_ref: (S*N, E) tokens; row r corresponds to (seq = r // N, batch = r % N),
    i.e. the seq-first (S, N, E) PyTorch layout flattened (no transposes).
    Stacked weights carry a leading layer axis and are indexed statically.
    """
    T, E = x_ref.shape
    N = BATCH
    H, Dh = NUM_HEADS, HEAD_DIM

    # same-batch ADDITIVE mask, built once and reused by every head/layer
    # (tokens interleaved seq-major: batch index = row % N)
    r = jax.lax.broadcasted_iota(jnp.int32, (T, T), 0)
    c = jax.lax.broadcasted_iota(jnp.int32, (T, T), 1)
    mask_add = jnp.where((r % N) == (c % N), 0.0, -1e30).astype(jnp.float32)

    x = x_ref[...]                                              # (T, E) f32

    for l in range(TOTAL_LAYERS):                               # static unroll
        xb = x.astype(jnp.bfloat16)                             # cast once/layer
        attn_out = jnp.zeros((T, E), jnp.float32)

        for h in range(H):                                      # static unroll
            off = h * Dh
            # per-head Q/K/V straight from static lane slices of the weight REF
            # (Q scale already folded into wqkv at init)
            qh = (jnp.dot(xb, wqkv_ref[l, :, off:off + Dh],
                          preferred_element_type=jnp.float32)
                  + bqkv_ref[l, :, off:off + Dh]).astype(jnp.bfloat16)
            kh = (jnp.dot(xb, wqkv_ref[l, :, E + off:E + off + Dh],
                          preferred_element_type=jnp.float32)
                  + bqkv_ref[l, :, E + off:E + off + Dh]).astype(jnp.bfloat16)
            vh = (jnp.dot(xb, wqkv_ref[l, :, 2 * E + off:2 * E + off + Dh],
                          preferred_element_type=jnp.float32)
                  + bqkv_ref[l, :, 2 * E + off:2 * E + off + Dh]).astype(jnp.bfloat16)

            # q @ k^T: contracting dims ((1,),(1,)) -> MXU takes the transposed
            # operand directly (no XLU transpose)
            s = jax.lax.dot_general(qh, kh, (((1,), (1,)), ((), ())),
                                    preferred_element_type=jnp.float32)
            s = s + mask_add                                    # block-diag batch
            s = s - jnp.max(s, axis=-1, keepdims=True)
            p = jnp.exp(s)
            p = p * pl.reciprocal(jnp.sum(p, axis=-1, keepdims=True),
                                  approx=True)                  # EUP divide

            pv = jnp.dot(p.astype(jnp.bfloat16), vh,
                         preferred_element_type=jnp.float32)    # (T, Dh) f32
            # fold this head's slice of Wo straight into the accumulator
            # (sublane slice of the ref: lane-dense (Dh, E) operand)
            attn_out = attn_out + jnp.dot(pv.astype(jnp.bfloat16),
                                          wo_ref[l, off:off + Dh, :],
                                          preferred_element_type=jnp.float32)

        attn_out = attn_out + bo_ref[l]

        # residual + LayerNorm1 (dropout = identity / eval semantics)
        h1 = _layernorm(x + attn_out, ln1_g_ref[l], ln1_b_ref[l])

        # ---- feed-forward (ReLU) ----
        ff = jnp.dot(h1.astype(jnp.bfloat16), w1_ref[l],
                     preferred_element_type=jnp.float32) + b1_ref[l]
        ff = jnp.maximum(ff, 0.0)
        ff = jnp.dot(ff.astype(jnp.bfloat16), w2_ref[l],
                     preferred_element_type=jnp.float32) + b2_ref[l]

        # residual + LayerNorm2
        x = _layernorm(h1 + ff, ln2_g_ref[l], ln2_b_ref[l])

    # ---- fc head on ALL tokens, lane-dense 128-wide slab (wrapper slices) ---
    out_ref[...] = jnp.dot(x.astype(jnp.bfloat16), fcw_ref[...],
                           preferred_element_type=jnp.float32) + fcb_ref[...]


# ----------------------------- wrappers ---------------------------------------
_STACK_ORDER = ("wqkv", "bqkv", "wo", "bo", "ln1_g", "ln1_b",
                "w1", "b1", "w2", "b2", "ln2_g", "ln2_b")
_BF16_KEYS = ("wqkv", "wo", "w1", "w2")   # MXU operands -> bf16 (f32 accumulate)


def forward(x_sne, stacked_weights, fcw_pad, fcb_pad):
    """x_sne: (S, N, E), seq-first (PyTorch batch_first=False layout)."""
    S, N, E = x_sne.shape
    T = S * N
    x2 = x_sne.reshape(T, E)                       # free, contiguous reshape
    args = (x2, *stacked_weights, fcw_pad, fcb_pad)

    # advisory cost estimate for XLA scheduling around the custom call
    flops_per_layer = (2 * T * E * 3 * E                       # qkv projections
                       + NUM_HEADS * (2 * T * T * HEAD_DIM) * 2  # scores + p@v
                       + NUM_HEADS * 2 * T * HEAD_DIM * E        # out-proj
                       + 2 * T * E * DIM_FF * 2)                 # ff1 + ff2
    flops = TOTAL_LAYERS * flops_per_layer + 2 * T * E * FC_PAD
    transcendentals = TOTAL_LAYERS * (NUM_HEADS * T * T         # exp
                                      + NUM_HEADS * T           # reciprocal
                                      + 2 * T)                  # rsqrt (2 LN)
    bytes_accessed = int(sum(a.size * a.dtype.itemsize for a in args)
                         + T * FC_PAD * 4)

    out = pl.pallas_call(
        fused_transformer_kernel,
        out_shape=jax.ShapeDtypeStruct((T, FC_PAD), jnp.float32),
        in_specs=[pl.BlockSpec(memory_space=pltpu.MemorySpace.VMEM)] * len(args),
        out_specs=pl.BlockSpec(memory_space=pltpu.MemorySpace.VMEM),
        cost_estimate=pl.CostEstimate(flops=flops,
                                      transcendentals=transcendentals,
                                      bytes_accessed=bytes_accessed),
    )(*args)
    # Replicate torch `x[:, -1, :]` on the (S, N, E) seq-first tensor:
    # it selects the LAST BATCH element for every sequence position.
    return out.reshape(S, N, FC_PAD)[:, -1, :NUM_CLASSES]


# ----------------------------- param init -------------------------------------
def _uniform(key, shape, bound):
    return jax.random.uniform(key, shape, jnp.float32, -bound, bound)


def init_layer_params(key):
    """One TransformerEncoderLayer, pre-transposed to (in_dim, out_dim) with
    the 1/sqrt(head_dim) attention scale folded into the Q projection."""
    k1, k2, k3, k4, k5, k6, k7, k8 = jax.random.split(key, 8)
    e, f = D_MODEL, DIM_FF
    be, bf = 1.0 / math.sqrt(e), 1.0 / math.sqrt(f)

    wqkv_t = _uniform(k1, (e, 3 * e), be)          # MHA in_proj  : x @ wqkv_t
    bqkv = _uniform(k2, (1, 3 * e), be)
    scale = 1.0 / math.sqrt(HEAD_DIM)              # exact fold of Q scaling
    wqkv_t = wqkv_t.at[:, :e].multiply(scale)
    bqkv = bqkv.at[:, :e].multiply(scale)

    wo_t = _uniform(k3, (e, e), be)                # MHA out_proj
    bo = _uniform(k4, (1, e), be)
    w1_t = _uniform(k5, (e, f), be)                # linear1
    b1 = _uniform(k6, (1, f), be)
    w2_t = _uniform(k7, (f, e), bf)                # linear2
    b2 = _uniform(k8, (1, e), bf)
    ones = jnp.ones((1, e), jnp.float32)
    zeros = jnp.zeros((1, e), jnp.float32)
    return dict(wqkv=wqkv_t, bqkv=bqkv, wo=wo_t, bo=bo,
                ln1_g=ones, ln1_b=zeros,
                w1=w1_t, b1=b1, w2=w2_t, b2=b2,
                ln2_g=ones, ln2_b=zeros)


def stack_layers(layers):
    """Stack per-layer params along a leading layer axis; MXU weights -> bf16."""
    stacked = []
    for name in _STACK_ORDER:
        arr = jnp.stack([p[name] for p in layers], axis=0)
        if name in _BF16_KEYS:
            arr = arr.astype(jnp.bfloat16)
        stacked.append(arr)
    return tuple(stacked)


# ----------------------------- main -------------------------------------------
if __name__ == "__main__":
    key = jax.random.PRNGKey(0)
    kx, kp, kfc = jax.random.split(key, 3)

    x = jax.random.normal(kx, (SEQ, BATCH, D_MODEL), dtype=jnp.float32)

    layer_keys = jax.random.split(kp, TOTAL_LAYERS)
    layers = [init_layer_params(layer_keys[i]) for i in range(TOTAL_LAYERS)]
    stacked = stack_layers(layers)

    # fc = nn.Linear(128, 10), pre-transposed and zero-padded to a lane-dense
    # 128-wide output slab (padded columns stay exactly zero).
    kfw, kfb = jax.random.split(kfc)
    bound = 1.0 / math.sqrt(D_MODEL)
    fc_w_t = _uniform(kfw, (D_MODEL, NUM_CLASSES), bound)
    fc_b = _uniform(kfb, (1, NUM_CLASSES), bound)
    fcw_pad = (jnp.zeros((D_MODEL, FC_PAD), jnp.float32)
               .at[:, :NUM_CLASSES].set(fc_w_t).astype(jnp.bfloat16))
    fcb_pad = jnp.zeros((1, FC_PAD), jnp.float32).at[:, :NUM_CLASSES].set(fc_b)

    logits = jax.jit(forward)(x, stacked, fcw_pad, fcb_pad)
    jax.block_until_ready(logits)

    assert logits.shape == (SEQ, NUM_CLASSES)
    assert bool(jnp.all(jnp.isfinite(logits)))
    print("KERNEL_OK")
</pallas_src>

<mosaic_0001>
module attributes {stable_mosaic.version = 11 : i64} {
  func.func @fused_transformer_kernel(%arg0: memref<16x128xf32, #tpu.memory_space<vmem>>, %arg1: memref<4x128x384xbf16, #tpu.memory_space<vmem>>, %arg2: memref<4x1x384xf32, #tpu.memory_space<vmem>>, %arg3: memref<4x128x128xbf16, #tpu.memory_space<vmem>>, %arg4: memref<4x1x128xf32, #tpu.memory_space<vmem>>, %arg5: memref<4x1x128xf32, #tpu.memory_space<vmem>>, %arg6: memref<4x1x128xf32, #tpu.memory_space<vmem>>, %arg7: memref<4x128x256xbf16, #tpu.memory_space<vmem>>, %arg8: memref<4x1x256xf32, #tpu.memory_space<vmem>>, %arg9: memref<4x256x128xbf16, #tpu.memory_space<vmem>>, %arg10: memref<4x1x128xf32, #tpu.memory_space<vmem>>, %arg11: memref<4x1x128xf32, #tpu.memory_space<vmem>>, %arg12: memref<4x1x128xf32, #tpu.memory_space<vmem>>, %arg13: memref<128x128xbf16, #tpu.memory_space<vmem>>, %arg14: memref<1x128xf32, #tpu.memory_space<vmem>>, %arg15: memref<16x128xf32, #tpu.memory_space<vmem>>) attributes {dimension_semantics = [], scalar_prefetch = 0 : i64, scratch_operands = 0 : i64, tpu.core_type = #tpu.core_type<tc>} {
    %0 = tpu.iota {dimensions = array<i32: 0>} : vector<16x16xi32>
    %1 = tpu.iota {dimensions = array<i32: 1>} : vector<16x16xi32>
    %c2_i32 = arith.constant 2 : i32
    %c0_i32 = arith.constant 0 : i32
    %2 = arith.cmpi eq, %c2_i32, %c0_i32 : i32
    %c1_i32 = arith.constant 1 : i32
    %3 = arith.select %2, %c1_i32, %c2_i32 : i32
    %4 = vector.broadcast %3 : i32 to vector<16x16xi32>
    %5 = arith.remsi %0, %4 : vector<16x16xi32>
    %c0_i32_0 = arith.constant 0 : i32
    %6 = vector.broadcast %c0_i32_0 : i32 to vector<16x16xi32>
    %7 = arith.cmpi ne, %5, %6 : vector<16x16xi32>
    %c0_i32_1 = arith.constant 0 : i32
    %8 = vector.broadcast %c0_i32_1 : i32 to vector<16x16xi32>
    %9 = arith.cmpi slt, %5, %8 : vector<16x16xi32>
    %c0_i32_2 = arith.constant 0 : i32
    %10 = arith.cmpi slt, %3, %c0_i32_2 : i32
    %11 = vector.broadcast %10 : i1 to vector<16x16xi1>
    %12 = vector.broadcast %11 : vector<16x16xi1> to vector<16x16xi1>
    %13 = arith.xori %9, %12 : vector<16x16xi1>
    %14 = arith.andi %13, %7 : vector<16x16xi1>
    %15 = vector.broadcast %3 : i32 to vector<16x16xi32>
    %16 = arith.addi %5, %15 : vector<16x16xi32>
    %17 = arith.select %14, %16, %5 : vector<16x16xi1>, vector<16x16xi32>
    %c2_i32_3 = arith.constant 2 : i32
    %c0_i32_4 = arith.constant 0 : i32
    %18 = arith.cmpi eq, %c2_i32_3, %c0_i32_4 : i32
    %c1_i32_5 = arith.constant 1 : i32
    %19 = arith.select %18, %c1_i32_5, %c2_i32_3 : i32
    %20 = vector.broadcast %19 : i32 to vector<16x16xi32>
    %21 = arith.remsi %1, %20 : vector<16x16xi32>
    %c0_i32_6 = arith.constant 0 : i32
    %22 = vector.broadcast %c0_i32_6 : i32 to vector<16x16xi32>
    %23 = arith.cmpi ne, %21, %22 : vector<16x16xi32>
    %c0_i32_7 = arith.constant 0 : i32
    %24 = vector.broadcast %c0_i32_7 : i32 to vector<16x16xi32>
    %25 = arith.cmpi slt, %21, %24 : vector<16x16xi32>
    %c0_i32_8 = arith.constant 0 : i32
    %26 = arith.cmpi slt, %19, %c0_i32_8 : i32
    %27 = vector.broadcast %26 : i1 to vector<16x16xi1>
    %28 = vector.broadcast %27 : vector<16x16xi1> to vector<16x16xi1>
    %29 = arith.xori %25, %28 : vector<16x16xi1>
    %30 = arith.andi %29, %23 : vector<16x16xi1>
    %31 = vector.broadcast %19 : i32 to vector<16x16xi32>
    %32 = arith.addi %21, %31 : vector<16x16xi32>
    %33 = arith.select %30, %32, %21 : vector<16x16xi1>, vector<16x16xi32>
    %34 = arith.cmpi eq, %17, %33 : vector<16x16xi32>
    %cst = arith.constant 0.000000e+00 : f32
    %cst_9 = arith.constant -1.000000e+30 : f32
    %35 = vector.broadcast %cst : f32 to vector<16x16xf32>
    %36 = vector.broadcast %cst_9 : f32 to vector<16x16xf32>
    %37 = arith.select %34, %35, %36 : vector<16x16xi1>, vector<16x16xf32>
    %c0 = arith.constant 0 : index
    %c0_10 = arith.constant 0 : index
    %38 = vector.load %arg0[%c0, %c0_10] : memref<16x128xf32, #tpu.memory_space<vmem>>, vector<16x128xf32>
    %39 = arith.truncf %38 : vector<16x128xf32> to vector<16x128xbf16>
    %cst_11 = arith.constant 0.000000e+00 : f32
    %40 = vector.broadcast %cst_11 : f32 to vector<16x128xf32>
    %c0_12 = arith.constant 0 : index
    %c0_13 = arith.constant 0 : index
    %c0_14 = arith.constant 0 : index
    %41 = vector.load %arg1[%c0_12, %c0_13, %c0_14] : memref<4x128x384xbf16, #tpu.memory_space<vmem>>, vector<1x128x32xbf16>
    %42 = vector.shape_cast %41 : vector<1x128x32xbf16> to vector<128x32xbf16>
    %cst_15 = arith.constant dense<0.000000e+00> : vector<16x32xf32>
    %43 = tpu.matmul %39, %42, %cst_15 {dimension_numbers = #tpu.dot_dimension_numbers<[1], [0], [0], [1], [0, 0, 1, 1], [], []>} : vector<16x128xbf16>, vector<128x32xbf16>, vector<16x32xf32> -> vector<16x32xf32>
    %c0_16 = arith.constant 0 : index
    %c0_17 = arith.constant 0 : index
    %c0_18 = arith.constant 0 : index
    %44 = vector.load %arg2[%c0_16, %c0_17, %c0_18] : memref<4x1x384xf32, #tpu.memory_space<vmem>>, vector<1x1x32xf32>
    %45 = vector.shape_cast %44 : vector<1x1x32xf32> to vector<1x32xf32>
    %46 = vector.broadcast %45 : vector<1x32xf32> to vector<16x32xf32>
    %47 = arith.addf %43, %46 : vector<16x32xf32>
    %48 = arith.truncf %47 : vector<16x32xf32> to vector<16x32xbf16>
    %c0_19 = arith.constant 0 : index
    %c0_20 = arith.constant 0 : index
    %c128 = arith.constant 128 : index
    %49 = vector.load %arg1[%c0_19, %c0_20, %c128] : memref<4x128x384xbf16, #tpu.memory_space<vmem>>, vector<1x128x32xbf16>
    %50 = vector.shape_cast %49 : vector<1x128x32xbf16> to vector<128x32xbf16>
    %cst_21 = arith.constant dense<0.000000e+00> : vector<16x32xf32>
    %51 = tpu.matmul %39, %50, %cst_21 {dimension_numbers = #tpu.dot_dimension_numbers<[1], [0], [0], [1], [0, 0, 1, 1], [], []>} : vector<16x128xbf16>, vector<128x32xbf16>, vector<16x32xf32> -> vector<16x32xf32>
    %c0_22 = arith.constant 0 : index
    %c0_23 = arith.constant 0 : index
    %c128_24 = arith.constant 128 : index
    %52 = vector.load %arg2[%c0_22, %c0_23, %c128_24] : memref<4x1x384xf32, #tpu.memory_space<vmem>>, vector<1x1x32xf32>
    %53 = vector.shape_cast %52 : vector<1x1x32xf32> to vector<1x32xf32>
    %54 = vector.broadcast %53 : vector<1x32xf32> to vector<16x32xf32>
    %55 = arith.addf %51, %54 : vector<16x32xf32>
    %56 = arith.truncf %55 : vector<16x32xf32> to vector<16x32xbf16>
    %c0_25 = arith.constant 0 : index
    %c0_26 = arith.constant 0 : index
    %c256 = arith.constant 256 : index
    %57 = vector.load %arg1[%c0_25, %c0_26, %c256] : memref<4x128x384xbf16, #tpu.memory_space<vmem>>, vector<1x128x32xbf16>
    %58 = vector.shape_cast %57 : vector<1x128x32xbf16> to vector<128x32xbf16>
    %cst_27 = arith.constant dense<0.000000e+00> : vector<16x32xf32>
    %59 = tpu.matmul %39, %58, %cst_27 {dimension_numbers = #tpu.dot_dimension_numbers<[1], [0], [0], [1], [0, 0, 1, 1], [], []>} : vector<16x128xbf16>, vector<128x32xbf16>, vector<16x32xf32> -> vector<16x32xf32>
    %c0_28 = arith.constant 0 : index
    %c0_29 = arith.constant 0 : index
    %c256_30 = arith.constant 256 : index
    %60 = vector.load %arg2[%c0_28, %c0_29, %c256_30] : memref<4x1x384xf32, #tpu.memory_space<vmem>>, vector<1x1x32xf32>
    %61 = vector.shape_cast %60 : vector<1x1x32xf32> to vector<1x32xf32>
    %62 = vector.broadcast %61 : vector<1x32xf32> to vector<16x32xf32>
    %63 = arith.addf %59, %62 : vector<16x32xf32>
    %64 = arith.truncf %63 : vector<16x32xf32> to vector<16x32xbf16>
    %cst_31 = arith.constant dense<0.000000e+00> : vector<16x16xf32>
    %65 = tpu.matmul %48, %56, %cst_31 {dimension_numbers = #tpu.dot_dimension_numbers<[1], [1], [0], [0], [0, 0, 1, 0], [], []>} : vector<16x32xbf16>, vector<16x32xbf16>, vector<16x16xf32> -> vector<16x16xf32>
    %66 = arith.addf %65, %37 : vector<16x16xf32>
    %cst_32 = arith.constant dense<0xFF800000> : vector<16xf32>
    %67 = vector.multi_reduction <maximumf>, %66, %cst_32 [1] : vector<16x16xf32> to vector<16xf32>
    %68 = vector.shape_cast %67 : vector<16xf32> to vector<16x1xf32>
    %69 = vector.broadcast %68 : vector<16x1xf32> to vector<16x16xf32>
    %70 = arith.subf %66, %69 : vector<16x16xf32>
    %71 = math.exp %70 : vector<16x16xf32>
    %cst_33 = arith.constant dense<0.000000e+00> : vector<16xf32>
    %72 = vector.multi_reduction <add>, %71, %cst_33 [1] : vector<16x16xf32> to vector<16xf32>
    %73 = vector.shape_cast %72 : vector<16xf32> to vector<16x1xf32>
    %74 = tpu.reciprocal %73 {approx = true} : vector<16x1xf32> -> vector<16x1xf32>
    %75 = vector.broadcast %74 : vector<16x1xf32> to vector<16x16xf32>
    %76 = arith.mulf %71, %75 : vector<16x16xf32>
    %77 = arith.truncf %76 : vector<16x16xf32> to vector<16x16xbf16>
    %cst_34 = arith.constant dense<0.000000e+00> : vector<16x32xf32>
    %78 = tpu.matmul %77, %64, %cst_34 {dimension_numbers = #tpu.dot_dimension_numbers<[1], [0], [0], [1], [0, 0, 1, 1], [], []>} : vector<16x16xbf16>, vector<16x32xbf16>, vector<16x32xf32> -> vector<16x32xf32>
    %79 = arith.truncf %78 : vector<16x32xf32> to vector<16x32xbf16>
    %c0_35 = arith.constant 0 : index
    %c0_36 = arith.constant 0 : index
    %c0_37 = arith.constant 0 : index
    %80 = vector.load %arg3[%c0_35, %c0_36, %c0_37] : memref<4x128x128xbf16, #tpu.memory_space<vmem>>, vector<1x32x128xbf16>
    %81 = vector.shape_cast %80 : vector<1x32x128xbf16> to vector<32x128xbf16>
    %cst_38 = arith.constant dense<0.000000e+00> : vector<16x128xf32>
    %82 = tpu.matmul %79, %81, %cst_38 {dimension_numbers = #tpu.dot_dimension_numbers<[1], [0], [0], [1], [0, 0, 1, 1], [], []>} : vector<16x32xbf16>, vector<32x128xbf16>, vector<16x128xf32> -> vector<16x128xf32>
    %83 = arith.addf %40, %82 : vector<16x128xf32>
    %c0_39 = arith.constant 0 : index
    %c0_40 = arith.constant 0 : index
    %c32 = arith.constant 32 : index
    %84 = vector.load %arg1[%c0_39, %c0_40, %c32] : memref<4x128x384xbf16, #tpu.memory_space<vmem>>, vector<1x128x32xbf16>
    %85 = vector.shape_cast %84 : vector<1x128x32xbf16> to vector<128x32xbf16>
    %cst_41 = arith.constant dense<0.000000e+00> : vector<16x32xf32>
    %86 = tpu.matmul %39, %85, %cst_41 {dimension_numbers = #tpu.dot_dimension_numbers<[1], [0], [0], [1], [0, 0, 1, 1], [], []>} : vector<16x128xbf16>, vector<128x32xbf16>, vector<16x32xf32> -> vector<16x32xf32>
    %c0_42 = arith.constant 0 : index
    %c0_43 = arith.constant 0 : index
    %c32_44 = arith.constant 32 : index
    %87 = vector.load %arg2[%c0_42, %c0_43, %c32_44] : memref<4x1x384xf32, #tpu.memory_space<vmem>>, vector<1x1x32xf32>
    %88 = vector.shape_cast %87 : vector<1x1x32xf32> to vector<1x32xf32>
    %89 = vector.broadcast %88 : vector<1x32xf32> to vector<16x32xf32>
    %90 = arith.addf %86, %89 : vector<16x32xf32>
    %91 = arith.truncf %90 : vector<16x32xf32> to vector<16x32xbf16>
    %c0_45 = arith.constant 0 : index
    %c0_46 = arith.constant 0 : index
    %c160 = arith.constant 160 : index
    %92 = vector.load %arg1[%c0_45, %c0_46, %c160] : memref<4x128x384xbf16, #tpu.memory_space<vmem>>, vector<1x128x32xbf16>
    %93 = vector.shape_cast %92 : vector<1x128x32xbf16> to vector<128x32xbf16>
    %cst_47 = arith.constant dense<0.000000e+00> : vector<16x32xf32>
    %94 = tpu.matmul %39, %93, %cst_47 {dimension_numbers = #tpu.dot_dimension_numbers<[1], [0], [0], [1], [0, 0, 1, 1], [], []>} : vector<16x128xbf16>, vector<128x32xbf16>, vector<16x32xf32> -> vector<16x32xf32>
    %c0_48 = arith.constant 0 : index
    %c0_49 = arith.constant 0 : index
    %c160_50 = arith.constant 160 : index
    %95 = vector.load %arg2[%c0_48, %c0_49, %c160_50] : memref<4x1x384xf32, #tpu.memory_space<vmem>>, vector<1x1x32xf32>
    %96 = vector.shape_cast %95 : vector<1x1x32xf32> to vector<1x32xf32>
    %97 = vector.broadcast %96 : vector<1x32xf32> to vector<16x32xf32>
    %98 = arith.addf %94, %97 : vector<16x32xf32>
    %99 = arith.truncf %98 : vector<16x32xf32> to vector<16x32xbf16>
    %c0_51 = arith.constant 0 : index
    %c0_52 = arith.constant 0 : index
    %c288 = arith.constant 288 : index
    %100 = vector.load %arg1[%c0_51, %c0_52, %c288] : memref<4x128x384xbf16, #tpu.memory_space<vmem>>, vector<1x128x32xbf16>
    %101 = vector.shape_cast %100 : vector<1x128x32xbf16> to vector<128x32xbf16>
    %cst_53 = arith.constant dense<0.000000e+00> : vector<16x32xf32>
    %102 = tpu.matmul %39, %101, %cst_53 {dimension_numbers = #tpu.dot_dimension_numbers<[1], [0], [0], [1], [0, 0, 1, 1], [], []>} : vector<16x128xbf16>, vector<128x32xbf16>, vector<16x32xf32> -> vector<16x32xf32>
    %c0_54 = arith.constant 0 : index
    %c0_55 = arith.constant 0 : index
    %c288_56 = arith.constant 288 : index
    %103 = vector.load %arg2[%c0_54, %c0_55, %c288_56] : memref<4x1x384xf32, #tpu.memory_space<vmem>>, vector<1x1x32xf32>
    %104 = vector.shape_cast %103 : vector<1x1x32xf32> to vector<1x32xf32>
    %105 = vector.broadcast %104 : vector<1x32xf32> to vector<16x32xf32>
    %106 = arith.addf %102, %105 : vector<16x32xf32>
    %107 = arith.truncf %106 : vector<16x32xf32> to vector<16x32xbf16>
    %cst_57 = arith.constant dense<0.000000e+00> : vector<16x16xf32>
    %108 = tpu.matmul %91, %99, %cst_57 {dimension_numbers = #tpu.dot_dimension_numbers<[1], [1], [0], [0], [0, 0, 1, 0], [], []>} : vector<16x32xbf16>, vector<16x32xbf16>, vector<16x16xf32> -> vector<16x16xf32>
    %109 = arith.addf %108, %37 : vector<16x16xf32>
    %cst_58 = arith.constant dense<0xFF800000> : vector<16xf32>
    %110 = vector.multi_reduction <maximumf>, %109, %cst_58 [1] : vector<16x16xf32> to vector<16xf32>
    %111 = vector.shape_cast %110 : vector<16xf32> to vector<16x1xf32>
    %112 = vector.broadcast %111 : vector<16x1xf32> to vector<16x16xf32>
    %113 = arith.subf %109, %112 : vector<16x16xf32>
    %114 = math.exp %113 : vector<16x16xf32>
    %cst_59 = arith.constant dense<0.000000e+00> : vector<16xf32>
    %115 = vector.multi_reduction <add>, %114, %cst_59 [1] : vector<16x16xf32> to vector<16xf32>
    %116 = vector.shape_cast %115 : vector<16xf32> to vector<16x1xf32>
    %117 = tpu.reciprocal %116 {approx = true} : vector<16x1xf32> -> vector<16x1xf32>
    %118 = vector.broadcast %117 : vector<16x1xf32> to vector<16x16xf32>
    %119 = arith.mulf %114, %118 : vector<16x16xf32>
    %120 = arith.truncf %119 : vector<16x16xf32> to vector<16x16xbf16>
    %cst_60 = arith.constant dense<0.000000e+00> : vector<16x32xf32>
    %121 = tpu.matmul %120, %107, %cst_60 {dimension_numbers = #tpu.dot_dimension_numbers<[1], [0], [0], [1], [0, 0, 1, 1], [], []>} : vector<16x16xbf16>, vector<16x32xbf16>, vector<16x32xf32> -> vector<16x32xf32>
    %122 = arith.truncf %121 : vector<16x32xf32> to vector<16x32xbf16>
    %c0_61 = arith.constant 0 : index
    %c32_62 = arith.constant 32 : index
    %c0_63 = arith.constant 0 : index
    %123 = vector.load %arg3[%c0_61, %c32_62, %c0_63] : memref<4x128x128xbf16, #tpu.memory_space<vmem>>, vector<1x32x128xbf16>
    %124 = vector.shape_cast %123 : vector<1x32x128xbf16> to vector<32x128xbf16>
    %cst_64 = arith.constant dense<0.000000e+00> : vector<16x128xf32>
    %125 = tpu.matmul %122, %124, %cst_64 {dimension_numbers = #tpu.dot_dimension_numbers<[1], [0], [0], [1], [0, 0, 1, 1], [], []>} : vector<16x32xbf16>, vector<32x128xbf16>, vector<16x128xf32> -> vector<16x128xf32>
    %126 = arith.addf %83, %125 : vector<16x128xf32>
    %c0_65 = arith.constant 0 : index
    %c0_66 = arith.constant 0 : index
    %c64 = arith.constant 64 : index
    %127 = vector.load %arg1[%c0_65, %c0_66, %c64] : memref<4x128x384xbf16, #tpu.memory_space<vmem>>, vector<1x128x32xbf16>
    %128 = vector.shape_cast %127 : vector<1x128x32xbf16> to vector<128x32xbf16>
    %cst_67 = arith.constant dense<0.000000e+00> : vector<16x32xf32>
    %129 = tpu.matmul %39, %128, %cst_67 {dimension_numbers = #tpu.dot_dimension_numbers<[1], [0], [0], [1], [0, 0, 1, 1], [], []>} : vector<16x128xbf16>, vector<128x32xbf16>, vector<16x32xf32> -> vector<16x32xf32>
    %c0_68 = arith.constant 0 : index
    %c0_69 = arith.constant 0 : index
    %c64_70 = arith.constant 64 : index
    %130 = vector.load %arg2[%c0_68, %c0_69, %c64_70] : memref<4x1x384xf32, #tpu.memory_space<vmem>>, vector<1x1x32xf32>
    %131 = vector.shape_cast %130 : vector<1x1x32xf32> to vector<1x32xf32>
    %132 = vector.broadcast %131 : vector<1x32xf32> to vector<16x32xf32>
    %133 = arith.addf %129, %132 : vector<16x32xf32>
    %134 = arith.truncf %133 : vector<16x32xf32> to vector<16x32xbf16>
    %c0_71 = arith.constant 0 : index
    %c0_72 = arith.constant 0 : index
    %c192 = arith.constant 192 : index
    %135 = vector.load %arg1[%c0_71, %c0_72, %c192] : memref<4x128x384xbf16, #tpu.memory_space<vmem>>, vector<1x128x32xbf16>
    %136 = vector.shape_cast %135 : vector<1x128x32xbf16> to vector<128x32xbf16>
    %cst_73 = arith.constant dense<0.000000e+00> : vector<16x32xf32>
    %137 = tpu.matmul %39, %136, %cst_73 {dimension_numbers = #tpu.dot_dimension_numbers<[1], [0], [0], [1], [0, 0, 1, 1], [], []>} : vector<16x128xbf16>, vector<128x32xbf16>, vector<16x32xf32> -> vector<16x32xf32>
    %c0_74 = arith.constant 0 : index
    %c0_75 = arith.constant 0 : index
    %c192_76 = arith.constant 192 : index
    %138 = vector.load %arg2[%c0_74, %c0_75, %c192_76] : memref<4x1x384xf32, #tpu.memory_space<vmem>>, vector<1x1x32xf32>
    %139 = vector.shape_cast %138 : vector<1x1x32xf32> to vector<1x32xf32>
    %140 = vector.broadcast %139 : vector<1x32xf32> to vector<16x32xf32>
    %141 = arith.addf %137, %140 : vector<16x32xf32>
    %142 = arith.truncf %141 : vector<16x32xf32> to vector<16x32xbf16>
    %c0_77 = arith.constant 0 : index
    %c0_78 = arith.constant 0 : index
    %c320 = arith.constant 320 : index
    %143 = vector.load %arg1[%c0_77, %c0_78, %c320] : memref<4x128x384xbf16, #tpu.memory_space<vmem>>, vector<1x128x32xbf16>
    %144 = vector.shape_cast %143 : vector<1x128x32xbf16> to vector<128x32xbf16>
    %cst_79 = arith.constant dense<0.000000e+00> : vector<16x32xf32>
    %145 = tpu.matmul %39, %144, %cst_79 {dimension_numbers = #tpu.dot_dimension_numbers<[1], [0], [0], [1], [0, 0, 1, 1], [], []>} : vector<16x128xbf16>, vector<128x32xbf16>, vector<16x32xf32> -> vector<16x32xf32>
    %c0_80 = arith.constant 0 : index
    %c0_81 = arith.constant 0 : index
    %c320_82 = arith.constant 320 : index
    %146 = vector.load %arg2[%c0_80, %c0_81, %c320_82] : memref<4x1x384xf32, #tpu.memory_space<vmem>>, vector<1x1x32xf32>
    %147 = vector.shape_cast %146 : vector<1x1x32xf32> to vector<1x32xf32>
    %148 = vector.broadcast %147 : vector<1x32xf32> to vector<16x32xf32>
    %149 = arith.addf %145, %148 : vector<16x32xf32>
    %150 = arith.truncf %149 : vector<16x32xf32> to vector<16x32xbf16>
    %cst_83 = arith.constant dense<0.000000e+00> : vector<16x16xf32>
    %151 = tpu.matmul %134, %142, %cst_83 {dimension_numbers = #tpu.dot_dimension_numbers<[1], [1], [0], [0], [0, 0, 1, 0], [], []>} : vector<16x32xbf16>, vector<16x32xbf16>, vector<16x16xf32> -> vector<16x16xf32>
    %152 = arith.addf %151, %37 : vector<16x16xf32>
    %cst_84 = arith.constant dense<0xFF800000> : vector<16xf32>
    %153 = vector.multi_reduction <maximumf>, %152, %cst_84 [1] : vector<16x16xf32> to vector<16xf32>
    %154 = vector.shape_cast %153 : vector<16xf32> to vector<16x1xf32>
    %155 = vector.broadcast %154 : vector<16x1xf32> to vector<16x16xf32>
    %156 = arith.subf %152, %155 : vector<16x16xf32>
    %157 = math.exp %156 : vector<16x16xf32>
    %cst_85 = arith.constant dense<0.000000e+00> : vector<16xf32>
    %158 = vector.multi_reduction <add>, %157, %cst_85 [1] : vector<16x16xf32> to vector<16xf32>
    %159 = vector.shape_cast %158 : vector<16xf32> to vector<16x1xf32>
    %160 = tpu.reciprocal %159 {approx = true} : vector<16x1xf32> -> vector<16x1xf32>
    %161 = vector.broadcast %160 : vector<16x1xf32> to vector<16x16xf32>
    %162 = arith.mulf %157, %161 : vector<16x16xf32>
    %163 = arith.truncf %162 : vector<16x16xf32> to vector<16x16xbf16>
    %cst_86 = arith.constant dense<0.000000e+00> : vector<16x32xf32>
    %164 = tpu.matmul %163, %150, %cst_86 {dimension_numbers = #tpu.dot_dimension_numbers<[1], [0], [0], [1], [0, 0, 1, 1], [], []>} : vector<16x16xbf16>, vector<16x32xbf16>, vector<16x32xf32> -> vector<16x32xf32>
    %165 = arith.truncf %164 : vector<16x32xf32> to vector<16x32xbf16>
    %c0_87 = arith.constant 0 : index
    %c64_88 = arith.constant 64 : index
    %c0_89 = arith.constant 0 : index
    %166 = vector.load %arg3[%c0_87, %c64_88, %c0_89] : memref<4x128x128xbf16, #tpu.memory_space<vmem>>, vector<1x32x128xbf16>
    %167 = vector.shape_cast %166 : vector<1x32x128xbf16> to vector<32x128xbf16>
    %cst_90 = arith.constant dense<0.000000e+00> : vector<16x128xf32>
    %168 = tpu.matmul %165, %167, %cst_90 {dimension_numbers = #tpu.dot_dimension_numbers<[1], [0], [0], [1], [0, 0, 1, 1], [], []>} : vector<16x32xbf16>, vector<32x128xbf16>, vector<16x128xf32> -> vector<16x128xf32>
    %169 = arith.addf %126, %168 : vector<16x128xf32>
    %c0_91 = arith.constant 0 : index
    %c0_92 = arith.constant 0 : index
    %c96 = arith.constant 96 : index
    %170 = vector.load %arg1[%c0_91, %c0_92, %c96] : memref<4x128x384xbf16, #tpu.memory_space<vmem>>, vector<1x128x32xbf16>
    %171 = vector.shape_cast %170 : vector<1x128x32xbf16> to vector<128x32xbf16>
    %cst_93 = arith.constant dense<0.000000e+00> : vector<16x32xf32>
    %172 = tpu.matmul %39, %171, %cst_93 {dimension_numbers = #tpu.dot_dimension_numbers<[1], [0], [0], [1], [0, 0, 1, 1], [], []>} : vector<16x128xbf16>, vector<128x32xbf16>, vector<16x32xf32> -> vector<16x32xf32>
    %c0_94 = arith.constant 0 : index
    %c0_95 = arith.constant 0 : index
    %c96_96 = arith.constant 96 : index
    %173 = vector.load %arg2[%c0_94, %c0_95, %c96_96] : memref<4x1x384xf32, #tpu.memory_space<vmem>>, vector<1x1x32xf32>
    %174 = vector.shape_cast %173 : vector<1x1x32xf32> to vector<1x32xf32>
    %175 = vector.broadcast %174 : vector<1x32xf32> to vector<16x32xf32>
    %176 = arith.addf %172, %175 : vector<16x32xf32>
    %177 = arith.truncf %176 : vector<16x32xf32> to vector<16x32xbf16>
    %c0_97 = arith.constant 0 : index
    %c0_98 = arith.constant 0 : index
    %c224 = arith.constant 224 : index
    %178 = vector.load %arg1[%c0_97, %c0_98, %c224] : memref<4x128x384xbf16, #tpu.memory_space<vmem>>, vector<1x128x32xbf16>
    %179 = vector.shape_cast %178 : vector<1x128x32xbf16> to vector<128x32xbf16>
    %cst_99 = arith.constant dense<0.000000e+00> : vector<16x32xf32>
    %180 = tpu.matmul %39, %179, %cst_99 {dimension_numbers = #tpu.dot_dimension_numbers<[1], [0], [0], [1], [0, 0, 1, 1], [], []>} : vector<16x128xbf16>, vector<128x32xbf16>, vector<16x32xf32> -> vector<16x32xf32>
    %c0_100 = arith.constant 0 : index
    %c0_101 = arith.constant 0 : index
    %c224_102 = arith.constant 224 : index
    %181 = vector.load %arg2[%c0_100, %c0_101, %c224_102] : memref<4x1x384xf32, #tpu.memory_space<vmem>>, vector<1x1x32xf32>
    %182 = vector.shape_cast %181 : vector<1x1x32xf32> to vector<1x32xf32>
    %183 = vector.broadcast %182 : vector<1x32xf32> to vector<16x32xf32>
    %184 = arith.addf %180, %183 : vector<16x32xf32>
    %185 = arith.truncf %184 : vector<16x32xf32> to vector<16x32xbf16>
    %c0_103 = arith.constant 0 : index
    %c0_104 = arith.constant 0 : index
    %c352 = arith.constant 352 : index
    %186 = vector.load %arg1[%c0_103, %c0_104, %c352] : memref<4x128x384xbf16, #tpu.memory_space<vmem>>, vector<1x128x32xbf16>
    %187 = vector.shape_cast %186 : vector<1x128x32xbf16> to vector<128x32xbf16>
    %cst_105 = arith.constant dense<0.000000e+00> : vector<16x32xf32>
    %188 = tpu.matmul %39, %187, %cst_105 {dimension_numbers = #tpu.dot_dimension_numbers<[1], [0], [0], [1], [0, 0, 1, 1], [], []>} : vector<16x128xbf16>, vector<128x32xbf16>, vector<16x32xf32> -> vector<16x32xf32>
    %c0_106 = arith.constant 0 : index
    %c0_107 = arith.constant 0 : index
    %c352_108 = arith.constant 352 : index
    %189 = vector.load %arg2[%c0_106, %c0_107, %c352_108] : memref<4x1x384xf32, #tpu.memory_space<vmem>>, vector<1x1x32xf32>
    %190 = vector.shape_cast %189 : vector<1x1x32xf32> to vector<1x32xf32>
    %191 = vector.broadcast %190 : vector<1x32xf32> to vector<16x32xf32>
    %192 = arith.addf %188, %191 : vector<16x32xf32>
    %193 = arith.truncf %192 : vector<16x32xf32> to vector<16x32xbf16>
    %cst_109 = arith.constant dense<0.000000e+00> : vector<16x16xf32>
    %194 = tpu.matmul %177, %185, %cst_109 {dimension_numbers = #tpu.dot_dimension_numbers<[1], [1], [0], [0], [0, 0, 1, 0], [], []>} : vector<16x32xbf16>, vector<16x32xbf16>, vector<16x16xf32> -> vector<16x16xf32>
    %195 = arith.addf %194, %37 : vector<16x16xf32>
    %cst_110 = arith.constant dense<0xFF800000> : vector<16xf32>
    %196 = vector.multi_reduction <maximumf>, %195, %cst_110 [1] : vector<16x16xf32> to vector<16xf32>
    %197 = vector.shape_cast %196 : vector<16xf32> to vector<16x1xf32>
    %198 = vector.broadcast %197 : vector<16x1xf32> to vector<16x16xf32>
    %199 = arith.subf %195, %198 : vector<16x16xf32>
    %200 = math.exp %199 : vector<16x16xf32>
    %cst_111 = arith.constant dense<0.000000e+00> : vector<16xf32>
    %201 = vector.multi_reduction <add>, %200, %cst_111 [1] : vector<16x16xf32> to vector<16xf32>
    %202 = vector.shape_cast %201 : vector<16xf32> to vector<16x1xf32>
    %203 = tpu.reciprocal %202 {approx = true} : vector<16x1xf32> -> vector<16x1xf32>
    %204 = vector.broadcast %203 : vector<16x1xf32> to vector<16x16xf32>
    %205 = arith.mulf %200, %204 : vector<16x16xf32>
    %206 = arith.truncf %205 : vector<16x16xf32> to vector<16x16xbf16>
    %cst_112 = arith.constant dense<0.000000e+00> : vector<16x32xf32>
    %207 = tpu.matmul %206, %193, %cst_112 {dimension_numbers = #tpu.dot_dimension_numbers<[1], [0], [0], [1], [0, 0, 1, 1], [], []>} : vector<16x16xbf16>, vector<16x32xbf16>, vector<16x32xf32> -> vector<16x32xf32>
    %208 = arith.truncf %207 : vector<16x32xf32> to vector<16x32xbf16>
    %c0_113 = arith.constant 0 : index
    %c96_114 = arith.constant 96 : index
    %c0_115 = arith.constant 0 : index
    %209 = vector.load %arg3[%c0_113, %c96_114, %c0_115] : memref<4x128x128xbf16, #tpu.memory_space<vmem>>, vector<1x32x128xbf16>
    %210 = vector.shape_cast %209 : vector<1x32x128xbf16> to vector<32x128xbf16>
    %cst_116 = arith.constant dense<0.000000e+00> : vector<16x128xf32>
    %211 = tpu.matmul %208, %210, %cst_116 {dimension_numbers = #tpu.dot_dimension_numbers<[1], [0], [0], [1], [0, 0, 1, 1], [], []>} : vector<16x32xbf16>, vector<32x128xbf16>, vector<16x128xf32> -> vector<16x128xf32>
    %212 = arith.addf %169, %211 : vector<16x128xf32>
    %c0_117 = arith.constant 0 : index
    %c0_118 = arith.constant 0 : index
    %c0_119 = arith.constant 0 : index
    %213 = vector.load %arg4[%c0_117, %c0_118, %c0_119] : memref<4x1x128xf32, #tpu.memory_space<vmem>>, vector<1x1x128xf32>
    %214 = vector.shape_cast %213 : vector<1x1x128xf32> to vector<1x128xf32>
    %215 = vector.broadcast %214 : vector<1x128xf32> to vector<16x128xf32>
    %216 = arith.addf %212, %215 : vector<16x128xf32>
    %217 = arith.addf %38, %216 : vector<16x128xf32>
    %c0_120 = arith.constant 0 : index
    %c0_121 = arith.constant 0 : index
    %c0_122 = arith.constant 0 : index
    %218 = vector.load %arg5[%c0_120, %c0_121, %c0_122] : memref<4x1x128xf32, #tpu.memory_space<vmem>>, vector<1x1x128xf32>
    %219 = vector.shape_cast %218 : vector<1x1x128xf32> to vector<1x128xf32>
    %c0_123 = arith.constant 0 : index
    %c0_124 = arith.constant 0 : index
    %c0_125 = arith.constant 0 : index
    %220 = vector.load %arg6[%c0_123, %c0_124, %c0_125] : memref<4x1x128xf32, #tpu.memory_space<vmem>>, vector<1x1x128xf32>
    %221 = vector.shape_cast %220 : vector<1x1x128xf32> to vector<1x128xf32>
    %cst_126 = arith.constant dense<0.000000e+00> : vector<16xf32>
    %222 = vector.multi_reduction <add>, %217, %cst_126 [1] : vector<16x128xf32> to vector<16xf32>
    %223 = vector.shape_cast %222 : vector<16xf32> to vector<16x1xf32>
    %cst_127 = arith.constant 1.280000e+02 : f32
    %224 = vector.broadcast %cst_127 : f32 to vector<16x1xf32>
    %225 = arith.divf %223, %224 : vector<16x1xf32>
    %226 = vector.broadcast %225 : vector<16x1xf32> to vector<16x128xf32>
    %227 = arith.subf %217, %226 : vector<16x128xf32>
    %228 = arith.mulf %227, %227 : vector<16x128xf32>
    %cst_128 = arith.constant dense<0.000000e+00> : vector<16xf32>
    %229 = vector.multi_reduction <add>, %228, %cst_128 [1] : vector<16x128xf32> to vector<16xf32>
    %230 = vector.shape_cast %229 : vector<16xf32> to vector<16x1xf32>
    %cst_129 = arith.constant 1.280000e+02 : f32
    %231 = vector.broadcast %cst_129 : f32 to vector<16x1xf32>
    %232 = arith.divf %230, %231 : vector<16x1xf32>
    %cst_130 = arith.constant 9.99999974E-6 : f32
    %233 = vector.broadcast %cst_130 : f32 to vector<16x1xf32>
    %234 = arith.addf %232, %233 : vector<16x1xf32>
    %235 = math.rsqrt %234 : vector<16x1xf32>
    %236 = vector.broadcast %225 : vector<16x1xf32> to vector<16x128xf32>
    %237 = arith.subf %217, %236 : vector<16x128xf32>
    %238 = vector.broadcast %235 : vector<16x1xf32> to vector<16x128xf32>
    %239 = arith.mulf %237, %238 : vector<16x128xf32>
    %240 = vector.broadcast %219 : vector<1x128xf32> to vector<16x128xf32>
    %241 = arith.mulf %239, %240 : vector<16x128xf32>
    %242 = vector.broadcast %221 : vector<1x128xf32> to vector<16x128xf32>
    %243 = arith.addf %241, %242 : vector<16x128xf32>
    %244 = arith.truncf %243 : vector<16x128xf32> to vector<16x128xbf16>
    %c0_131 = arith.constant 0 : index
    %c0_132 = arith.constant 0 : index
    %c0_133 = arith.constant 0 : index
    %245 = vector.load %arg7[%c0_131, %c0_132, %c0_133] : memref<4x128x256xbf16, #tpu.memory_space<vmem>>, vector<1x128x256xbf16>
    %246 = vector.shape_cast %245 : vector<1x128x256xbf16> to vector<128x256xbf16>
    %cst_134 = arith.constant dense<0.000000e+00> : vector<16x256xf32>
    %247 = tpu.matmul %244, %246, %cst_134 {dimension_numbers = #tpu.dot_dimension_numbers<[1], [0], [0], [1], [0, 0, 1, 1], [], []>} : vector<16x128xbf16>, vector<128x256xbf16>, vector<16x256xf32> -> vector<16x256xf32>
    %c0_135 = arith.constant 0 : index
    %c0_136 = arith.constant 0 : index
    %c0_137 = arith.constant 0 : index
    %248 = vector.load %arg8[%c0_135, %c0_136, %c0_137] : memref<4x1x256xf32, #tpu.memory_space<vmem>>, vector<1x1x256xf32>
    %249 = vector.shape_cast %248 : vector<1x1x256xf32> to vector<1x256xf32>
    %250 = vector.broadcast %249 : vector<1x256xf32> to vector<16x256xf32>
    %251 = arith.addf %247, %250 : vector<16x256xf32>
    %cst_138 = arith.constant 0.000000e+00 : f32
    %252 = vector.broadcast %cst_138 : f32 to vector<16x256xf32>
    %253 = arith.maximumf %251, %252 : vector<16x256xf32>
    %254 = arith.truncf %253 : vector<16x256xf32> to vector<16x256xbf16>
    %c0_139 = arith.constant 0 : index
    %c0_140 = arith.constant 0 : index
    %c0_141 = arith.constant 0 : index
    %255 = vector.load %arg9[%c0_139, %c0_140, %c0_141] : memref<4x256x128xbf16, #tpu.memory_space<vmem>>, vector<1x256x128xbf16>
    %256 = vector.shape_cast %255 : vector<1x256x128xbf16> to vector<256x128xbf16>
    %cst_142 = arith.constant dense<0.000000e+00> : vector<16x128xf32>
    %257 = tpu.matmul %254, %256, %cst_142 {dimension_numbers = #tpu.dot_dimension_numbers<[1], [0], [0], [1], [0, 0, 1, 1], [], []>} : vector<16x256xbf16>, vector<256x128xbf16>, vector<16x128xf32> -> vector<16x128xf32>
    %c0_143 = arith.constant 0 : index
    %c0_144 = arith.constant 0 : index
    %c0_145 = arith.constant 0 : index
    %258 = vector.load %arg10[%c0_143, %c0_144, %c0_145] : memref<4x1x128xf32, #tpu.memory_space<vmem>>, vector<1x1x128xf32>
    %259 = vector.shape_cast %258 : vector<1x1x128xf32> to vector<1x128xf32>
    %260 = vector.broadcast %259 : vector<1x128xf32> to vector<16x128xf32>
    %261 = arith.addf %257, %260 : vector<16x128xf32>
    %262 = arith.addf %243, %261 : vector<16x128xf32>
    %c0_146 = arith.constant 0 : index
    %c0_147 = arith.constant 0 : index
    %c0_148 = arith.constant 0 : index
    %263 = vector.load %arg11[%c0_146, %c0_147, %c0_148] : memref<4x1x128xf32, #tpu.memory_space<vmem>>, vector<1x1x128xf32>
    %264 = vector.shape_cast %263 : vector<1x1x128xf32> to vector<1x128xf32>
    %c0_149 = arith.constant 0 : index
    %c0_150 = arith.constant 0 : index
    %c0_151 = arith.constant 0 : index
    %265 = vector.load %arg12[%c0_149, %c0_150, %c0_151] : memref<4x1x128xf32, #tpu.memory_space<vmem>>, vector<1x1x128xf32>
    %266 = vector.shape_cast %265 : vector<1x1x128xf32> to vector<1x128xf32>
    %cst_152 = arith.constant dense<0.000000e+00> : vector<16xf32>
    %267 = vector.multi_reduction <add>, %262, %cst_152 [1] : vector<16x128xf32> to vector<16xf32>
    %268 = vector.shape_cast %267 : vector<16xf32> to vector<16x1xf32>
    %cst_153 = arith.constant 1.280000e+02 : f32
    %269 = vector.broadcast %cst_153 : f32 to vector<16x1xf32>
    %270 = arith.divf %268, %269 : vector<16x1xf32>
    %271 = vector.broadcast %270 : vector<16x1xf32> to vector<16x128xf32>
    %272 = arith.subf %262, %271 : vector<16x128xf32>
    %273 = arith.mulf %272, %272 : vector<16x128xf32>
    %cst_154 = arith.constant dense<0.000000e+00> : vector<16xf32>
    %274 = vector.multi_reduction <add>, %273, %cst_154 [1] : vector<16x128xf32> to vector<16xf32>
    %275 = vector.shape_cast %274 : vector<16xf32> to vector<16x1xf32>
    %cst_155 = arith.constant 1.280000e+02 : f32
    %276 = vector.broadcast %cst_155 : f32 to vector<16x1xf32>
    %277 = arith.divf %275, %276 : vector<16x1xf32>
    %cst_156 = arith.constant 9.99999974E-6 : f32
    %278 = vector.broadcast %cst_156 : f32 to vector<16x1xf32>
    %279 = arith.addf %277, %278 : vector<16x1xf32>
    %280 = math.rsqrt %279 : vector<16x1xf32>
    %281 = vector.broadcast %270 : vector<16x1xf32> to vector<16x128xf32>
    %282 = arith.subf %262, %281 : vector<16x128xf32>
    %283 = vector.broadcast %280 : vector<16x1xf32> to vector<16x128xf32>
    %284 = arith.mulf %282, %283 : vector<16x128xf32>
    %285 = vector.broadcast %264 : vector<1x128xf32> to vector<16x128xf32>
    %286 = arith.mulf %284, %285 : vector<16x128xf32>
    %287 = vector.broadcast %266 : vector<1x128xf32> to vector<16x128xf32>
    %288 = arith.addf %286, %287 : vector<16x128xf32>
    %289 = arith.truncf %288 : vector<16x128xf32> to vector<16x128xbf16>
    %cst_157 = arith.constant 0.000000e+00 : f32
    %290 = vector.broadcast %cst_157 : f32 to vector<16x128xf32>
    %c1 = arith.constant 1 : index
    %c0_158 = arith.constant 0 : index
    %c0_159 = arith.constant 0 : index
    %291 = vector.load %arg1[%c1, %c0_158, %c0_159] : memref<4x128x384xbf16, #tpu.memory_space<vmem>>, vector<1x128x32xbf16>
    %292 = vector.shape_cast %291 : vector<1x128x32xbf16> to vector<128x32xbf16>
    %cst_160 = arith.constant dense<0.000000e+00> : vector<16x32xf32>
    %293 = tpu.matmul %289, %292, %cst_160 {dimension_numbers = #tpu.dot_dimension_numbers<[1], [0], [0], [1], [0, 0, 1, 1], [], []>} : vector<16x128xbf16>, vector<128x32xbf16>, vector<16x32xf32> -> vector<16x32xf32>
    %c1_161 = arith.constant 1 : index
    %c0_162 = arith.constant 0 : index
    %c0_163 = arith.constant 0 : index
    %294 = vector.load %arg2[%c1_161, %c0_162, %c0_163] : memref<4x1x384xf32, #tpu.memory_space<vmem>>, vector<1x1x32xf32>
    %295 = vector.shape_cast %294 : vector<1x1x32xf32> to vector<1x32xf32>
    %296 = vector.broadcast %295 : vector<1x32xf32> to vector<16x32xf32>
    %297 = arith.addf %293, %296 : vector<16x32xf32>
    %298 = arith.truncf %297 : vector<16x32xf32> to vector<16x32xbf16>
    %c1_164 = arith.constant 1 : index
    %c0_165 = arith.constant 0 : index
    %c128_166 = arith.constant 128 : index
    %299 = vector.load %arg1[%c1_164, %c0_165, %c128_166] : memref<4x128x384xbf16, #tpu.memory_space<vmem>>, vector<1x128x32xbf16>
    %300 = vector.shape_cast %299 : vector<1x128x32xbf16> to vector<128x32xbf16>
    %cst_167 = arith.constant dense<0.000000e+00> : vector<16x32xf32>
    %301 = tpu.matmul %289, %300, %cst_167 {dimension_numbers = #tpu.dot_dimension_numbers<[1], [0], [0], [1], [0, 0, 1, 1], [], []>} : vector<16x128xbf16>, vector<128x32xbf16>, vector<16x32xf32> -> vector<16x32xf32>
    %c1_168 = arith.constant 1 : index
    %c0_169 = arith.constant 0 : index
    %c128_170 = arith.constant 128 : index
    %302 = vector.load %arg2[%c1_168, %c0_169, %c128_170] : memref<4x1x384xf32, #tpu.memory_space<vmem>>, vector<1x1x32xf32>
    %303 = vector.shape_cast %302 : vector<1x1x32xf32> to vector<1x32xf32>
    %304 = vector.broadcast %303 : vector<1x32xf32> to vector<16x32xf32>
    %305 = arith.addf %301, %304 : vector<16x32xf32>
    %306 = arith.truncf %305 : vector<16x32xf32> to vector<16x32xbf16>
    %c1_171 = arith.constant 1 : index
    %c0_172 = arith.constant 0 : index
    %c256_173 = arith.constant 256 : index
    %307 = vector.load %arg1[%c1_171, %c0_172, %c256_173] : memref<4x128x384xbf16, #tpu.memory_space<vmem>>, vector<1x128x32xbf16>
    %308 = vector.shape_cast %307 : vector<1x128x32xbf16> to vector<128x32xbf16>
    %cst_174 = arith.constant dense<0.000000e+00> : vector<16x32xf32>
    %309 = tpu.matmul %289, %308, %cst_174 {dimension_numbers = #tpu.dot_dimension_numbers<[1], [0], [0], [1], [0, 0, 1, 1], [], []>} : vector<16x128xbf16>, vector<128x32xbf16>, vector<16x32xf32> -> vector<16x32xf32>
    %c1_175 = arith.constant 1 : index
    %c0_176 = arith.constant 0 : index
    %c256_177 = arith.constant 256 : index
    %310 = vector.load %arg2[%c1_175, %c0_176, %c256_177] : memref<4x1x384xf32, #tpu.memory_space<vmem>>, vector<1x1x32xf32>
    %311 = vector.shape_cast %310 : vector<1x1x32xf32> to vector<1x32xf32>
    %312 = vector.broadcast %311 : vector<1x32xf32> to vector<16x32xf32>
    %313 = arith.addf %309, %312 : vector<16x32xf32>
    %314 = arith.truncf %313 : vector<16x32xf32> to vector<16x32xbf16>
    %cst_178 = arith.constant dense<0.000000e+00> : vector<16x16xf32>
    %315 = tpu.matmul %298, %306, %cst_178 {dimension_numbers = #tpu.dot_dimension_numbers<[1], [1], [0], [0], [0, 0, 1, 0], [], []>} : vector<16x32xbf16>, vector<16x32xbf16>, vector<16x16xf32> -> vector<16x16xf32>
    %316 = arith.addf %315, %37 : vector<16x16xf32>
    %cst_179 = arith.constant dense<0xFF800000> : vector<16xf32>
    %317 = vector.multi_reduction <maximumf>, %316, %cst_179 [1] : vector<16x16xf32> to vector<16xf32>
    %318 = vector.shape_cast %317 : vector<16xf32> to vector<16x1xf32>
    %319 = vector.broadcast %318 : vector<16x1xf32> to vector<16x16xf32>
    %320 = arith.subf %316, %319 : vector<16x16xf32>
    %321 = math.exp %320 : vector<16x16xf32>
    %cst_180 = arith.constant dense<0.000000e+00> : vector<16xf32>
    %322 = vector.multi_reduction <add>, %321, %cst_180 [1] : vector<16x16xf32> to vector<16xf32>
    %323 = vector.shape_cast %322 : vector<16xf32> to vector<16x1xf32>
    %324 = tpu.reciprocal %323 {approx = true} : vector<16x1xf32> -> vector<16x1xf32>
    %325 = vector.broadcast %324 : vector<16x1xf32> to vector<16x16xf32>
    %326 = arith.mulf %321, %325 : vector<16x16xf32>
    %327 = arith.truncf %326 : vector<16x16xf32> to vector<16x16xbf16>
    %cst_181 = arith.constant dense<0.000000e+00> : vector<16x32xf32>
    %328 = tpu.matmul %327, %314, %cst_181 {dimension_numbers = #tpu.dot_dimension_numbers<[1], [0], [0], [1], [0, 0, 1, 1], [], []>} : vector<16x16xbf16>, vector<16x32xbf16>, vector<16x32xf32> -> vector<16x32xf32>
    %329 = arith.truncf %328 : vector<16x32xf32> to vector<16x32xbf16>
    %c1_182 = arith.constant 1 : index
    %c0_183 = arith.constant 0 : index
    %c0_184 = arith.constant 0 : index
    %330 = vector.load %arg3[%c1_182, %c0_183, %c0_184] : memref<4x128x128xbf16, #tpu.memory_space<vmem>>, vector<1x32x128xbf16>
    %331 = vector.shape_cast %330 : vector<1x32x128xbf16> to vector<32x128xbf16>
    %cst_185 = arith.constant dense<0.000000e+00> : vector<16x128xf32>
    %332 = tpu.matmul %329, %331, %cst_185 {dimension_numbers = #tpu.dot_dimension_numbers<[1], [0], [0], [1], [0, 0, 1, 1], [], []>} : vector<16x32xbf16>, vector<32x128xbf16>, vector<16x128xf32> -> vector<16x128xf32>
    %333 = arith.addf %290, %332 : vector<16x128xf32>
    %c1_186 = arith.constant 1 : index
    %c0_187 = arith.constant 0 : index
    %c32_188 = arith.constant 32 : index
    %334 = vector.load %arg1[%c1_186, %c0_187, %c32_188] : memref<4x128x384xbf16, #tpu.memory_space<vmem>>, vector<1x128x32xbf16>
    %335 = vector.shape_cast %334 : vector<1x128x32xbf16> to vector<128x32xbf16>
    %cst_189 = arith.constant dense<0.000000e+00> : vector<16x32xf32>
    %336 = tpu.matmul %289, %335, %cst_189 {dimension_numbers = #tpu.dot_dimension_numbers<[1], [0], [0], [1], [0, 0, 1, 1], [], []>} : vector<16x128xbf16>, vector<128x32xbf16>, vector<16x32xf32> -> vector<16x32xf32>
    %c1_190 = arith.constant 1 : index
    %c0_191 = arith.constant 0 : index
    %c32_192 = arith.constant 32 : index
    %337 = vector.load %arg2[%c1_190, %c0_191, %c32_192] : memref<4x1x384xf32, #tpu.memory_space<vmem>>, vector<1x1x32xf32>
    %338 = vector.shape_cast %337 : vector<1x1x32xf32> to vector<1x32xf32>
    %339 = vector.broadcast %338 : vector<1x32xf32> to vector<16x32xf32>
    %340 = arith.addf %336, %339 : vector<16x32xf32>
    %341 = arith.truncf %340 : vector<16x32xf32> to vector<16x32xbf16>
    %c1_193 = arith.constant 1 : index
    %c0_194 = arith.constant 0 : index
    %c160_195 = arith.constant 160 : index
    %342 = vector.load %arg1[%c1_193, %c0_194, %c160_195] : memref<4x128x384xbf16, #tpu.memory_space<vmem>>, vector<1x128x32xbf16>
    %343 = vector.shape_cast %342 : vector<1x128x32xbf16> to vector<128x32xbf16>
    %cst_196 = arith.constant dense<0.000000e+00> : vector<16x32xf32>
    %344 = tpu.matmul %289, %343, %cst_196 {dimension_numbers = #tpu.dot_dimension_numbers<[1], [0], [0], [1], [0, 0, 1, 1], [], []>} : vector<16x128xbf16>, vector<128x32xbf16>, vector<16x32xf32> -> vector<16x32xf32>
    %c1_197 = arith.constant 1 : index
    %c0_198 = arith.constant 0 : index
    %c160_199 = arith.constant 160 : index
    %345 = vector.load %arg2[%c1_197, %c0_198, %c160_199] : memref<4x1x384xf32, #tpu.memory_space<vmem>>, vector<1x1x32xf32>
    %346 = vector.shape_cast %345 : vector<1x1x32xf32> to vector<1x32xf32>
    %347 = vector.broadcast %346 : vector<1x32xf32> to vector<16x32xf32>
    %348 = arith.addf %344, %347 : vector<16x32xf32>
    %349 = arith.truncf %348 : vector<16x32xf32> to vector<16x32xbf16>
    %c1_200 = arith.constant 1 : index
    %c0_201 = arith.constant 0 : index
    %c288_202 = arith.constant 288 : index
    %350 = vector.load %arg1[%c1_200, %c0_201, %c288_202] : memref<4x128x384xbf16, #tpu.memory_space<vmem>>, vector<1x128x32xbf16>
    %351 = vector.shape_cast %350 : vector<1x128x32xbf16> to vector<128x32xbf16>
    %cst_203 = arith.constant dense<0.000000e+00> : vector<16x32xf32>
    %352 = tpu.matmul %289, %351, %cst_203 {dimension_numbers = #tpu.dot_dimension_numbers<[1], [0], [0], [1], [0, 0, 1, 1], [], []>} : vector<16x128xbf16>, vector<128x32xbf16>, vector<16x32xf32> -> vector<16x32xf32>
    %c1_204 = arith.constant 1 : index
    %c0_205 = arith.constant 0 : index
    %c288_206 = arith.constant 288 : index
    %353 = vector.load %arg2[%c1_204, %c0_205, %c288_206] : memref<4x1x384xf32, #tpu.memory_space<vmem>>, vector<1x1x32xf32>
    %354 = vector.shape_cast %353 : vector<1x1x32xf32> to vector<1x32xf32>
    %355 = vector.broadcast %354 : vector<1x32xf32> to vector<16x32xf32>
    %356 = arith.addf %352, %355 : vector<16x32xf32>
    %357 = arith.truncf %356 : vector<16x32xf32> to vector<16x32xbf16>
    %cst_207 = arith.constant dense<0.000000e+00> : vector<16x16xf32>
    %358 = tpu.matmul %341, %349, %cst_207 {dimension_numbers = #tpu.dot_dimension_numbers<[1], [1], [0], [0], [0, 0, 1, 0], [], []>} : vector<16x32xbf16>, vector<16x32xbf16>, vector<16x16xf32> -> vector<16x16xf32>
    %359 = arith.addf %358, %37 : vector<16x16xf32>
    %cst_208 = arith.constant dense<0xFF800000> : vector<16xf32>
    %360 = vector.multi_reduction <maximumf>, %359, %cst_208 [1] : vector<16x16xf32> to vector<16xf32>
    %361 = vector.shape_cast %360 : vector<16xf32> to vector<16x1xf32>
    %362 = vector.broadcast %361 : vector<16x1xf32> to vector<16x16xf32>
    %363 = arith.subf %359, %362 : vector<16x16xf32>
    %364 = math.exp %363 : vector<16x16xf32>
    %cst_209 = arith.constant dense<0.000000e+00> : vector<16xf32>
    %365 = vector.multi_reduction <add>, %364, %cst_209 [1] : vector<16x16xf32> to vector<16xf32>
    %366 = vector.shape_cast %365 : vector<16xf32> to vector<16x1xf32>
    %367 = tpu.reciprocal %366 {approx = true} : vector<16x1xf32> -> vector<16x1xf32>
    %368 = vector.broadcast %367 : vector<16x1xf32> to vector<16x16xf32>
    %369 = arith.mulf %364, %368 : vector<16x16xf32>
    %370 = arith.truncf %369 : vector<16x16xf32> to vector<16x16xbf16>
    %cst_210 = arith.constant dense<0.000000e+00> : vector<16x32xf32>
    %371 = tpu.matmul %370, %357, %cst_210 {dimension_numbers = #tpu.dot_dimension_numbers<[1], [0], [0], [1], [0, 0, 1, 1], [], []>} : vector<16x16xbf16>, vector<16x32xbf16>, vector<16x32xf32> -> vector<16x32xf32>
    %372 = arith.truncf %371 : vector<16x32xf32> to vector<16x32xbf16>
    %c1_211 = arith.constant 1 : index
    %c32_212 = arith.constant 32 : index
    %c0_213 = arith.constant 0 : index
    %373 = vector.load %arg3[%c1_211, %c32_212, %c0_213] : memref<4x128x128xbf16, #tpu.memory_space<vmem>>, vector<1x32x128xbf16>
    %374 = vector.shape_cast %373 : vector<1x32x128xbf16> to vector<32x128xbf16>
    %cst_214 = arith.constant dense<0.000000e+00> : vector<16x128xf32>
    %375 = tpu.matmul %372, %374, %cst_214 {dimension_numbers = #tpu.dot_dimension_numbers<[1], [0], [0], [1], [0, 0, 1, 1], [], []>} : vector<16x32xbf16>, vector<32x128xbf16>, vector<16x128xf32> -> vector<16x128xf32>
    %376 = arith.addf %333, %375 : vector<16x128xf32>
    %c1_215 = arith.constant 1 : index
    %c0_216 = arith.constant 0 : index
    %c64_217 = arith.constant 64 : index
    %377 = vector.load %arg1[%c1_215, %c0_216, %c64_217] : memref<4x128x384xbf16, #tpu.memory_space<vmem>>, vector<1x128x32xbf16>
    %378 = vector.shape_cast %377 : vector<1x128x32xbf16> to vector<128x32xbf16>
    %cst_218 = arith.constant dense<0.000000e+00> : vector<16x32xf32>
    %379 = tpu.matmul %289, %378, %cst_218 {dimension_numbers = #tpu.dot_dimension_numbers<[1], [0], [0], [1], [0, 0, 1, 1], [], []>} : vector<16x128xbf16>, vector<128x32xbf16>, vector<16x32xf32> -> vector<16x32xf32>
    %c1_219 = arith.constant 1 : index
    %c0_220 = arith.constant 0 : index
    %c64_221 = arith.constant 64 : index
    %380 = vector.load %arg2[%c1_219, %c0_220, %c64_221] : memref<4x1x384xf32, #tpu.memory_space<vmem>>, vector<1x1x32xf32>
    %381 = vector.shape_cast %380 : vector<1x1x32xf32> to vector<1x32xf32>
    %382 = vector.broadcast %381 : vector<1x32xf32> to vector<16x32xf32>
    %383 = arith.addf %379, %382 : vector<16x32xf32>
    %384 = arith.truncf %383 : vector<16x32xf32> to vector<16x32xbf16>
    %c1_222 = arith.constant 1 : index
    %c0_223 = arith.constant 0 : index
    %c192_224 = arith.constant 192 : index
    %385 = vector.load %arg1[%c1_222, %c0_223, %c192_224] : memref<4x128x384xbf16, #tpu.memory_space<vmem>>, vector<1x128x32xbf16>
    %386 = vector.shape_cast %385 : vector<1x128x32xbf16> to vector<128x32xbf16>
    %cst_225 = arith.constant dense<0.000000e+00> : vector<16x32xf32>
    %387 = tpu.matmul %289, %386, %cst_225 {dimension_numbers = #tpu.dot_dimension_numbers<[1], [0], [0], [1], [0, 0, 1, 1], [], []>} : vector<16x128xbf16>, vector<128x32xbf16>, vector<16x32xf32> -> vector<16x32xf32>
    %c1_226 = arith.constant 1 : index
    %c0_227 = arith.constant 0 : index
    %c192_228 = arith.constant 192 : index
    %388 = vector.load %arg2[%c1_226, %c0_227, %c192_228] : memref<4x1x384xf32, #tpu.memory_space<vmem>>, vector<1x1x32xf32>
    %389 = vector.shape_cast %388 : vector<1x1x32xf32> to vector<1x32xf32>
    %390 = vector.broadcast %389 : vector<1x32xf32> to vector<16x32xf32>
    %391 = arith.addf %387, %390 : vector<16x32xf32>
    %392 = arith.truncf %391 : vector<16x32xf32> to vector<16x32xbf16>
    %c1_229 = arith.constant 1 : index
    %c0_230 = arith.constant 0 : index
    %c320_231 = arith.constant 320 : index
    %393 = vector.load %arg1[%c1_229, %c0_230, %c320_231] : memref<4x128x384xbf16, #tpu.memory_space<vmem>>, vector<1x128x32xbf16>
    %394 = vector.shape_cast %393 : vector<1x128x32xbf16> to vector<128x32xbf16>
    %cst_232 = arith.constant dense<0.000000e+00> : vector<16x32xf32>
    %395 = tpu.matmul %289, %394, %cst_232 {dimension_numbers = #tpu.dot_dimension_numbers<[1], [0], [0], [1], [0, 0, 1, 1], [], []>} : vector<16x128xbf16>, vector<128x32xbf16>, vector<16x32xf32> -> vector<16x32xf32>
    %c1_233 = arith.constant 1 : index
    %c0_234 = arith.constant 0 : index
    %c320_235 = arith.constant 320 : index
    %396 = vector.load %arg2[%c1_233, %c0_234, %c320_235] : memref<4x1x384xf32, #tpu.memory_space<vmem>>, vector<1x1x32xf32>
    %397 = vector.shape_cast %396 : vector<1x1x32xf32> to vector<1x32xf32>
    %398 = vector.broadcast %397 : vector<1x32xf32> to vector<16x32xf32>
    %399 = arith.addf %395, %398 : vector<16x32xf32>
    %400 = arith.truncf %399 : vector<16x32xf32> to vector<16x32xbf16>
    %cst_236 = arith.constant dense<0.000000e+00> : vector<16x16xf32>
    %401 = tpu.matmul %384, %392, %cst_236 {dimension_numbers = #tpu.dot_dimension_numbers<[1], [1], [0], [0], [0, 0, 1, 0], [], []>} : vector<16x32xbf16>, vector<16x32xbf16>, vector<16x16xf32> -> vector<16x16xf32>
    %402 = arith.addf %401, %37 : vector<16x16xf32>
    %cst_237 = arith.constant dense<0xFF800000> : vector<16xf32>
    %403 = vector.multi_reduction <maximumf>, %402, %cst_237 [1] : vector<16x16xf32> to vector<16xf32>
    %404 = vector.shape_cast %403 : vector<16xf32> to vector<16x1xf32>
    %405 = vector.broadcast %404 : vector<16x1xf32> to vector<16x16xf32>
    %406 = arith.subf %402, %405 : vector<16x16xf32>
    %407 = math.exp %406 : vector<16x16xf32>
    %cst_238 = arith.constant dense<0.000000e+00> : vector<16xf32>
    %408 = vector.multi_reduction <add>, %407, %cst_238 [1] : vector<16x16xf32> to vector<16xf32>
    %409 = vector.shape_cast %408 : vector<16xf32> to vector<16x1xf32>
    %410 = tpu.reciprocal %409 {approx = true} : vector<16x1xf32> -> vector<16x1xf32>
    %411 = vector.broadcast %410 : vector<16x1xf32> to vector<16x16xf32>
    %412 = arith.mulf %407, %411 : vector<16x16xf32>
    %413 = arith.truncf %412 : vector<16x16xf32> to vector<16x16xbf16>
    %cst_239 = arith.constant dense<0.000000e+00> : vector<16x32xf32>
    %414 = tpu.matmul %413, %400, %cst_239 {dimension_numbers = #tpu.dot_dimension_numbers<[1], [0], [0], [1], [0, 0, 1, 1], [], []>} : vector<16x16xbf16>, vector<16x32xbf16>, vector<16x32xf32> -> vector<16x32xf32>
    %415 = arith.truncf %414 : vector<16x32xf32> to vector<16x32xbf16>
    %c1_240 = arith.constant 1 : index
    %c64_241 = arith.constant 64 : index
    %c0_242 = arith.constant 0 : index
    %416 = vector.load %arg3[%c1_240, %c64_241, %c0_242] : memref<4x128x128xbf16, #tpu.memory_space<vmem>>, vector<1x32x128xbf16>
    %417 = vector.shape_cast %416 : vector<1x32x128xbf16> to vector<32x128xbf16>
    %cst_243 = arith.constant dense<0.000000e+00> : vector<16x128xf32>
    %418 = tpu.matmul %415, %417, %cst_243 {dimension_numbers = #tpu.dot_dimension_numbers<[1], [0], [0], [1], [0, 0, 1, 1], [], []>} : vector<16x32xbf16>, vector<32x128xbf16>, vector<16x128xf32> -> vector<16x128xf32>
    %419 = arith.addf %376, %418 : vector<16x128xf32>
    %c1_244 = arith.constant 1 : index
    %c0_245 = arith.constant 0 : index
    %c96_246 = arith.constant 96 : index
    %420 = vector.load %arg1[%c1_244, %c0_245, %c96_246] : memref<4x128x384xbf16, #tpu.memory_space<vmem>>, vector<1x128x32xbf16>
    %421 = vector.shape_cast %420 : vector<1x128x32xbf16> to vector<128x32xbf16>
    %cst_247 = arith.constant dense<0.000000e+00> : vector<16x32xf32>
    %422 = tpu.matmul %289, %421, %cst_247 {dimension_numbers = #tpu.dot_dimension_numbers<[1], [0], [0], [1], [0, 0, 1, 1], [], []>} : vector<16x128xbf16>, vector<128x32xbf16>, vector<16x32xf32> -> vector<16x32xf32>
    %c1_248 = arith.constant 1 : index
    %c0_249 = arith.constant 0 : index
    %c96_250 = arith.constant 96 : index
    %423 = vector.load %arg2[%c1_248, %c0_249, %c96_250] : memref<4x1x384xf32, #tpu.memory_space<vmem>>, vector<1x1x32xf32>
    %424 = vector.shape_cast %423 : vector<1x1x32xf32> to vector<1x32xf32>
    %425 = vector.broadcast %424 : vector<1x32xf32> to vector<16x32xf32>
    %426 = arith.addf %422, %425 : vector<16x32xf32>
    %427 = arith.truncf %426 : vector<16x32xf32> to vector<16x32xbf16>
    %c1_251 = arith.constant 1 : index
    %c0_252 = arith.constant 0 : index
    %c224_253 = arith.constant 224 : index
    %428 = vector.load %arg1[%c1_251, %c0_252, %c224_253] : memref<4x128x384xbf16, #tpu.memory_space<vmem>>, vector<1x128x32xbf16>
    %429 = vector.shape_cast %428 : vector<1x128x32xbf16> to vector<128x32xbf16>
    %cst_254 = arith.constant dense<0.000000e+00> : vector<16x32xf32>
    %430 = tpu.matmul %289, %429, %cst_254 {dimension_numbers = #tpu.dot_dimension_numbers<[1], [0], [0], [1], [0, 0, 1, 1], [], []>} : vector<16x128xbf16>, vector<128x32xbf16>, vector<16x32xf32> -> vector<16x32xf32>
    %c1_255 = arith.constant 1 : index
    %c0_256 = arith.constant 0 : index
    %c224_257 = arith.constant 224 : index
    %431 = vector.load %arg2[%c1_255, %c0_256, %c224_257] : memref<4x1x384xf32, #tpu.memory_space<vmem>>, vector<1x1x32xf32>
    %432 = vector.shape_cast %431 : vector<1x1x32xf32> to vector<1x32xf32>
    %433 = vector.broadcast %432 : vector<1x32xf32> to vector<16x32xf32>
    %434 = arith.addf %430, %433 : vector<16x32xf32>
    %435 = arith.truncf %434 : vector<16x32xf32> to vector<16x32xbf16>
    %c1_258 = arith.constant 1 : index
    %c0_259 = arith.constant 0 : index
    %c352_260 = arith.constant 352 : index
    %436 = vector.load %arg1[%c1_258, %c0_259, %c352_260] : memref<4x128x384xbf16, #tpu.memory_space<vmem>>, vector<1x128x32xbf16>
    %437 = vector.shape_cast %436 : vector<1x128x32xbf16> to vector<128x32xbf16>
    %cst_261 = arith.constant dense<0.000000e+00> : vector<16x32xf32>
    %438 = tpu.matmul %289, %437, %cst_261 {dimension_numbers = #tpu.dot_dimension_numbers<[1], [0], [0], [1], [0, 0, 1, 1], [], []>} : vector<16x128xbf16>, vector<128x32xbf16>, vector<16x32xf32> -> vector<16x32xf32>
    %c1_262 = arith.constant 1 : index
    %c0_263 = arith.constant 0 : index
    %c352_264 = arith.constant 352 : index
    %439 = vector.load %arg2[%c1_262, %c0_263, %c352_264] : memref<4x1x384xf32, #tpu.memory_space<vmem>>, vector<1x1x32xf32>
    %440 = vector.shape_cast %439 : vector<1x1x32xf32> to vector<1x32xf32>
    %441 = vector.broadcast %440 : vector<1x32xf32> to vector<16x32xf32>
    %442 = arith.addf %438, %441 : vector<16x32xf32>
    %443 = arith.truncf %442 : vector<16x32xf32> to vector<16x32xbf16>
    %cst_265 = arith.constant dense<0.000000e+00> : vector<16x16xf32>
    %444 = tpu.matmul %427, %435, %cst_265 {dimension_numbers = #tpu.dot_dimension_numbers<[1], [1], [0], [0], [0, 0, 1, 0], [], []>} : vector<16x32xbf16>, vector<16x32xbf16>, vector<16x16xf32> -> vector<16x16xf32>
    %445 = arith.addf %444, %37 : vector<16x16xf32>
    %cst_266 = arith.constant dense<0xFF800000> : vector<16xf32>
    %446 = vector.multi_reduction <maximumf>, %445, %cst_266 [1] : vector<16x16xf32> to vector<16xf32>
    %447 = vector.shape_cast %446 : vector<16xf32> to vector<16x1xf32>
    %448 = vector.broadcast %447 : vector<16x1xf32> to vector<16x16xf32>
    %449 = arith.subf %445, %448 : vector<16x16xf32>
    %450 = math.exp %449 : vector<16x16xf32>
    %cst_267 = arith.constant dense<0.000000e+00> : vector<16xf32>
    %451 = vector.multi_reduction <add>, %450, %cst_267 [1] : vector<16x16xf32> to vector<16xf32>
    %452 = vector.shape_cast %451 : vector<16xf32> to vector<16x1xf32>
    %453 = tpu.reciprocal %452 {approx = true} : vector<16x1xf32> -> vector<16x1xf32>
    %454 = vector.broadcast %453 : vector<16x1xf32> to vector<16x16xf32>
    %455 = arith.mulf %450, %454 : vector<16x16xf32>
    %456 = arith.truncf %455 : vector<16x16xf32> to vector<16x16xbf16>
    %cst_268 = arith.constant dense<0.000000e+00> : vector<16x32xf32>
    %457 = tpu.matmul %456, %443, %cst_268 {dimension_numbers = #tpu.dot_dimension_numbers<[1], [0], [0], [1], [0, 0, 1, 1], [], []>} : vector<16x16xbf16>, vector<16x32xbf16>, vector<16x32xf32> -> vector<16x32xf32>
    %458 = arith.truncf %457 : vector<16x32xf32> to vector<16x32xbf16>
    %c1_269 = arith.constant 1 : index
    %c96_270 = arith.constant 96 : index
    %c0_271 = arith.constant 0 : index
    %459 = vector.load %arg3[%c1_269, %c96_270, %c0_271] : memref<4x128x128xbf16, #tpu.memory_space<vmem>>, vector<1x32x128xbf16>
    %460 = vector.shape_cast %459 : vector<1x32x128xbf16> to vector<32x128xbf16>
    %cst_272 = arith.constant dense<0.000000e+00> : vector<16x128xf32>
    %461 = tpu.matmul %458, %460, %cst_272 {dimension_numbers = #tpu.dot_dimension_numbers<[1], [0], [0], [1], [0, 0, 1, 1], [], []>} : vector<16x32xbf16>, vector<32x128xbf16>, vector<16x128xf32> -> vector<16x128xf32>
    %462 = arith.addf %419, %461 : vector<16x128xf32>
    %c1_273 = arith.constant 1 : index
    %c0_274 = arith.constant 0 : index
    %c0_275 = arith.constant 0 : index
    %463 = vector.load %arg4[%c1_273, %c0_274, %c0_275] : memref<4x1x128xf32, #tpu.memory_space<vmem>>, vector<1x1x128xf32>
    %464 = vector.shape_cast %463 : vector<1x1x128xf32> to vector<1x128xf32>
    %465 = vector.broadcast %464 : vector<1x128xf32> to vector<16x128xf32>
    %466 = arith.addf %462, %465 : vector<16x128xf32>
    %467 = arith.addf %288, %466 : vector<16x128xf32>
    %c1_276 = arith.constant 1 : index
    %c0_277 = arith.constant 0 : index
    %c0_278 = arith.constant 0 : index
    %468 = vector.load %arg5[%c1_276, %c0_277, %c0_278] : memref<4x1x128xf32, #tpu.memory_space<vmem>>, vector<1x1x128xf32>
    %469 = vector.shape_cast %468 : vector<1x1x128xf32> to vector<1x128xf32>
    %c1_279 = arith.constant 1 : index
    %c0_280 = arith.constant 0 : index
    %c0_281 = arith.constant 0 : index
    %470 = vector.load %arg6[%c1_279, %c0_280, %c0_281] : memref<4x1x128xf32, #tpu.memory_space<vmem>>, vector<1x1x128xf32>
    %471 = vector.shape_cast %470 : vector<1x1x128xf32> to vector<1x128xf32>
    %cst_282 = arith.constant dense<0.000000e+00> : vector<16xf32>
    %472 = vector.multi_reduction <add>, %467, %cst_282 [1] : vector<16x128xf32> to vector<16xf32>
    %473 = vector.shape_cast %472 : vector<16xf32> to vector<16x1xf32>
    %cst_283 = arith.constant 1.280000e+02 : f32
    %474 = vector.broadcast %cst_283 : f32 to vector<16x1xf32>
    %475 = arith.divf %473, %474 : vector<16x1xf32>
    %476 = vector.broadcast %475 : vector<16x1xf32> to vector<16x128xf32>
    %477 = arith.subf %467, %476 : vector<16x128xf32>
    %478 = arith.mulf %477, %477 : vector<16x128xf32>
    %cst_284 = arith.constant dense<0.000000e+00> : vector<16xf32>
    %479 = vector.multi_reduction <add>, %478, %cst_284 [1] : vector<16x128xf32> to vector<16xf32>
    %480 = vector.shape_cast %479 : vector<16xf32> to vector<16x1xf32>
    %cst_285 = arith.constant 1.280000e+02 : f32
    %481 = vector.broadcast %cst_285 : f32 to vector<16x1xf32>
    %482 = arith.divf %480, %481 : vector<16x1xf32>
    %cst_286 = arith.constant 9.99999974E-6 : f32
    %483 = vector.broadcast %cst_286 : f32 to vector<16x1xf32>
    %484 = arith.addf %482, %483 : vector<16x1xf32>
    %485 = math.rsqrt %484 : vector<16x1xf32>
    %486 = vector.broadcast %475 : vector<16x1xf32> to vector<16x128xf32>
    %487 = arith.subf %467, %486 : vector<16x128xf32>
    %488 = vector.broadcast %485 : vector<16x1xf32> to vector<16x128xf32>
    %489 = arith.mulf %487, %488 : vector<16x128xf32>
    %490 = vector.broadcast %469 : vector<1x128xf32> to vector<16x128xf32>
    %491 = arith.mulf %489, %490 : vector<16x128xf32>
    %492 = vector.broadcast %471 : vector<1x128xf32> to vector<16x128xf32>
    %493 = arith.addf %491, %492 : vector<16x128xf32>
    %494 = arith.truncf %493 : vector<16x128xf32> to vector<16x128xbf16>
    %c1_287 = arith.constant 1 : index
    %c0_288 = arith.constant 0 : index
    %c0_289 = arith.constant 0 : index
    %495 = vector.load %arg7[%c1_287, %c0_288, %c0_289] : memref<4x128x256xbf16, #tpu.memory_space<vmem>>, vector<1x128x256xbf16>
    %496 = vector.shape_cast %495 : vector<1x128x256xbf16> to vector<128x256xbf16>
    %cst_290 = arith.constant dense<0.000000e+00> : vector<16x256xf32>
    %497 = tpu.matmul %494, %496, %cst_290 {dimension_numbers = #tpu.dot_dimension_numbers<[1], [0], [0], [1], [0, 0, 1, 1], [], []>} : vector<16x128xbf16>, vector<128x256xbf16>, vector<16x256xf32> -> vector<16x256xf32>
    %c1_291 = arith.constant 1 : index
    %c0_292 = arith.constant 0 : index
    %c0_293 = arith.constant 0 : index
    %498 = vector.load %arg8[%c1_291, %c0_292, %c0_293] : memref<4x1x256xf32, #tpu.memory_space<vmem>>, vector<1x1x256xf32>
    %499 = vector.shape_cast %498 : vector<1x1x256xf32> to vector<1x256xf32>
    %500 = vector.broadcast %499 : vector<1x256xf32> to vector<16x256xf32>
    %501 = arith.addf %497, %500 : vector<16x256xf32>
    %cst_294 = arith.constant 0.000000e+00 : f32
    %502 = vector.broadcast %cst_294 : f32 to vector<16x256xf32>
    %503 = arith.maximumf %501, %502 : vector<16x256xf32>
    %504 = arith.truncf %503 : vector<16x256xf32> to vector<16x256xbf16>
    %c1_295 = arith.constant 1 : index
    %c0_296 = arith.constant 0 : index
    %c0_297 = arith.constant 0 : index
    %505 = vector.load %arg9[%c1_295, %c0_296, %c0_297] : memref<4x256x128xbf16, #tpu.memory_space<vmem>>, vector<1x256x128xbf16>
    %506 = vector.shape_cast %505 : vector<1x256x128xbf16> to vector<256x128xbf16>
    %cst_298 = arith.constant dense<0.000000e+00> : vector<16x128xf32>
    %507 = tpu.matmul %504, %506, %cst_298 {dimension_numbers = #tpu.dot_dimension_numbers<[1], [0], [0], [1], [0, 0, 1, 1], [], []>} : vector<16x256xbf16>, vector<256x128xbf16>, vector<16x128xf32> -> vector<16x128xf32>
    %c1_299 = arith.constant 1 : index
    %c0_300 = arith.constant 0 : index
    %c0_301 = arith.constant 0 : index
    %508 = vector.load %arg10[%c1_299, %c0_300, %c0_301] : memref<4x1x128xf32, #tpu.memory_space<vmem>>, vector<1x1x128xf32>
    %509 = vector.shape_cast %508 : vector<1x1x128xf32> to vector<1x128xf32>
    %510 = vector.broadcast %509 : vector<1x128xf32> to vector<16x128xf32>
    %511 = arith.addf %507, %510 : vector<16x128xf32>
    %512 = arith.addf %493, %511 : vector<16x128xf32>
    %c1_302 = arith.constant 1 : index
    %c0_303 = arith.constant 0 : index
    %c0_304 = arith.constant 0 : index
    %513 = vector.load %arg11[%c1_302, %c0_303, %c0_304] : memref<4x1x128xf32, #tpu.memory_space<vmem>>, vector<1x1x128xf32>
    %514 = vector.shape_cast %513 : vector<1x1x128xf32> to vector<1x128xf32>
    %c1_305 = arith.constant 1 : index
    %c0_306 = arith.constant 0 : index
    %c0_307 = arith.constant 0 : index
    %515 = vector.load %arg12[%c1_305, %c0_306, %c0_307] : memref<4x1x128xf32, #tpu.memory_space<vmem>>, vector<1x1x128xf32>
    %516 = vector.shape_cast %515 : vector<1x1x128xf32> to vector<1x128xf32>
    %cst_308 = arith.constant dense<0.000000e+00> : vector<16xf32>
    %517 = vector.multi_reduction <add>, %512, %cst_308 [1] : vector<16x128xf32> to vector<16xf32>
    %518 = vector.shape_cast %517 : vector<16xf32> to vector<16x1xf32>
    %cst_309 = arith.constant 1.280000e+02 : f32
    %519 = vector.broadcast %cst_309 : f32 to vector<16x1xf32>
    %520 = arith.divf %518, %519 : vector<16x1xf32>
    %521 = vector.broadcast %520 : vector<16x1xf32> to vector<16x128xf32>
    %522 = arith.subf %512, %521 : vector<16x128xf32>
    %523 = arith.mulf %522, %522 : vector<16x128xf32>
    %cst_310 = arith.constant dense<0.000000e+00> : vector<16xf32>
    %524 = vector.multi_reduction <add>, %523, %cst_310 [1] : vector<16x128xf32> to vector<16xf32>
    %525 = vector.shape_cast %524 : vector<16xf32> to vector<16x1xf32>
    %cst_311 = arith.constant 1.280000e+02 : f32
    %526 = vector.broadcast %cst_311 : f32 to vector<16x1xf32>
    %527 = arith.divf %525, %526 : vector<16x1xf32>
    %cst_312 = arith.constant 9.99999974E-6 : f32
    %528 = vector.broadcast %cst_312 : f32 to vector<16x1xf32>
    %529 = arith.addf %527, %528 : vector<16x1xf32>
    %530 = math.rsqrt %529 : vector<16x1xf32>
    %531 = vector.broadcast %520 : vector<16x1xf32> to vector<16x128xf32>
    %532 = arith.subf %512, %531 : vector<16x128xf32>
    %533 = vector.broadcast %530 : vector<16x1xf32> to vector<16x128xf32>
    %534 = arith.mulf %532, %533 : vector<16x128xf32>
    %535 = vector.broadcast %514 : vector<1x128xf32> to vector<16x128xf32>
    %536 = arith.mulf %534, %535 : vector<16x128xf32>
    %537 = vector.broadcast %516 : vector<1x128xf32> to vector<16x128xf32>
    %538 = arith.addf %536, %537 : vector<16x128xf32>
    %539 = arith.truncf %538 : vector<16x128xf32> to vector<16x128xbf16>
    %cst_313 = arith.constant 0.000000e+00 : f32
    %540 = vector.broadcast %cst_313 : f32 to vector<16x128xf32>
    %c2 = arith.constant 2 : index
    %c0_314 = arith.constant 0 : index
    %c0_315 = arith.constant 0 : index
    %541 = vector.load %arg1[%c2, %c0_314, %c0_315] : memref<4x128x384xbf16, #tpu.memory_space<vmem>>, vector<1x128x32xbf16>
    %542 = vector.shape_cast %541 : vector<1x128x32xbf16> to vector<128x32xbf16>
    %cst_316 = arith.constant dense<0.000000e+00> : vector<16x32xf32>
    %543 = tpu.matmul %539, %542, %cst_316 {dimension_numbers = #tpu.dot_dimension_numbers<[1], [0], [0], [1], [0, 0, 1, 1], [], []>} : vector<16x128xbf16>, vector<128x32xbf16>, vector<16x32xf32> -> vector<16x32xf32>
    %c2_317 = arith.constant 2 : index
    %c0_318 = arith.constant 0 : index
    %c0_319 = arith.constant 0 : index
    %544 = vector.load %arg2[%c2_317, %c0_318, %c0_319] : memref<4x1x384xf32, #tpu.memory_space<vmem>>, vector<1x1x32xf32>
    %545 = vector.shape_cast %544 : vector<1x1x32xf32> to vector<1x32xf32>
    %546 = vector.broadcast %545 : vector<1x32xf32> to vector<16x32xf32>
    %547 = arith.addf %543, %546 : vector<16x32xf32>
    %548 = arith.truncf %547 : vector<16x32xf32> to vector<16x32xbf16>
    %c2_320 = arith.constant 2 : index
    %c0_321 = arith.constant 0 : index
    %c128_322 = arith.constant 128 : index
    %549 = vector.load %arg1[%c2_320, %c0_321, %c128_322] : memref<4x128x384xbf16, #tpu.memory_space<vmem>>, vector<1x128x32xbf16>
    %550 = vector.shape_cast %549 : vector<1x128x32xbf16> to vector<128x32xbf16>
    %cst_323 = arith.constant dense<0.000000e+00> : vector<16x32xf32>
    %551 = tpu.matmul %539, %550, %cst_323 {dimension_numbers = #tpu.dot_dimension_numbers<[1], [0], [0], [1], [0, 0, 1, 1], [], []>} : vector<16x128xbf16>, vector<128x32xbf16>, vector<16x32xf32> -> vector<16x32xf32>
    %c2_324 = arith.constant 2 : index
    %c0_325 = arith.constant 0 : index
    %c128_326 = arith.constant 128 : index
    %552 = vector.load %arg2[%c2_324, %c0_325, %c128_326] : memref<4x1x384xf32, #tpu.memory_space<vmem>>, vector<1x1x32xf32>
    %553 = vector.shape_cast %552 : vector<1x1x32xf32> to vector<1x32xf32>
    %554 = vector.broadcast %553 : vector<1x32xf32> to vector<16x32xf32>
    %555 = arith.addf %551, %554 : vector<16x32xf32>
    %556 = arith.truncf %555 : vector<16x32xf32> to vector<16x32xbf16>
    %c2_327 = arith.constant 2 : index
    %c0_328 = arith.constant 0 : index
    %c256_329 = arith.constant 256 : index
    %557 = vector.load %arg1[%c2_327, %c0_328, %c256_329] : memref<4x128x384xbf16, #tpu.memory_space<vmem>>, vector<1x128x32xbf16>
    %558 = vector.shape_cast %557 : vector<1x128x32xbf16> to vector<128x32xbf16>
    %cst_330 = arith.constant dense<0.000000e+00> : vector<16x32xf32>
    %559 = tpu.matmul %539, %558, %cst_330 {dimension_numbers = #tpu.dot_dimension_numbers<[1], [0], [0], [1], [0, 0, 1, 1], [], []>} : vector<16x128xbf16>, vector<128x32xbf16>, vector<16x32xf32> -> vector<16x32xf32>
    %c2_331 = arith.constant 2 : index
    %c0_332 = arith.constant 0 : index
    %c256_333 = arith.constant 256 : index
    %560 = vector.load %arg2[%c2_331, %c0_332, %c256_333] : memref<4x1x384xf32, #tpu.memory_space<vmem>>, vector<1x1x32xf32>
    %561 = vector.shape_cast %560 : vector<1x1x32xf32> to vector<1x32xf32>
    %562 = vector.broadcast %561 : vector<1x32xf32> to vector<16x32xf32>
    %563 = arith.addf %559, %562 : vector<16x32xf32>
    %564 = arith.truncf %563 : vector<16x32xf32> to vector<16x32xbf16>
    %cst_334 = arith.constant dense<0.000000e+00> : vector<16x16xf32>
    %565 = tpu.matmul %548, %556, %cst_334 {dimension_numbers = #tpu.dot_dimension_numbers<[1], [1], [0], [0], [0, 0, 1, 0], [], []>} : vector<16x32xbf16>, vector<16x32xbf16>, vector<16x16xf32> -> vector<16x16xf32>
    %566 = arith.addf %565, %37 : vector<16x16xf32>
    %cst_335 = arith.constant dense<0xFF800000> : vector<16xf32>
    %567 = vector.multi_reduction <maximumf>, %566, %cst_335 [1] : vector<16x16xf32> to vector<16xf32>
    %568 = vector.shape_cast %567 : vector<16xf32> to vector<16x1xf32>
    %569 = vector.broadcast %568 : vector<16x1xf32> to vector<16x16xf32>
    %570 = arith.subf %566, %569 : vector<16x16xf32>
    %571 = math.exp %570 : vector<16x16xf32>
    %cst_336 = arith.constant dense<0.000000e+00> : vector<16xf32>
    %572 = vector.multi_reduction <add>, %571, %cst_336 [1] : vector<16x16xf32> to vector<16xf32>
    %573 = vector.shape_cast %572 : vector<16xf32> to vector<16x1xf32>
    %574 = tpu.reciprocal %573 {approx = true} : vector<16x1xf32> -> vector<16x1xf32>
    %575 = vector.broadcast %574 : vector<16x1xf32> to vector<16x16xf32>
    %576 = arith.mulf %571, %575 : vector<16x16xf32>
    %577 = arith.truncf %576 : vector<16x16xf32> to vector<16x16xbf16>
    %cst_337 = arith.constant dense<0.000000e+00> : vector<16x32xf32>
    %578 = tpu.matmul %577, %564, %cst_337 {dimension_numbers = #tpu.dot_dimension_numbers<[1], [0], [0], [1], [0, 0, 1, 1], [], []>} : vector<16x16xbf16>, vector<16x32xbf16>, vector<16x32xf32> -> vector<16x32xf32>
    %579 = arith.truncf %578 : vector<16x32xf32> to vector<16x32xbf16>
    %c2_338 = arith.constant 2 : index
    %c0_339 = arith.constant 0 : index
    %c0_340 = arith.constant 0 : index
    %580 = vector.load %arg3[%c2_338, %c0_339, %c0_340] : memref<4x128x128xbf16, #tpu.memory_space<vmem>>, vector<1x32x128xbf16>
    %581 = vector.shape_cast %580 : vector<1x32x128xbf16> to vector<32x128xbf16>
    %cst_341 = arith.constant dense<0.000000e+00> : vector<16x128xf32>
    %582 = tpu.matmul %579, %581, %cst_341 {dimension_numbers = #tpu.dot_dimension_numbers<[1], [0], [0], [1], [0, 0, 1, 1], [], []>} : vector<16x32xbf16>, vector<32x128xbf16>, vector<16x128xf32> -> vector<16x128xf32>
    %583 = arith.addf %540, %582 : vector<16x128xf32>
    %c2_342 = arith.constant 2 : index
    %c0_343 = arith.constant 0 : index
    %c32_344 = arith.constant 32 : index
    %584 = vector.load %arg1[%c2_342, %c0_343, %c32_344] : memref<4x128x384xbf16, #tpu.memory_space<vmem>>, vector<1x128x32xbf16>
    %585 = vector.shape_cast %584 : vector<1x128x32xbf16> to vector<128x32xbf16>
    %cst_345 = arith.constant dense<0.000000e+00> : vector<16x32xf32>
    %586 = tpu.matmul %539, %585, %cst_345 {dimension_numbers = #tpu.dot_dimension_numbers<[1], [0], [0], [1], [0, 0, 1, 1], [], []>} : vector<16x128xbf16>, vector<128x32xbf16>, vector<16x32xf32> -> vector<16x32xf32>
    %c2_346 = arith.constant 2 : index
    %c0_347 = arith.constant 0 : index
    %c32_348 = arith.constant 32 : index
    %587 = vector.load %arg2[%c2_346, %c0_347, %c32_348] : memref<4x1x384xf32, #tpu.memory_space<vmem>>, vector<1x1x32xf32>
    %588 = vector.shape_cast %587 : vector<1x1x32xf32> to vector<1x32xf32>
    %589 = vector.broadcast %588 : vector<1x32xf32> to vector<16x32xf32>
    %590 = arith.addf %586, %589 : vector<16x32xf32>
    %591 = arith.truncf %590 : vector<16x32xf32> to vector<16x32xbf16>
    %c2_349 = arith.constant 2 : index
    %c0_350 = arith.constant 0 : index
    %c160_351 = arith.constant 160 : index
    %592 = vector.load %arg1[%c2_349, %c0_350, %c160_351] : memref<4x128x384xbf16, #tpu.memory_space<vmem>>, vector<1x128x32xbf16>
    %593 = vector.shape_cast %592 : vector<1x128x32xbf16> to vector<128x32xbf16>
    %cst_352 = arith.constant dense<0.000000e+00> : vector<16x32xf32>
    %594 = tpu.matmul %539, %593, %cst_352 {dimension_numbers = #tpu.dot_dimension_numbers<[1], [0], [0], [1], [0, 0, 1, 1], [], []>} : vector<16x128xbf16>, vector<128x32xbf16>, vector<16x32xf32> -> vector<16x32xf32>
    %c2_353 = arith.constant 2 : index
    %c0_354 = arith.constant 0 : index
    %c160_355 = arith.constant 160 : index
    %595 = vector.load %arg2[%c2_353, %c0_354, %c160_355] : memref<4x1x384xf32, #tpu.memory_space<vmem>>, vector<1x1x32xf32>
    %596 = vector.shape_cast %595 : vector<1x1x32xf32> to vector<1x32xf32>
    %597 = vector.broadcast %596 : vector<1x32xf32> to vector<16x32xf32>
    %598 = arith.addf %594, %597 : vector<16x32xf32>
    %599 = arith.truncf %598 : vector<16x32xf32> to vector<16x32xbf16>
    %c2_356 = arith.constant 2 : index
    %c0_357 = arith.constant 0 : index
    %c288_358 = arith.constant 288 : index
    %600 = vector.load %arg1[%c2_356, %c0_357, %c288_358] : memref<4x128x384xbf16, #tpu.memory_space<vmem>>, vector<1x128x32xbf16>
    %601 = vector.shape_cast %600 : vector<1x128x32xbf16> to vector<128x32xbf16>
    %cst_359 = arith.constant dense<0.000000e+00> : vector<16x32xf32>
    %602 = tpu.matmul %539, %601, %cst_359 {dimension_numbers = #tpu.dot_dimension_numbers<[1], [0], [0], [1], [0, 0, 1, 1], [], []>} : vector<16x128xbf16>, vector<128x32xbf16>, vector<16x32xf32> -> vector<16x32xf32>
    %c2_360 = arith.constant 2 : index
    %c0_361 = arith.constant 0 : index
    %c288_362 = arith.constant 288 : index
    %603 = vector.load %arg2[%c2_360, %c0_361, %c288_362] : memref<4x1x384xf32, #tpu.memory_space<vmem>>, vector<1x1x32xf32>
    %604 = vector.shape_cast %603 : vector<1x1x32xf32> to vector<1x32xf32>
    %605 = vector.broadcast %604 : vector<1x32xf32> to vector<16x32xf32>
    %606 = arith.addf %602, %605 : vector<16x32xf32>
    %607 = arith.truncf %606 : vector<16x32xf32> to vector<16x32xbf16>
    %cst_363 = arith.constant dense<0.000000e+00> : vector<16x16xf32>
    %608 = tpu.matmul %591, %599, %cst_363 {dimension_numbers = #tpu.dot_dimension_numbers<[1], [1], [0], [0], [0, 0, 1, 0], [], []>} : vector<16x32xbf16>, vector<16x32xbf16>, vector<16x16xf32> -> vector<16x16xf32>
    %609 = arith.addf %608, %37 : vector<16x16xf32>
    %cst_364 = arith.constant dense<0xFF800000> : vector<16xf32>
    %610 = vector.multi_reduction <maximumf>, %609, %cst_364 [1] : vector<16x16xf32> to vector<16xf32>
    %611 = vector.shape_cast %610 : vector<16xf32> to vector<16x1xf32>
    %612 = vector.broadcast %611 : vector<16x1xf32> to vector<16x16xf32>
    %613 = arith.subf %609, %612 : vector<16x16xf32>
    %614 = math.exp %613 : vector<16x16xf32>
    %cst_365 = arith.constant dense<0.000000e+00> : vector<16xf32>
    %615 = vector.multi_reduction <add>, %614, %cst_365 [1] : vector<16x16xf32> to vector<16xf32>
    %616 = vector.shape_cast %615 : vector<16xf32> to vector<16x1xf32>
    %617 = tpu.reciprocal %616 {approx = true} : vector<16x1xf32> -> vector<16x1xf32>
    %618 = vector.broadcast %617 : vector<16x1xf32> to vector<16x16xf32>
    %619 = arith.mulf %614, %618 : vector<16x16xf32>
    %620 = arith.truncf %619 : vector<16x16xf32> to vector<16x16xbf16>
    %cst_366 = arith.constant dense<0.000000e+00> : vector<16x32xf32>
    %621 = tpu.matmul %620, %607, %cst_366 {dimension_numbers = #tpu.dot_dimension_numbers<[1], [0], [0], [1], [0, 0, 1, 1], [], []>} : vector<16x16xbf16>, vector<16x32xbf16>, vector<16x32xf32> -> vector<16x32xf32>
    %622 = arith.truncf %621 : vector<16x32xf32> to vector<16x32xbf16>
    %c2_367 = arith.constant 2 : index
    %c32_368 = arith.constant 32 : index
    %c0_369 = arith.constant 0 : index
    %623 = vector.load %arg3[%c2_367, %c32_368, %c0_369] : memref<4x128x128xbf16, #tpu.memory_space<vmem>>, vector<1x32x128xbf16>
    %624 = vector.shape_cast %623 : vector<1x32x128xbf16> to vector<32x128xbf16>
    %cst_370 = arith.constant dense<0.000000e+00> : vector<16x128xf32>
    %625 = tpu.matmul %622, %624, %cst_370 {dimension_numbers = #tpu.dot_dimension_numbers<[1], [0], [0], [1], [0, 0, 1, 1], [], []>} : vector<16x32xbf16>, vector<32x128xbf16>, vector<16x128xf32> -> vector<16x128xf32>
    %626 = arith.addf %583, %625 : vector<16x128xf32>
    %c2_371 = arith.constant 2 : index
    %c0_372 = arith.constant 0 : index
    %c64_373 = arith.constant 64 : index
    %627 = vector.load %arg1[%c2_371, %c0_372, %c64_373] : memref<4x128x384xbf16, #tpu.memory_space<vmem>>, vector<1x128x32xbf16>
    %628 = vector.shape_cast %627 : vector<1x128x32xbf16> to vector<128x32xbf16>
    %cst_374 = arith.constant dense<0.000000e+00> : vector<16x32xf32>
    %629 = tpu.matmul %539, %628, %cst_374 {dimension_numbers = #tpu.dot_dimension_numbers<[1], [0], [0], [1], [0, 0, 1, 1], [], []>} : vector<16x128xbf16>, vector<128x32xbf16>, vector<16x32xf32> -> vector<16x32xf32>
    %c2_375 = arith.constant 2 : index
    %c0_376 = arith.constant 0 : index
    %c64_377 = arith.constant 64 : index
    %630 = vector.load %arg2[%c2_375, %c0_376, %c64_377] : memref<4x1x384xf32, #tpu.memory_space<vmem>>, vector<1x1x32xf32>
    %631 = vector.shape_cast %630 : vector<1x1x32xf32> to vector<1x32xf32>
    %632 = vector.broadcast %631 : vector<1x32xf32> to vector<16x32xf32>
    %633 = arith.addf %629, %632 : vector<16x32xf32>
    %634 = arith.truncf %633 : vector<16x32xf32> to vector<16x32xbf16>
    %c2_378 = arith.constant 2 : index
    %c0_379 = arith.constant 0 : index
    %c192_380 = arith.constant 192 : index
    %635 = vector.load %arg1[%c2_378, %c0_379, %c192_380] : memref<4x128x384xbf16, #tpu.memory_space<vmem>>, vector<1x128x32xbf16>
    %636 = vector.shape_cast %635 : vector<1x128x32xbf16> to vector<128x32xbf16>
    %cst_381 = arith.constant dense<0.000000e+00> : vector<16x32xf32>
    %637 = tpu.matmul %539, %636, %cst_381 {dimension_numbers = #tpu.dot_dimension_numbers<[1], [0], [0], [1], [0, 0, 1, 1], [], []>} : vector<16x128xbf16>, vector<128x32xbf16>, vector<16x32xf32> -> vector<16x32xf32>
    %c2_382 = arith.constant 2 : index
    %c0_383 = arith.constant 0 : index
    %c192_384 = arith.constant 192 : index
    %638 = vector.load %arg2[%c2_382, %c0_383, %c192_384] : memref<4x1x384xf32, #tpu.memory_space<vmem>>, vector<1x1x32xf32>
    %639 = vector.shape_cast %638 : vector<1x1x32xf32> to vector<1x32xf32>
    %640 = vector.broadcast %639 : vector<1x32xf32> to vector<16x32xf32>
    %641 = arith.addf %637, %640 : vector<16x32xf32>
    %642 = arith.truncf %641 : vector<16x32xf32> to vector<16x32xbf16>
    %c2_385 = arith.constant 2 : index
    %c0_386 = arith.constant 0 : index
    %c320_387 = arith.constant 320 : index
    %643 = vector.load %arg1[%c2_385, %c0_386, %c320_387] : memref<4x128x384xbf16, #tpu.memory_space<vmem>>, vector<1x128x32xbf16>
    %644 = vector.shape_cast %643 : vector<1x128x32xbf16> to vector<128x32xbf16>
    %cst_388 = arith.constant dense<0.000000e+00> : vector<16x32xf32>
    %645 = tpu.matmul %539, %644, %cst_388 {dimension_numbers = #tpu.dot_dimension_numbers<[1], [0], [0], [1], [0, 0, 1, 1], [], []>} : vector<16x128xbf16>, vector<128x32xbf16>, vector<16x32xf32> -> vector<16x32xf32>
    %c2_389 = arith.constant 2 : index
    %c0_390 = arith.constant 0 : index
    %c320_391 = arith.constant 320 : index
    %646 = vector.load %arg2[%c2_389, %c0_390, %c320_391] : memref<4x1x384xf32, #tpu.memory_space<vmem>>, vector<1x1x32xf32>
    %647 = vector.shape_cast %646 : vector<1x1x32xf32> to vector<1x32xf32>
    %648 = vector.broadcast %647 : vector<1x32xf32> to vector<16x32xf32>
    %649 = arith.addf %645, %648 : vector<16x32xf32>
    %650 = arith.truncf %649 : vector<16x32xf32> to vector<16x32xbf16>
    %cst_392 = arith.constant dense<0.000000e+00> : vector<16x16xf32>
    %651 = tpu.matmul %634, %642, %cst_392 {dimension_numbers = #tpu.dot_dimension_numbers<[1], [1], [0], [0], [0, 0, 1, 0], [], []>} : vector<16x32xbf16>, vector<16x32xbf16>, vector<16x16xf32> -> vector<16x16xf32>
    %652 = arith.addf %651, %37 : vector<16x16xf32>
    %cst_393 = arith.constant dense<0xFF800000> : vector<16xf32>
    %653 = vector.multi_reduction <maximumf>, %652, %cst_393 [1] : vector<16x16xf32> to vector<16xf32>
    %654 = vector.shape_cast %653 : vector<16xf32> to vector<16x1xf32>
    %655 = vector.broadcast %654 : vector<16x1xf32> to vector<16x16xf32>
    %656 = arith.subf %652, %655 : vector<16x16xf32>
    %657 = math.exp %656 : vector<16x16xf32>
    %cst_394 = arith.constant dense<0.000000e+00> : vector<16xf32>
    %658 = vector.multi_reduction <add>, %657, %cst_394 [1] : vector<16x16xf32> to vector<16xf32>
    %659 = vector.shape_cast %658 : vector<16xf32> to vector<16x1xf32>
    %660 = tpu.reciprocal %659 {approx = true} : vector<16x1xf32> -> vector<16x1xf32>
    %661 = vector.broadcast %660 : vector<16x1xf32> to vector<16x16xf32>
    %662 = arith.mulf %657, %661 : vector<16x16xf32>
    %663 = arith.truncf %662 : vector<16x16xf32> to vector<16x16xbf16>
    %cst_395 = arith.constant dense<0.000000e+00> : vector<16x32xf32>
    %664 = tpu.matmul %663, %650, %cst_395 {dimension_numbers = #tpu.dot_dimension_numbers<[1], [0], [0], [1], [0, 0, 1, 1], [], []>} : vector<16x16xbf16>, vector<16x32xbf16>, vector<16x32xf32> -> vector<16x32xf32>
    %665 = arith.truncf %664 : vector<16x32xf32> to vector<16x32xbf16>
    %c2_396 = arith.constant 2 : index
    %c64_397 = arith.constant 64 : index
    %c0_398 = arith.constant 0 : index
    %666 = vector.load %arg3[%c2_396, %c64_397, %c0_398] : memref<4x128x128xbf16, #tpu.memory_space<vmem>>, vector<1x32x128xbf16>
    %667 = vector.shape_cast %666 : vector<1x32x128xbf16> to vector<32x128xbf16>
    %cst_399 = arith.constant dense<0.000000e+00> : vector<16x128xf32>
    %668 = tpu.matmul %665, %667, %cst_399 {dimension_numbers = #tpu.dot_dimension_numbers<[1], [0], [0], [1], [0, 0, 1, 1], [], []>} : vector<16x32xbf16>, vector<32x128xbf16>, vector<16x128xf32> -> vector<16x128xf32>
    %669 = arith.addf %626, %668 : vector<16x128xf32>
    %c2_400 = arith.constant 2 : index
    %c0_401 = arith.constant 0 : index
    %c96_402 = arith.constant 96 : index
    %670 = vector.load %arg1[%c2_400, %c0_401, %c96_402] : memref<4x128x384xbf16, #tpu.memory_space<vmem>>, vector<1x128x32xbf16>
    %671 = vector.shape_cast %670 : vector<1x128x32xbf16> to vector<128x32xbf16>
    %cst_403 = arith.constant dense<0.000000e+00> : vector<16x32xf32>
    %672 = tpu.matmul %539, %671, %cst_403 {dimension_numbers = #tpu.dot_dimension_numbers<[1], [0], [0], [1], [0, 0, 1, 1], [], []>} : vector<16x128xbf16>, vector<128x32xbf16>, vector<16x32xf32> -> vector<16x32xf32>
    %c2_404 = arith.constant 2 : index
    %c0_405 = arith.constant 0 : index
    %c96_406 = arith.constant 96 : index
    %673 = vector.load %arg2[%c2_404, %c0_405, %c96_406] : memref<4x1x384xf32, #tpu.memory_space<vmem>>, vector<1x1x32xf32>
    %674 = vector.shape_cast %673 : vector<1x1x32xf32> to vector<1x32xf32>
    %675 = vector.broadcast %674 : vector<1x32xf32> to vector<16x32xf32>
    %676 = arith.addf %672, %675 : vector<16x32xf32>
    %677 = arith.truncf %676 : vector<16x32xf32> to vector<16x32xbf16>
    %c2_407 = arith.constant 2 : index
    %c0_408 = arith.constant 0 : index
    %c224_409 = arith.constant 224 : index
    %678 = vector.load %arg1[%c2_407, %c0_408, %c224_409] : memref<4x128x384xbf16, #tpu.memory_space<vmem>>, vector<1x128x32xbf16>
    %679 = vector.shape_cast %678 : vector<1x128x32xbf16> to vector<128x32xbf16>
    %cst_410 = arith.constant dense<0.000000e+00> : vector<16x32xf32>
    %680 = tpu.matmul %539, %679, %cst_410 {dimension_numbers = #tpu.dot_dimension_numbers<[1], [0], [0], [1], [0, 0, 1, 1], [], []>} : vector<16x128xbf16>, vector<128x32xbf16>, vector<16x32xf32> -> vector<16x32xf32>
    %c2_411 = arith.constant 2 : index
    %c0_412 = arith.constant 0 : index
    %c224_413 = arith.constant 224 : index
    %681 = vector.load %arg2[%c2_411, %c0_412, %c224_413] : memref<4x1x384xf32, #tpu.memory_space<vmem>>, vector<1x1x32xf32>
    %682 = vector.shape_cast %681 : vector<1x1x32xf32> to vector<1x32xf32>
    %683 = vector.broadcast %682 : vector<1x32xf32> to vector<16x32xf32>
    %684 = arith.addf %680, %683 : vector<16x32xf32>
    %685 = arith.truncf %684 : vector<16x32xf32> to vector<16x32xbf16>
    %c2_414 = arith.constant 2 : index
    %c0_415 = arith.constant 0 : index
    %c352_416 = arith.constant 352 : index
    %686 = vector.load %arg1[%c2_414, %c0_415, %c352_416] : memref<4x128x384xbf16, #tpu.memory_space<vmem>>, vector<1x128x32xbf16>
    %687 = vector.shape_cast %686 : vector<1x128x32xbf16> to vector<128x32xbf16>
    %cst_417 = arith.constant dense<0.000000e+00> : vector<16x32xf32>
    %688 = tpu.matmul %539, %687, %cst_417 {dimension_numbers = #tpu.dot_dimension_numbers<[1], [0], [0], [1], [0, 0, 1, 1], [], []>} : vector<16x128xbf16>, vector<128x32xbf16>, vector<16x32xf32> -> vector<16x32xf32>
    %c2_418 = arith.constant 2 : index
    %c0_419 = arith.constant 0 : index
    %c352_420 = arith.constant 352 : index
    %689 = vector.load %arg2[%c2_418, %c0_419, %c352_420] : memref<4x1x384xf32, #tpu.memory_space<vmem>>, vector<1x1x32xf32>
    %690 = vector.shape_cast %689 : vector<1x1x32xf32> to vector<1x32xf32>
    %691 = vector.broadcast %690 : vector<1x32xf32> to vector<16x32xf32>
    %692 = arith.addf %688, %691 : vector<16x32xf32>
    %693 = arith.truncf %692 : vector<16x32xf32> to vector<16x32xbf16>
    %cst_421 = arith.constant dense<0.000000e+00> : vector<16x16xf32>
    %694 = tpu.matmul %677, %685, %cst_421 {dimension_numbers = #tpu.dot_dimension_numbers<[1], [1], [0], [0], [0, 0, 1, 0], [], []>} : vector<16x32xbf16>, vector<16x32xbf16>, vector<16x16xf32> -> vector<16x16xf32>
    %695 = arith.addf %694, %37 : vector<16x16xf32>
    %cst_422 = arith.constant dense<0xFF800000> : vector<16xf32>
    %696 = vector.multi_reduction <maximumf>, %695, %cst_422 [1] : vector<16x16xf32> to vector<16xf32>
    %697 = vector.shape_cast %696 : vector<16xf32> to vector<16x1xf32>
    %698 = vector.broadcast %697 : vector<16x1xf32> to vector<16x16xf32>
    %699 = arith.subf %695, %698 : vector<16x16xf32>
    %700 = math.exp %699 : vector<16x16xf32>
    %cst_423 = arith.constant dense<0.000000e+00> : vector<16xf32>
    %701 = vector.multi_reduction <add>, %700, %cst_423 [1] : vector<16x16xf32> to vector<16xf32>
    %702 = vector.shape_cast %701 : vector<16xf32> to vector<16x1xf32>
    %703 = tpu.reciprocal %702 {approx = true} : vector<16x1xf32> -> vector<16x1xf32>
    %704 = vector.broadcast %703 : vector<16x1xf32> to vector<16x16xf32>
    %705 = arith.mulf %700, %704 : vector<16x16xf32>
    %706 = arith.truncf %705 : vector<16x16xf32> to vector<16x16xbf16>
    %cst_424 = arith.constant dense<0.000000e+00> : vector<16x32xf32>
    %707 = tpu.matmul %706, %693, %cst_424 {dimension_numbers = #tpu.dot_dimension_numbers<[1], [0], [0], [1], [0, 0, 1, 1], [], []>} : vector<16x16xbf16>, vector<16x32xbf16>, vector<16x32xf32> -> vector<16x32xf32>
    %708 = arith.truncf %707 : vector<16x32xf32> to vector<16x32xbf16>
    %c2_425 = arith.constant 2 : index
    %c96_426 = arith.constant 96 : index
    %c0_427 = arith.constant 0 : index
    %709 = vector.load %arg3[%c2_425, %c96_426, %c0_427] : memref<4x128x128xbf16, #tpu.memory_space<vmem>>, vector<1x32x128xbf16>
    %710 = vector.shape_cast %709 : vector<1x32x128xbf16> to vector<32x128xbf16>
    %cst_428 = arith.constant dense<0.000000e+00> : vector<16x128xf32>
    %711 = tpu.matmul %708, %710, %cst_428 {dimension_numbers = #tpu.dot_dimension_numbers<[1], [0], [0], [1], [0, 0, 1, 1], [], []>} : vector<16x32xbf16>, vector<32x128xbf16>, vector<16x128xf32> -> vector<16x128xf32>
    %712 = arith.addf %669, %711 : vector<16x128xf32>
    %c2_429 = arith.constant 2 : index
    %c0_430 = arith.constant 0 : index
    %c0_431 = arith.constant 0 : index
    %713 = vector.load %arg4[%c2_429, %c0_430, %c0_431] : memref<4x1x128xf32, #tpu.memory_space<vmem>>, vector<1x1x128xf32>
    %714 = vector.shape_cast %713 : vector<1x1x128xf32> to vector<1x128xf32>
    %715 = vector.broadcast %714 : vector<1x128xf32> to vector<16x128xf32>
    %716 = arith.addf %712, %715 : vector<16x128xf32>
    %717 = arith.addf %538, %716 : vector<16x128xf32>
    %c2_432 = arith.constant 2 : index
    %c0_433 = arith.constant 0 : index
    %c0_434 = arith.constant 0 : index
    %718 = vector.load %arg5[%c2_432, %c0_433, %c0_434] : memref<4x1x128xf32, #tpu.memory_space<vmem>>, vector<1x1x128xf32>
    %719 = vector.shape_cast %718 : vector<1x1x128xf32> to vector<1x128xf32>
    %c2_435 = arith.constant 2 : index
    %c0_436 = arith.constant 0 : index
    %c0_437 = arith.constant 0 : index
    %720 = vector.load %arg6[%c2_435, %c0_436, %c0_437] : memref<4x1x128xf32, #tpu.memory_space<vmem>>, vector<1x1x128xf32>
    %721 = vector.shape_cast %720 : vector<1x1x128xf32> to vector<1x128xf32>
    %cst_438 = arith.constant dense<0.000000e+00> : vector<16xf32>
    %722 = vector.multi_reduction <add>, %717, %cst_438 [1] : vector<16x128xf32> to vector<16xf32>
    %723 = vector.shape_cast %722 : vector<16xf32> to vector<16x1xf32>
    %cst_439 = arith.constant 1.280000e+02 : f32
    %724 = vector.broadcast %cst_439 : f32 to vector<16x1xf32>
    %725 = arith.divf %723, %724 : vector<16x1xf32>
    %726 = vector.broadcast %725 : vector<16x1xf32> to vector<16x128xf32>
    %727 = arith.subf %717, %726 : vector<16x128xf32>
    %728 = arith.mulf %727, %727 : vector<16x128xf32>
    %cst_440 = arith.constant dense<0.000000e+00> : vector<16xf32>
    %729 = vector.multi_reduction <add>, %728, %cst_440 [1] : vector<16x128xf32> to vector<16xf32>
    %730 = vector.shape_cast %729 : vector<16xf32> to vector<16x1xf32>
    %cst_441 = arith.constant 1.280000e+02 : f32
    %731 = vector.broadcast %cst_441 : f32 to vector<16x1xf32>
    %732 = arith.divf %730, %731 : vector<16x1xf32>
    %cst_442 = arith.constant 9.99999974E-6 : f32
    %733 = vector.broadcast %cst_442 : f32 to vector<16x1xf32>
    %734 = arith.addf %732, %733 : vector<16x1xf32>
    %735 = math.rsqrt %734 : vector<16x1xf32>
    %736 = vector.broadcast %725 : vector<16x1xf32> to vector<16x128xf32>
    %737 = arith.subf %717, %736 : vector<16x128xf32>
    %738 = vector.broadcast %735 : vector<16x1xf32> to vector<16x128xf32>
    %739 = arith.mulf %737, %738 : vector<16x128xf32>
    %740 = vector.broadcast %719 : vector<1x128xf32> to vector<16x128xf32>
    %741 = arith.mulf %739, %740 : vector<16x128xf32>
    %742 = vector.broadcast %721 : vector<1x128xf32> to vector<16x128xf32>
    %743 = arith.addf %741, %742 : vector<16x128xf32>
    %744 = arith.truncf %743 : vector<16x128xf32> to vector<16x128xbf16>
    %c2_443 = arith.constant 2 : index
    %c0_444 = arith.constant 0 : index
    %c0_445 = arith.constant 0 : index
    %745 = vector.load %arg7[%c2_443, %c0_444, %c0_445] : memref<4x128x256xbf16, #tpu.memory_space<vmem>>, vector<1x128x256xbf16>
    %746 = vector.shape_cast %745 : vector<1x128x256xbf16> to vector<128x256xbf16>
    %cst_446 = arith.constant dense<0.000000e+00> : vector<16x256xf32>
    %747 = tpu.matmul %744, %746, %cst_446 {dimension_numbers = #tpu.dot_dimension_numbers<[1], [0], [0], [1], [0, 0, 1, 1], [], []>} : vector<16x128xbf16>, vector<128x256xbf16>, vector<16x256xf32> -> vector<16x256xf32>
    %c2_447 = arith.constant 2 : index
    %c0_448 = arith.constant 0 : index
    %c0_449 = arith.constant 0 : index
    %748 = vector.load %arg8[%c2_447, %c0_448, %c0_449] : memref<4x1x256xf32, #tpu.memory_space<vmem>>, vector<1x1x256xf32>
    %749 = vector.shape_cast %748 : vector<1x1x256xf32> to vector<1x256xf32>
    %750 = vector.broadcast %749 : vector<1x256xf32> to vector<16x256xf32>
    %751 = arith.addf %747, %750 : vector<16x256xf32>
    %cst_450 = arith.constant 0.000000e+00 : f32
    %752 = vector.broadcast %cst_450 : f32 to vector<16x256xf32>
    %753 = arith.maximumf %751, %752 : vector<16x256xf32>
    %754 = arith.truncf %753 : vector<16x256xf32> to vector<16x256xbf16>
    %c2_451 = arith.constant 2 : index
    %c0_452 = arith.constant 0 : index
    %c0_453 = arith.constant 0 : index
    %755 = vector.load %arg9[%c2_451, %c0_452, %c0_453] : memref<4x256x128xbf16, #tpu.memory_space<vmem>>, vector<1x256x128xbf16>
    %756 = vector.shape_cast %755 : vector<1x256x128xbf16> to vector<256x128xbf16>
    %cst_454 = arith.constant dense<0.000000e+00> : vector<16x128xf32>
    %757 = tpu.matmul %754, %756, %cst_454 {dimension_numbers = #tpu.dot_dimension_numbers<[1], [0], [0], [1], [0, 0, 1, 1], [], []>} : vector<16x256xbf16>, vector<256x128xbf16>, vector<16x128xf32> -> vector<16x128xf32>
    %c2_455 = arith.constant 2 : index
    %c0_456 = arith.constant 0 : index
    %c0_457 = arith.constant 0 : index
    %758 = vector.load %arg10[%c2_455, %c0_456, %c0_457] : memref<4x1x128xf32, #tpu.memory_space<vmem>>, vector<1x1x128xf32>
    %759 = vector.shape_cast %758 : vector<1x1x128xf32> to vector<1x128xf32>
    %760 = vector.broadcast %759 : vector<1x128xf32> to vector<16x128xf32>
    %761 = arith.addf %757, %760 : vector<16x128xf32>
    %762 = arith.addf %743, %761 : vector<16x128xf32>
    %c2_458 = arith.constant 2 : index
    %c0_459 = arith.constant 0 : index
    %c0_460 = arith.constant 0 : index
    %763 = vector.load %arg11[%c2_458, %c0_459, %c0_460] : memref<4x1x128xf32, #tpu.memory_space<vmem>>, vector<1x1x128xf32>
    %764 = vector.shape_cast %763 : vector<1x1x128xf32> to vector<1x128xf32>
    %c2_461 = arith.constant 2 : index
    %c0_462 = arith.constant 0 : index
    %c0_463 = arith.constant 0 : index
    %765 = vector.load %arg12[%c2_461, %c0_462, %c0_463] : memref<4x1x128xf32, #tpu.memory_space<vmem>>, vector<1x1x128xf32>
    %766 = vector.shape_cast %765 : vector<1x1x128xf32> to vector<1x128xf32>
    %cst_464 = arith.constant dense<0.000000e+00> : vector<16xf32>
    %767 = vector.multi_reduction <add>, %762, %cst_464 [1] : vector<16x128xf32> to vector<16xf32>
    %768 = vector.shape_cast %767 : vector<16xf32> to vector<16x1xf32>
    %cst_465 = arith.constant 1.280000e+02 : f32
    %769 = vector.broadcast %cst_465 : f32 to vector<16x1xf32>
    %770 = arith.divf %768, %769 : vector<16x1xf32>
    %771 = vector.broadcast %770 : vector<16x1xf32> to vector<16x128xf32>
    %772 = arith.subf %762, %771 : vector<16x128xf32>
    %773 = arith.mulf %772, %772 : vector<16x128xf32>
    %cst_466 = arith.constant dense<0.000000e+00> : vector<16xf32>
    %774 = vector.multi_reduction <add>, %773, %cst_466 [1] : vector<16x128xf32> to vector<16xf32>
    %775 = vector.shape_cast %774 : vector<16xf32> to vector<16x1xf32>
    %cst_467 = arith.constant 1.280000e+02 : f32
    %776 = vector.broadcast %cst_467 : f32 to vector<16x1xf32>
    %777 = arith.divf %775, %776 : vector<16x1xf32>
    %cst_468 = arith.constant 9.99999974E-6 : f32
    %778 = vector.broadcast %cst_468 : f32 to vector<16x1xf32>
    %779 = arith.addf %777, %778 : vector<16x1xf32>
    %780 = math.rsqrt %779 : vector<16x1xf32>
    %781 = vector.broadcast %770 : vector<16x1xf32> to vector<16x128xf32>
    %782 = arith.subf %762, %781 : vector<16x128xf32>
    %783 = vector.broadcast %780 : vector<16x1xf32> to vector<16x128xf32>
    %784 = arith.mulf %782, %783 : vector<16x128xf32>
    %785 = vector.broadcast %764 : vector<1x128xf32> to vector<16x128xf32>
    %786 = arith.mulf %784, %785 : vector<16x128xf32>
    %787 = vector.broadcast %766 : vector<1x128xf32> to vector<16x128xf32>
    %788 = arith.addf %786, %787 : vector<16x128xf32>
    %789 = arith.truncf %788 : vector<16x128xf32> to vector<16x128xbf16>
    %cst_469 = arith.constant 0.000000e+00 : f32
    %790 = vector.broadcast %cst_469 : f32 to vector<16x128xf32>
    %c3 = arith.constant 3 : index
    %c0_470 = arith.constant 0 : index
    %c0_471 = arith.constant 0 : index
    %791 = vector.load %arg1[%c3, %c0_470, %c0_471] : memref<4x128x384xbf16, #tpu.memory_space<vmem>>, vector<1x128x32xbf16>
    %792 = vector.shape_cast %791 : vector<1x128x32xbf16> to vector<128x32xbf16>
    %cst_472 = arith.constant dense<0.000000e+00> : vector<16x32xf32>
    %793 = tpu.matmul %789, %792, %cst_472 {dimension_numbers = #tpu.dot_dimension_numbers<[1], [0], [0], [1], [0, 0, 1, 1], [], []>} : vector<16x128xbf16>, vector<128x32xbf16>, vector<16x32xf32> -> vector<16x32xf32>
    %c3_473 = arith.constant 3 : index
    %c0_474 = arith.constant 0 : index
    %c0_475 = arith.constant 0 : index
    %794 = vector.load %arg2[%c3_473, %c0_474, %c0_475] : memref<4x1x384xf32, #tpu.memory_space<vmem>>, vector<1x1x32xf32>
    %795 = vector.shape_cast %794 : vector<1x1x32xf32> to vector<1x32xf32>
    %796 = vector.broadcast %795 : vector<1x32xf32> to vector<16x32xf32>
    %797 = arith.addf %793, %796 : vector<16x32xf32>
    %798 = arith.truncf %797 : vector<16x32xf32> to vector<16x32xbf16>
    %c3_476 = arith.constant 3 : index
    %c0_477 = arith.constant 0 : index
    %c128_478 = arith.constant 128 : index
    %799 = vector.load %arg1[%c3_476, %c0_477, %c128_478] : memref<4x128x384xbf16, #tpu.memory_space<vmem>>, vector<1x128x32xbf16>
    %800 = vector.shape_cast %799 : vector<1x128x32xbf16> to vector<128x32xbf16>
    %cst_479 = arith.constant dense<0.000000e+00> : vector<16x32xf32>
    %801 = tpu.matmul %789, %800, %cst_479 {dimension_numbers = #tpu.dot_dimension_numbers<[1], [0], [0], [1], [0, 0, 1, 1], [], []>} : vector<16x128xbf16>, vector<128x32xbf16>, vector<16x32xf32> -> vector<16x32xf32>
    %c3_480 = arith.constant 3 : index
    %c0_481 = arith.constant 0 : index
    %c128_482 = arith.constant 128 : index
    %802 = vector.load %arg2[%c3_480, %c0_481, %c128_482] : memref<4x1x384xf32, #tpu.memory_space<vmem>>, vector<1x1x32xf32>
    %803 = vector.shape_cast %802 : vector<1x1x32xf32> to vector<1x32xf32>
    %804 = vector.broadcast %803 : vector<1x32xf32> to vector<16x32xf32>
    %805 = arith.addf %801, %804 : vector<16x32xf32>
    %806 = arith.truncf %805 : vector<16x32xf32> to vector<16x32xbf16>
    %c3_483 = arith.constant 3 : index
    %c0_484 = arith.constant 0 : index
    %c256_485 = arith.constant 256 : index
    %807 = vector.load %arg1[%c3_483, %c0_484, %c256_485] : memref<4x128x384xbf16, #tpu.memory_space<vmem>>, vector<1x128x32xbf16>
    %808 = vector.shape_cast %807 : vector<1x128x32xbf16> to vector<128x32xbf16>
    %cst_486 = arith.constant dense<0.000000e+00> : vector<16x32xf32>
    %809 = tpu.matmul %789, %808, %cst_486 {dimension_numbers = #tpu.dot_dimension_numbers<[1], [0], [0], [1], [0, 0, 1, 1], [], []>} : vector<16x128xbf16>, vector<128x32xbf16>, vector<16x32xf32> -> vector<16x32xf32>
    %c3_487 = arith.constant 3 : index
    %c0_488 = arith.constant 0 : index
    %c256_489 = arith.constant 256 : index
    %810 = vector.load %arg2[%c3_487, %c0_488, %c256_489] : memref<4x1x384xf32, #tpu.memory_space<vmem>>, vector<1x1x32xf32>
    %811 = vector.shape_cast %810 : vector<1x1x32xf32> to vector<1x32xf32>
    %812 = vector.broadcast %811 : vector<1x32xf32> to vector<16x32xf32>
    %813 = arith.addf %809, %812 : vector<16x32xf32>
    %814 = arith.truncf %813 : vector<16x32xf32> to vector<16x32xbf16>
    %cst_490 = arith.constant dense<0.000000e+00> : vector<16x16xf32>
    %815 = tpu.matmul %798, %806, %cst_490 {dimension_numbers = #tpu.dot_dimension_numbers<[1], [1], [0], [0], [0, 0, 1, 0], [], []>} : vector<16x32xbf16>, vector<16x32xbf16>, vector<16x16xf32> -> vector<16x16xf32>
    %816 = arith.addf %815, %37 : vector<16x16xf32>
    %cst_491 = arith.constant dense<0xFF800000> : vector<16xf32>
    %817 = vector.multi_reduction <maximumf>, %816, %cst_491 [1] : vector<16x16xf32> to vector<16xf32>
    %818 = vector.shape_cast %817 : vector<16xf32> to vector<16x1xf32>
    %819 = vector.broadcast %818 : vector<16x1xf32> to vector<16x16xf32>
    %820 = arith.subf %816, %819 : vector<16x16xf32>
    %821 = math.exp %820 : vector<16x16xf32>
    %cst_492 = arith.constant dense<0.000000e+00> : vector<16xf32>
    %822 = vector.multi_reduction <add>, %821, %cst_492 [1] : vector<16x16xf32> to vector<16xf32>
    %823 = vector.shape_cast %822 : vector<16xf32> to vector<16x1xf32>
    %824 = tpu.reciprocal %823 {approx = true} : vector<16x1xf32> -> vector<16x1xf32>
    %825 = vector.broadcast %824 : vector<16x1xf32> to vector<16x16xf32>
    %826 = arith.mulf %821, %825 : vector<16x16xf32>
    %827 = arith.truncf %826 : vector<16x16xf32> to vector<16x16xbf16>
    %cst_493 = arith.constant dense<0.000000e+00> : vector<16x32xf32>
    %828 = tpu.matmul %827, %814, %cst_493 {dimension_numbers = #tpu.dot_dimension_numbers<[1], [0], [0], [1], [0, 0, 1, 1], [], []>} : vector<16x16xbf16>, vector<16x32xbf16>, vector<16x32xf32> -> vector<16x32xf32>
    %829 = arith.truncf %828 : vector<16x32xf32> to vector<16x32xbf16>
    %c3_494 = arith.constant 3 : index
    %c0_495 = arith.constant 0 : index
    %c0_496 = arith.constant 0 : index
    %830 = vector.load %arg3[%c3_494, %c0_495, %c0_496] : memref<4x128x128xbf16, #tpu.memory_space<vmem>>, vector<1x32x128xbf16>
    %831 = vector.shape_cast %830 : vector<1x32x128xbf16> to vector<32x128xbf16>
    %cst_497 = arith.constant dense<0.000000e+00> : vector<16x128xf32>
    %832 = tpu.matmul %829, %831, %cst_497 {dimension_numbers = #tpu.dot_dimension_numbers<[1], [0], [0], [1], [0, 0, 1, 1], [], []>} : vector<16x32xbf16>, vector<32x128xbf16>, vector<16x128xf32> -> vector<16x128xf32>
    %833 = arith.addf %790, %832 : vector<16x128xf32>
    %c3_498 = arith.constant 3 : index
    %c0_499 = arith.constant 0 : index
    %c32_500 = arith.constant 32 : index
    %834 = vector.load %arg1[%c3_498, %c0_499, %c32_500] : memref<4x128x384xbf16, #tpu.memory_space<vmem>>, vector<1x128x32xbf16>
    %835 = vector.shape_cast %834 : vector<1x128x32xbf16> to vector<128x32xbf16>
    %cst_501 = arith.constant dense<0.000000e+00> : vector<16x32xf32>
    %836 = tpu.matmul %789, %835, %cst_501 {dimension_numbers = #tpu.dot_dimension_numbers<[1], [0], [0], [1], [0, 0, 1, 1], [], []>} : vector<16x128xbf16>, vector<128x32xbf16>, vector<16x32xf32> -> vector<16x32xf32>
    %c3_502 = arith.constant 3 : index
    %c0_503 = arith.constant 0 : index
    %c32_504 = arith.constant 32 : index
    %837 = vector.load %arg2[%c3_502, %c0_503, %c32_504] : memref<4x1x384xf32, #tpu.memory_space<vmem>>, vector<1x1x32xf32>
    %838 = vector.shape_cast %837 : vector<1x1x32xf32> to vector<1x32xf32>
    %839 = vector.broadcast %838 : vector<1x32xf32> to vector<16x32xf32>
    %840 = arith.addf %836, %839 : vector<16x32xf32>
    %841 = arith.truncf %840 : vector<16x32xf32> to vector<16x32xbf16>
    %c3_505 = arith.constant 3 : index
    %c0_506 = arith.constant 0 : index
    %c160_507 = arith.constant 160 : index
    %842 = vector.load %arg1[%c3_505, %c0_506, %c160_507] : memref<4x128x384xbf16, #tpu.memory_space<vmem>>, vector<1x128x32xbf16>
    %843 = vector.shape_cast %842 : vector<1x128x32xbf16> to vector<128x32xbf16>
    %cst_508 = arith.constant dense<0.000000e+00> : vector<16x32xf32>
    %844 = tpu.matmul %789, %843, %cst_508 {dimension_numbers = #tpu.dot_dimension_numbers<[1], [0], [0], [1], [0, 0, 1, 1], [], []>} : vector<16x128xbf16>, vector<128x32xbf16>, vector<16x32xf32> -> vector<16x32xf32>
    %c3_509 = arith.constant 3 : index
    %c0_510 = arith.constant 0 : index
    %c160_511 = arith.constant 160 : index
    %845 = vector.load %arg2[%c3_509, %c0_510, %c160_511] : memref<4x1x384xf32, #tpu.memory_space<vmem>>, vector<1x1x32xf32>
    %846 = vector.shape_cast %845 : vector<1x1x32xf32> to vector<1x32xf32>
    %847 = vector.broadcast %846 : vector<1x32xf32> to vector<16x32xf32>
    %848 = arith.addf %844, %847 : vector<16x32xf32>
    %849 = arith.truncf %848 : vector<16x32xf32> to vector<16x32xbf16>
    %c3_512 = arith.constant 3 : index
    %c0_513 = arith.constant 0 : index
    %c288_514 = arith.constant 288 : index
    %850 = vector.load %arg1[%c3_512, %c0_513, %c288_514] : memref<4x128x384xbf16, #tpu.memory_space<vmem>>, vector<1x128x32xbf16>
    %851 = vector.shape_cast %850 : vector<1x128x32xbf16> to vector<128x32xbf16>
    %cst_515 = arith.constant dense<0.000000e+00> : vector<16x32xf32>
    %852 = tpu.matmul %789, %851, %cst_515 {dimension_numbers = #tpu.dot_dimension_numbers<[1], [0], [0], [1], [0, 0, 1, 1], [], []>} : vector<16x128xbf16>, vector<128x32xbf16>, vector<16x32xf32> -> vector<16x32xf32>
    %c3_516 = arith.constant 3 : index
    %c0_517 = arith.constant 0 : index
    %c288_518 = arith.constant 288 : index
    %853 = vector.load %arg2[%c3_516, %c0_517, %c288_518] : memref<4x1x384xf32, #tpu.memory_space<vmem>>, vector<1x1x32xf32>
    %854 = vector.shape_cast %853 : vector<1x1x32xf32> to vector<1x32xf32>
    %855 = vector.broadcast %854 : vector<1x32xf32> to vector<16x32xf32>
    %856 = arith.addf %852, %855 : vector<16x32xf32>
    %857 = arith.truncf %856 : vector<16x32xf32> to vector<16x32xbf16>
    %cst_519 = arith.constant dense<0.000000e+00> : vector<16x16xf32>
    %858 = tpu.matmul %841, %849, %cst_519 {dimension_numbers = #tpu.dot_dimension_numbers<[1], [1], [0], [0], [0, 0, 1, 0], [], []>} : vector<16x32xbf16>, vector<16x32xbf16>, vector<16x16xf32> -> vector<16x16xf32>
    %859 = arith.addf %858, %37 : vector<16x16xf32>
    %cst_520 = arith.constant dense<0xFF800000> : vector<16xf32>
    %860 = vector.multi_reduction <maximumf>, %859, %cst_520 [1] : vector<16x16xf32> to vector<16xf32>
    %861 = vector.shape_cast %860 : vector<16xf32> to vector<16x1xf32>
    %862 = vector.broadcast %861 : vector<16x1xf32> to vector<16x16xf32>
    %863 = arith.subf %859, %862 : vector<16x16xf32>
    %864 = math.exp %863 : vector<16x16xf32>
    %cst_521 = arith.constant dense<0.000000e+00> : vector<16xf32>
    %865 = vector.multi_reduction <add>, %864, %cst_521 [1] : vector<16x16xf32> to vector<16xf32>
    %866 = vector.shape_cast %865 : vector<16xf32> to vector<16x1xf32>
    %867 = tpu.reciprocal %866 {approx = true} : vector<16x1xf32> -> vector<16x1xf32>
    %868 = vector.broadcast %867 : vector<16x1xf32> to vector<16x16xf32>
    %869 = arith.mulf %864, %868 : vector<16x16xf32>
    %870 = arith.truncf %869 : vector<16x16xf32> to vector<16x16xbf16>
    %cst_522 = arith.constant dense<0.000000e+00> : vector<16x32xf32>
    %871 = tpu.matmul %870, %857, %cst_522 {dimension_numbers = #tpu.dot_dimension_numbers<[1], [0], [0], [1], [0, 0, 1, 1], [], []>} : vector<16x16xbf16>, vector<16x32xbf16>, vector<16x32xf32> -> vector<16x32xf32>
    %872 = arith.truncf %871 : vector<16x32xf32> to vector<16x32xbf16>
    %c3_523 = arith.constant 3 : index
    %c32_524 = arith.constant 32 : index
    %c0_525 = arith.constant 0 : index
    %873 = vector.load %arg3[%c3_523, %c32_524, %c0_525] : memref<4x128x128xbf16, #tpu.memory_space<vmem>>, vector<1x32x128xbf16>
    %874 = vector.shape_cast %873 : vector<1x32x128xbf16> to vector<32x128xbf16>
    %cst_526 = arith.constant dense<0.000000e+00> : vector<16x128xf32>
    %875 = tpu.matmul %872, %874, %cst_526 {dimension_numbers = #tpu.dot_dimension_numbers<[1], [0], [0], [1], [0, 0, 1, 1], [], []>} : vector<16x32xbf16>, vector<32x128xbf16>, vector<16x128xf32> -> vector<16x128xf32>
    %876 = arith.addf %833, %875 : vector<16x128xf32>
    %c3_527 = arith.constant 3 : index
    %c0_528 = arith.constant 0 : index
    %c64_529 = arith.constant 64 : index
    %877 = vector.load %arg1[%c3_527, %c0_528, %c64_529] : memref<4x128x384xbf16, #tpu.memory_space<vmem>>, vector<1x128x32xbf16>
    %878 = vector.shape_cast %877 : vector<1x128x32xbf16> to vector<128x32xbf16>
    %cst_530 = arith.constant dense<0.000000e+00> : vector<16x32xf32>
    %879 = tpu.matmul %789, %878, %cst_530 {dimension_numbers = #tpu.dot_dimension_numbers<[1], [0], [0], [1], [0, 0, 1, 1], [], []>} : vector<16x128xbf16>, vector<128x32xbf16>, vector<16x32xf32> -> vector<16x32xf32>
    %c3_531 = arith.constant 3 : index
    %c0_532 = arith.constant 0 : index
    %c64_533 = arith.constant 64 : index
    %880 = vector.load %arg2[%c3_531, %c0_532, %c64_533] : memref<4x1x384xf32, #tpu.memory_space<vmem>>, vector<1x1x32xf32>
    %881 = vector.shape_cast %880 : vector<1x1x32xf32> to vector<1x32xf32>
    %882 = vector.broadcast %881 : vector<1x32xf32> to vector<16x32xf32>
    %883 = arith.addf %879, %882 : vector<16x32xf32>
    %884 = arith.truncf %883 : vector<16x32xf32> to vector<16x32xbf16>
    %c3_534 = arith.constant 3 : index
    %c0_535 = arith.constant 0 : index
    %c192_536 = arith.constant 192 : index
    %885 = vector.load %arg1[%c3_534, %c0_535, %c192_536] : memref<4x128x384xbf16, #tpu.memory_space<vmem>>, vector<1x128x32xbf16>
    %886 = vector.shape_cast %885 : vector<1x128x32xbf16> to vector<128x32xbf16>
    %cst_537 = arith.constant dense<0.000000e+00> : vector<16x32xf32>
    %887 = tpu.matmul %789, %886, %cst_537 {dimension_numbers = #tpu.dot_dimension_numbers<[1], [0], [0], [1], [0, 0, 1, 1], [], []>} : vector<16x128xbf16>, vector<128x32xbf16>, vector<16x32xf32> -> vector<16x32xf32>
    %c3_538 = arith.constant 3 : index
    %c0_539 = arith.constant 0 : index
    %c192_540 = arith.constant 192 : index
    %888 = vector.load %arg2[%c3_538, %c0_539, %c192_540] : memref<4x1x384xf32, #tpu.memory_space<vmem>>, vector<1x1x32xf32>
    %889 = vector.shape_cast %888 : vector<1x1x32xf32> to vector<1x32xf32>
    %890 = vector.broadcast %889 : vector<1x32xf32> to vector<16x32xf32>
    %891 = arith.addf %887, %890 : vector<16x32xf32>
    %892 = arith.truncf %891 : vector<16x32xf32> to vector<16x32xbf16>
    %c3_541 = arith.constant 3 : index
    %c0_542 = arith.constant 0 : index
    %c320_543 = arith.constant 320 : index
    %893 = vector.load %arg1[%c3_541, %c0_542, %c320_543] : memref<4x128x384xbf16, #tpu.memory_space<vmem>>, vector<1x128x32xbf16>
    %894 = vector.shape_cast %893 : vector<1x128x32xbf16> to vector<128x32xbf16>
    %cst_544 = arith.constant dense<0.000000e+00> : vector<16x32xf32>
    %895 = tpu.matmul %789, %894, %cst_544 {dimension_numbers = #tpu.dot_dimension_numbers<[1], [0], [0], [1], [0, 0, 1, 1], [], []>} : vector<16x128xbf16>, vector<128x32xbf16>, vector<16x32xf32> -> vector<16x32xf32>
    %c3_545 = arith.constant 3 : index
    %c0_546 = arith.constant 0 : index
    %c320_547 = arith.constant 320 : index
    %896 = vector.load %arg2[%c3_545, %c0_546, %c320_547] : memref<4x1x384xf32, #tpu.memory_space<vmem>>, vector<1x1x32xf32>
    %897 = vector.shape_cast %896 : vector<1x1x32xf32> to vector<1x32xf32>
    %898 = vector.broadcast %897 : vector<1x32xf32> to vector<16x32xf32>
    %899 = arith.addf %895, %898 : vector<16x32xf32>
    %900 = arith.truncf %899 : vector<16x32xf32> to vector<16x32xbf16>
    %cst_548 = arith.constant dense<0.000000e+00> : vector<16x16xf32>
    %901 = tpu.matmul %884, %892, %cst_548 {dimension_numbers = #tpu.dot_dimension_numbers<[1], [1], [0], [0], [0, 0, 1, 0], [], []>} : vector<16x32xbf16>, vector<16x32xbf16>, vector<16x16xf32> -> vector<16x16xf32>
    %902 = arith.addf %901, %37 : vector<16x16xf32>
    %cst_549 = arith.constant dense<0xFF800000> : vector<16xf32>
    %903 = vector.multi_reduction <maximumf>, %902, %cst_549 [1] : vector<16x16xf32> to vector<16xf32>
    %904 = vector.shape_cast %903 : vector<16xf32> to vector<16x1xf32>
    %905 = vector.broadcast %904 : vector<16x1xf32> to vector<16x16xf32>
    %906 = arith.subf %902, %905 : vector<16x16xf32>
    %907 = math.exp %906 : vector<16x16xf32>
    %cst_550 = arith.constant dense<0.000000e+00> : vector<16xf32>
    %908 = vector.multi_reduction <add>, %907, %cst_550 [1] : vector<16x16xf32> to vector<16xf32>
    %909 = vector.shape_cast %908 : vector<16xf32> to vector<16x1xf32>
    %910 = tpu.reciprocal %909 {approx = true} : vector<16x1xf32> -> vector<16x1xf32>
    %911 = vector.broadcast %910 : vector<16x1xf32> to vector<16x16xf32>
    %912 = arith.mulf %907, %911 : vector<16x16xf32>
    %913 = arith.truncf %912 : vector<16x16xf32> to vector<16x16xbf16>
    %cst_551 = arith.constant dense<0.000000e+00> : vector<16x32xf32>
    %914 = tpu.matmul %913, %900, %cst_551 {dimension_numbers = #tpu.dot_dimension_numbers<[1], [0], [0], [1], [0, 0, 1, 1], [], []>} : vector<16x16xbf16>, vector<16x32xbf16>, vector<16x32xf32> -> vector<16x32xf32>
    %915 = arith.truncf %914 : vector<16x32xf32> to vector<16x32xbf16>
    %c3_552 = arith.constant 3 : index
    %c64_553 = arith.constant 64 : index
    %c0_554 = arith.constant 0 : index
    %916 = vector.load %arg3[%c3_552, %c64_553, %c0_554] : memref<4x128x128xbf16, #tpu.memory_space<vmem>>, vector<1x32x128xbf16>
    %917 = vector.shape_cast %916 : vector<1x32x128xbf16> to vector<32x128xbf16>
    %cst_555 = arith.constant dense<0.000000e+00> : vector<16x128xf32>
    %918 = tpu.matmul %915, %917, %cst_555 {dimension_numbers = #tpu.dot_dimension_numbers<[1], [0], [0], [1], [0, 0, 1, 1], [], []>} : vector<16x32xbf16>, vector<32x128xbf16>, vector<16x128xf32> -> vector<16x128xf32>
    %919 = arith.addf %876, %918 : vector<16x128xf32>
    %c3_556 = arith.constant 3 : index
    %c0_557 = arith.constant 0 : index
    %c96_558 = arith.constant 96 : index
    %920 = vector.load %arg1[%c3_556, %c0_557, %c96_558] : memref<4x128x384xbf16, #tpu.memory_space<vmem>>, vector<1x128x32xbf16>
    %921 = vector.shape_cast %920 : vector<1x128x32xbf16> to vector<128x32xbf16>
    %cst_559 = arith.constant dense<0.000000e+00> : vector<16x32xf32>
    %922 = tpu.matmul %789, %921, %cst_559 {dimension_numbers = #tpu.dot_dimension_numbers<[1], [0], [0], [1], [0, 0, 1, 1], [], []>} : vector<16x128xbf16>, vector<128x32xbf16>, vector<16x32xf32> -> vector<16x32xf32>
    %c3_560 = arith.constant 3 : index
    %c0_561 = arith.constant 0 : index
    %c96_562 = arith.constant 96 : index
    %923 = vector.load %arg2[%c3_560, %c0_561, %c96_562] : memref<4x1x384xf32, #tpu.memory_space<vmem>>, vector<1x1x32xf32>
    %924 = vector.shape_cast %923 : vector<1x1x32xf32> to vector<1x32xf32>
    %925 = vector.broadcast %924 : vector<1x32xf32> to vector<16x32xf32>
    %926 = arith.addf %922, %925 : vector<16x32xf32>
    %927 = arith.truncf %926 : vector<16x32xf32> to vector<16x32xbf16>
    %c3_563 = arith.constant 3 : index
    %c0_564 = arith.constant 0 : index
    %c224_565 = arith.constant 224 : index
    %928 = vector.load %arg1[%c3_563, %c0_564, %c224_565] : memref<4x128x384xbf16, #tpu.memory_space<vmem>>, vector<1x128x32xbf16>
    %929 = vector.shape_cast %928 : vector<1x128x32xbf16> to vector<128x32xbf16>
    %cst_566 = arith.constant dense<0.000000e+00> : vector<16x32xf32>
    %930 = tpu.matmul %789, %929, %cst_566 {dimension_numbers = #tpu.dot_dimension_numbers<[1], [0], [0], [1], [0, 0, 1, 1], [], []>} : vector<16x128xbf16>, vector<128x32xbf16>, vector<16x32xf32> -> vector<16x32xf32>
    %c3_567 = arith.constant 3 : index
    %c0_568 = arith.constant 0 : index
    %c224_569 = arith.constant 224 : index
    %931 = vector.load %arg2[%c3_567, %c0_568, %c224_569] : memref<4x1x384xf32, #tpu.memory_space<vmem>>, vector<1x1x32xf32>
    %932 = vector.shape_cast %931 : vector<1x1x32xf32> to vector<1x32xf32>
    %933 = vector.broadcast %932 : vector<1x32xf32> to vector<16x32xf32>
    %934 = arith.addf %930, %933 : vector<16x32xf32>
    %935 = arith.truncf %934 : vector<16x32xf32> to vector<16x32xbf16>
    %c3_570 = arith.constant 3 : index
    %c0_571 = arith.constant 0 : index
    %c352_572 = arith.constant 352 : index
    %936 = vector.load %arg1[%c3_570, %c0_571, %c352_572] : memref<4x128x384xbf16, #tpu.memory_space<vmem>>, vector<1x128x32xbf16>
    %937 = vector.shape_cast %936 : vector<1x128x32xbf16> to vector<128x32xbf16>
    %cst_573 = arith.constant dense<0.000000e+00> : vector<16x32xf32>
    %938 = tpu.matmul %789, %937, %cst_573 {dimension_numbers = #tpu.dot_dimension_numbers<[1], [0], [0], [1], [0, 0, 1, 1], [], []>} : vector<16x128xbf16>, vector<128x32xbf16>, vector<16x32xf32> -> vector<16x32xf32>
    %c3_574 = arith.constant 3 : index
    %c0_575 = arith.constant 0 : index
    %c352_576 = arith.constant 352 : index
    %939 = vector.load %arg2[%c3_574, %c0_575, %c352_576] : memref<4x1x384xf32, #tpu.memory_space<vmem>>, vector<1x1x32xf32>
    %940 = vector.shape_cast %939 : vector<1x1x32xf32> to vector<1x32xf32>
    %941 = vector.broadcast %940 : vector<1x32xf32> to vector<16x32xf32>
    %942 = arith.addf %938, %941 : vector<16x32xf32>
    %943 = arith.truncf %942 : vector<16x32xf32> to vector<16x32xbf16>
    %cst_577 = arith.constant dense<0.000000e+00> : vector<16x16xf32>
    %944 = tpu.matmul %927, %935, %cst_577 {dimension_numbers = #tpu.dot_dimension_numbers<[1], [1], [0], [0], [0, 0, 1, 0], [], []>} : vector<16x32xbf16>, vector<16x32xbf16>, vector<16x16xf32> -> vector<16x16xf32>
    %945 = arith.addf %944, %37 : vector<16x16xf32>
    %cst_578 = arith.constant dense<0xFF800000> : vector<16xf32>
    %946 = vector.multi_reduction <maximumf>, %945, %cst_578 [1] : vector<16x16xf32> to vector<16xf32>
    %947 = vector.shape_cast %946 : vector<16xf32> to vector<16x1xf32>
    %948 = vector.broadcast %947 : vector<16x1xf32> to vector<16x16xf32>
    %949 = arith.subf %945, %948 : vector<16x16xf32>
    %950 = math.exp %949 : vector<16x16xf32>
    %cst_579 = arith.constant dense<0.000000e+00> : vector<16xf32>
    %951 = vector.multi_reduction <add>, %950, %cst_579 [1] : vector<16x16xf32> to vector<16xf32>
    %952 = vector.shape_cast %951 : vector<16xf32> to vector<16x1xf32>
    %953 = tpu.reciprocal %952 {approx = true} : vector<16x1xf32> -> vector<16x1xf32>
    %954 = vector.broadcast %953 : vector<16x1xf32> to vector<16x16xf32>
    %955 = arith.mulf %950, %954 : vector<16x16xf32>
    %956 = arith.truncf %955 : vector<16x16xf32> to vector<16x16xbf16>
    %cst_580 = arith.constant dense<0.000000e+00> : vector<16x32xf32>
    %957 = tpu.matmul %956, %943, %cst_580 {dimension_numbers = #tpu.dot_dimension_numbers<[1], [0], [0], [1], [0, 0, 1, 1], [], []>} : vector<16x16xbf16>, vector<16x32xbf16>, vector<16x32xf32> -> vector<16x32xf32>
    %958 = arith.truncf %957 : vector<16x32xf32> to vector<16x32xbf16>
    %c3_581 = arith.constant 3 : index
    %c96_582 = arith.constant 96 : index
    %c0_583 = arith.constant 0 : index
    %959 = vector.load %arg3[%c3_581, %c96_582, %c0_583] : memref<4x128x128xbf16, #tpu.memory_space<vmem>>, vector<1x32x128xbf16>
    %960 = vector.shape_cast %959 : vector<1x32x128xbf16> to vector<32x128xbf16>
    %cst_584 = arith.constant dense<0.000000e+00> : vector<16x128xf32>
    %961 = tpu.matmul %958, %960, %cst_584 {dimension_numbers = #tpu.dot_dimension_numbers<[1], [0], [0], [1], [0, 0, 1, 1], [], []>} : vector<16x32xbf16>, vector<32x128xbf16>, vector<16x128xf32> -> vector<16x128xf32>
    %962 = arith.addf %919, %961 : vector<16x128xf32>
    %c3_585 = arith.constant 3 : index
    %c0_586 = arith.constant 0 : index
    %c0_587 = arith.constant 0 : index
    %963 = vector.load %arg4[%c3_585, %c0_586, %c0_587] : memref<4x1x128xf32, #tpu.memory_space<vmem>>, vector<1x1x128xf32>
    %964 = vector.shape_cast %963 : vector<1x1x128xf32> to vector<1x128xf32>
    %965 = vector.broadcast %964 : vector<1x128xf32> to vector<16x128xf32>
    %966 = arith.addf %962, %965 : vector<16x128xf32>
    %967 = arith.addf %788, %966 : vector<16x128xf32>
    %c3_588 = arith.constant 3 : index
    %c0_589 = arith.constant 0 : index
    %c0_590 = arith.constant 0 : index
    %968 = vector.load %arg5[%c3_588, %c0_589, %c0_590] : memref<4x1x128xf32, #tpu.memory_space<vmem>>, vector<1x1x128xf32>
    %969 = vector.shape_cast %968 : vector<1x1x128xf32> to vector<1x128xf32>
    %c3_591 = arith.constant 3 : index
    %c0_592 = arith.constant 0 : index
    %c0_593 = arith.constant 0 : index
    %970 = vector.load %arg6[%c3_591, %c0_592, %c0_593] : memref<4x1x128xf32, #tpu.memory_space<vmem>>, vector<1x1x128xf32>
    %971 = vector.shape_cast %970 : vector<1x1x128xf32> to vector<1x128xf32>
    %cst_594 = arith.constant dense<0.000000e+00> : vector<16xf32>
    %972 = vector.multi_reduction <add>, %967, %cst_594 [1] : vector<16x128xf32> to vector<16xf32>
    %973 = vector.shape_cast %972 : vector<16xf32> to vector<16x1xf32>
    %cst_595 = arith.constant 1.280000e+02 : f32
    %974 = vector.broadcast %cst_595 : f32 to vector<16x1xf32>
    %975 = arith.divf %973, %974 : vector<16x1xf32>
    %976 = vector.broadcast %975 : vector<16x1xf32> to vector<16x128xf32>
    %977 = arith.subf %967, %976 : vector<16x128xf32>
    %978 = arith.mulf %977, %977 : vector<16x128xf32>
    %cst_596 = arith.constant dense<0.000000e+00> : vector<16xf32>
    %979 = vector.multi_reduction <add>, %978, %cst_596 [1] : vector<16x128xf32> to vector<16xf32>
    %980 = vector.shape_cast %979 : vector<16xf32> to vector<16x1xf32>
    %cst_597 = arith.constant 1.280000e+02 : f32
    %981 = vector.broadcast %cst_597 : f32 to vector<16x1xf32>
    %982 = arith.divf %980, %981 : vector<16x1xf32>
    %cst_598 = arith.constant 9.99999974E-6 : f32
    %983 = vector.broadcast %cst_598 : f32 to vector<16x1xf32>
    %984 = arith.addf %982, %983 : vector<16x1xf32>
    %985 = math.rsqrt %984 : vector<16x1xf32>
    %986 = vector.broadcast %975 : vector<16x1xf32> to vector<16x128xf32>
    %987 = arith.subf %967, %986 : vector<16x128xf32>
    %988 = vector.broadcast %985 : vector<16x1xf32> to vector<16x128xf32>
    %989 = arith.mulf %987, %988 : vector<16x128xf32>
    %990 = vector.broadcast %969 : vector<1x128xf32> to vector<16x128xf32>
    %991 = arith.mulf %989, %990 : vector<16x128xf32>
    %992 = vector.broadcast %971 : vector<1x128xf32> to vector<16x128xf32>
    %993 = arith.addf %991, %992 : vector<16x128xf32>
    %994 = arith.truncf %993 : vector<16x128xf32> to vector<16x128xbf16>
    %c3_599 = arith.constant 3 : index
    %c0_600 = arith.constant 0 : index
    %c0_601 = arith.constant 0 : index
    %995 = vector.load %arg7[%c3_599, %c0_600, %c0_601] : memref<4x128x256xbf16, #tpu.memory_space<vmem>>, vector<1x128x256xbf16>
    %996 = vector.shape_cast %995 : vector<1x128x256xbf16> to vector<128x256xbf16>
    %cst_602 = arith.constant dense<0.000000e+00> : vector<16x256xf32>
    %997 = tpu.matmul %994, %996, %cst_602 {dimension_numbers = #tpu.dot_dimension_numbers<[1], [0], [0], [1], [0, 0, 1, 1], [], []>} : vector<16x128xbf16>, vector<128x256xbf16>, vector<16x256xf32> -> vector<16x256xf32>
    %c3_603 = arith.constant 3 : index
    %c0_604 = arith.constant 0 : index
    %c0_605 = arith.constant 0 : index
    %998 = vector.load %arg8[%c3_603, %c0_604, %c0_605] : memref<4x1x256xf32, #tpu.memory_space<vmem>>, vector<1x1x256xf32>
    %999 = vector.shape_cast %998 : vector<1x1x256xf32> to vector<1x256xf32>
    %1000 = vector.broadcast %999 : vector<1x256xf32> to vector<16x256xf32>
    %1001 = arith.addf %997, %1000 : vector<16x256xf32>
    %cst_606 = arith.constant 0.000000e+00 : f32
    %1002 = vector.broadcast %cst_606 : f32 to vector<16x256xf32>
    %1003 = arith.maximumf %1001, %1002 : vector<16x256xf32>
    %1004 = arith.truncf %1003 : vector<16x256xf32> to vector<16x256xbf16>
    %c3_607 = arith.constant 3 : index
    %c0_608 = arith.constant 0 : index
    %c0_609 = arith.constant 0 : index
    %1005 = vector.load %arg9[%c3_607, %c0_608, %c0_609] : memref<4x256x128xbf16, #tpu.memory_space<vmem>>, vector<1x256x128xbf16>
    %1006 = vector.shape_cast %1005 : vector<1x256x128xbf16> to vector<256x128xbf16>
    %cst_610 = arith.constant dense<0.000000e+00> : vector<16x128xf32>
    %1007 = tpu.matmul %1004, %1006, %cst_610 {dimension_numbers = #tpu.dot_dimension_numbers<[1], [0], [0], [1], [0, 0, 1, 1], [], []>} : vector<16x256xbf16>, vector<256x128xbf16>, vector<16x128xf32> -> vector<16x128xf32>
    %c3_611 = arith.constant 3 : index
    %c0_612 = arith.constant 0 : index
    %c0_613 = arith.constant 0 : index
    %1008 = vector.load %arg10[%c3_611, %c0_612, %c0_613] : memref<4x1x128xf32, #tpu.memory_space<vmem>>, vector<1x1x128xf32>
    %1009 = vector.shape_cast %1008 : vector<1x1x128xf32> to vector<1x128xf32>
    %1010 = vector.broadcast %1009 : vector<1x128xf32> to vector<16x128xf32>
    %1011 = arith.addf %1007, %1010 : vector<16x128xf32>
    %1012 = arith.addf %993, %1011 : vector<16x128xf32>
    %c3_614 = arith.constant 3 : index
    %c0_615 = arith.constant 0 : index
    %c0_616 = arith.constant 0 : index
    %1013 = vector.load %arg11[%c3_614, %c0_615, %c0_616] : memref<4x1x128xf32, #tpu.memory_space<vmem>>, vector<1x1x128xf32>
    %1014 = vector.shape_cast %1013 : vector<1x1x128xf32> to vector<1x128xf32>
    %c3_617 = arith.constant 3 : index
    %c0_618 = arith.constant 0 : index
    %c0_619 = arith.constant 0 : index
    %1015 = vector.load %arg12[%c3_617, %c0_618, %c0_619] : memref<4x1x128xf32, #tpu.memory_space<vmem>>, vector<1x1x128xf32>
    %1016 = vector.shape_cast %1015 : vector<1x1x128xf32> to vector<1x128xf32>
    %cst_620 = arith.constant dense<0.000000e+00> : vector<16xf32>
    %1017 = vector.multi_reduction <add>, %1012, %cst_620 [1] : vector<16x128xf32> to vector<16xf32>
    %1018 = vector.shape_cast %1017 : vector<16xf32> to vector<16x1xf32>
    %cst_621 = arith.constant 1.280000e+02 : f32
    %1019 = vector.broadcast %cst_621 : f32 to vector<16x1xf32>
    %1020 = arith.divf %1018, %1019 : vector<16x1xf32>
    %1021 = vector.broadcast %1020 : vector<16x1xf32> to vector<16x128xf32>
    %1022 = arith.subf %1012, %1021 : vector<16x128xf32>
    %1023 = arith.mulf %1022, %1022 : vector<16x128xf32>
    %cst_622 = arith.constant dense<0.000000e+00> : vector<16xf32>
    %1024 = vector.multi_reduction <add>, %1023, %cst_622 [1] : vector<16x128xf32> to vector<16xf32>
    %1025 = vector.shape_cast %1024 : vector<16xf32> to vector<16x1xf32>
    %cst_623 = arith.constant 1.280000e+02 : f32
    %1026 = vector.broadcast %cst_623 : f32 to vector<16x1xf32>
    %1027 = arith.divf %1025, %1026 : vector<16x1xf32>
    %cst_624 = arith.constant 9.99999974E-6 : f32
    %1028 = vector.broadcast %cst_624 : f32 to vector<16x1xf32>
    %1029 = arith.addf %1027, %1028 : vector<16x1xf32>
    %1030 = math.rsqrt %1029 : vector<16x1xf32>
    %1031 = vector.broadcast %1020 : vector<16x1xf32> to vector<16x128xf32>
    %1032 = arith.subf %1012, %1031 : vector<16x128xf32>
    %1033 = vector.broadcast %1030 : vector<16x1xf32> to vector<16x128xf32>
    %1034 = arith.mulf %1032, %1033 : vector<16x128xf32>
    %1035 = vector.broadcast %1014 : vector<1x128xf32> to vector<16x128xf32>
    %1036 = arith.mulf %1034, %1035 : vector<16x128xf32>
    %1037 = vector.broadcast %1016 : vector<1x128xf32> to vector<16x128xf32>
    %1038 = arith.addf %1036, %1037 : vector<16x128xf32>
    %1039 = arith.truncf %1038 : vector<16x128xf32> to vector<16x128xbf16>
    %c0_625 = arith.constant 0 : index
    %c0_626 = arith.constant 0 : index
    %1040 = vector.load %arg13[%c0_625, %c0_626] : memref<128x128xbf16, #tpu.memory_space<vmem>>, vector<128x128xbf16>
    %cst_627 = arith.constant dense<0.000000e+00> : vector<16x128xf32>
    %1041 = tpu.matmul %1039, %1040, %cst_627 {dimension_numbers = #tpu.dot_dimension_numbers<[1], [0], [0], [1], [0, 0, 1, 1], [], []>} : vector<16x128xbf16>, vector<128x128xbf16>, vector<16x128xf32> -> vector<16x128xf32>
    %c0_628 = arith.constant 0 : index
    %c0_629 = arith.constant 0 : index
    %1042 = vector.load %arg14[%c0_628, %c0_629] : memref<1x128xf32, #tpu.memory_space<vmem>>, vector<1x128xf32>
    %1043 = vector.broadcast %1042 : vector<1x128xf32> to vector<16x128xf32>
    %1044 = arith.addf %1041, %1043 : vector<16x128xf32>
    %c0_630 = arith.constant 0 : index
    %c0_631 = arith.constant 0 : index
    %1045 = vector.load %arg15[%c0_630, %c0_631] : memref<16x128xf32, #tpu.memory_space<vmem>>, vector<16x128xf32>
    tpu.vector_store %arg15[%c0_630, %c0_631], %1044 {strides = array<i32>} : memref<16x128xf32, #tpu.memory_space<vmem>>, vector<16x128xf32>,
    return
  }
}

</mosaic_0001>

<llo_original>
// kernel: forward.1
$region0: #{forward.1}
  #allocation0 [shape = 'u32[]', space=smem, size = 0x4, offset = 0x4, fixed_abs, tag = 'smem constant byte address 0x4 - core index']
  #allocation1 [shape = 'u32[144,128]{1,0:T(1,128)}', space=vmem, size = 0x12000, scoped, tag = 'internal scratch']
  %s0 = inlined_call_operand.hbm [shape: f32[16,128], index: 0, kind: input, shape index: {}]
  %s1 = inlined_call_operand.hbm [shape: bf16[4,128,384], index: 1, kind: input, shape index: {}]
  %s2 = inlined_call_operand.hbm [shape: f32[4,1,384], index: 2, kind: input, shape index: {}]
  %s3 = inlined_call_operand.hbm [shape: bf16[4,128,128], index: 3, kind: input, shape index: {}]
  %s4 = inlined_call_operand.vmem [shape: f32[4,1,128], index: 4, kind: input, shape index: {}]
  %s5 = inlined_call_operand.vmem [shape: f32[4,1,128], index: 5, kind: input, shape index: {}]
  %s6 = inlined_call_operand.vmem [shape: f32[4,1,128], index: 6, kind: input, shape index: {}]
  %s7 = inlined_call_operand.hbm [shape: bf16[4,128,256], index: 7, kind: input, shape index: {}]
  %s8 = inlined_call_operand.vmem [shape: f32[4,1,256], index: 8, kind: input, shape index: {}]
  %s9 = inlined_call_operand.hbm [shape: bf16[4,256,128], index: 9, kind: input, shape index: {}]
  %s10 = inlined_call_operand.vmem [shape: f32[4,1,128], index: 10, kind: input, shape index: {}]
  %s11 = inlined_call_operand.vmem [shape: f32[4,1,128], index: 11, kind: input, shape index: {}]
  %s12 = inlined_call_operand.vmem [shape: f32[4,1,128], index: 12, kind: input, shape index: {}]
  %s13 = inlined_call_operand.hbm [shape: bf16[128,128], index: 13, kind: input, shape index: {}]
  %s14 = inlined_call_operand.vmem [shape: f32[1,128], index: 14, kind: input, shape index: {}]
  %s15 = inlined_call_operand.vmem [shape: f32[16,128], index: 15, kind: output, shape index: {}]
  %s16 = sld [smem:[#allocation0]]
  $region98: #{forward.1} parent=0
    _
  %s18 = ssub.s32 1, %s16
  %s19 = scalar_select 0, %s18, %s16
  $region1: #{forward.1} parent=0
    #allocation2 [shape = 'u8[8192]{0}', space=vmem, size = 0x2000, scoped, tag = 'input window, operand 0, single buffered']
    #allocation3 [shape = 's32[1]{0}', space=sflag, size = 0x4, scoped, tag = 'scoped memory for forward.1']
    #allocation4 [shape = 'u8[393216]{0}', space=vmem, size = 0x60000, scoped, tag = 'input window, operand 1, single buffered']
    #allocation5 [shape = 's32[1]{0}', space=sflag, size = 0x4, scoped, tag = 'scoped memory for forward.1']
    #allocation6 [shape = 'u8[6144]{0}', space=vmem, size = 0x1800, scoped, tag = 'input window, operand 2, single buffered']
    #allocation7 [shape = 'u8[131072]{0}', space=vmem, size = 0x20000, scoped, tag = 'input window, operand 3, single buffered']
    #allocation8 [shape = 's32[1]{0}', space=sflag, size = 0x4, scoped, tag = 'scoped memory for forward.1']
    #allocation9 [shape = 'u8[262144]{0}', space=vmem, size = 0x40000, scoped, tag = 'input window, operand 7, single buffered']
    #allocation10 [shape = 'u8[262144]{0}', space=vmem, size = 0x40000, scoped, tag = 'input window, operand 9, single buffered']
    #allocation11 [shape = 's32[1]{0}', space=sflag, size = 0x4, scoped, tag = 'scoped memory for forward.1']
    #allocation12 [shape = 'u8[32768]{0}', space=vmem, size = 0x8000, scoped, tag = 'input window, operand 13, single buffered']
    %20 = vsyncpa [#allocation3], 0
    %21 = vsyncpa [#allocation5], 0
    %22 = vsyncpa [#allocation8], 0
    %23 = vsyncpa [#allocation11], 0
    // Predicated region
    $region2: #{forward.1} parent=1 // pred_check
      _
    $region3: #{forward.1} parent=1 // pred_check_branch
      %25 = sbr.rel (0) target = $region5
    $region4: #{forward.1} parent=1 // pred_region
      %s27 = ssub.s32 256, 256
      %28 = vsyncadd [#allocation3], %s27
      %s29 = sshll.u32 [#allocation2], 4
      %s30 = int_to_ptr.vmem [resolvable:$true] %s29
      %35 = dma.hbm_to_vmem [thread:$0]  %s0, 256, %s30, [#allocation3], 128, 128, 8
    $region5: #{forward.1} parent=1 // pred_fallthru
      _
    // Predicated region
    $region6: #{forward.1} parent=1 // pred_check
      _
    $region7: #{forward.1} parent=1 // pred_check_branch
      %37 = sbr.rel (0) target = $region9
    $region8: #{forward.1} parent=1 // pred_region
      %s39 = ssub.s32 12288, 12288
      %40 = vsyncadd [#allocation5], %s39
      %s41 = sshll.u32 [#allocation4], 4
      %s42 = int_to_ptr.vmem [resolvable:$true] %s41
      %47 = dma.hbm_to_vmem [thread:$0]  %s1, 12288, %s42, [#allocation5], 192, 192, 12
    $region9: #{forward.1} parent=1 // pred_fallthru
      _
    // Predicated region
    $region10: #{forward.1} parent=1 // pred_check
      _
    $region11: #{forward.1} parent=1 // pred_check_branch
      %49 = sbr.rel (0) target = $region13
    $region12: #{forward.1} parent=1 // pred_region
      %s51 = ssub.s32 192, 192
      %52 = vsyncadd [#allocation5], %s51
      %s53 = sshll.u32 [#allocation6], 4
      %s54 = int_to_ptr.vmem [resolvable:$true] %s53
      %59 = dma.hbm_to_vmem [thread:$0]  %s2, 192, %s54, [#allocation5], 48, 48, 3
    $region13: #{forward.1} parent=1 // pred_fallthru
      _
    // Predicated region
    $region14: #{forward.1} parent=1 // pred_check
      _
    $region15: #{forward.1} parent=1 // pred_check_branch
      %61 = sbr.rel (0) target = $region17
    $region16: #{forward.1} parent=1 // pred_region
      %s63 = ssub.s32 4096, 4096
      %64 = vsyncadd [#allocation8], %s63
      %s65 = sshll.u32 [#allocation7], 4
      %s66 = int_to_ptr.vmem [resolvable:$true] %s65
      %71 = dma.hbm_to_vmem [thread:$0]  %s3, 4096, %s66, [#allocation8], 64, 64, 4
    $region17: #{forward.1} parent=1 // pred_fallthru
      _
    // Predicated region
    $region18: #{forward.1} parent=1 // pred_check
      _
    $region19: #{forward.1} parent=1 // pred_check_branch
      %73 = sbr.rel (0) target = $region21
    $region20: #{forward.1} parent=1 // pred_region
      _
    $region21: #{forward.1} parent=1 // pred_fallthru
      _
    // Predicated region
    $region22: #{forward.1} parent=1 // pred_check
      _
    $region23: #{forward.1} parent=1 // pred_check_branch
      %75 = sbr.rel (0) target = $region25
    $region24: #{forward.1} parent=1 // pred_region
      _
    $region25: #{forward.1} parent=1 // pred_fallthru
      _
    // Predicated region
    $region26: #{forward.1} parent=1 // pred_check
      _
    $region27: #{forward.1} parent=1 // pred_check_branch
      %77 = sbr.rel (0) target = $region29
    $region28: #{forward.1} parent=1 // pred_region
      _
    $region29: #{forward.1} parent=1 // pred_fallthru
      _
    // Predicated region
    $region30: #{forward.1} parent=1 // pred_check
      _
    $region31: #{forward.1} parent=1 // pred_check_branch
      %79 = sbr.rel (0) target = $region33
    $region32: #{forward.1} parent=1 // pred_region
      %s81 = ssub.s32 8192, 8192
      %82 = vsyncadd [#allocation8], %s81
      %s83 = sshll.u32 [#allocation9], 4
      %s84 = int_to_ptr.vmem [resolvable:$true] %s83
      %89 = dma.hbm_to_vmem [thread:$0]  %s7, 8192, %s84, [#allocation8], 128, 128, 8
    $region33: #{forward.1} parent=1 // pred_fallthru
      _
    // Predicated region
    $region34: #{forward.1} parent=1 // pred_check
      _
    $region35: #{forward.1} parent=1 // pred_check_branch
      %91 = sbr.rel (0) target = $region37
    $region36: #{forward.1} parent=1 // pred_region
      _
    $region37: #{forward.1} parent=1 // pred_fallthru
      _
    // Predicated region
    $region38: #{forward.1} parent=1 // pred_check
      _
    $region39: #{forward.1} parent=1 // pred_check_branch
      %93 = sbr.rel (0) target = $region41
    $region40: #{forward.1} parent=1 // pred_region
      %s95 = ssub.s32 8192, 8192
      %96 = vsyncadd [#allocation11], %s95
      %s97 = sshll.u32 [#allocation10], 4
      %s98 = int_to_ptr.vmem [resolvable:$true] %s97
      %103 = dma.hbm_to_vmem [thread:$0]  %s9, 8192, %s98, [#allocation11], 64, 64, 4
    $region41: #{forward.1} parent=1 // pred_fallthru
      _
    // Predicated region
    $region42: #{forward.1} parent=1 // pred_check
      _
    $region43: #{forward.1} parent=1 // pred_check_branch
      %105 = sbr.rel (0) target = $region45
    $region44: #{forward.1} parent=1 // pred_region
      _
    $region45: #{forward.1} parent=1 // pred_fallthru
      _
    // Predicated region
    $region46: #{forward.1} parent=1 // pred_check
      _
    $region47: #{forward.1} parent=1 // pred_check_branch
      %107 = sbr.rel (0) target = $region49
    $region48: #{forward.1} parent=1 // pred_region
      _
    $region49: #{forward.1} parent=1 // pred_fallthru
      _
    // Predicated region
    $region50: #{forward.1} parent=1 // pred_check
      _
    $region51: #{forward.1} parent=1 // pred_check_branch
      %109 = sbr.rel (0) target = $region53
    $region52: #{forward.1} parent=1 // pred_region
      _
    $region53: #{forward.1} parent=1 // pred_fallthru
      _
    // Predicated region
    $region54: #{forward.1} parent=1 // pred_check
      _
    $region55: #{forward.1} parent=1 // pred_check_branch
      %111 = sbr.rel (0) target = $region57
    $region56: #{forward.1} parent=1 // pred_region
      %s113 = ssub.s32 1024, 1024
      %114 = vsyncadd [#allocation11], %s113
      %s115 = sshll.u32 [#allocation12], 4
      %s116 = int_to_ptr.vmem [resolvable:$true] %s115
      %121 = dma.hbm_to_vmem [thread:$0]  %s13, 1024, %s116, [#allocation11], 64, 64, 4
    $region57: #{forward.1} parent=1 // pred_fallthru
      _
    // Predicated region
    $region58: #{forward.1} parent=1 // pred_check
      _
    $region59: #{forward.1} parent=1 // pred_check_branch
      %123 = sbr.rel (0) target = $region61
    $region60: #{forward.1} parent=1 // pred_region
      _
    $region61: #{forward.1} parent=1 // pred_fallthru
      _
    // Predicated region
    $region62: #{forward.1} parent=1 // pred_check
      _
    $region63: #{forward.1} parent=1 // pred_check_branch
      %125 = sbr.rel (0) target = $region65
    $region64: #{forward.1} parent=1 // pred_region
      %126 = dma.done [#allocation3], 256
    $region65: #{forward.1} parent=1 // pred_fallthru
      _
    // Predicated region
    $region66: #{forward.1} parent=1 // pred_check
      _
    $region67: #{forward.1} parent=1 // pred_check_branch
      %128 = sbr.rel (0) target = $region69
    $region68: #{forward.1} parent=1 // pred_region
      %129 = dma.done [#allocation5], 12288
    $region69: #{forward.1} parent=1 // pred_fallthru
      _
    // Predicated region
    $region70: #{forward.1} parent=1 // pred_check
      _
    $region71: #{forward.1} parent=1 // pred_check_branch
      %131 = sbr.rel (0) target = $region73
    $region72: #{forward.1} parent=1 // pred_region
      %132 = dma.done [#allocation5], 192
    $region73: #{forward.1} parent=1 // pred_fallthru
      _
    // Predicated region
    $region74: #{forward.1} parent=1 // pred_check
      _
    $region75: #{forward.1} parent=1 // pred_check_branch
      %134 = sbr.rel (0) target = $region77
    $region76: #{forward.1} parent=1 // pred_region
      %135 = dma.done [#allocation8], 4096
    $region77: #{forward.1} parent=1 // pred_fallthru
      _
    // Predicated region
    $region78: #{forward.1} parent=1 // pred_check
      _
    $region79: #{forward.1} parent=1 // pred_check_branch
      %137 = sbr.rel (0) target = $region81
    $region80: #{forward.1} parent=1 // pred_region
      %138 = dma.done [#allocation8], 8192
    $region81: #{forward.1} parent=1 // pred_fallthru
      _
    // Predicated region
    $region82: #{forward.1} parent=1 // pred_check
      _
    $region83: #{forward.1} parent=1 // pred_check_branch
      %140 = sbr.rel (0) target = $region85
    $region84: #{forward.1} parent=1 // pred_region
      %141 = dma.done [#allocation11], 8192
    $region85: #{forward.1} parent=1 // pred_fallthru
      _
    // Predicated region
    $region86: #{forward.1} parent=1 // pred_check
      _
    $region87: #{forward.1} parent=1 // pred_check_branch
      %143 = sbr.rel (0) target = $region89
    $region88: #{forward.1} parent=1 // pred_region
      %144 = dma.done [#allocation11], 1024
    $region89: #{forward.1} parent=1 // pred_fallthru
      _
    %v146 = vlaneseq
    %v147 = vshrl.u32 %v146, 7
    %v148 = vadd.s32 %v147, 8
    %v149 = vlaneseq
    %v150 = vand.u32 %v149, 127
    %vm151 = vcmp.lt.s32.totalorder %v147, 0
    %v152 = vsub.s32 0, %v147
    %v153 = vsel %vm151, %v152, %v147
    %v154 = vshrl.u32 %v153, 1
    %v155 = vand.u32 %v153, 1
    %v156 = vsub.s32 0, %v155
    %v157 = vsel %vm151, %v156, %v155
    %vm158 = vcmp.lt.s32.totalorder %v148, 0
    %v159 = vsub.s32 0, %v148
    %v160 = vsel %vm158, %v159, %v148
    %v161 = vshrl.u32 %v160, 1
    %v162 = vand.u32 %v160, 1
    %v163 = vsub.s32 0, %v162
    %v164 = vsel %vm158, %v163, %v162
    %vm165 = vcmp.ne.s32.totalorder %v157, 0
    %vm166 = vcmp.ne.s32.totalorder %v164, 0
    %vm167 = vcmp.lt.s32.totalorder %v157, 0
    %vm168 = vcmp.lt.s32.totalorder %v164, 0
    %vm169 = vmand %vm167, %vm165
    %vm170 = vmand %vm168, %vm166
    %v171 = vadd.s32 %v157, 2
    %v172 = vadd.s32 %v164, 2
    %v173 = vsel %vm169, %v171, %v157
    %v174 = vsel %vm170, %v172, %v164
    %vm175 = vcmp.lt.s32.totalorder %v150, 0
    %v176 = vsub.s32 0, %v150
    %v177 = vsel %vm175, %v176, %v150
    %v178 = vshrl.u32 %v177, 1
    %v179 = vand.u32 %v177, 1
    %v180 = vsub.s32 0, %v179
    %v181 = vsel %vm175, %v180, %v179
    %vm182 = vcmp.ne.s32.totalorder %v181, 0
    %vm183 = vcmp.lt.s32.totalorder %v181, 0
    %vm184 = vmand %vm183, %vm182
    %v185 = vadd.s32 %v181, 2
    %v186 = vsel %vm184, %v185, %v181
    %vm187 = vcmp.eq.s32.totalorder %v173, %v186
    %vm188 = vcmp.eq.s32.totalorder %v174, %v186
    %v189 = vsel %vm187, 0.0, -1e+30
    %v190 = vsel %vm188, 0.0, -1e+30
    %v191 = vld [vmem:[#allocation2] sm:$0xff]
    %v192 = vld [vmem:[#allocation2 + $0x8] sm:$0xff]
    %v193 = vpack.c.bf16 %v192, %v191
    %v194 = vld [vmem:[#allocation4] sm:$0xf]
    %v195 = vld [vmem:[#allocation4 + $0xc] sm:$0xf]
    %v196 = vld [vmem:[#allocation4 + $0x18] sm:$0xf]
    %v197 = vld [vmem:[#allocation4 + $0x24] sm:$0xf]
    %v198 = vld [vmem:[#allocation4 + $0x30] sm:$0xf]
    %v199 = vld [vmem:[#allocation4 + $0x3c] sm:$0xf]
    %v200 = vld [vmem:[#allocation4 + $0x48] sm:$0xf]
    %v201 = vld [vmem:[#allocation4 + $0x54] sm:$0xf]
    %v202 = vld [vmem:[#allocation4 + $0x60] sm:$0xf]
    %v203 = vld [vmem:[#allocation4 + $0x6c] sm:$0xf]
    %v204 = vld [vmem:[#allocation4 + $0x78] sm:$0xf]
    %v205 = vld [vmem:[#allocation4 + $0x84] sm:$0xf]
    %v206 = vld [vmem:[#allocation4 + $0x90] sm:$0xf]
    %v207 = vld [vmem:[#allocation4 + $0x9c] sm:$0xf]
    %v208 = vld [vmem:[#allocation4 + $0xa8] sm:$0xf]
    %v209 = vld [vmem:[#allocation4 + $0xb4] sm:$0xf]
    %v210 = vld [vmem:[#allocation6] sm:$0x1]
    %v212 = vlaneseq
    %v213 = vshrl.u32 %v212, 7
    %v214 = vsub.s32 0, %v213
    %v215 = vrot.slane %v210, %v214
    %v233 = vunpack.c.l.b16 %v194
    %v234 = vunpack.c.l.b16 %v195
    %v235 = vunpack.c.l.b16 %v196
    %v236 = vunpack.c.l.b16 %v197
    %v237 = vunpack.c.l.b16 %v198
    %v238 = vunpack.c.l.b16 %v199
    %v239 = vunpack.c.l.b16 %v200
    %v240 = vunpack.c.l.b16 %v201
    %v241 = vunpack.c.l.b16 %v202
    %v242 = vunpack.c.l.b16 %v203
    %v243 = vunpack.c.l.b16 %v204
    %v244 = vunpack.c.l.b16 %v205
    %v245 = vunpack.c.l.b16 %v206
    %v246 = vunpack.c.l.b16 %v207
    %v247 = vunpack.c.l.b16 %v208
    %v248 = vunpack.c.l.b16 %v209
    %v249 = vpack.c.b16 %v234, %v233
    %v250 = vpack.c.b16 %v236, %v235
    %v251 = vpack.c.b16 %v238, %v237
    %v252 = vpack.c.b16 %v240, %v239
    %v253 = vpack.c.b16 %v242, %v241
    %v254 = vpack.c.b16 %v244, %v243
    %v255 = vpack.c.b16 %v246, %v245
    %v256 = vpack.c.b16 %v248, %v247
    %265 = vmatprep.subr.bf16.mxu0 0
    %266 = vmatpush1.bf16.msra.mxu0 %v249
    %267 = vmatprep.subr.bf16.mxu0 0
    %268 = vmatpush1.bf16.msra.mxu0 %v250
    %269 = vmatprep.subr.bf16.mxu0 0
    %270 = vmatpush1.bf16.msra.mxu0 %v251
    %271 = vmatprep.subr.bf16.mxu0 0
    %272 = vmatpush1.bf16.msra.mxu0 %v252
    %273 = vmatprep.subr.bf16.mxu0 0
    %274 = vmatpush1.bf16.msra.mxu0 %v253
    %275 = vmatprep.subr.bf16.mxu0 0
    %276 = vmatpush1.bf16.msra.mxu0 %v254
    %277 = vmatprep.subr.bf16.mxu0 0
    %278 = vmatpush1.bf16.msra.mxu0 %v255
    %279 = vmatprep.subr.bf16.mxu0 0
    %280 = vmatpush1.bf16.msra.mxu0 %v256
    %281 = vmatprep.subr.bf16.mxu0 0
    %282 = vmatpush1.bf16.msra.mxu0 0
    %283 = vmatprep.subr.bf16.mxu0 0
    %284 = vmatpush1.bf16.msra.mxu0 0
    %285 = vmatprep.subr.bf16.mxu0 0
    %286 = vmatpush1.bf16.msra.mxu0 0
    %287 = vmatprep.subr.bf16.mxu0 0
    %288 = vmatpush1.bf16.msra.mxu0 0
    %289 = vmatprep.subr.bf16.mxu0 0
    %290 = vmatpush1.bf16.msra.mxu0 0
    %291 = vmatprep.subr.bf16.mxu0 0
    %292 = vmatpush1.bf16.msra.mxu0 0
    %293 = vmatprep.subr.bf16.mxu0 0
    %294 = vmatpush1.bf16.msra.mxu0 0
    %295 = vmatprep.subr.bf16.mxu0 0
    %296 = vmatpush1.bf16.msra.mxu0 0
    %297 = vmatprep.mubr.bf16.mxu0 0
    %298 = vmatmul.mubr.bf16.gmra.mrb[0].mxu0 %v193
    %v299 = vpop.f32.mrb[0].mxu0
    %v300 = vadd.f32 %v215, %v299
    %v301 = vpop.f32.mrb[0].mxu0
    %v302 = vpop.f32.mrb[0].mxu0
    %v303 = vadd.f32 %v215, %v302
    %v304 = vpop.f32.mrb[0].mxu0
    %305 = vdwg.mxu0
    %v306 = vpack.c.bf16 %v303, %v300
    %v307 = vld [vmem:[#allocation4 + $0x4] sm:$0xf]
    %v308 = vld [vmem:[#allocation4 + $0x10] sm:$0xf]
    %v309 = vld [vmem:[#allocation4 + $0x1c] sm:$0xf]
    %v310 = vld [vmem:[#allocation4 + $0x28] sm:$0xf]
    %v311 = vld [vmem:[#allocation4 + $0x34] sm:$0xf]
    %v312 = vld [vmem:[#allocation4 + $0x40] sm:$0xf]
    %v313 = vld [vmem:[#allocation4 + $0x4c] sm:$0xf]
    %v314 = vld [vmem:[#allocation4 + $0x58] sm:$0xf]
    %v315 = vld [vmem:[#allocation4 + $0x64] sm:$0xf]
    %v316 = vld [vmem:[#allocation4 + $0x70] sm:$0xf]
    %v317 = vld [vmem:[#allocation4 + $0x7c] sm:$0xf]
    %v318 = vld [vmem:[#allocation4 + $0x88] sm:$0xf]
    %v319 = vld [vmem:[#allocation4 + $0x94] sm:$0xf]
    %v320 = vld [vmem:[#allocation4 + $0xa0] sm:$0xf]
    %v321 = vld [vmem:[#allocation4 + $0xac] sm:$0xf]
    %v322 = vld [vmem:[#allocation4 + $0xb8] sm:$0xf]
    %v323 = vld [vmem:[#allocation6 + $0x1] sm:$0x1]
    %v325 = vlaneseq
    %v326 = vshrl.u32 %v325, 7
    %v327 = vsub.s32 0, %v326
    %v328 = vrot.slane %v323, %v327
    %v346 = vunpack.c.l.b16 %v307
    %v347 = vunpack.c.l.b16 %v308
    %v348 = vunpack.c.l.b16 %v309
    %v349 = vunpack.c.l.b16 %v310
    %v350 = vunpack.c.l.b16 %v311
    %v351 = vunpack.c.l.b16 %v312
    %v352 = vunpack.c.l.b16 %v313
    %v353 = vunpack.c.l.b16 %v314
    %v354 = vunpack.c.l.b16 %v315
    %v355 = vunpack.c.l.b16 %v316
    %v356 = vunpack.c.l.b16 %v317
    %v357 = vunpack.c.l.b16 %v318
    %v358 = vunpack.c.l.b16 %v319
    %v359 = vunpack.c.l.b16 %v320
    %v360 = vunpack.c.l.b16 %v321
    %v361 = vunpack.c.l.b16 %v322
    %v362 = vpack.c.b16 %v347, %v346
    %v363 = vpack.c.b16 %v349, %v348
    %v364 = vpack.c.b16 %v351, %v350
    %v365 = vpack.c.b16 %v353, %v352
    %v366 = vpack.c.b16 %v355, %v354
    %v367 = vpack.c.b16 %v357, %v356
    %v368 = vpack.c.b16 %v359, %v358
    %v369 = vpack.c.b16 %v361, %v360
    %378 = vmatprep.subr.bf16.mxu0 0
    %379 = vmatpush1.bf16.msra.mxu0 %v362
    %380 = vmatprep.subr.bf16.mxu0 0
    %381 = vmatpush1.bf16.msra.mxu0 %v363
    %382 = vmatprep.subr.bf16.mxu0 0
    %383 = vmatpush1.bf16.msra.mxu0 %v364
    %384 = vmatprep.subr.bf16.mxu0 0
    %385 = vmatpush1.bf16.msra.mxu0 %v365
    %386 = vmatprep.subr.bf16.mxu0 0
    %387 = vmatpush1.bf16.msra.mxu0 %v366
    %388 = vmatprep.subr.bf16.mxu0 0
    %389 = vmatpush1.bf16.msra.mxu0 %v367
    %390 = vmatprep.subr.bf16.mxu0 0
    %391 = vmatpush1.bf16.msra.mxu0 %v368
    %392 = vmatprep.subr.bf16.mxu0 0
    %393 = vmatpush1.bf16.msra.mxu0 %v369
    %394 = vmatprep.subr.bf16.mxu0 0
    %395 = vmatpush1.bf16.msra.mxu0 0
    %396 = vmatprep.subr.bf16.mxu0 0
    %397 = vmatpush1.bf16.msra.mxu0 0
    %398 = vmatprep.subr.bf16.mxu0 0
    %399 = vmatpush1.bf16.msra.mxu0 0
    %400 = vmatprep.subr.bf16.mxu0 0
    %401 = vmatpush1.bf16.msra.mxu0 0
    %402 = vmatprep.subr.bf16.mxu0 0
    %403 = vmatpush1.bf16.msra.mxu0 0
    %404 = vmatprep.subr.bf16.mxu0 0
    %405 = vmatpush1.bf16.msra.mxu0 0
    %406 = vmatprep.subr.bf16.mxu0 0
    %407 = vmatpush1.bf16.msra.mxu0 0
    %408 = vmatprep.subr.bf16.mxu0 0
    %409 = vmatpush1.bf16.msra.mxu0 0
    %410 = vmatprep.mubr.bf16.mxu0 0
    %411 = vmatmul.mubr.bf16.gmra.mrb[0].mxu0 %v193
    %v412 = vpop.f32.mrb[0].mxu0
    %v413 = vadd.f32 %v328, %v412
    %v414 = vpop.f32.mrb[0].mxu0
    %v415 = vpop.f32.mrb[0].mxu0
    %v416 = vadd.f32 %v328, %v415
    %v417 = vpop.f32.mrb[0].mxu0
    %418 = vdwg.mxu0
    %v419 = vpack.c.bf16 %v416, %v413
    %v420 = vld [vmem:[#allocation4 + $0x8] sm:$0xf]
    %v421 = vld [vmem:[#allocation4 + $0x14] sm:$0xf]
    %v422 = vld [vmem:[#allocation4 + $0x20] sm:$0xf]
    %v423 = vld [vmem:[#allocation4 + $0x2c] sm:$0xf]
    %v424 = vld [vmem:[#allocation4 + $0x38] sm:$0xf]
    %v425 = vld [vmem:[#allocation4 + $0x44] sm:$0xf]
    %v426 = vld [vmem:[#allocation4 + $0x50] sm:$0xf]
    %v427 = vld [vmem:[#allocation4 + $0x5c] sm:$0xf]
    %v428 = vld [vmem:[#allocation4 + $0x68] sm:$0xf]
    %v429 = vld [vmem:[#allocation4 + $0x74] sm:$0xf]
    %v430 = vld [vmem:[#allocation4 + $0x80] sm:$0xf]
    %v431 = vld [vmem:[#allocation4 + $0x8c] sm:$0xf]
    %v432 = vld [vmem:[#allocation4 + $0x98] sm:$0xf]
    %v433 = vld [vmem:[#allocation4 + $0xa4] sm:$0xf]
    %v434 = vld [vmem:[#allocation4 + $0xb0] sm:$0xf]
    %v435 = vld [vmem:[#allocation4 + $0xbc] sm:$0xf]
    %v436 = vld [vmem:[#allocation6 + $0x2] sm:$0x1]
    %v438 = vlaneseq
    %v439 = vshrl.u32 %v438, 7
    %v440 = vsub.s32 0, %v439
    %v441 = vrot.slane %v436, %v440
    %v459 = vunpack.c.l.b16 %v420
    %v460 = vunpack.c.l.b16 %v421
    %v461 = vunpack.c.l.b16 %v422
    %v462 = vunpack.c.l.b16 %v423
    %v463 = vunpack.c.l.b16 %v424
    %v464 = vunpack.c.l.b16 %v425
    %v465 = vunpack.c.l.b16 %v426
    %v466 = vunpack.c.l.b16 %v427
    %v467 = vunpack.c.l.b16 %v428
    %v468 = vunpack.c.l.b16 %v429
    %v469 = vunpack.c.l.b16 %v430
    %v470 = vunpack.c.l.b16 %v431
    %v471 = vunpack.c.l.b16 %v432
    %v472 = vunpack.c.l.b16 %v433
    %v473 = vunpack.c.l.b16 %v434
    %v474 = vunpack.c.l.b16 %v435
    %v475 = vpack.c.b16 %v460, %v459
    %v476 = vpack.c.b16 %v462, %v461
    %v477 = vpack.c.b16 %v464, %v463
    %v478 = vpack.c.b16 %v466, %v465
    %v479 = vpack.c.b16 %v468, %v467
    %v480 = vpack.c.b16 %v470, %v469
    %v481 = vpack.c.b16 %v472, %v471
    %v482 = vpack.c.b16 %v474, %v473
    %491 = vmatprep.subr.bf16.mxu0 0
    %492 = vmatpush1.bf16.msra.mxu0 %v475
    %493 = vmatprep.subr.bf16.mxu0 0
    %494 = vmatpush1.bf16.msra.mxu0 %v476
    %495 = vmatprep.subr.bf16.mxu0 0
    %496 = vmatpush1.bf16.msra.mxu0 %v477
    %497 = vmatprep.subr.bf16.mxu0 0
    %498 = vmatpush1.bf16.msra.mxu0 %v478
    %499 = vmatprep.subr.bf16.mxu0 0
    %500 = vmatpush1.bf16.msra.mxu0 %v479
    %501 = vmatprep.subr.bf16.mxu0 0
    %502 = vmatpush1.bf16.msra.mxu0 %v480
    %503 = vmatprep.subr.bf16.mxu0 0
    %504 = vmatpush1.bf16.msra.mxu0 %v481
    %505 = vmatprep.subr.bf16.mxu0 0
    %506 = vmatpush1.bf16.msra.mxu0 %v482
    %507 = vmatprep.subr.bf16.mxu0 0
    %508 = vmatpush1.bf16.msra.mxu0 0
    %509 = vmatprep.subr.bf16.mxu0 0
    %510 = vmatpush1.bf16.msra.mxu0 0
    %511 = vmatprep.subr.bf16.mxu0 0
    %512 = vmatpush1.bf16.msra.mxu0 0
    %513 = vmatprep.subr.bf16.mxu0 0
    %514 = vmatpush1.bf16.msra.mxu0 0
    %515 = vmatprep.subr.bf16.mxu0 0
    %516 = vmatpush1.bf16.msra.mxu0 0
    %517 = vmatprep.subr.bf16.mxu0 0
    %518 = vmatpush1.bf16.msra.mxu0 0
    %519 = vmatprep.subr.bf16.mxu0 0
    %520 = vmatpush1.bf16.msra.mxu0 0
    %521 = vmatprep.subr.bf16.mxu0 0
    %522 = vmatpush1.bf16.msra.mxu0 0
    %523 = vmatprep.mubr.bf16.mxu0 0
    %524 = vmatmul.mubr.bf16.gmra.mrb[0].mxu0 %v193
    %v525 = vpop.f32.mrb[0].mxu0
    %v526 = vadd.f32 %v441, %v525
    %v527 = vpop.f32.mrb[0].mxu0
    %v528 = vpop.f32.mrb[0].mxu0
    %v529 = vadd.f32 %v441, %v528
    %v530 = vpop.f32.mrb[0].mxu0
    %531 = vdwg.mxu0
    %v532 = vpack.c.bf16 %v529, %v526
    %vm533 = vcmask 261120
    %v535 = vsel %vm533, %v306, 0
    %v538 = vsel %vm533, %v419, 0
    %540 = vmatprep.subr.bf16.mxu0 0
    %541 = vmatpush1.bf16.xpose.msra.mxu0 %v538
    %542 = vmatprep.subr.bf16.mxu0 0
    %543 = vmatpush1.bf16.xpose.msra.mxu0 0
    %544 = vmatprep.subr.bf16.mxu0 0
    %545 = vmatpush1.bf16.xpose.msra.mxu0 0
    %546 = vmatprep.subr.bf16.mxu0 0
    %547 = vmatpush1.bf16.xpose.msra.mxu0 0
    %548 = vmatprep.subr.bf16.mxu0 0
    %549 = vmatpush1.bf16.xpose.msra.mxu0 0
    %550 = vmatprep.subr.bf16.mxu0 0
    %551 = vmatpush1.bf16.xpose.msra.mxu0 0
    %552 = vmatprep.subr.bf16.mxu0 0
    %553 = vmatpush1.bf16.xpose.msra.mxu0 0
    %554 = vmatprep.subr.bf16.mxu0 0
    %555 = vmatpush1.bf16.xpose.msra.mxu0 0
    %556 = vmatprep.subr.bf16.mxu0 0
    %557 = vmatpush1.bf16.xpose.msra.mxu0 0
    %558 = vmatprep.subr.bf16.mxu0 0
    %559 = vmatpush1.bf16.xpose.msra.mxu0 0
    %560 = vmatprep.subr.bf16.mxu0 0
    %561 = vmatpush1.bf16.xpose.msra.mxu0 0
    %562 = vmatprep.subr.bf16.mxu0 0
    %563 = vmatpush1.bf16.xpose.msra.mxu0 0
    %564 = vmatprep.subr.bf16.mxu0 0
    %565 = vmatpush1.bf16.xpose.msra.mxu0 0
    %566 = vmatprep.subr.bf16.mxu0 0
    %567 = vmatpush1.bf16.xpose.msra.mxu0 0
    %568 = vmatprep.subr.bf16.mxu0 0
    %569 = vmatpush1.bf16.xpose.msra.mxu0 0
    %570 = vmatprep.subr.bf16.mxu0 0
    %571 = vmatpush1.bf16.xpose.msra.mxu0 0
    %572 = vmatprep.mubr.bf16.mxu0 0
    %573 = vmatmul.mubr.bf16.gmra.mrb[0].mxu0 %v535
    %v574 = vpop.f32.mrb[0].mxu0
    %v575 = vadd.f32 %v189, %v574
    %v576 = vpop.f32.mrb[0].mxu0
    %v577 = vpop.f32.mrb[0].mxu0
    %v578 = vadd.f32 %v190, %v577
    %v579 = vpop.f32.mrb[0].mxu0
    %580 = vdwg.mxu0
    %vm581 = vcmask 130048
    %v582 = vsel %vm581, %v575, -inf
    %583 = vmax.xlane.f32.xlu0 %v582
    %v584 = vpop.xlane.xlu0 %583
    %v585 = vsel %vm581, %v578, -inf
    %586 = vmax.xlane.f32.xlu0 %v585
    %v587 = vpop.xlane.xlu0 %586
    %v588 = vsub.f32 %v575, %v584
    %v589 = vsub.f32 %v578, %v587
    %v590 = vmul.f32 %v588, 1.442695
    %v591 = vpow.pop %v590
    %v592 = vmul.f32 %v589, 1.442695
    %v593 = vpow.pop %v592
    %v594 = vsel %vm581, %v591, 0.0
    %595 = vadd.xlane.f32.xlu0 %v594
    %v596 = vpop.xlane.xlu0 %595
    %v597 = vsel %vm581, %v593, 0.0
    %598 = vadd.xlane.f32.xlu0 %v597
    %v599 = vpop.xlane.xlu0 %598
    %v600 = vrcp.pop %v596
    %v601 = vrcp.pop %v599
    %v602 = vmul.f32 %v591, %v600
    %v603 = vmul.f32 %v593, %v601
    %v604 = vpack.c.bf16 %v603, %v602
    %v606 = vsel %vm581, %v604, 0
    %608 = vmatprep.subr.bf16.mxu0 0
    %609 = vmatpush1.bf16.msra.mxu0 %v532
    %610 = vmatprep.subr.bf16.mxu0 0
    %611 = vmatpush1.bf16.msra.mxu0 0
    %612 = vmatprep.subr.bf16.mxu0 0
    %613 = vmatpush1.bf16.msra.mxu0 0
    %614 = vmatprep.subr.bf16.mxu0 0
    %615 = vmatpush1.bf16.msra.mxu0 0
    %616 = vmatprep.subr.bf16.mxu0 0
    %617 = vmatpush1.bf16.msra.mxu0 0
    %618 = vmatprep.subr.bf16.mxu0 0
    %619 = vmatpush1.bf16.msra.mxu0 0
    %620 = vmatprep.subr.bf16.mxu0 0
    %621 = vmatpush1.bf16.msra.mxu0 0
    %622 = vmatprep.subr.bf16.mxu0 0
    %623 = vmatpush1.bf16.msra.mxu0 0
    %624 = vmatprep.subr.bf16.mxu0 0
    %625 = vmatpush1.bf16.msra.mxu0 0
    %626 = vmatprep.subr.bf16.mxu0 0
    %627 = vmatpush1.bf16.msra.mxu0 0
    %628 = vmatprep.subr.bf16.mxu0 0
    %629 = vmatpush1.bf16.msra.mxu0 0
    %630 = vmatprep.subr.bf16.mxu0 0
    %631 = vmatpush1.bf16.msra.mxu0 0
    %632 = vmatprep.subr.bf16.mxu0 0
    %633 = vmatpush1.bf16.msra.mxu0 0
    %634 = vmatprep.subr.bf16.mxu0 0
    %635 = vmatpush1.bf16.msra.mxu0 0
    %636 = vmatprep.subr.bf16.mxu0 0
    %637 = vmatpush1.bf16.msra.mxu0 0
    %638 = vmatprep.subr.bf16.mxu0 0
    %639 = vmatpush1.bf16.msra.mxu0 0
    %640 = vmatprep.mubr.bf16.mxu0 0
    %641 = vmatmul.mubr.bf16.gmra.mrb[0].mxu0 %v606
    %v642 = vpop.f32.mrb[0].mxu0
    %v643 = vadd.f32 0.0, %v642
    %v644 = vpop.f32.mrb[0].mxu0
    %v645 = vpop.f32.mrb[0].mxu0
    %v646 = vadd.f32 0.0, %v645
    %v647 = vpop.f32.mrb[0].mxu0
    %648 = vdwg.mxu0
    %v649 = vpack.c.bf16 %v646, %v643
    %v650 = vld [vmem:[#allocation7] sm:$0xf]
    %v651 = vld [vmem:[#allocation7 + $0x4] sm:$0xf]
    %v652 = vld [vmem:[#allocation7 + $0x8] sm:$0xf]
    %v653 = vld [vmem:[#allocation7 + $0xc] sm:$0xf]
    %654 = vrot.lane.b32.xlu0 %v249, 96
    %v655 = vpop.permute.xlu0 %654
    %656 = vrot.lane.b32.xlu0 %v250, 96
    %v657 = vpop.permute.xlu0 %656
    %658 = vrot.lane.b32.xlu0 %v251, 96
    %v659 = vpop.permute.xlu0 %658
    %660 = vrot.lane.b32.xlu0 %v252, 96
    %v661 = vpop.permute.xlu0 %660
    %662 = vrot.lane.b32.xlu0 %v253, 96
    %v663 = vpop.permute.xlu0 %662
    %664 = vrot.lane.b32.xlu0 %v254, 96
    %v665 = vpop.permute.xlu0 %664
    %666 = vrot.lane.b32.xlu0 %v255, 96
    %v667 = vpop.permute.xlu0 %666
    %668 = vrot.lane.b32.xlu0 %v256, 96
    %v669 = vpop.permute.xlu0 %668
    %678 = vrot.lane.b32.xlu0 %v215, 96
    %v679 = vpop.permute.xlu0 %678
    %681 = vmatprep.subr.bf16.mxu0 0
    %682 = vmatpush1.bf16.msra.mxu0 %v655
    %683 = vmatprep.subr.bf16.mxu0 0
    %684 = vmatpush1.bf16.msra.mxu0 %v657
    %685 = vmatprep.subr.bf16.mxu0 0
    %686 = vmatpush1.bf16.msra.mxu0 %v659
    %687 = vmatprep.subr.bf16.mxu0 0
    %688 = vmatpush1.bf16.msra.mxu0 %v661
    %689 = vmatprep.subr.bf16.mxu0 0
    %690 = vmatpush1.bf16.msra.mxu0 %v663
    %691 = vmatprep.subr.bf16.mxu0 0
    %692 = vmatpush1.bf16.msra.mxu0 %v665
    %693 = vmatprep.subr.bf16.mxu0 0
    %694 = vmatpush1.bf16.msra.mxu0 %v667
    %695 = vmatprep.subr.bf16.mxu0 0
    %696 = vmatpush1.bf16.msra.mxu0 %v669
    %697 = vmatprep.subr.bf16.mxu0 0
    %698 = vmatpush1.bf16.msra.mxu0 0
    %699 = vmatprep.subr.bf16.mxu0 0
    %700 = vmatpush1.bf16.msra.mxu0 0
    %701 = vmatprep.subr.bf16.mxu0 0
    %702 = vmatpush1.bf16.msra.mxu0 0
    %703 = vmatprep.subr.bf16.mxu0 0
    %704 = vmatpush1.bf16.msra.mxu0 0
    %705 = vmatprep.subr.bf16.mxu0 0
    %706 = vmatpush1.bf16.msra.mxu0 0
    %707 = vmatprep.subr.bf16.mxu0 0
    %708 = vmatpush1.bf16.msra.mxu0 0
    %709 = vmatprep.subr.bf16.mxu0 0
    %710 = vmatpush1.bf16.msra.mxu0 0
    %711 = vmatprep.subr.bf16.mxu0 0
    %712 = vmatpush1.bf16.msra.mxu0 0
    %713 = vmatprep.mubr.bf16.mxu0 0
    %714 = vmatmul.mubr.bf16.gmra.mrb[0].mxu0 %v193
    %v715 = vpop.f32.mrb[0].mxu0
    %v716 = vadd.f32 %v679, %v715
    %v717 = vpop.f32.mrb[0].mxu0
    %v718 = vpop.f32.mrb[0].mxu0
    %v719 = vadd.f32 %v679, %v718
    %v720 = vpop.f32.mrb[0].mxu0
    %721 = vdwg.mxu0
    %v722 = vpack.c.bf16 %v719, %v716
    %723 = vrot.lane.b32.xlu0 %v362, 96
    %v724 = vpop.permute.xlu0 %723
    %725 = vrot.lane.b32.xlu0 %v363, 96
    %v726 = vpop.permute.xlu0 %725
    %727 = vrot.lane.b32.xlu0 %v364, 96
    %v728 = vpop.permute.xlu0 %727
    %729 = vrot.lane.b32.xlu0 %v365, 96
    %v730 = vpop.permute.xlu0 %729
    %731 = vrot.lane.b32.xlu0 %v366, 96
    %v732 = vpop.permute.xlu0 %731
    %733 = vrot.lane.b32.xlu0 %v367, 96
    %v734 = vpop.permute.xlu0 %733
    %735 = vrot.lane.b32.xlu0 %v368, 96
    %v736 = vpop.permute.xlu0 %735
    %737 = vrot.lane.b32.xlu0 %v369, 96
    %v738 = vpop.permute.xlu0 %737
    %747 = vrot.lane.b32.xlu0 %v328, 96
    %v748 = vpop.permute.xlu0 %747
    %750 = vmatprep.subr.bf16.mxu0 0
    %751 = vmatpush1.bf16.msra.mxu0 %v724
    %752 = vmatprep.subr.bf16.mxu0 0
    %753 = vmatpush1.bf16.msra.mxu0 %v726
    %754 = vmatprep.subr.bf16.mxu0 0
    %755 = vmatpush1.bf16.msra.mxu0 %v728
    %756 = vmatprep.subr.bf16.mxu0 0
    %757 = vmatpush1.bf16.msra.mxu0 %v730
    %758 = vmatprep.subr.bf16.mxu0 0
    %759 = vmatpush1.bf16.msra.mxu0 %v732
    %760 = vmatprep.subr.bf16.mxu0 0
    %761 = vmatpush1.bf16.msra.mxu0 %v734
    %762 = vmatprep.subr.bf16.mxu0 0
    %763 = vmatpush1.bf16.msra.mxu0 %v736
    %764 = vmatprep.subr.bf16.mxu0 0
    %765 = vmatpush1.bf16.msra.mxu0 %v738
    %766 = vmatprep.subr.bf16.mxu0 0
    %767 = vmatpush1.bf16.msra.mxu0 0
    %768 = vmatprep.subr.bf16.mxu0 0
    %769 = vmatpush1.bf16.msra.mxu0 0
    %770 = vmatprep.subr.bf16.mxu0 0
    %771 = vmatpush1.bf16.msra.mxu0 0
    %772 = vmatprep.subr.bf16.mxu0 0
    %773 = vmatpush1.bf16.msra.mxu0 0
    %774 = vmatprep.subr.bf16.mxu0 0
    %775 = vmatpush1.bf16.msra.mxu0 0
    %776 = vmatprep.subr.bf16.mxu0 0
    %777 = vmatpush1.bf16.msra.mxu0 0
    %778 = vmatprep.subr.bf16.mxu0 0
    %779 = vmatpush1.bf16.msra.mxu0 0
    %780 = vmatprep.subr.bf16.mxu0 0
    %781 = vmatpush1.bf16.msra.mxu0 0
    %782 = vmatprep.mubr.bf16.mxu0 0
    %783 = vmatmul.mubr.bf16.gmra.mrb[0].mxu0 %v193
    %v784 = vpop.f32.mrb[0].mxu0
    %v785 = vadd.f32 %v748, %v784
    %v786 = vpop.f32.mrb[0].mxu0
    %v787 = vpop.f32.mrb[0].mxu0
    %v788 = vadd.f32 %v748, %v787
    %v789 = vpop.f32.mrb[0].mxu0
    %790 = vdwg.mxu0
    %v791 = vpack.c.bf16 %v788, %v785
    %792 = vrot.lane.b32.xlu0 %v475, 96
    %v793 = vpop.permute.xlu0 %792
    %794 = vrot.lane.b32.xlu0 %v476, 96
    %v795 = vpop.permute.xlu0 %794
    %796 = vrot.lane.b32.xlu0 %v477, 96
    %v797 = vpop.permute.xlu0 %796
    %798 = vrot.lane.b32.xlu0 %v478, 96
    %v799 = vpop.permute.xlu0 %798
    %800 = vrot.lane.b32.xlu0 %v479, 96
    %v801 = vpop.permute.xlu0 %800
    %802 = vrot.lane.b32.xlu0 %v480, 96
    %v803 = vpop.permute.xlu0 %802
    %804 = vrot.lane.b32.xlu0 %v481, 96
    %v805 = vpop.permute.xlu0 %804
    %806 = vrot.lane.b32.xlu0 %v482, 96
    %v807 = vpop.permute.xlu0 %806
    %816 = vrot.lane.b32.xlu0 %v441, 96
    %v817 = vpop.permute.xlu0 %816
    %819 = vmatprep.subr.bf16.mxu0 0
    %820 = vmatpush1.bf16.msra.mxu0 %v793
    %821 = vmatprep.subr.bf16.mxu0 0
    %822 = vmatpush1.bf16.msra.mxu0 %v795
    %823 = vmatprep.subr.bf16.mxu0 0
    %824 = vmatpush1.bf16.msra.mxu0 %v797
    %825 = vmatprep.subr.bf16.mxu0 0
    %826 = vmatpush1.bf16.msra.mxu0 %v799
    %827 = vmatprep.subr.bf16.mxu0 0
    %828 = vmatpush1.bf16.msra.mxu0 %v801
    %829 = vmatprep.subr.bf16.mxu0 0
    %830 = vmatpush1.bf16.msra.mxu0 %v803
    %831 = vmatprep.subr.bf16.mxu0 0
    %832 = vmatpush1.bf16.msra.mxu0 %v805
    %833 = vmatprep.subr.bf16.mxu0 0
    %834 = vmatpush1.bf16.msra.mxu0 %v807
    %835 = vmatprep.subr.bf16.mxu0 0
    %836 = vmatpush1.bf16.msra.mxu0 0
    %837 = vmatprep.subr.bf16.mxu0 0
    %838 = vmatpush1.bf16.msra.mxu0 0
    %839 = vmatprep.subr.bf16.mxu0 0
    %840 = vmatpush1.bf16.msra.mxu0 0
    %841 = vmatprep.subr.bf16.mxu0 0
    %842 = vmatpush1.bf16.msra.mxu0 0
    %843 = vmatprep.subr.bf16.mxu0 0
    %844 = vmatpush1.bf16.msra.mxu0 0
    %845 = vmatprep.subr.bf16.mxu0 0
    %846 = vmatpush1.bf16.msra.mxu0 0
    %847 = vmatprep.subr.bf16.mxu0 0
    %848 = vmatpush1.bf16.msra.mxu0 0
    %849 = vmatprep.subr.bf16.mxu0 0
    %850 = vmatpush1.bf16.msra.mxu0 0
    %851 = vmatprep.mubr.bf16.mxu0 0
    %852 = vmatmul.mubr.bf16.gmra.mrb[0].mxu0 %v193
    %v853 = vpop.f32.mrb[0].mxu0
    %v854 = vadd.f32 %v817, %v853
    %v855 = vpop.f32.mrb[0].mxu0
    %v856 = vpop.f32.mrb[0].mxu0
    %v857 = vadd.f32 %v817, %v856
    %v858 = vpop.f32.mrb[0].mxu0
    %859 = vdwg.mxu0
    %v860 = vpack.c.bf16 %v857, %v854
    %v862 = vsel %vm533, %v722, 0
    %v865 = vsel %vm533, %v791, 0
    %867 = vmatprep.subr.bf16.mxu0 0
    %868 = vmatpush1.bf16.xpose.msra.mxu0 %v865
    %869 = vmatprep.subr.bf16.mxu0 0
    %870 = vmatpush1.bf16.xpose.msra.mxu0 0
    %871 = vmatprep.subr.bf16.mxu0 0
    %872 = vmatpush1.bf16.xpose.msra.mxu0 0
    %873 = vmatprep.subr.bf16.mxu0 0
    %874 = vmatpush1.bf16.xpose.msra.mxu0 0
    %875 = vmatprep.subr.bf16.mxu0 0
    %876 = vmatpush1.bf16.xpose.msra.mxu0 0
    %877 = vmatprep.subr.bf16.mxu0 0
    %878 = vmatpush1.bf16.xpose.msra.mxu0 0
    %879 = vmatprep.subr.bf16.mxu0 0
    %880 = vmatpush1.bf16.xpose.msra.mxu0 0
    %881 = vmatprep.subr.bf16.mxu0 0
    %882 = vmatpush1.bf16.xpose.msra.mxu0 0
    %883 = vmatprep.subr.bf16.mxu0 0
    %884 = vmatpush1.bf16.xpose.msra.mxu0 0
    %885 = vmatprep.subr.bf16.mxu0 0
    %886 = vmatpush1.bf16.xpose.msra.mxu0 0
    %887 = vmatprep.subr.bf16.mxu0 0
    %888 = vmatpush1.bf16.xpose.msra.mxu0 0
    %889 = vmatprep.subr.bf16.mxu0 0
    %890 = vmatpush1.bf16.xpose.msra.mxu0 0
    %891 = vmatprep.subr.bf16.mxu0 0
    %892 = vmatpush1.bf16.xpose.msra.mxu0 0
    %893 = vmatprep.subr.bf16.mxu0 0
    %894 = vmatpush1.bf16.xpose.msra.mxu0 0
    %895 = vmatprep.subr.bf16.mxu0 0
    %896 = vmatpush1.bf16.xpose.msra.mxu0 0
    %897 = vmatprep.subr.bf16.mxu0 0
    %898 = vmatpush1.bf16.xpose.msra.mxu0 0
    %899 = vmatprep.mubr.bf16.mxu0 0
    %900 = vmatmul.mubr.bf16.gmra.mrb[0].mxu0 %v862
    %v901 = vpop.f32.mrb[0].mxu0
    %v902 = vadd.f32 %v189, %v901
    %v903 = vpop.f32.mrb[0].mxu0
    %v904 = vpop.f32.mrb[0].mxu0
    %v905 = vadd.f32 %v190, %v904
    %v906 = vpop.f32.mrb[0].mxu0
    %907 = vdwg.mxu0
    %v908 = vsel %vm581, %v902, -inf
    %909 = vmax.xlane.f32.xlu0 %v908
    %v910 = vpop.xlane.xlu0 %909
    %v911 = vsel %vm581, %v905, -inf
    %912 = vmax.xlane.f32.xlu0 %v911
    %v913 = vpop.xlane.xlu0 %912
    %v914 = vsub.f32 %v902, %v910
    %v915 = vsub.f32 %v905, %v913
    %v916 = vmul.f32 %v914, 1.442695
    %v917 = vpow.pop %v916
    %v918 = vmul.f32 %v915, 1.442695
    %v919 = vpow.pop %v918
    %v920 = vsel %vm581, %v917, 0.0
    %921 = vadd.xlane.f32.xlu0 %v920
    %v922 = vpop.xlane.xlu0 %921
    %v923 = vsel %vm581, %v919, 0.0
    %924 = vadd.xlane.f32.xlu0 %v923
    %v925 = vpop.xlane.xlu0 %924
    %v926 = vrcp.pop %v922
    %v927 = vrcp.pop %v925
    %v928 = vmul.f32 %v917, %v926
    %v929 = vmul.f32 %v919, %v927
    %v930 = vpack.c.bf16 %v929, %v928
    %v932 = vsel %vm581, %v930, 0
    %934 = vmatprep.subr.bf16.mxu0 0
    %935 = vmatpush1.bf16.msra.mxu0 %v860
    %936 = vmatprep.subr.bf16.mxu0 0
    %937 = vmatpush1.bf16.msra.mxu0 0
    %938 = vmatprep.subr.bf16.mxu0 0
    %939 = vmatpush1.bf16.msra.mxu0 0
    %940 = vmatprep.subr.bf16.mxu0 0
    %941 = vmatpush1.bf16.msra.mxu0 0
    %942 = vmatprep.subr.bf16.mxu0 0
    %943 = vmatpush1.bf16.msra.mxu0 0
    %944 = vmatprep.subr.bf16.mxu0 0
    %945 = vmatpush1.bf16.msra.mxu0 0
    %946 = vmatprep.subr.bf16.mxu0 0
    %947 = vmatpush1.bf16.msra.mxu0 0
    %948 = vmatprep.subr.bf16.mxu0 0
    %949 = vmatpush1.bf16.msra.mxu0 0
    %950 = vmatprep.subr.bf16.mxu0 0
    %951 = vmatpush1.bf16.msra.mxu0 0
    %952 = vmatprep.subr.bf16.mxu0 0
    %953 = vmatpush1.bf16.msra.mxu0 0
    %954 = vmatprep.subr.bf16.mxu0 0
    %955 = vmatpush1.bf16.msra.mxu0 0
    %956 = vmatprep.subr.bf16.mxu0 0
    %957 = vmatpush1.bf16.msra.mxu0 0
    %958 = vmatprep.subr.bf16.mxu0 0
    %959 = vmatpush1.bf16.msra.mxu0 0
    %960 = vmatprep.subr.bf16.mxu0 0
    %961 = vmatpush1.bf16.msra.mxu0 0
    %962 = vmatprep.subr.bf16.mxu0 0
    %963 = vmatpush1.bf16.msra.mxu0 0
    %964 = vmatprep.subr.bf16.mxu0 0
    %965 = vmatpush1.bf16.msra.mxu0 0
    %966 = vmatprep.mubr.bf16.mxu0 0
    %967 = vmatmul.mubr.bf16.gmra.mrb[0].mxu0 %v932
    %v968 = vpop.f32.mrb[0].mxu0
    %v969 = vadd.f32 0.0, %v968
    %v970 = vpop.f32.mrb[0].mxu0
    %v971 = vpop.f32.mrb[0].mxu0
    %v972 = vadd.f32 0.0, %v971
    %v973 = vpop.f32.mrb[0].mxu0
    %974 = vdwg.mxu0
    %v975 = vpack.c.bf16 %v972, %v969
    %v976 = vld [vmem:[#allocation7 + $0x10] sm:$0xf]
    %v977 = vld [vmem:[#allocation7 + $0x14] sm:$0xf]
    %v978 = vld [vmem:[#allocation7 + $0x18] sm:$0xf]
    %v979 = vld [vmem:[#allocation7 + $0x1c] sm:$0xf]
    %v984 = vunpack.c.l.b16 %v976
    %v985 = vunpack.c.l.b16 %v977
    %v986 = vunpack.c.l.b16 %v978
    %v987 = vunpack.c.l.b16 %v979
    %v988 = vpack.c.b16 %v985, %v984
    %v989 = vpack.c.b16 %v987, %v986
    %v993 = vsel %vm533, %v975, 0
    %995 = vmatprep.subr.bf16.mxu0 0
    %996 = vmatpush1.bf16.msra.mxu0 %v988
    %997 = vmatprep.subr.bf16.mxu0 0
    %998 = vmatpush1.bf16.msra.mxu0 %v989
    %999 = vmatprep.subr.bf16.mxu0 0
    %1000 = vmatpush1.bf16.msra.mxu0 0
    %1001 = vmatprep.subr.bf16.mxu0 0
    %1002 = vmatpush1.bf16.msra.mxu0 0
    %1003 = vmatprep.subr.bf16.mxu0 0
    %1004 = vmatpush1.bf16.msra.mxu0 0
    %1005 = vmatprep.subr.bf16.mxu0 0
    %1006 = vmatpush1.bf16.msra.mxu0 0
    %1007 = vmatprep.subr.bf16.mxu0 0
    %1008 = vmatpush1.bf16.msra.mxu0 0
    %1009 = vmatprep.subr.bf16.mxu0 0
    %1010 = vmatpush1.bf16.msra.mxu0 0
    %1011 = vmatprep.subr.bf16.mxu0 0
    %1012 = vmatpush1.bf16.msra.mxu0 0
    %1013 = vmatprep.subr.bf16.mxu0 0
    %1014 = vmatpush1.bf16.msra.mxu0 0
    %1015 = vmatprep.subr.bf16.mxu0 0
    %1016 = vmatpush1.bf16.msra.mxu0 0
    %1017 = vmatprep.subr.bf16.mxu0 0
    %1018 = vmatpush1.bf16.msra.mxu0 0
    %1019 = vmatprep.subr.bf16.mxu0 0
    %1020 = vmatpush1.bf16.msra.mxu0 0
    %1021 = vmatprep.subr.bf16.mxu0 0
    %1022 = vmatpush1.bf16.msra.mxu0 0
    %1023 = vmatprep.subr.bf16.mxu0 0
    %1024 = vmatpush1.bf16.msra.mxu0 0
    %1025 = vmatprep.subr.bf16.mxu0 0
    %1026 = vmatpush1.bf16.msra.mxu0 0
    %1027 = vmatprep.mubr.bf16.mxu0 0
    %1028 = vmatmul.mubr.bf16.gmra.mrb[0].mxu0 %v993
    %v1029 = vpop.f32.mrb[0].mxu0
    %v1030 = vadd.f32 0.0, %v1029
    %v1031 = vpop.f32.mrb[0].mxu0
    %v1032 = vpop.f32.mrb[0].mxu0
    %v1033 = vadd.f32 0.0, %v1032
    %v1034 = vpop.f32.mrb[0].mxu0
    %1035 = vdwg.mxu0
    %v1040 = vunpack.c.l.b16 %v650
    %v1041 = vunpack.c.l.b16 %v651
    %v1042 = vunpack.c.l.b16 %v652
    %v1043 = vunpack.c.l.b16 %v653
    %v1044 = vpack.c.b16 %v1041, %v1040
    %v1045 = vpack.c.b16 %v1043, %v1042
    %v1049 = vsel %vm533, %v649, 0
    %1051 = vmatprep.subr.bf16.mxu0 0
    %1052 = vmatpush1.bf16.msra.mxu0 %v1044
    %1053 = vmatprep.subr.bf16.mxu0 0
    %1054 = vmatpush1.bf16.msra.mxu0 %v1045
    %1055 = vmatprep.subr.bf16.mxu0 0
    %1056 = vmatpush1.bf16.msra.mxu0 0
    %1057 = vmatprep.subr.bf16.mxu0 0
    %1058 = vmatpush1.bf16.msra.mxu0 0
    %1059 = vmatprep.subr.bf16.mxu0 0
    %1060 = vmatpush1.bf16.msra.mxu0 0
    %1061 = vmatprep.subr.bf16.mxu0 0
    %1062 = vmatpush1.bf16.msra.mxu0 0
    %1063 = vmatprep.subr.bf16.mxu0 0
    %1064 = vmatpush1.bf16.msra.mxu0 0
    %1065 = vmatprep.subr.bf16.mxu0 0
    %1066 = vmatpush1.bf16.msra.mxu0 0
    %1067 = vmatprep.subr.bf16.mxu0 0
    %1068 = vmatpush1.bf16.msra.mxu0 0
    %1069 = vmatprep.subr.bf16.mxu0 0
    %1070 = vmatpush1.bf16.msra.mxu0 0
    %1071 = vmatprep.subr.bf16.mxu0 0
    %1072 = vmatpush1.bf16.msra.mxu0 0
    %1073 = vmatprep.subr.bf16.mxu0 0
    %1074 = vmatpush1.bf16.msra.mxu0 0
    %1075 = vmatprep.subr.bf16.mxu0 0
    %1076 = vmatpush1.bf16.msra.mxu0 0
    %1077 = vmatprep.subr.bf16.mxu0 0
    %1078 = vmatpush1.bf16.msra.mxu0 0
    %1079 = vmatprep.subr.bf16.mxu0 0
    %1080 = vmatpush1.bf16.msra.mxu0 0
    %1081 = vmatprep.subr.bf16.mxu0 0
    %1082 = vmatpush1.bf16.msra.mxu0 0
    %1083 = vmatprep.mubr.bf16.mxu0 0
    %1084 = vmatmul.mubr.bf16.gmra.mrb[0].mxu0 %v1049
    %v1085 = vpop.f32.mrb[0].mxu0
    %v1086 = vadd.f32 %v1030, %v1085
    %v1087 = vpop.f32.mrb[0].mxu0
    %v1088 = vpop.f32.mrb[0].mxu0
    %v1089 = vadd.f32 %v1033, %v1088
    %v1090 = vpop.f32.mrb[0].mxu0
    %1091 = vdwg.mxu0
    %1092 = vrot.lane.b32.xlu0 %v249, 64
    %v1093 = vpop.permute.xlu0 %1092
    %1094 = vrot.lane.b32.xlu0 %v250, 64
    %v1095 = vpop.permute.xlu0 %1094
    %1096 = vrot.lane.b32.xlu0 %v251, 64
    %v1097 = vpop.permute.xlu0 %1096
    %1098 = vrot.lane.b32.xlu0 %v252, 64
    %v1099 = vpop.permute.xlu0 %1098
    %1100 = vrot.lane.b32.xlu0 %v253, 64
    %v1101 = vpop.permute.xlu0 %1100
    %1102 = vrot.lane.b32.xlu0 %v254, 64
    %v1103 = vpop.permute.xlu0 %1102
    %1104 = vrot.lane.b32.xlu0 %v255, 64
    %v1105 = vpop.permute.xlu0 %1104
    %1106 = vrot.lane.b32.xlu0 %v256, 64
    %v1107 = vpop.permute.xlu0 %1106
    %1116 = vrot.lane.b32.xlu0 %v215, 64
    %v1117 = vpop.permute.xlu0 %1116
    %1119 = vmatprep.subr.bf16.mxu0 0
    %1120 = vmatpush1.bf16.msra.mxu0 %v1093
    %1121 = vmatprep.subr.bf16.mxu0 0
    %1122 = vmatpush1.bf16.msra.mxu0 %v1095
    %1123 = vmatprep.subr.bf16.mxu0 0
    %1124 = vmatpush1.bf16.msra.mxu0 %v1097
    %1125 = vmatprep.subr.bf16.mxu0 0
    %1126 = vmatpush1.bf16.msra.mxu0 %v1099
    %1127 = vmatprep.subr.bf16.mxu0 0
    %1128 = vmatpush1.bf16.msra.mxu0 %v1101
    %1129 = vmatprep.subr.bf16.mxu0 0
    %1130 = vmatpush1.bf16.msra.mxu0 %v1103
    %1131 = vmatprep.subr.bf16.mxu0 0
    %1132 = vmatpush1.bf16.msra.mxu0 %v1105
    %1133 = vmatprep.subr.bf16.mxu0 0
    %1134 = vmatpush1.bf16.msra.mxu0 %v1107
    %1135 = vmatprep.subr.bf16.mxu0 0
    %1136 = vmatpush1.bf16.msra.mxu0 0
    %1137 = vmatprep.subr.bf16.mxu0 0
    %1138 = vmatpush1.bf16.msra.mxu0 0
    %1139 = vmatprep.subr.bf16.mxu0 0
    %1140 = vmatpush1.bf16.msra.mxu0 0
    %1141 = vmatprep.subr.bf16.mxu0 0
    %1142 = vmatpush1.bf16.msra.mxu0 0
    %1143 = vmatprep.subr.bf16.mxu0 0
    %1144 = vmatpush1.bf16.msra.mxu0 0
    %1145 = vmatprep.subr.bf16.mxu0 0
    %1146 = vmatpush1.bf16.msra.mxu0 0
    %1147 = vmatprep.subr.bf16.mxu0 0
    %1148 = vmatpush1.bf16.msra.mxu0 0
    %1149 = vmatprep.subr.bf16.mxu0 0
    %1150 = vmatpush1.bf16.msra.mxu0 0
    %1151 = vmatprep.mubr.bf16.mxu0 0
    %1152 = vmatmul.mubr.bf16.gmra.mrb[0].mxu0 %v193
    %v1153 = vpop.f32.mrb[0].mxu0
    %v1154 = vadd.f32 %v1117, %v1153
    %v1155 = vpop.f32.mrb[0].mxu0
    %v1156 = vpop.f32.mrb[0].mxu0
    %v1157 = vadd.f32 %v1117, %v1156
    %v1158 = vpop.f32.mrb[0].mxu0
    %1159 = vdwg.mxu0
    %v1160 = vpack.c.bf16 %v1157, %v1154
    %1161 = vrot.lane.b32.xlu0 %v362, 64
    %v1162 = vpop.permute.xlu0 %1161
    %1163 = vrot.lane.b32.xlu0 %v363, 64
    %v1164 = vpop.permute.xlu0 %1163
    %1165 = vrot.lane.b32.xlu0 %v364, 64
    %v1166 = vpop.permute.xlu0 %1165
    %1167 = vrot.lane.b32.xlu0 %v365, 64
    %v1168 = vpop.permute.xlu0 %1167
    %1169 = vrot.lane.b32.xlu0 %v366, 64
    %v1170 = vpop.permute.xlu0 %1169
    %1171 = vrot.lane.b32.xlu0 %v367, 64
    %v1172 = vpop.permute.xlu0 %1171
    %1173 = vrot.lane.b32.xlu0 %v368, 64
    %v1174 = vpop.permute.xlu0 %1173
    %1175 = vrot.lane.b32.xlu0 %v369, 64
    %v1176 = vpop.permute.xlu0 %1175
    %1185 = vrot.lane.b32.xlu0 %v328, 64
    %v1186 = vpop.permute.xlu0 %1185
    %1188 = vmatprep.subr.bf16.mxu0 0
    %1189 = vmatpush1.bf16.msra.mxu0 %v1162
    %1190 = vmatprep.subr.bf16.mxu0 0
    %1191 = vmatpush1.bf16.msra.mxu0 %v1164
    %1192 = vmatprep.subr.bf16.mxu0 0
    %1193 = vmatpush1.bf16.msra.mxu0 %v1166
    %1194 = vmatprep.subr.bf16.mxu0 0
    %1195 = vmatpush1.bf16.msra.mxu0 %v1168
    %1196 = vmatprep.subr.bf16.mxu0 0
    %1197 = vmatpush1.bf16.msra.mxu0 %v1170
    %1198 = vmatprep.subr.bf16.mxu0 0
    %1199 = vmatpush1.bf16.msra.mxu0 %v1172
    %1200 = vmatprep.subr.bf16.mxu0 0
    %1201 = vmatpush1.bf16.msra.mxu0 %v1174
    %1202 = vmatprep.subr.bf16.mxu0 0
    %1203 = vmatpush1.bf16.msra.mxu0 %v1176
    %1204 = vmatprep.subr.bf16.mxu0 0
    %1205 = vmatpush1.bf16.msra.mxu0 0
    %1206 = vmatprep.subr.bf16.mxu0 0
    %1207 = vmatpush1.bf16.msra.mxu0 0
    %1208 = vmatprep.subr.bf16.mxu0 0
    %1209 = vmatpush1.bf16.msra.mxu0 0
    %1210 = vmatprep.subr.bf16.mxu0 0
    %1211 = vmatpush1.bf16.msra.mxu0 0
    %1212 = vmatprep.subr.bf16.mxu0 0
    %1213 = vmatpush1.bf16.msra.mxu0 0
    %1214 = vmatprep.subr.bf16.mxu0 0
    %1215 = vmatpush1.bf16.msra.mxu0 0
    %1216 = vmatprep.subr.bf16.mxu0 0
    %1217 = vmatpush1.bf16.msra.mxu0 0
    %1218 = vmatprep.subr.bf16.mxu0 0
    %1219 = vmatpush1.bf16.msra.mxu0 0
    %1220 = vmatprep.mubr.bf16.mxu0 0
    %1221 = vmatmul.mubr.bf16.gmra.mrb[0].mxu0 %v193
    %v1222 = vpop.f32.mrb[0].mxu0
    %v1223 = vadd.f32 %v1186, %v1222
    %v1224 = vpop.f32.mrb[0].mxu0
    %v1225 = vpop.f32.mrb[0].mxu0
    %v1226 = vadd.f32 %v1186, %v1225
    %v1227 = vpop.f32.mrb[0].mxu0
    %1228 = vdwg.mxu0
    %v1229 = vpack.c.bf16 %v1226, %v1223
    %1230 = vrot.lane.b32.xlu0 %v475, 64
    %v1231 = vpop.permute.xlu0 %1230
    %1232 = vrot.lane.b32.xlu0 %v476, 64
    %v1233 = vpop.permute.xlu0 %1232
    %1234 = vrot.lane.b32.xlu0 %v477, 64
    %v1235 = vpop.permute.xlu0 %1234
    %1236 = vrot.lane.b32.xlu0 %v478, 64
    %v1237 = vpop.permute.xlu0 %1236
    %1238 = vrot.lane.b32.xlu0 %v479, 64
    %v1239 = vpop.permute.xlu0 %1238
    %1240 = vrot.lane.b32.xlu0 %v480, 64
    %v1241 = vpop.permute.xlu0 %1240
    %1242 = vrot.lane.b32.xlu0 %v481, 64
    %v1243 = vpop.permute.xlu0 %1242
    %1244 = vrot.lane.b32.xlu0 %v482, 64
    %v1245 = vpop.permute.xlu0 %1244
    %1254 = vrot.lane.b32.xlu0 %v441, 64
    %v1255 = vpop.permute.xlu0 %1254
    %1257 = vmatprep.subr.bf16.mxu0 0
    %1258 = vmatpush1.bf16.msra.mxu0 %v1231
    %1259 = vmatprep.subr.bf16.mxu0 0
    %1260 = vmatpush1.bf16.msra.mxu0 %v1233
    %1261 = vmatprep.subr.bf16.mxu0 0
    %1262 = vmatpush1.bf16.msra.mxu0 %v1235
    %1263 = vmatprep.subr.bf16.mxu0 0
    %1264 = vmatpush1.bf16.msra.mxu0 %v1237
    %1265 = vmatprep.subr.bf16.mxu0 0
    %1266 = vmatpush1.bf16.msra.mxu0 %v1239
    %1267 = vmatprep.subr.bf16.mxu0 0
    %1268 = vmatpush1.bf16.msra.mxu0 %v1241
    %1269 = vmatprep.subr.bf16.mxu0 0
    %1270 = vmatpush1.bf16.msra.mxu0 %v1243
    %1271 = vmatprep.subr.bf16.mxu0 0
    %1272 = vmatpush1.bf16.msra.mxu0 %v1245
    %1273 = vmatprep.subr.bf16.mxu0 0
    %1274 = vmatpush1.bf16.msra.mxu0 0
    %1275 = vmatprep.subr.bf16.mxu0 0
    %1276 = vmatpush1.bf16.msra.mxu0 0
    %1277 = vmatprep.subr.bf16.mxu0 0
    %1278 = vmatpush1.bf16.msra.mxu0 0
    %1279 = vmatprep.subr.bf16.mxu0 0
    %1280 = vmatpush1.bf16.msra.mxu0 0
    %1281 = vmatprep.subr.bf16.mxu0 0
    %1282 = vmatpush1.bf16.msra.mxu0 0
    %1283 = vmatprep.subr.bf16.mxu0 0
    %1284 = vmatpush1.bf16.msra.mxu0 0
    %1285 = vmatprep.subr.bf16.mxu0 0
    %1286 = vmatpush1.bf16.msra.mxu0 0
    %1287 = vmatprep.subr.bf16.mxu0 0
    %1288 = vmatpush1.bf16.msra.mxu0 0
    %1289 = vmatprep.mubr.bf16.mxu0 0
    %1290 = vmatmul.mubr.bf16.gmra.mrb[0].mxu0 %v193
    %v1291 = vpop.f32.mrb[0].mxu0
    %v1292 = vadd.f32 %v1255, %v1291
    %v1293 = vpop.f32.mrb[0].mxu0
    %v1294 = vpop.f32.mrb[0].mxu0
    %v1295 = vadd.f32 %v1255, %v1294
    %v1296 = vpop.f32.mrb[0].mxu0
    %1297 = vdwg.mxu0
    %v1298 = vpack.c.bf16 %v1295, %v1292
    %v1300 = vsel %vm533, %v1160, 0
    %v1303 = vsel %vm533, %v1229, 0
    %1305 = vmatprep.subr.bf16.mxu0 0
    %1306 = vmatpush1.bf16.xpose.msra.mxu0 %v1303
    %1307 = vmatprep.subr.bf16.mxu0 0
    %1308 = vmatpush1.bf16.xpose.msra.mxu0 0
    %1309 = vmatprep.subr.bf16.mxu0 0
    %1310 = vmatpush1.bf16.xpose.msra.mxu0 0
    %1311 = vmatprep.subr.bf16.mxu0 0
    %1312 = vmatpush1.bf16.xpose.msra.mxu0 0
    %1313 = vmatprep.subr.bf16.mxu0 0
    %1314 = vmatpush1.bf16.xpose.msra.mxu0 0
    %1315 = vmatprep.subr.bf16.mxu0 0
    %1316 = vmatpush1.bf16.xpose.msra.mxu0 0
    %1317 = vmatprep.subr.bf16.mxu0 0
    %1318 = vmatpush1.bf16.xpose.msra.mxu0 0
    %1319 = vmatprep.subr.bf16.mxu0 0
    %1320 = vmatpush1.bf16.xpose.msra.mxu0 0
    %1321 = vmatprep.subr.bf16.mxu0 0
    %1322 = vmatpush1.bf16.xpose.msra.mxu0 0
    %1323 = vmatprep.subr.bf16.mxu0 0
    %1324 = vmatpush1.bf16.xpose.msra.mxu0 0
    %1325 = vmatprep.subr.bf16.mxu0 0
    %1326 = vmatpush1.bf16.xpose.msra.mxu0 0
    %1327 = vmatprep.subr.bf16.mxu0 0
    %1328 = vmatpush1.bf16.xpose.msra.mxu0 0
    %1329 = vmatprep.subr.bf16.mxu0 0
    %1330 = vmatpush1.bf16.xpose.msra.mxu0 0
    %1331 = vmatprep.subr.bf16.mxu0 0
    %1332 = vmatpush1.bf16.xpose.msra.mxu0 0
    %1333 = vmatprep.subr.bf16.mxu0 0
    %1334 = vmatpush1.bf16.xpose.msra.mxu0 0
    %1335 = vmatprep.subr.bf16.mxu0 0
    %1336 = vmatpush1.bf16.xpose.msra.mxu0 0
    %1337 = vmatprep.mubr.bf16.mxu0 0
    %1338 = vmatmul.mubr.bf16.gmra.mrb[0].mxu0 %v1300
    %v1339 = vpop.f32.mrb[0].mxu0
    %v1340 = vadd.f32 %v189, %v1339
    %v1341 = vpop.f32.mrb[0].mxu0
    %v1342 = vpop.f32.mrb[0].mxu0
    %v1343 = vadd.f32 %v190, %v1342
    %v1344 = vpop.f32.mrb[0].mxu0
    %1345 = vdwg.mxu0
    %v1346 = vsel %vm581, %v1340, -inf
    %1347 = vmax.xlane.f32.xlu0 %v1346
    %v1348 = vpop.xlane.xlu0 %1347
    %v1349 = vsel %vm581, %v1343, -inf
    %1350 = vmax.xlane.f32.xlu0 %v1349
    %v1351 = vpop.xlane.xlu0 %1350
    %v1352 = vsub.f32 %v1340, %v1348
    %v1353 = vsub.f32 %v1343, %v1351
    %v1354 = vmul.f32 %v1352, 1.442695
    %v1355 = vpow.pop %v1354
    %v1356 = vmul.f32 %v1353, 1.442695
    %v1357 = vpow.pop %v1356
    %v1358 = vsel %vm581, %v1355, 0.0
    %1359 = vadd.xlane.f32.xlu0 %v1358
    %v1360 = vpop.xlane.xlu0 %1359
    %v1361 = vsel %vm581, %v1357, 0.0
    %1362 = vadd.xlane.f32.xlu0 %v1361
    %v1363 = vpop.xlane.xlu0 %1362
    %v1364 = vrcp.pop %v1360
    %v1365 = vrcp.pop %v1363
    %v1366 = vmul.f32 %v1355, %v1364
    %v1367 = vmul.f32 %v1357, %v1365
    %v1368 = vpack.c.bf16 %v1367, %v1366
    %v1370 = vsel %vm581, %v1368, 0
    %1372 = vmatprep.subr.bf16.mxu0 0
    %1373 = vmatpush1.bf16.msra.mxu0 %v1298
    %1374 = vmatprep.subr.bf16.mxu0 0
    %1375 = vmatpush1.bf16.msra.mxu0 0
    %1376 = vmatprep.subr.bf16.mxu0 0
    %1377 = vmatpush1.bf16.msra.mxu0 0
    %1378 = vmatprep.subr.bf16.mxu0 0
    %1379 = vmatpush1.bf16.msra.mxu0 0
    %1380 = vmatprep.subr.bf16.mxu0 0
    %1381 = vmatpush1.bf16.msra.mxu0 0
    %1382 = vmatprep.subr.bf16.mxu0 0
    %1383 = vmatpush1.bf16.msra.mxu0 0
    %1384 = vmatprep.subr.bf16.mxu0 0
    %1385 = vmatpush1.bf16.msra.mxu0 0
    %1386 = vmatprep.subr.bf16.mxu0 0
    %1387 = vmatpush1.bf16.msra.mxu0 0
    %1388 = vmatprep.subr.bf16.mxu0 0
    %1389 = vmatpush1.bf16.msra.mxu0 0
    %1390 = vmatprep.subr.bf16.mxu0 0
    %1391 = vmatpush1.bf16.msra.mxu0 0
    %1392 = vmatprep.subr.bf16.mxu0 0
    %1393 = vmatpush1.bf16.msra.mxu0 0
    %1394 = vmatprep.subr.bf16.mxu0 0
    %1395 = vmatpush1.bf16.msra.mxu0 0
    %1396 = vmatprep.subr.bf16.mxu0 0
    %1397 = vmatpush1.bf16.msra.mxu0 0
    %1398 = vmatprep.subr.bf16.mxu0 0
    %1399 = vmatpush1.bf16.msra.mxu0 0
    %1400 = vmatprep.subr.bf16.mxu0 0
    %1401 = vmatpush1.bf16.msra.mxu0 0
    %1402 = vmatprep.subr.bf16.mxu0 0
    %1403 = vmatpush1.bf16.msra.mxu0 0
    %1404 = vmatprep.mubr.bf16.mxu0 0
    %1405 = vmatmul.mubr.bf16.gmra.mrb[0].mxu0 %v1370
    %v1406 = vpop.f32.mrb[0].mxu0
    %v1407 = vadd.f32 0.0, %v1406
    %v1408 = vpop.f32.mrb[0].mxu0
    %v1409 = vpop.f32.mrb[0].mxu0
    %v1410 = vadd.f32 0.0, %v1409
    %v1411 = vpop.f32.mrb[0].mxu0
    %1412 = vdwg.mxu0
    %v1413 = vpack.c.bf16 %v1410, %v1407
    %v1414 = vld [vmem:[#allocation7 + $0x20] sm:$0xf]
    %v1415 = vld [vmem:[#allocation7 + $0x24] sm:$0xf]
    %v1416 = vld [vmem:[#allocation7 + $0x28] sm:$0xf]
    %v1417 = vld [vmem:[#allocation7 + $0x2c] sm:$0xf]
    %v1422 = vunpack.c.l.b16 %v1414
    %v1423 = vunpack.c.l.b16 %v1415
    %v1424 = vunpack.c.l.b16 %v1416
    %v1425 = vunpack.c.l.b16 %v1417
    %v1426 = vpack.c.b16 %v1423, %v1422
    %v1427 = vpack.c.b16 %v1425, %v1424
    %v1431 = vsel %vm533, %v1413, 0
    %1433 = vmatprep.subr.bf16.mxu0 0
    %1434 = vmatpush1.bf16.msra.mxu0 %v1426
    %1435 = vmatprep.subr.bf16.mxu0 0
    %1436 = vmatpush1.bf16.msra.mxu0 %v1427
    %1437 = vmatprep.subr.bf16.mxu0 0
    %1438 = vmatpush1.bf16.msra.mxu0 0
    %1439 = vmatprep.subr.bf16.mxu0 0
    %1440 = vmatpush1.bf16.msra.mxu0 0
    %1441 = vmatprep.subr.bf16.mxu0 0
    %1442 = vmatpush1.bf16.msra.mxu0 0
    %1443 = vmatprep.subr.bf16.mxu0 0
    %1444 = vmatpush1.bf16.msra.mxu0 0
    %1445 = vmatprep.subr.bf16.mxu0 0
    %1446 = vmatpush1.bf16.msra.mxu0 0
    %1447 = vmatprep.subr.bf16.mxu0 0
    %1448 = vmatpush1.bf16.msra.mxu0 0
    %1449 = vmatprep.subr.bf16.mxu0 0
    %1450 = vmatpush1.bf16.msra.mxu0 0
    %1451 = vmatprep.subr.bf16.mxu0 0
    %1452 = vmatpush1.bf16.msra.mxu0 0
    %1453 = vmatprep.subr.bf16.mxu0 0
    %1454 = vmatpush1.bf16.msra.mxu0 0
    %1455 = vmatprep.subr.bf16.mxu0 0
    %1456 = vmatpush1.bf16.msra.mxu0 0
    %1457 = vmatprep.subr.bf16.mxu0 0
    %1458 = vmatpush1.bf16.msra.mxu0 0
    %1459 = vmatprep.subr.bf16.mxu0 0
    %1460 = vmatpush1.bf16.msra.mxu0 0
    %1461 = vmatprep.subr.bf16.mxu0 0
    %1462 = vmatpush1.bf16.msra.mxu0 0
    %1463 = vmatprep.subr.bf16.mxu0 0
    %1464 = vmatpush1.bf16.msra.mxu0 0
    %1465 = vmatprep.mubr.bf16.mxu0 0
    %1466 = vmatmul.mubr.bf16.gmra.mrb[0].mxu0 %v1431
    %v1467 = vpop.f32.mrb[0].mxu0
    %v1468 = vadd.f32 0.0, %v1467
    %v1469 = vpop.f32.mrb[0].mxu0
    %v1470 = vpop.f32.mrb[0].mxu0
    %v1471 = vadd.f32 0.0, %v1470
    %v1472 = vpop.f32.mrb[0].mxu0
    %1473 = vdwg.mxu0
    %v1474 = vadd.f32 %v1086, %v1468
    %v1475 = vadd.f32 %v1089, %v1471
    %1476 = vrot.lane.b32.xlu0 %v249, 32
    %v1477 = vpop.permute.xlu0 %1476
    %1478 = vrot.lane.b32.xlu0 %v250, 32
    %v1479 = vpop.permute.xlu0 %1478
    %1480 = vrot.lane.b32.xlu0 %v251, 32
    %v1481 = vpop.permute.xlu0 %1480
    %1482 = vrot.lane.b32.xlu0 %v252, 32
    %v1483 = vpop.permute.xlu0 %1482
    %1484 = vrot.lane.b32.xlu0 %v253, 32
    %v1485 = vpop.permute.xlu0 %1484
    %1486 = vrot.lane.b32.xlu0 %v254, 32
    %v1487 = vpop.permute.xlu0 %1486
    %1488 = vrot.lane.b32.xlu0 %v255, 32
    %v1489 = vpop.permute.xlu0 %1488
    %1490 = vrot.lane.b32.xlu0 %v256, 32
    %v1491 = vpop.permute.xlu0 %1490
    %1500 = vrot.lane.b32.xlu0 %v215, 32
    %v1501 = vpop.permute.xlu0 %1500
    %1503 = vmatprep.subr.bf16.mxu0 0
    %1504 = vmatpush1.bf16.msra.mxu0 %v1477
    %1505 = vmatprep.subr.bf16.mxu0 0
    %1506 = vmatpush1.bf16.msra.mxu0 %v1479
    %1507 = vmatprep.subr.bf16.mxu0 0
    %1508 = vmatpush1.bf16.msra.mxu0 %v1481
    %1509 = vmatprep.subr.bf16.mxu0 0
    %1510 = vmatpush1.bf16.msra.mxu0 %v1483
    %1511 = vmatprep.subr.bf16.mxu0 0
    %1512 = vmatpush1.bf16.msra.mxu0 %v1485
    %1513 = vmatprep.subr.bf16.mxu0 0
    %1514 = vmatpush1.bf16.msra.mxu0 %v1487
    %1515 = vmatprep.subr.bf16.mxu0 0
    %1516 = vmatpush1.bf16.msra.mxu0 %v1489
    %1517 = vmatprep.subr.bf16.mxu0 0
    %1518 = vmatpush1.bf16.msra.mxu0 %v1491
    %1519 = vmatprep.subr.bf16.mxu0 0
    %1520 = vmatpush1.bf16.msra.mxu0 0
    %1521 = vmatprep.subr.bf16.mxu0 0
    %1522 = vmatpush1.bf16.msra.mxu0 0
    %1523 = vmatprep.subr.bf16.mxu0 0
    %1524 = vmatpush1.bf16.msra.mxu0 0
    %1525 = vmatprep.subr.bf16.mxu0 0
    %1526 = vmatpush1.bf16.msra.mxu0 0
    %1527 = vmatprep.subr.bf16.mxu0 0
    %1528 = vmatpush1.bf16.msra.mxu0 0
    %1529 = vmatprep.subr.bf16.mxu0 0
    %1530 = vmatpush1.bf16.msra.mxu0 0
    %1531 = vmatprep.subr.bf16.mxu0 0
    %1532 = vmatpush1.bf16.msra.mxu0 0
    %1533 = vmatprep.subr.bf16.mxu0 0
    %1534 = vmatpush1.bf16.msra.mxu0 0
    %1535 = vmatprep.mubr.bf16.mxu0 0
    %1536 = vmatmul.mubr.bf16.gmra.mrb[0].mxu0 %v193
    %v1537 = vpop.f32.mrb[0].mxu0
    %v1538 = vadd.f32 %v1501, %v1537
    %v1539 = vpop.f32.mrb[0].mxu0
    %v1540 = vpop.f32.mrb[0].mxu0
    %v1541 = vadd.f32 %v1501, %v1540
    %v1542 = vpop.f32.mrb[0].mxu0
    %1543 = vdwg.mxu0
    %v1544 = vpack.c.bf16 %v1541, %v1538
    %1545 = vrot.lane.b32.xlu0 %v362, 32
    %v1546 = vpop.permute.xlu0 %1545
    %1547 = vrot.lane.b32.xlu0 %v363, 32
    %v1548 = vpop.permute.xlu0 %1547
    %1549 = vrot.lane.b32.xlu0 %v364, 32
    %v1550 = vpop.permute.xlu0 %1549
    %1551 = vrot.lane.b32.xlu0 %v365, 32
    %v1552 = vpop.permute.xlu0 %1551
    %1553 = vrot.lane.b32.xlu0 %v366, 32
    %v1554 = vpop.permute.xlu0 %1553
    %1555 = vrot.lane.b32.xlu0 %v367, 32
    %v1556 = vpop.permute.xlu0 %1555
    %1557 = vrot.lane.b32.xlu0 %v368, 32
    %v1558 = vpop.permute.xlu0 %1557
    %1559 = vrot.lane.b32.xlu0 %v369, 32
    %v1560 = vpop.permute.xlu0 %1559
    %1569 = vrot.lane.b32.xlu0 %v328, 32
    %v1570 = vpop.permute.xlu0 %1569
    %1572 = vmatprep.subr.bf16.mxu0 0
    %1573 = vmatpush1.bf16.msra.mxu0 %v1546
    %1574 = vmatprep.subr.bf16.mxu0 0
    %1575 = vmatpush1.bf16.msra.mxu0 %v1548
    %1576 = vmatprep.subr.bf16.mxu0 0
    %1577 = vmatpush1.bf16.msra.mxu0 %v1550
    %1578 = vmatprep.subr.bf16.mxu0 0
    %1579 = vmatpush1.bf16.msra.mxu0 %v1552
    %1580 = vmatprep.subr.bf16.mxu0 0
    %1581 = vmatpush1.bf16.msra.mxu0 %v1554
    %1582 = vmatprep.subr.bf16.mxu0 0
    %1583 = vmatpush1.bf16.msra.mxu0 %v1556
    %1584 = vmatprep.subr.bf16.mxu0 0
    %1585 = vmatpush1.bf16.msra.mxu0 %v1558
    %1586 = vmatprep.subr.bf16.mxu0 0
    %1587 = vmatpush1.bf16.msra.mxu0 %v1560
    %1588 = vmatprep.subr.bf16.mxu0 0
    %1589 = vmatpush1.bf16.msra.mxu0 0
    %1590 = vmatprep.subr.bf16.mxu0 0
    %1591 = vmatpush1.bf16.msra.mxu0 0
    %1592 = vmatprep.subr.bf16.mxu0 0
    %1593 = vmatpush1.bf16.msra.mxu0 0
    %1594 = vmatprep.subr.bf16.mxu0 0
    %1595 = vmatpush1.bf16.msra.mxu0 0
    %1596 = vmatprep.subr.bf16.mxu0 0
    %1597 = vmatpush1.bf16.msra.mxu0 0
    %1598 = vmatprep.subr.bf16.mxu0 0
    %1599 = vmatpush1.bf16.msra.mxu0 0
    %1600 = vmatprep.subr.bf16.mxu0 0
    %1601 = vmatpush1.bf16.msra.mxu0 0
    %1602 = vmatprep.subr.bf16.mxu0 0
    %1603 = vmatpush1.bf16.msra.mxu0 0
    %1604 = vmatprep.mubr.bf16.mxu0 0
    %1605 = vmatmul.mubr.bf16.gmra.mrb[0].mxu0 %v193
    %v1606 = vpop.f32.mrb[0].mxu0
    %v1607 = vadd.f32 %v1570, %v1606
    %v1608 = vpop.f32.mrb[0].mxu0
    %v1609 = vpop.f32.mrb[0].mxu0
    %v1610 = vadd.f32 %v1570, %v1609
    %v1611 = vpop.f32.mrb[0].mxu0
    %1612 = vdwg.mxu0
    %v1613 = vpack.c.bf16 %v1610, %v1607
    %1614 = vrot.lane.b32.xlu0 %v475, 32
    %v1615 = vpop.permute.xlu0 %1614
    %1616 = vrot.lane.b32.xlu0 %v476, 32
    %v1617 = vpop.permute.xlu0 %1616
    %1618 = vrot.lane.b32.xlu0 %v477, 32
    %v1619 = vpop.permute.xlu0 %1618
    %1620 = vrot.lane.b32.xlu0 %v478, 32
    %v1621 = vpop.permute.xlu0 %1620
    %1622 = vrot.lane.b32.xlu0 %v479, 32
    %v1623 = vpop.permute.xlu0 %1622
    %1624 = vrot.lane.b32.xlu0 %v480, 32
    %v1625 = vpop.permute.xlu0 %1624
    %1626 = vrot.lane.b32.xlu0 %v481, 32
    %v1627 = vpop.permute.xlu0 %1626
    %1628 = vrot.lane.b32.xlu0 %v482, 32
    %v1629 = vpop.permute.xlu0 %1628
    %1638 = vrot.lane.b32.xlu0 %v441, 32
    %v1639 = vpop.permute.xlu0 %1638
    %1641 = vmatprep.subr.bf16.mxu0 0
    %1642 = vmatpush1.bf16.msra.mxu0 %v1615
    %1643 = vmatprep.subr.bf16.mxu0 0
    %1644 = vmatpush1.bf16.msra.mxu0 %v1617
    %1645 = vmatprep.subr.bf16.mxu0 0
    %1646 = vmatpush1.bf16.msra.mxu0 %v1619
    %1647 = vmatprep.subr.bf16.mxu0 0
    %1648 = vmatpush1.bf16.msra.mxu0 %v1621
    %1649 = vmatprep.subr.bf16.mxu0 0
    %1650 = vmatpush1.bf16.msra.mxu0 %v1623
    %1651 = vmatprep.subr.bf16.mxu0 0
    %1652 = vmatpush1.bf16.msra.mxu0 %v1625
    %1653 = vmatprep.subr.bf16.mxu0 0
    %1654 = vmatpush1.bf16.msra.mxu0 %v1627
    %1655 = vmatprep.subr.bf16.mxu0 0
    %1656 = vmatpush1.bf16.msra.mxu0 %v1629
    %1657 = vmatprep.subr.bf16.mxu0 0
    %1658 = vmatpush1.bf16.msra.mxu0 0
    %1659 = vmatprep.subr.bf16.mxu0 0
    %1660 = vmatpush1.bf16.msra.mxu0 0
    %1661 = vmatprep.subr.bf16.mxu0 0
    %1662 = vmatpush1.bf16.msra.mxu0 0
    %1663 = vmatprep.subr.bf16.mxu0 0
    %1664 = vmatpush1.bf16.msra.mxu0 0
    %1665 = vmatprep.subr.bf16.mxu0 0
    %1666 = vmatpush1.bf16.msra.mxu0 0
    %1667 = vmatprep.subr.bf16.mxu0 0
    %1668 = vmatpush1.bf16.msra.mxu0 0
    %1669 = vmatprep.subr.bf16.mxu0 0
    %1670 = vmatpush1.bf16.msra.mxu0 0
    %1671 = vmatprep.subr.bf16.mxu0 0
    %1672 = vmatpush1.bf16.msra.mxu0 0
    %1673 = vmatprep.mubr.bf16.mxu0 0
    %1674 = vmatmul.mubr.bf16.gmra.mrb[0].mxu0 %v193
    %v1675 = vpop.f32.mrb[0].mxu0
    %v1676 = vadd.f32 %v1639, %v1675
    %v1677 = vpop.f32.mrb[0].mxu0
    %v1678 = vpop.f32.mrb[0].mxu0
    %v1679 = vadd.f32 %v1639, %v1678
    %v1680 = vpop.f32.mrb[0].mxu0
    %1681 = vdwg.mxu0
    %v1682 = vpack.c.bf16 %v1679, %v1676
    %v1684 = vsel %vm533, %v1544, 0
    %v1687 = vsel %vm533, %v1613, 0
    %1689 = vmatprep.subr.bf16.mxu0 0
    %1690 = vmatpush1.bf16.xpose.msra.mxu0 %v1687
    %1691 = vmatprep.subr.bf16.mxu0 0
    %1692 = vmatpush1.bf16.xpose.msra.mxu0 0
    %1693 = vmatprep.subr.bf16.mxu0 0
    %1694 = vmatpush1.bf16.xpose.msra.mxu0 0
    %1695 = vmatprep.subr.bf16.mxu0 0
    %1696 = vmatpush1.bf16.xpose.msra.mxu0 0
    %1697 = vmatprep.subr.bf16.mxu0 0
    %1698 = vmatpush1.bf16.xpose.msra.mxu0 0
    %1699 = vmatprep.subr.bf16.mxu0 0
    %1700 = vmatpush1.bf16.xpose.msra.mxu0 0
    %1701 = vmatprep.subr.bf16.mxu0 0
    %1702 = vmatpush1.bf16.xpose.msra.mxu0 0
    %1703 = vmatprep.subr.bf16.mxu0 0
    %1704 = vmatpush1.bf16.xpose.msra.mxu0 0
    %1705 = vmatprep.subr.bf16.mxu0 0
    %1706 = vmatpush1.bf16.xpose.msra.mxu0 0
    %1707 = vmatprep.subr.bf16.mxu0 0
    %1708 = vmatpush1.bf16.xpose.msra.mxu0 0
    %1709 = vmatprep.subr.bf16.mxu0 0
    %1710 = vmatpush1.bf16.xpose.msra.mxu0 0
    %1711 = vmatprep.subr.bf16.mxu0 0
    %1712 = vmatpush1.bf16.xpose.msra.mxu0 0
    %1713 = vmatprep.subr.bf16.mxu0 0
    %1714 = vmatpush1.bf16.xpose.msra.mxu0 0
    %1715 = vmatprep.subr.bf16.mxu0 0
    %1716 = vmatpush1.bf16.xpose.msra.mxu0 0
    %1717 = vmatprep.subr.bf16.mxu0 0
    %1718 = vmatpush1.bf16.xpose.msra.mxu0 0
    %1719 = vmatprep.subr.bf16.mxu0 0
    %1720 = vmatpush1.bf16.xpose.msra.mxu0 0
    %1721 = vmatprep.mubr.bf16.mxu0 0
    %1722 = vmatmul.mubr.bf16.gmra.mrb[0].mxu0 %v1684
    %v1723 = vpop.f32.mrb[0].mxu0
    %v1724 = vadd.f32 %v189, %v1723
    %v1725 = vpop.f32.mrb[0].mxu0
    %v1726 = vpop.f32.mrb[0].mxu0
    %v1727 = vadd.f32 %v190, %v1726
    %v1728 = vpop.f32.mrb[0].mxu0
    %1729 = vdwg.mxu0
    %v1730 = vsel %vm581, %v1724, -inf
    %1731 = vmax.xlane.f32.xlu0 %v1730
    %v1732 = vpop.xlane.xlu0 %1731
    %v1733 = vsel %vm581, %v1727, -inf
    %1734 = vmax.xlane.f32.xlu0 %v1733
    %v1735 = vpop.xlane.xlu0 %1734
    %v1736 = vsub.f32 %v1724, %v1732
    %v1737 = vsub.f32 %v1727, %v1735
    %v1738 = vmul.f32 %v1736, 1.442695
    %v1739 = vpow.pop %v1738
    %v1740 = vmul.f32 %v1737, 1.442695
    %v1741 = vpow.pop %v1740
    %v1742 = vsel %vm581, %v1739, 0.0
    %1743 = vadd.xlane.f32.xlu0 %v1742
    %v1744 = vpop.xlane.xlu0 %1743
    %v1745 = vsel %vm581, %v1741, 0.0
    %1746 = vadd.xlane.f32.xlu0 %v1745
    %v1747 = vpop.xlane.xlu0 %1746
    %v1748 = vrcp.pop %v1744
    %v1749 = vrcp.pop %v1747
    %v1750 = vmul.f32 %v1739, %v1748
    %v1751 = vmul.f32 %v1741, %v1749
    %v1752 = vpack.c.bf16 %v1751, %v1750
    %v1754 = vsel %vm581, %v1752, 0
    %1756 = vmatprep.subr.bf16.mxu0 0
    %1757 = vmatpush1.bf16.msra.mxu0 %v1682
    %1758 = vmatprep.subr.bf16.mxu0 0
    %1759 = vmatpush1.bf16.msra.mxu0 0
    %1760 = vmatprep.subr.bf16.mxu0 0
    %1761 = vmatpush1.bf16.msra.mxu0 0
    %1762 = vmatprep.subr.bf16.mxu0 0
    %1763 = vmatpush1.bf16.msra.mxu0 0
    %1764 = vmatprep.subr.bf16.mxu0 0
    %1765 = vmatpush1.bf16.msra.mxu0 0
    %1766 = vmatprep.subr.bf16.mxu0 0
    %1767 = vmatpush1.bf16.msra.mxu0 0
    %1768 = vmatprep.subr.bf16.mxu0 0
    %1769 = vmatpush1.bf16.msra.mxu0 0
    %1770 = vmatprep.subr.bf16.mxu0 0
    %1771 = vmatpush1.bf16.msra.mxu0 0
    %1772 = vmatprep.subr.bf16.mxu0 0
    %1773 = vmatpush1.bf16.msra.mxu0 0
    %1774 = vmatprep.subr.bf16.mxu0 0
    %1775 = vmatpush1.bf16.msra.mxu0 0
    %1776 = vmatprep.subr.bf16.mxu0 0
    %1777 = vmatpush1.bf16.msra.mxu0 0
    %1778 = vmatprep.subr.bf16.mxu0 0
    %1779 = vmatpush1.bf16.msra.mxu0 0
    %1780 = vmatprep.subr.bf16.mxu0 0
    %1781 = vmatpush1.bf16.msra.mxu0 0
    %1782 = vmatprep.subr.bf16.mxu0 0
    %1783 = vmatpush1.bf16.msra.mxu0 0
    %1784 = vmatprep.subr.bf16.mxu0 0
    %1785 = vmatpush1.bf16.msra.mxu0 0
    %1786 = vmatprep.subr.bf16.mxu0 0
    %1787 = vmatpush1.bf16.msra.mxu0 0
    %1788 = vmatprep.mubr.bf16.mxu0 0
    %1789 = vmatmul.mubr.bf16.gmra.mrb[0].mxu0 %v1754
    %v1790 = vpop.f32.mrb[0].mxu0
    %v1791 = vadd.f32 0.0, %v1790
    %v1792 = vpop.f32.mrb[0].mxu0
    %v1793 = vpop.f32.mrb[0].mxu0
    %v1794 = vadd.f32 0.0, %v1793
    %v1795 = vpop.f32.mrb[0].mxu0
    %1796 = vdwg.mxu0
    %v1797 = vpack.c.bf16 %v1794, %v1791
    %v1798 = vld [vmem:[#allocation7 + $0x30] sm:$0xf]
    %v1799 = vld [vmem:[#allocation7 + $0x34] sm:$0xf]
    %v1800 = vld [vmem:[#allocation7 + $0x38] sm:$0xf]
    %v1801 = vld [vmem:[#allocation7 + $0x3c] sm:$0xf]
    %v1806 = vunpack.c.l.b16 %v1798
    %v1807 = vunpack.c.l.b16 %v1799
    %v1808 = vunpack.c.l.b16 %v1800
    %v1809 = vunpack.c.l.b16 %v1801
    %v1810 = vpack.c.b16 %v1807, %v1806
    %v1811 = vpack.c.b16 %v1809, %v1808
    %v1815 = vsel %vm533, %v1797, 0
    %1817 = vmatprep.subr.bf16.mxu0 0
    %1818 = vmatpush1.bf16.msra.mxu0 %v1810
    %1819 = vmatprep.subr.bf16.mxu0 0
    %1820 = vmatpush1.bf16.msra.mxu0 %v1811
    %1821 = vmatprep.subr.bf16.mxu0 0
    %1822 = vmatpush1.bf16.msra.mxu0 0
    %1823 = vmatprep.subr.bf16.mxu0 0
    %1824 = vmatpush1.bf16.msra.mxu0 0
    %1825 = vmatprep.subr.bf16.mxu0 0
    %1826 = vmatpush1.bf16.msra.mxu0 0
    %1827 = vmatprep.subr.bf16.mxu0 0
    %1828 = vmatpush1.bf16.msra.mxu0 0
    %1829 = vmatprep.subr.bf16.mxu0 0
    %1830 = vmatpush1.bf16.msra.mxu0 0
    %1831 = vmatprep.subr.bf16.mxu0 0
    %1832 = vmatpush1.bf16.msra.mxu0 0
    %1833 = vmatprep.subr.bf16.mxu0 0
    %1834 = vmatpush1.bf16.msra.mxu0 0
    %1835 = vmatprep.subr.bf16.mxu0 0
    %1836 = vmatpush1.bf16.msra.mxu0 0
    %1837 = vmatprep.subr.bf16.mxu0 0
    %1838 = vmatpush1.bf16.msra.mxu0 0
    %1839 = vmatprep.subr.bf16.mxu0 0
    %1840 = vmatpush1.bf16.msra.mxu0 0
    %1841 = vmatprep.subr.bf16.mxu0 0
    %1842 = vmatpush1.bf16.msra.mxu0 0
    %1843 = vmatprep.subr.bf16.mxu0 0
    %1844 = vmatpush1.bf16.msra.mxu0 0
    %1845 = vmatprep.subr.bf16.mxu0 0
    %1846 = vmatpush1.bf16.msra.mxu0 0
    %1847 = vmatprep.subr.bf16.mxu0 0
    %1848 = vmatpush1.bf16.msra.mxu0 0
    %1849 = vmatprep.mubr.bf16.mxu0 0
    %1850 = vmatmul.mubr.bf16.gmra.mrb[0].mxu0 %v1815
    %v1851 = vpop.f32.mrb[0].mxu0
    %v1852 = vadd.f32 0.0, %v1851
    %v1853 = vpop.f32.mrb[0].mxu0
    %v1854 = vpop.f32.mrb[0].mxu0
    %v1855 = vadd.f32 0.0, %v1854
    %v1856 = vpop.f32.mrb[0].mxu0
    %1857 = vdwg.mxu0
    %v1858 = vadd.f32 %v1474, %v1852
    %v1859 = vadd.f32 %v1475, %v1855
    %v1860 = vld [vmem:[%s4] sm:$0x1]
    %v1862 = vlaneseq
    %v1863 = vshrl.u32 %v1862, 7
    %v1864 = vsub.s32 0, %v1863
    %v1865 = vrot.slane %v1860, %v1864
    %v1867 = vadd.f32 %v1858, %v1865
    %v1868 = vadd.f32 %v1859, %v1865
    %v1869 = vadd.f32 %v191, %v1867
    %v1870 = vadd.f32 %v192, %v1868
    %v1871 = vld [vmem:[%s5] sm:$0x1]
    %v1872 = vld [vmem:[%s6] sm:$0x1]
    %1873 = vadd.xlane.f32.xlu0 %v1869
    %v1874 = vpop.xlane.xlu0 %1873
    %1875 = vadd.xlane.f32.xlu0 %v1870
    %v1876 = vpop.xlane.xlu0 %1875
    %v1877 = vrcp.pop 128.0
    %v1878 = vmul.f32 %v1874, %v1877
    %v1879 = vmul.f32 %v1876, %v1877
    %v1880 = vsub.f32 %v1869, %v1878
    %v1881 = vsub.f32 %v1870, %v1879
    %v1882 = vmul.f32 %v1880, %v1880
    %v1883 = vmul.f32 %v1881, %v1881
    %1884 = vadd.xlane.f32.xlu0 %v1882
    %v1885 = vpop.xlane.xlu0 %1884
    %1886 = vadd.xlane.f32.xlu0 %v1883
    %v1887 = vpop.xlane.xlu0 %1886
    %v1888 = vmul.f32 %v1885, %v1877
    %v1889 = vmul.f32 %v1887, %v1877
    %v1890 = vadd.f32 %v1888, 1e-05
    %v1891 = vadd.f32 %v1889, 1e-05
    %v1892 = vrsqrt.pop %v1890
    %v1893 = vrsqrt.pop %v1891
    %v1894 = vmul.f32 %v1880, %v1892
    %v1895 = vmul.f32 %v1881, %v1893
    %v1897 = vlaneseq
    %v1898 = vshrl.u32 %v1897, 7
    %v1899 = vsub.s32 0, %v1898
    %v1900 = vrot.slane %v1871, %v1899
    %v1902 = vmul.f32 %v1894, %v1900
    %v1903 = vmul.f32 %v1895, %v1900
    %v1905 = vlaneseq
    %v1906 = vshrl.u32 %v1905, 7
    %v1907 = vsub.s32 0, %v1906
    %v1908 = vrot.slane %v1872, %v1907
    %v1910 = vadd.f32 %v1902, %v1908
    %v1911 = vadd.f32 %v1903, %v1908
    %v1912 = vpack.c.bf16 %v1911, %v1910
    %v1913 = vld [vmem:[#allocation9] sm:$0xff]
    %v1914 = vld [vmem:[#allocation9 + $0x8] sm:$0xff]
    %v1915 = vld [vmem:[#allocation9 + $0x10] sm:$0xff]
    %v1916 = vld [vmem:[#allocation9 + $0x18] sm:$0xff]
    %v1917 = vld [vmem:[#allocation9 + $0x20] sm:$0xff]
    %v1918 = vld [vmem:[#allocation9 + $0x28] sm:$0xff]
    %v1919 = vld [vmem:[#allocation9 + $0x30] sm:$0xff]
    %v1920 = vld [vmem:[#allocation9 + $0x38] sm:$0xff]
    %v1921 = vld [vmem:[#allocation9 + $0x40] sm:$0xff]
    %v1922 = vld [vmem:[#allocation9 + $0x48] sm:$0xff]
    %v1923 = vld [vmem:[#allocation9 + $0x50] sm:$0xff]
    %v1924 = vld [vmem:[#allocation9 + $0x58] sm:$0xff]
    %v1925 = vld [vmem:[#allocation9 + $0x60] sm:$0xff]
    %v1926 = vld [vmem:[#allocation9 + $0x68] sm:$0xff]
    %v1927 = vld [vmem:[#allocation9 + $0x70] sm:$0xff]
    %v1928 = vld [vmem:[#allocation9 + $0x78] sm:$0xff]
    %v1929 = vld [vmem:[%s8] sm:$0x3]
    %v1931 = vlaneseq
    %v1932 = vshrl.u32 %v1931, 7
    %v1933 = vsub.s32 0, %v1932
    %v1934 = vrot.slane %v1929, %v1933
    %v1935 = vlaneseq
    %v1936 = vshrl.u32 %v1935, 7
    %v1937 = vsub.s32 1, %v1936
    %v1938 = vrot.slane %v1929, %v1937
    %v1957 = vunpack.c.l.b16 %v1913
    %v1958 = vunpack.c.h.b16 %v1913
    %v1959 = vunpack.c.l.b16 %v1914
    %v1960 = vunpack.c.h.b16 %v1914
    %v1961 = vunpack.c.l.b16 %v1915
    %v1962 = vunpack.c.h.b16 %v1915
    %v1963 = vunpack.c.l.b16 %v1916
    %v1964 = vunpack.c.h.b16 %v1916
    %v1965 = vunpack.c.l.b16 %v1917
    %v1966 = vunpack.c.h.b16 %v1917
    %v1967 = vunpack.c.l.b16 %v1918
    %v1968 = vunpack.c.h.b16 %v1918
    %v1969 = vunpack.c.l.b16 %v1919
    %v1970 = vunpack.c.h.b16 %v1919
    %v1971 = vunpack.c.l.b16 %v1920
    %v1972 = vunpack.c.h.b16 %v1920
    %v1973 = vunpack.c.l.b16 %v1921
    %v1974 = vunpack.c.h.b16 %v1921
    %v1975 = vunpack.c.l.b16 %v1922
    %v1976 = vunpack.c.h.b16 %v1922
    %v1977 = vunpack.c.l.b16 %v1923
    %v1978 = vunpack.c.h.b16 %v1923
    %v1979 = vunpack.c.l.b16 %v1924
    %v1980 = vunpack.c.h.b16 %v1924
    %v1981 = vunpack.c.l.b16 %v1925
    %v1982 = vunpack.c.h.b16 %v1925
    %v1983 = vunpack.c.l.b16 %v1926
    %v1984 = vunpack.c.h.b16 %v1926
    %v1985 = vunpack.c.l.b16 %v1927
    %v1986 = vunpack.c.h.b16 %v1927
    %v1987 = vunpack.c.l.b16 %v1928
    %v1988 = vunpack.c.h.b16 %v1928
    %v1989 = vpack.c.b16 %v1959, %v1957
    %v1990 = vpack.c.b16 %v1960, %v1958
    %v1991 = vpack.c.b16 %v1963, %v1961
    %v1992 = vpack.c.b16 %v1964, %v1962
    %v1993 = vpack.c.b16 %v1967, %v1965
    %v1994 = vpack.c.b16 %v1968, %v1966
    %v1995 = vpack.c.b16 %v1971, %v1969
    %v1996 = vpack.c.b16 %v1972, %v1970
    %v1997 = vpack.c.b16 %v1975, %v1973
    %v1998 = vpack.c.b16 %v1976, %v1974
    %v1999 = vpack.c.b16 %v1979, %v1977
    %v2000 = vpack.c.b16 %v1980, %v1978
    %v2001 = vpack.c.b16 %v1983, %v1981
    %v2002 = vpack.c.b16 %v1984, %v1982
    %v2003 = vpack.c.b16 %v1987, %v1985
    %v2004 = vpack.c.b16 %v1988, %v1986
    %2021 = vmatprep.subr.bf16.mxu0 %v1990
    %2022 = vmatpush1.bf16.msra.mxu0 %v1989
    %2023 = vmatprep.subr.bf16.mxu0 %v1992
    %2024 = vmatpush1.bf16.msra.mxu0 %v1991
    %2025 = vmatprep.subr.bf16.mxu0 %v1994
    %2026 = vmatpush1.bf16.msra.mxu0 %v1993
    %2027 = vmatprep.subr.bf16.mxu0 %v1996
    %2028 = vmatpush1.bf16.msra.mxu0 %v1995
    %2029 = vmatprep.subr.bf16.mxu0 %v1998
    %2030 = vmatpush1.bf16.msra.mxu0 %v1997
    %2031 = vmatprep.subr.bf16.mxu0 %v2000
    %2032 = vmatpush1.bf16.msra.mxu0 %v1999
    %2033 = vmatprep.subr.bf16.mxu0 %v2002
    %2034 = vmatpush1.bf16.msra.mxu0 %v2001
    %2035 = vmatprep.subr.bf16.mxu0 %v2004
    %2036 = vmatpush1.bf16.msra.mxu0 %v2003
    %2037 = vmatprep.subr.bf16.mxu0 0
    %2038 = vmatpush1.bf16.msra.mxu0 0
    %2039 = vmatprep.subr.bf16.mxu0 0
    %2040 = vmatpush1.bf16.msra.mxu0 0
    %2041 = vmatprep.subr.bf16.mxu0 0
    %2042 = vmatpush1.bf16.msra.mxu0 0
    %2043 = vmatprep.subr.bf16.mxu0 0
    %2044 = vmatpush1.bf16.msra.mxu0 0
    %2045 = vmatprep.subr.bf16.mxu0 0
    %2046 = vmatpush1.bf16.msra.mxu0 0
    %2047 = vmatprep.subr.bf16.mxu0 0
    %2048 = vmatpush1.bf16.msra.mxu0 0
    %2049 = vmatprep.subr.bf16.mxu0 0
    %2050 = vmatpush1.bf16.msra.mxu0 0
    %2051 = vmatprep.subr.bf16.mxu0 0
    %2052 = vmatpush1.bf16.msra.mxu0 0
    %2053 = vmatprep.mubr.bf16.mxu0 0
    %2054 = vmatmul.mubr.bf16.gmra.mrb[0].mxu0 %v1912
    %v2055 = vpop.f32.mrb[0].mxu0
    %v2056 = vadd.f32 %v1934, %v2055
    %v2057 = vpop.f32.mrb[0].mxu0
    %v2058 = vadd.f32 %v1938, %v2057
    %v2059 = vpop.f32.mrb[0].mxu0
    %v2060 = vadd.f32 %v1934, %v2059
    %v2061 = vpop.f32.mrb[0].mxu0
    %v2062 = vadd.f32 %v1938, %v2061
    %2063 = vdwg.mxu0
    %v2064 = vmax.f32 %v2056, 0.0
    %v2065 = vmax.f32 %v2058, 0.0
    %v2066 = vmax.f32 %v2060, 0.0
    %v2067 = vmax.f32 %v2062, 0.0
    %v2068 = vpack.c.bf16 %v2066, %v2064
    %v2069 = vpack.c.bf16 %v2067, %v2065
    %v2070 = vld [vmem:[#allocation10] sm:$0xf]
    %v2071 = vld [vmem:[#allocation10 + $0x4] sm:$0xf]
    %v2072 = vld [vmem:[#allocation10 + $0x8] sm:$0xf]
    %v2073 = vld [vmem:[#allocation10 + $0xc] sm:$0xf]
    %v2074 = vld [vmem:[#allocation10 + $0x10] sm:$0xf]
    %v2075 = vld [vmem:[#allocation10 + $0x14] sm:$0xf]
    %v2076 = vld [vmem:[#allocation10 + $0x18] sm:$0xf]
    %v2077 = vld [vmem:[#allocation10 + $0x1c] sm:$0xf]
    %v2078 = vld [vmem:[#allocation10 + $0x20] sm:$0xf]
    %v2079 = vld [vmem:[#allocation10 + $0x24] sm:$0xf]
    %v2080 = vld [vmem:[#allocation10 + $0x28] sm:$0xf]
    %v2081 = vld [vmem:[#allocation10 + $0x2c] sm:$0xf]
    %v2082 = vld [vmem:[#allocation10 + $0x30] sm:$0xf]
    %v2083 = vld [vmem:[#allocation10 + $0x34] sm:$0xf]
    %v2084 = vld [vmem:[#allocation10 + $0x38] sm:$0xf]
    %v2085 = vld [vmem:[#allocation10 + $0x3c] sm:$0xf]
    %v2086 = vld [vmem:[#allocation10 + $0x40] sm:$0xf]
    %v2087 = vld [vmem:[#allocation10 + $0x44] sm:$0xf]
    %v2088 = vld [vmem:[#allocation10 + $0x48] sm:$0xf]
    %v2089 = vld [vmem:[#allocation10 + $0x4c] sm:$0xf]
    %v2090 = vld [vmem:[#allocation10 + $0x50] sm:$0xf]
    %v2091 = vld [vmem:[#allocation10 + $0x54] sm:$0xf]
    %v2092 = vld [vmem:[#allocation10 + $0x58] sm:$0xf]
    %v2093 = vld [vmem:[#allocation10 + $0x5c] sm:$0xf]
    %v2094 = vld [vmem:[#allocation10 + $0x60] sm:$0xf]
    %v2095 = vld [vmem:[#allocation10 + $0x64] sm:$0xf]
    %v2096 = vld [vmem:[#allocation10 + $0x68] sm:$0xf]
    %v2097 = vld [vmem:[#allocation10 + $0x6c] sm:$0xf]
    %v2098 = vld [vmem:[#allocation10 + $0x70] sm:$0xf]
    %v2099 = vld [vmem:[#allocation10 + $0x74] sm:$0xf]
    %v2100 = vld [vmem:[#allocation10 + $0x78] sm:$0xf]
    %v2101 = vld [vmem:[#allocation10 + $0x7c] sm:$0xf]
    %v2102 = vld [vmem:[%s10] sm:$0x1]
    %v2104 = vlaneseq
    %v2105 = vshrl.u32 %v2104, 7
    %v2106 = vsub.s32 0, %v2105
    %v2107 = vrot.slane %v2102, %v2106
    %v2141 = vunpack.c.l.b16 %v2070
    %v2142 = vunpack.c.l.b16 %v2071
    %v2143 = vunpack.c.l.b16 %v2072
    %v2144 = vunpack.c.l.b16 %v2073
    %v2145 = vunpack.c.l.b16 %v2074
    %v2146 = vunpack.c.l.b16 %v2075
    %v2147 = vunpack.c.l.b16 %v2076
    %v2148 = vunpack.c.l.b16 %v2077
    %v2149 = vunpack.c.l.b16 %v2078
    %v2150 = vunpack.c.l.b16 %v2079
    %v2151 = vunpack.c.l.b16 %v2080
    %v2152 = vunpack.c.l.b16 %v2081
    %v2153 = vunpack.c.l.b16 %v2082
    %v2154 = vunpack.c.l.b16 %v2083
    %v2155 = vunpack.c.l.b16 %v2084
    %v2156 = vunpack.c.l.b16 %v2085
    %v2157 = vunpack.c.l.b16 %v2086
    %v2158 = vunpack.c.l.b16 %v2087
    %v2159 = vunpack.c.l.b16 %v2088
    %v2160 = vunpack.c.l.b16 %v2089
    %v2161 = vunpack.c.l.b16 %v2090
    %v2162 = vunpack.c.l.b16 %v2091
    %v2163 = vunpack.c.l.b16 %v2092
    %v2164 = vunpack.c.l.b16 %v2093
    %v2165 = vunpack.c.l.b16 %v2094
    %v2166 = vunpack.c.l.b16 %v2095
    %v2167 = vunpack.c.l.b16 %v2096
    %v2168 = vunpack.c.l.b16 %v2097
    %v2169 = vunpack.c.l.b16 %v2098
    %v2170 = vunpack.c.l.b16 %v2099
    %v2171 = vunpack.c.l.b16 %v2100
    %v2172 = vunpack.c.l.b16 %v2101
    %v2173 = vpack.c.b16 %v2142, %v2141
    %v2174 = vpack.c.b16 %v2144, %v2143
    %v2175 = vpack.c.b16 %v2146, %v2145
    %v2176 = vpack.c.b16 %v2148, %v2147
    %v2177 = vpack.c.b16 %v2150, %v2149
    %v2178 = vpack.c.b16 %v2152, %v2151
    %v2179 = vpack.c.b16 %v2154, %v2153
    %v2180 = vpack.c.b16 %v2156, %v2155
    %v2181 = vpack.c.b16 %v2158, %v2157
    %v2182 = vpack.c.b16 %v2160, %v2159
    %v2183 = vpack.c.b16 %v2162, %v2161
    %v2184 = vpack.c.b16 %v2164, %v2163
    %v2185 = vpack.c.b16 %v2166, %v2165
    %v2186 = vpack.c.b16 %v2168, %v2167
    %v2187 = vpack.c.b16 %v2170, %v2169
    %v2188 = vpack.c.b16 %v2172, %v2171
    %2205 = vmatprep.subr.bf16.mxu0 0
    %2206 = vmatpush1.bf16.msra.mxu0 %v2173
    %2207 = vmatprep.subr.bf16.mxu0 0
    %2208 = vmatpush1.bf16.msra.mxu0 %v2174
    %2209 = vmatprep.subr.bf16.mxu0 0
    %2210 = vmatpush1.bf16.msra.mxu0 %v2175
    %2211 = vmatprep.subr.bf16.mxu0 0
    %2212 = vmatpush1.bf16.msra.mxu0 %v2176
    %2213 = vmatprep.subr.bf16.mxu0 0
    %2214 = vmatpush1.bf16.msra.mxu0 %v2177
    %2215 = vmatprep.subr.bf16.mxu0 0
    %2216 = vmatpush1.bf16.msra.mxu0 %v2178
    %2217 = vmatprep.subr.bf16.mxu0 0
    %2218 = vmatpush1.bf16.msra.mxu0 %v2179
    %2219 = vmatprep.subr.bf16.mxu0 0
    %2220 = vmatpush1.bf16.msra.mxu0 %v2180
    %2221 = vmatprep.subr.bf16.mxu0 0
    %2222 = vmatpush1.bf16.msra.mxu0 %v2181
    %2223 = vmatprep.subr.bf16.mxu0 0
    %2224 = vmatpush1.bf16.msra.mxu0 %v2182
    %2225 = vmatprep.subr.bf16.mxu0 0
    %2226 = vmatpush1.bf16.msra.mxu0 %v2183
    %2227 = vmatprep.subr.bf16.mxu0 0
    %2228 = vmatpush1.bf16.msra.mxu0 %v2184
    %2229 = vmatprep.subr.bf16.mxu0 0
    %2230 = vmatpush1.bf16.msra.mxu0 %v2185
    %2231 = vmatprep.subr.bf16.mxu0 0
    %2232 = vmatpush1.bf16.msra.mxu0 %v2186
    %2233 = vmatprep.subr.bf16.mxu0 0
    %2234 = vmatpush1.bf16.msra.mxu0 %v2187
    %2235 = vmatprep.subr.bf16.mxu0 0
    %2236 = vmatpush1.bf16.msra.mxu0 %v2188
    %2237 = vmatprep.mubr.bf16.mxu0 %v2069
    %2238 = vmatmul.mubr.bf16.gmra.mrb[0].mxu0 %v2068
    %v2239 = vpop.f32.mrb[0].mxu0
    %v2240 = vadd.f32 %v2107, %v2239
    %v2241 = vpop.f32.mrb[0].mxu0
    %v2242 = vpop.f32.mrb[0].mxu0
    %v2243 = vadd.f32 %v2107, %v2242
    %v2244 = vpop.f32.mrb[0].mxu0
    %2245 = vdwg.mxu0
    %v2246 = vadd.f32 %v1910, %v2240
    %v2247 = vadd.f32 %v1911, %v2243
    %v2248 = vld [vmem:[%s11] sm:$0x1]
    %v2249 = vld [vmem:[%s12] sm:$0x1]
    %2250 = vadd.xlane.f32.xlu0 %v2246
    %v2251 = vpop.xlane.xlu0 %2250
    %2252 = vadd.xlane.f32.xlu0 %v2247
    %v2253 = vpop.xlane.xlu0 %2252
    %v2254 = vmul.f32 %v2251, %v1877
    %v2255 = vmul.f32 %v2253, %v1877
    %v2256 = vsub.f32 %v2246, %v2254
    %v2257 = vsub.f32 %v2247, %v2255
    %v2258 = vmul.f32 %v2256, %v2256
    %v2259 = vmul.f32 %v2257, %v2257
    %2260 = vadd.xlane.f32.xlu0 %v2258
    %v2261 = vpop.xlane.xlu0 %2260
    %2262 = vadd.xlane.f32.xlu0 %v2259
    %v2263 = vpop.xlane.xlu0 %2262
    %v2264 = vmul.f32 %v2261, %v1877
    %v2265 = vmul.f32 %v2263, %v1877
    %v2266 = vadd.f32 %v2264, 1e-05
    %v2267 = vadd.f32 %v2265, 1e-05
    %v2268 = vrsqrt.pop %v2266
    %v2269 = vrsqrt.pop %v2267
    %v2270 = vmul.f32 %v2256, %v2268
    %v2271 = vmul.f32 %v2257, %v2269
    %v2273 = vlaneseq
    %v2274 = vshrl.u32 %v2273, 7
    %v2275 = vsub.s32 0, %v2274
    %v2276 = vrot.slane %v2248, %v2275
    %v2278 = vmul.f32 %v2270, %v2276
    %v2279 = vmul.f32 %v2271, %v2276
    %v2281 = vlaneseq
    %v2282 = vshrl.u32 %v2281, 7
    %v2283 = vsub.s32 0, %v2282
    %v2284 = vrot.slane %v2249, %v2283
    %v2286 = vadd.f32 %v2278, %v2284
    %v2287 = vadd.f32 %v2279, %v2284
    %v2288 = vpack.c.bf16 %v2287, %v2286
    %s2289 = scalar_lea.vmem [#allocation4], 192
    %v2290 = vld [vmem:[%s2289] sm:$0xf]
    %v2291 = vld [vmem:[%s2289 + $0xc] sm:$0xf]
    %v2292 = vld [vmem:[%s2289 + $0x18] sm:$0xf]
    %v2293 = vld [vmem:[%s2289 + $0x24] sm:$0xf]
    %v2294 = vld [vmem:[%s2289 + $0x30] sm:$0xf]
    %v2295 = vld [vmem:[%s2289 + $0x3c] sm:$0xf]
    %v2296 = vld [vmem:[%s2289 + $0x48] sm:$0xf]
    %v2297 = vld [vmem:[%s2289 + $0x54] sm:$0xf]
    %v2298 = vld [vmem:[%s2289 + $0x60] sm:$0xf]
    %v2299 = vld [vmem:[%s2289 + $0x6c] sm:$0xf]
    %v2300 = vld [vmem:[%s2289 + $0x78] sm:$0xf]
    %v2301 = vld [vmem:[%s2289 + $0x84] sm:$0xf]
    %v2302 = vld [vmem:[%s2289 + $0x90] sm:$0xf]
    %v2303 = vld [vmem:[%s2289 + $0x9c] sm:$0xf]
    %v2304 = vld [vmem:[%s2289 + $0xa8] sm:$0xf]
    %v2305 = vld [vmem:[%s2289 + $0xb4] sm:$0xf]
    %s2306 = scalar_lea.vmem [#allocation6], 3
    %v2307 = vld [vmem:[%s2306] sm:$0x1]
    %v2309 = vlaneseq
    %v2310 = vshrl.u32 %v2309, 7
    %v2311 = vsub.s32 0, %v2310
    %v2312 = vrot.slane %v2307, %v2311
    %v2330 = vunpack.c.l.b16 %v2290
    %v2331 = vunpack.c.l.b16 %v2291
    %v2332 = vunpack.c.l.b16 %v2292
    %v2333 = vunpack.c.l.b16 %v2293
    %v2334 = vunpack.c.l.b16 %v2294
    %v2335 = vunpack.c.l.b16 %v2295
    %v2336 = vunpack.c.l.b16 %v2296
    %v2337 = vunpack.c.l.b16 %v2297
    %v2338 = vunpack.c.l.b16 %v2298
    %v2339 = vunpack.c.l.b16 %v2299
    %v2340 = vunpack.c.l.b16 %v2300
    %v2341 = vunpack.c.l.b16 %v2301
    %v2342 = vunpack.c.l.b16 %v2302
    %v2343 = vunpack.c.l.b16 %v2303
    %v2344 = vunpack.c.l.b16 %v2304
    %v2345 = vunpack.c.l.b16 %v2305
    %v2346 = vpack.c.b16 %v2331, %v2330
    %v2347 = vpack.c.b16 %v2333, %v2332
    %v2348 = vpack.c.b16 %v2335, %v2334
    %v2349 = vpack.c.b16 %v2337, %v2336
    %v2350 = vpack.c.b16 %v2339, %v2338
    %v2351 = vpack.c.b16 %v2341, %v2340
    %v2352 = vpack.c.b16 %v2343, %v2342
    %v2353 = vpack.c.b16 %v2345, %v2344
    %2362 = vmatprep.subr.bf16.mxu0 0
    %2363 = vmatpush1.bf16.msra.mxu0 %v2346
    %2364 = vmatprep.subr.bf16.mxu0 0
    %2365 = vmatpush1.bf16.msra.mxu0 %v2347
    %2366 = vmatprep.subr.bf16.mxu0 0
    %2367 = vmatpush1.bf16.msra.mxu0 %v2348
    %2368 = vmatprep.subr.bf16.mxu0 0
    %2369 = vmatpush1.bf16.msra.mxu0 %v2349
    %2370 = vmatprep.subr.bf16.mxu0 0
    %2371 = vmatpush1.bf16.msra.mxu0 %v2350
    %2372 = vmatprep.subr.bf16.mxu0 0
    %2373 = vmatpush1.bf16.msra.mxu0 %v2351
    %2374 = vmatprep.subr.bf16.mxu0 0
    %2375 = vmatpush1.bf16.msra.mxu0 %v2352
    %2376 = vmatprep.subr.bf16.mxu0 0
    %2377 = vmatpush1.bf16.msra.mxu0 %v2353
    %2378 = vmatprep.subr.bf16.mxu0 0
    %2379 = vmatpush1.bf16.msra.mxu0 0
    %2380 = vmatprep.subr.bf16.mxu0 0
    %2381 = vmatpush1.bf16.msra.mxu0 0
    %2382 = vmatprep.subr.bf16.mxu0 0
    %2383 = vmatpush1.bf16.msra.mxu0 0
    %2384 = vmatprep.subr.bf16.mxu0 0
    %2385 = vmatpush1.bf16.msra.mxu0 0
    %2386 = vmatprep.subr.bf16.mxu0 0
    %2387 = vmatpush1.bf16.msra.mxu0 0
    %2388 = vmatprep.subr.bf16.mxu0 0
    %2389 = vmatpush1.bf16.msra.mxu0 0
    %2390 = vmatprep.subr.bf16.mxu0 0
    %2391 = vmatpush1.bf16.msra.mxu0 0
    %2392 = vmatprep.subr.bf16.mxu0 0
    %2393 = vmatpush1.bf16.msra.mxu0 0
    %2394 = vmatprep.mubr.bf16.mxu0 0
    %2395 = vmatmul.mubr.bf16.gmra.mrb[0].mxu0 %v2288
    %v2396 = vpop.f32.mrb[0].mxu0
    %v2397 = vadd.f32 %v2312, %v2396
    %v2398 = vpop.f32.mrb[0].mxu0
    %v2399 = vpop.f32.mrb[0].mxu0
    %v2400 = vadd.f32 %v2312, %v2399
    %v2401 = vpop.f32.mrb[0].mxu0
    %2402 = vdwg.mxu0
    %v2403 = vpack.c.bf16 %v2400, %v2397
    %v2404 = vld [vmem:[%s2289 + $0x4] sm:$0xf]
    %v2405 = vld [vmem:[%s2289 + $0x10] sm:$0xf]
    %v2406 = vld [vmem:[%s2289 + $0x1c] sm:$0xf]
    %v2407 = vld [vmem:[%s2289 + $0x28] sm:$0xf]
    %v2408 = vld [vmem:[%s2289 + $0x34] sm:$0xf]
    %v2409 = vld [vmem:[%s2289 + $0x40] sm:$0xf]
    %v2410 = vld [vmem:[%s2289 + $0x4c] sm:$0xf]
    %v2411 = vld [vmem:[%s2289 + $0x58] sm:$0xf]
    %v2412 = vld [vmem:[%s2289 + $0x64] sm:$0xf]
    %v2413 = vld [vmem:[%s2289 + $0x70] sm:$0xf]
    %v2414 = vld [vmem:[%s2289 + $0x7c] sm:$0xf]
    %v2415 = vld [vmem:[%s2289 + $0x88] sm:$0xf]
    %v2416 = vld [vmem:[%s2289 + $0x94] sm:$0xf]
    %v2417 = vld [vmem:[%s2289 + $0xa0] sm:$0xf]
    %v2418 = vld [vmem:[%s2289 + $0xac] sm:$0xf]
    %v2419 = vld [vmem:[%s2289 + $0xb8] sm:$0xf]
    %v2420 = vld [vmem:[%s2306 + $0x1] sm:$0x1]
    %v2422 = vlaneseq
    %v2423 = vshrl.u32 %v2422, 7
    %v2424 = vsub.s32 0, %v2423
    %v2425 = vrot.slane %v2420, %v2424
    %v2443 = vunpack.c.l.b16 %v2404
    %v2444 = vunpack.c.l.b16 %v2405
    %v2445 = vunpack.c.l.b16 %v2406
    %v2446 = vunpack.c.l.b16 %v2407
    %v2447 = vunpack.c.l.b16 %v2408
    %v2448 = vunpack.c.l.b16 %v2409
    %v2449 = vunpack.c.l.b16 %v2410
    %v2450 = vunpack.c.l.b16 %v2411
    %v2451 = vunpack.c.l.b16 %v2412
    %v2452 = vunpack.c.l.b16 %v2413
    %v2453 = vunpack.c.l.b16 %v2414
    %v2454 = vunpack.c.l.b16 %v2415
    %v2455 = vunpack.c.l.b16 %v2416
    %v2456 = vunpack.c.l.b16 %v2417
    %v2457 = vunpack.c.l.b16 %v2418
    %v2458 = vunpack.c.l.b16 %v2419
    %v2459 = vpack.c.b16 %v2444, %v2443
    %v2460 = vpack.c.b16 %v2446, %v2445
    %v2461 = vpack.c.b16 %v2448, %v2447
    %v2462 = vpack.c.b16 %v2450, %v2449
    %v2463 = vpack.c.b16 %v2452, %v2451
    %v2464 = vpack.c.b16 %v2454, %v2453
    %v2465 = vpack.c.b16 %v2456, %v2455
    %v2466 = vpack.c.b16 %v2458, %v2457
    %2475 = vmatprep.subr.bf16.mxu0 0
    %2476 = vmatpush1.bf16.msra.mxu0 %v2459
    %2477 = vmatprep.subr.bf16.mxu0 0
    %2478 = vmatpush1.bf16.msra.mxu0 %v2460
    %2479 = vmatprep.subr.bf16.mxu0 0
    %2480 = vmatpush1.bf16.msra.mxu0 %v2461
    %2481 = vmatprep.subr.bf16.mxu0 0
    %2482 = vmatpush1.bf16.msra.mxu0 %v2462
    %2483 = vmatprep.subr.bf16.mxu0 0
    %2484 = vmatpush1.bf16.msra.mxu0 %v2463
    %2485 = vmatprep.subr.bf16.mxu0 0
    %2486 = vmatpush1.bf16.msra.mxu0 %v2464
    %2487 = vmatprep.subr.bf16.mxu0 0
    %2488 = vmatpush1.bf16.msra.mxu0 %v2465
    %2489 = vmatprep.subr.bf16.mxu0 0
    %2490 = vmatpush1.bf16.msra.mxu0 %v2466
    %2491 = vmatprep.subr.bf16.mxu0 0
    %2492 = vmatpush1.bf16.msra.mxu0 0
    %2493 = vmatprep.subr.bf16.mxu0 0
    %2494 = vmatpush1.bf16.msra.mxu0 0
    %2495 = vmatprep.subr.bf16.mxu0 0
    %2496 = vmatpush1.bf16.msra.mxu0 0
    %2497 = vmatprep.subr.bf16.mxu0 0
    %2498 = vmatpush1.bf16.msra.mxu0 0
    %2499 = vmatprep.subr.bf16.mxu0 0
    %2500 = vmatpush1.bf16.msra.mxu0 0
    %2501 = vmatprep.subr.bf16.mxu0 0
    %2502 = vmatpush1.bf16.msra.mxu0 0
    %2503 = vmatprep.subr.bf16.mxu0 0
    %2504 = vmatpush1.bf16.msra.mxu0 0
    %2505 = vmatprep.subr.bf16.mxu0 0
    %2506 = vmatpush1.bf16.msra.mxu0 0
    %2507 = vmatprep.mubr.bf16.mxu0 0
    %2508 = vmatmul.mubr.bf16.gmra.mrb[0].mxu0 %v2288
    %v2509 = vpop.f32.mrb[0].mxu0
    %v2510 = vadd.f32 %v2425, %v2509
    %v2511 = vpop.f32.mrb[0].mxu0
    %v2512 = vpop.f32.mrb[0].mxu0
    %v2513 = vadd.f32 %v2425, %v2512
    %v2514 = vpop.f32.mrb[0].mxu0
    %2515 = vdwg.mxu0
    %v2516 = vpack.c.bf16 %v2513, %v2510
    %v2517 = vld [vmem:[%s2289 + $0x8] sm:$0xf]
    %v2518 = vld [vmem:[%s2289 + $0x14] sm:$0xf]
    %v2519 = vld [vmem:[%s2289 + $0x20] sm:$0xf]
    %v2520 = vld [vmem:[%s2289 + $0x2c] sm:$0xf]
    %v2521 = vld [vmem:[%s2289 + $0x38] sm:$0xf]
    %v2522 = vld [vmem:[%s2289 + $0x44] sm:$0xf]
    %v2523 = vld [vmem:[%s2289 + $0x50] sm:$0xf]
    %v2524 = vld [vmem:[%s2289 + $0x5c] sm:$0xf]
    %v2525 = vld [vmem:[%s2289 + $0x68] sm:$0xf]
    %v2526 = vld [vmem:[%s2289 + $0x74] sm:$0xf]
    %v2527 = vld [vmem:[%s2289 + $0x80] sm:$0xf]
    %v2528 = vld [vmem:[%s2289 + $0x8c] sm:$0xf]
    %v2529 = vld [vmem:[%s2289 + $0x98] sm:$0xf]
    %v2530 = vld [vmem:[%s2289 + $0xa4] sm:$0xf]
    %v2531 = vld [vmem:[%s2289 + $0xb0] sm:$0xf]
    %v2532 = vld [vmem:[%s2289 + $0xbc] sm:$0xf]
    %v2533 = vld [vmem:[%s2306 + $0x2] sm:$0x1]
    %v2535 = vlaneseq
    %v2536 = vshrl.u32 %v2535, 7
    %v2537 = vsub.s32 0, %v2536
    %v2538 = vrot.slane %v2533, %v2537
    %v2556 = vunpack.c.l.b16 %v2517
    %v2557 = vunpack.c.l.b16 %v2518
    %v2558 = vunpack.c.l.b16 %v2519
    %v2559 = vunpack.c.l.b16 %v2520
    %v2560 = vunpack.c.l.b16 %v2521
    %v2561 = vunpack.c.l.b16 %v2522
    %v2562 = vunpack.c.l.b16 %v2523
    %v2563 = vunpack.c.l.b16 %v2524
    %v2564 = vunpack.c.l.b16 %v2525
    %v2565 = vunpack.c.l.b16 %v2526
    %v2566 = vunpack.c.l.b16 %v2527
    %v2567 = vunpack.c.l.b16 %v2528
    %v2568 = vunpack.c.l.b16 %v2529
    %v2569 = vunpack.c.l.b16 %v2530
    %v2570 = vunpack.c.l.b16 %v2531
    %v2571 = vunpack.c.l.b16 %v2532
    %v2572 = vpack.c.b16 %v2557, %v2556
    %v2573 = vpack.c.b16 %v2559, %v2558
    %v2574 = vpack.c.b16 %v2561, %v2560
    %v2575 = vpack.c.b16 %v2563, %v2562
    %v2576 = vpack.c.b16 %v2565, %v2564
    %v2577 = vpack.c.b16 %v2567, %v2566
    %v2578 = vpack.c.b16 %v2569, %v2568
    %v2579 = vpack.c.b16 %v2571, %v2570
    %2588 = vmatprep.subr.bf16.mxu0 0
    %2589 = vmatpush1.bf16.msra.mxu0 %v2572
    %2590 = vmatprep.subr.bf16.mxu0 0
    %2591 = vmatpush1.bf16.msra.mxu0 %v2573
    %2592 = vmatprep.subr.bf16.mxu0 0
    %2593 = vmatpush1.bf16.msra.mxu0 %v2574
    %2594 = vmatprep.subr.bf16.mxu0 0
    %2595 = vmatpush1.bf16.msra.mxu0 %v2575
    %2596 = vmatprep.subr.bf16.mxu0 0
    %2597 = vmatpush1.bf16.msra.mxu0 %v2576
    %2598 = vmatprep.subr.bf16.mxu0 0
    %2599 = vmatpush1.bf16.msra.mxu0 %v2577
    %2600 = vmatprep.subr.bf16.mxu0 0
    %2601 = vmatpush1.bf16.msra.mxu0 %v2578
    %2602 = vmatprep.subr.bf16.mxu0 0
    %2603 = vmatpush1.bf16.msra.mxu0 %v2579
    %2604 = vmatprep.subr.bf16.mxu0 0
    %2605 = vmatpush1.bf16.msra.mxu0 0
    %2606 = vmatprep.subr.bf16.mxu0 0
    %2607 = vmatpush1.bf16.msra.mxu0 0
    %2608 = vmatprep.subr.bf16.mxu0 0
    %2609 = vmatpush1.bf16.msra.mxu0 0
    %2610 = vmatprep.subr.bf16.mxu0 0
    %2611 = vmatpush1.bf16.msra.mxu0 0
    %2612 = vmatprep.subr.bf16.mxu0 0
    %2613 = vmatpush1.bf16.msra.mxu0 0
    %2614 = vmatprep.subr.bf16.mxu0 0
    %2615 = vmatpush1.bf16.msra.mxu0 0
    %2616 = vmatprep.subr.bf16.mxu0 0
    %2617 = vmatpush1.bf16.msra.mxu0 0
    %2618 = vmatprep.subr.bf16.mxu0 0
    %2619 = vmatpush1.bf16.msra.mxu0 0
    %2620 = vmatprep.mubr.bf16.mxu0 0
    %2621 = vmatmul.mubr.bf16.gmra.mrb[0].mxu0 %v2288
    %v2622 = vpop.f32.mrb[0].mxu0
    %v2623 = vadd.f32 %v2538, %v2622
    %v2624 = vpop.f32.mrb[0].mxu0
    %v2625 = vpop.f32.mrb[0].mxu0
    %v2626 = vadd.f32 %v2538, %v2625
    %v2627 = vpop.f32.mrb[0].mxu0
    %2628 = vdwg.mxu0
    %v2629 = vpack.c.bf16 %v2626, %v2623
    %v2631 = vsel %vm533, %v2403, 0
    %v2634 = vsel %vm533, %v2516, 0
    %2636 = vmatprep.subr.bf16.mxu0 0
    %2637 = vmatpush1.bf16.xpose.msra.mxu0 %v2634
    %2638 = vmatprep.subr.bf16.mxu0 0
    %2639 = vmatpush1.bf16.xpose.msra.mxu0 0
    %2640 = vmatprep.subr.bf16.mxu0 0
    %2641 = vmatpush1.bf16.xpose.msra.mxu0 0
    %2642 = vmatprep.subr.bf16.mxu0 0
    %2643 = vmatpush1.bf16.xpose.msra.mxu0 0
    %2644 = vmatprep.subr.bf16.mxu0 0
    %2645 = vmatpush1.bf16.xpose.msra.mxu0 0
    %2646 = vmatprep.subr.bf16.mxu0 0
    %2647 = vmatpush1.bf16.xpose.msra.mxu0 0
    %2648 = vmatprep.subr.bf16.mxu0 0
    %2649 = vmatpush1.bf16.xpose.msra.mxu0 0
    %2650 = vmatprep.subr.bf16.mxu0 0
    %2651 = vmatpush1.bf16.xpose.msra.mxu0 0
    %2652 = vmatprep.subr.bf16.mxu0 0
    %2653 = vmatpush1.bf16.xpose.msra.mxu0 0
    %2654 = vmatprep.subr.bf16.mxu0 0
    %2655 = vmatpush1.bf16.xpose.msra.mxu0 0
    %2656 = vmatprep.subr.bf16.mxu0 0
    %2657 = vmatpush1.bf16.xpose.msra.mxu0 0
    %2658 = vmatprep.subr.bf16.mxu0 0
    %2659 = vmatpush1.bf16.xpose.msra.mxu0 0
    %2660 = vmatprep.subr.bf16.mxu0 0
    %2661 = vmatpush1.bf16.xpose.msra.mxu0 0
    %2662 = vmatprep.subr.bf16.mxu0 0
    %2663 = vmatpush1.bf16.xpose.msra.mxu0 0
    %2664 = vmatprep.subr.bf16.mxu0 0
    %2665 = vmatpush1.bf16.xpose.msra.mxu0 0
    %2666 = vmatprep.subr.bf16.mxu0 0
    %2667 = vmatpush1.bf16.xpose.msra.mxu0 0
    %2668 = vmatprep.mubr.bf16.mxu0 0
    %2669 = vmatmul.mubr.bf16.gmra.mrb[0].mxu0 %v2631
    %v2670 = vpop.f32.mrb[0].mxu0
    %v2671 = vadd.f32 %v189, %v2670
    %v2672 = vpop.f32.mrb[0].mxu0
    %v2673 = vpop.f32.mrb[0].mxu0
    %v2674 = vadd.f32 %v190, %v2673
    %v2675 = vpop.f32.mrb[0].mxu0
    %2676 = vdwg.mxu0
    %v2677 = vsel %vm581, %v2671, -inf
    %2678 = vmax.xlane.f32.xlu0 %v2677
    %v2679 = vpop.xlane.xlu0 %2678
    %v2680 = vsel %vm581, %v2674, -inf
    %2681 = vmax.xlane.f32.xlu0 %v2680
    %v2682 = vpop.xlane.xlu0 %2681
    %v2683 = vsub.f32 %v2671, %v2679
    %v2684 = vsub.f32 %v2674, %v2682
    %v2685 = vmul.f32 %v2683, 1.442695
    %v2686 = vpow.pop %v2685
    %v2687 = vmul.f32 %v2684, 1.442695
    %v2688 = vpow.pop %v2687
    %v2689 = vsel %vm581, %v2686, 0.0
    %2690 = vadd.xlane.f32.xlu0 %v2689
    %v2691 = vpop.xlane.xlu0 %2690
    %v2692 = vsel %vm581, %v2688, 0.0
    %2693 = vadd.xlane.f32.xlu0 %v2692
    %v2694 = vpop.xlane.xlu0 %2693
    %v2695 = vrcp.pop %v2691
    %v2696 = vrcp.pop %v2694
    %v2697 = vmul.f32 %v2686, %v2695
    %v2698 = vmul.f32 %v2688, %v2696
    %v2699 = vpack.c.bf16 %v2698, %v2697
    %v2701 = vsel %vm581, %v2699, 0
    %2703 = vmatprep.subr.bf16.mxu0 0
    %2704 = vmatpush1.bf16.msra.mxu0 %v2629
    %2705 = vmatprep.subr.bf16.mxu0 0
    %2706 = vmatpush1.bf16.msra.mxu0 0
    %2707 = vmatprep.subr.bf16.mxu0 0
    %2708 = vmatpush1.bf16.msra.mxu0 0
    %2709 = vmatprep.subr.bf16.mxu0 0
    %2710 = vmatpush1.bf16.msra.mxu0 0
    %2711 = vmatprep.subr.bf16.mxu0 0
    %2712 = vmatpush1.bf16.msra.mxu0 0
    %2713 = vmatprep.subr.bf16.mxu0 0
    %2714 = vmatpush1.bf16.msra.mxu0 0
    %2715 = vmatprep.subr.bf16.mxu0 0
    %2716 = vmatpush1.bf16.msra.mxu0 0
    %2717 = vmatprep.subr.bf16.mxu0 0
    %2718 = vmatpush1.bf16.msra.mxu0 0
    %2719 = vmatprep.subr.bf16.mxu0 0
    %2720 = vmatpush1.bf16.msra.mxu0 0
    %2721 = vmatprep.subr.bf16.mxu0 0
    %2722 = vmatpush1.bf16.msra.mxu0 0
    %2723 = vmatprep.subr.bf16.mxu0 0
    %2724 = vmatpush1.bf16.msra.mxu0 0
    %2725 = vmatprep.subr.bf16.mxu0 0
    %2726 = vmatpush1.bf16.msra.mxu0 0
    %2727 = vmatprep.subr.bf16.mxu0 0
    %2728 = vmatpush1.bf16.msra.mxu0 0
    %2729 = vmatprep.subr.bf16.mxu0 0
    %2730 = vmatpush1.bf16.msra.mxu0 0
    %2731 = vmatprep.subr.bf16.mxu0 0
    %2732 = vmatpush1.bf16.msra.mxu0 0
    %2733 = vmatprep.subr.bf16.mxu0 0
    %2734 = vmatpush1.bf16.msra.mxu0 0
    %2735 = vmatprep.mubr.bf16.mxu0 0
    %2736 = vmatmul.mubr.bf16.gmra.mrb[0].mxu0 %v2701
    %v2737 = vpop.f32.mrb[0].mxu0
    %v2738 = vadd.f32 0.0, %v2737
    %v2739 = vpop.f32.mrb[0].mxu0
    %v2740 = vpop.f32.mrb[0].mxu0
    %v2741 = vadd.f32 0.0, %v2740
    %v2742 = vpop.f32.mrb[0].mxu0
    %2743 = vdwg.mxu0
    %v2744 = vpack.c.bf16 %v2741, %v2738
    %s2745 = scalar_lea.vmem [#allocation7], 64
    %v2746 = vld [vmem:[%s2745] sm:$0xf]
    %v2747 = vld [vmem:[%s2745 + $0x4] sm:$0xf]
    %v2748 = vld [vmem:[%s2745 + $0x8] sm:$0xf]
    %v2749 = vld [vmem:[%s2745 + $0xc] sm:$0xf]
    %2750 = vrot.lane.b32.xlu0 %v2346, 96
    %v2751 = vpop.permute.xlu0 %2750
    %2752 = vrot.lane.b32.xlu0 %v2347, 96
    %v2753 = vpop.permute.xlu0 %2752
    %2754 = vrot.lane.b32.xlu0 %v2348, 96
    %v2755 = vpop.permute.xlu0 %2754
    %2756 = vrot.lane.b32.xlu0 %v2349, 96
    %v2757 = vpop.permute.xlu0 %2756
    %2758 = vrot.lane.b32.xlu0 %v2350, 96
    %v2759 = vpop.permute.xlu0 %2758
    %2760 = vrot.lane.b32.xlu0 %v2351, 96
    %v2761 = vpop.permute.xlu0 %2760
    %2762 = vrot.lane.b32.xlu0 %v2352, 96
    %v2763 = vpop.permute.xlu0 %2762
    %2764 = vrot.lane.b32.xlu0 %v2353, 96
    %v2765 = vpop.permute.xlu0 %2764
    %2774 = vrot.lane.b32.xlu0 %v2312, 96
    %v2775 = vpop.permute.xlu0 %2774
    %2777 = vmatprep.subr.bf16.mxu0 0
    %2778 = vmatpush1.bf16.msra.mxu0 %v2751
    %2779 = vmatprep.subr.bf16.mxu0 0
    %2780 = vmatpush1.bf16.msra.mxu0 %v2753
    %2781 = vmatprep.subr.bf16.mxu0 0
    %2782 = vmatpush1.bf16.msra.mxu0 %v2755
    %2783 = vmatprep.subr.bf16.mxu0 0
    %2784 = vmatpush1.bf16.msra.mxu0 %v2757
    %2785 = vmatprep.subr.bf16.mxu0 0
    %2786 = vmatpush1.bf16.msra.mxu0 %v2759
    %2787 = vmatprep.subr.bf16.mxu0 0
    %2788 = vmatpush1.bf16.msra.mxu0 %v2761
    %2789 = vmatprep.subr.bf16.mxu0 0
    %2790 = vmatpush1.bf16.msra.mxu0 %v2763
    %2791 = vmatprep.subr.bf16.mxu0 0
    %2792 = vmatpush1.bf16.msra.mxu0 %v2765
    %2793 = vmatprep.subr.bf16.mxu0 0
    %2794 = vmatpush1.bf16.msra.mxu0 0
    %2795 = vmatprep.subr.bf16.mxu0 0
    %2796 = vmatpush1.bf16.msra.mxu0 0
    %2797 = vmatprep.subr.bf16.mxu0 0
    %2798 = vmatpush1.bf16.msra.mxu0 0
    %2799 = vmatprep.subr.bf16.mxu0 0
    %2800 = vmatpush1.bf16.msra.mxu0 0
    %2801 = vmatprep.subr.bf16.mxu0 0
    %2802 = vmatpush1.bf16.msra.mxu0 0
    %2803 = vmatprep.subr.bf16.mxu0 0
    %2804 = vmatpush1.bf16.msra.mxu0 0
    %2805 = vmatprep.subr.bf16.mxu0 0
    %2806 = vmatpush1.bf16.msra.mxu0 0
    %2807 = vmatprep.subr.bf16.mxu0 0
    %2808 = vmatpush1.bf16.msra.mxu0 0
    %2809 = vmatprep.mubr.bf16.mxu0 0
    %2810 = vmatmul.mubr.bf16.gmra.mrb[0].mxu0 %v2288
    %v2811 = vpop.f32.mrb[0].mxu0
    %v2812 = vadd.f32 %v2775, %v2811
    %v2813 = vpop.f32.mrb[0].mxu0
    %v2814 = vpop.f32.mrb[0].mxu0
    %v2815 = vadd.f32 %v2775, %v2814
    %v2816 = vpop.f32.mrb[0].mxu0
    %2817 = vdwg.mxu0
    %v2818 = vpack.c.bf16 %v2815, %v2812
    %2819 = vrot.lane.b32.xlu0 %v2459, 96
    %v2820 = vpop.permute.xlu0 %2819
    %2821 = vrot.lane.b32.xlu0 %v2460, 96
    %v2822 = vpop.permute.xlu0 %2821
    %2823 = vrot.lane.b32.xlu0 %v2461, 96
    %v2824 = vpop.permute.xlu0 %2823
    %2825 = vrot.lane.b32.xlu0 %v2462, 96
    %v2826 = vpop.permute.xlu0 %2825
    %2827 = vrot.lane.b32.xlu0 %v2463, 96
    %v2828 = vpop.permute.xlu0 %2827
    %2829 = vrot.lane.b32.xlu0 %v2464, 96
    %v2830 = vpop.permute.xlu0 %2829
    %2831 = vrot.lane.b32.xlu0 %v2465, 96
    %v2832 = vpop.permute.xlu0 %2831
    %2833 = vrot.lane.b32.xlu0 %v2466, 96
    %v2834 = vpop.permute.xlu0 %2833
    %2843 = vrot.lane.b32.xlu0 %v2425, 96
    %v2844 = vpop.permute.xlu0 %2843
    %2846 = vmatprep.subr.bf16.mxu0 0
    %2847 = vmatpush1.bf16.msra.mxu0 %v2820
    %2848 = vmatprep.subr.bf16.mxu0 0
    %2849 = vmatpush1.bf16.msra.mxu0 %v2822
    %2850 = vmatprep.subr.bf16.mxu0 0
    %2851 = vmatpush1.bf16.msra.mxu0 %v2824
    %2852 = vmatprep.subr.bf16.mxu0 0
    %2853 = vmatpush1.bf16.msra.mxu0 %v2826
    %2854 = vmatprep.subr.bf16.mxu0 0
    %2855 = vmatpush1.bf16.msra.mxu0 %v2828
    %2856 = vmatprep.subr.bf16.mxu0 0
    %2857 = vmatpush1.bf16.msra.mxu0 %v2830
    %2858 = vmatprep.subr.bf16.mxu0 0
    %2859 = vmatpush1.bf16.msra.mxu0 %v2832
    %2860 = vmatprep.subr.bf16.mxu0 0
    %2861 = vmatpush1.bf16.msra.mxu0 %v2834
    %2862 = vmatprep.subr.bf16.mxu0 0
    %2863 = vmatpush1.bf16.msra.mxu0 0
    %2864 = vmatprep.subr.bf16.mxu0 0
    %2865 = vmatpush1.bf16.msra.mxu0 0
    %2866 = vmatprep.subr.bf16.mxu0 0
    %2867 = vmatpush1.bf16.msra.mxu0 0
    %2868 = vmatprep.subr.bf16.mxu0 0
    %2869 = vmatpush1.bf16.msra.mxu0 0
    %2870 = vmatprep.subr.bf16.mxu0 0
    %2871 = vmatpush1.bf16.msra.mxu0 0
    %2872 = vmatprep.subr.bf16.mxu0 0
    %2873 = vmatpush1.bf16.msra.mxu0 0
    %2874 = vmatprep.subr.bf16.mxu0 0
    %2875 = vmatpush1.bf16.msra.mxu0 0
    %2876 = vmatprep.subr.bf16.mxu0 0
    %2877 = vmatpush1.bf16.msra.mxu0 0
    %2878 = vmatprep.mubr.bf16.mxu0 0
    %2879 = vmatmul.mubr.bf16.gmra.mrb[0].mxu0 %v2288
    %v2880 = vpop.f32.mrb[0].mxu0
    %v2881 = vadd.f32 %v2844, %v2880
    %v2882 = vpop.f32.mrb[0].mxu0
    %v2883 = vpop.f32.mrb[0].mxu0
    %v2884 = vadd.f32 %v2844, %v2883
    %v2885 = vpop.f32.mrb[0].mxu0
    %2886 = vdwg.mxu0
    %v2887 = vpack.c.bf16 %v2884, %v2881
    %2888 = vrot.lane.b32.xlu0 %v2572, 96
    %v2889 = vpop.permute.xlu0 %2888
    %2890 = vrot.lane.b32.xlu0 %v2573, 96
    %v2891 = vpop.permute.xlu0 %2890
    %2892 = vrot.lane.b32.xlu0 %v2574, 96
    %v2893 = vpop.permute.xlu0 %2892
    %2894 = vrot.lane.b32.xlu0 %v2575, 96
    %v2895 = vpop.permute.xlu0 %2894
    %2896 = vrot.lane.b32.xlu0 %v2576, 96
    %v2897 = vpop.permute.xlu0 %2896
    %2898 = vrot.lane.b32.xlu0 %v2577, 96
    %v2899 = vpop.permute.xlu0 %2898
    %2900 = vrot.lane.b32.xlu0 %v2578, 96
    %v2901 = vpop.permute.xlu0 %2900
    %2902 = vrot.lane.b32.xlu0 %v2579, 96
    %v2903 = vpop.permute.xlu0 %2902
    %2912 = vrot.lane.b32.xlu0 %v2538, 96
    %v2913 = vpop.permute.xlu0 %2912
    %2915 = vmatprep.subr.bf16.mxu0 0
    %2916 = vmatpush1.bf16.msra.mxu0 %v2889
    %2917 = vmatprep.subr.bf16.mxu0 0
    %2918 = vmatpush1.bf16.msra.mxu0 %v2891
    %2919 = vmatprep.subr.bf16.mxu0 0
    %2920 = vmatpush1.bf16.msra.mxu0 %v2893
    %2921 = vmatprep.subr.bf16.mxu0 0
    %2922 = vmatpush1.bf16.msra.mxu0 %v2895
    %2923 = vmatprep.subr.bf16.mxu0 0
    %2924 = vmatpush1.bf16.msra.mxu0 %v2897
    %2925 = vmatprep.subr.bf16.mxu0 0
    %2926 = vmatpush1.bf16.msra.mxu0 %v2899
    %2927 = vmatprep.subr.bf16.mxu0 0
    %2928 = vmatpush1.bf16.msra.mxu0 %v2901
    %2929 = vmatprep.subr.bf16.mxu0 0
    %2930 = vmatpush1.bf16.msra.mxu0 %v2903
    %2931 = vmatprep.subr.bf16.mxu0 0
    %2932 = vmatpush1.bf16.msra.mxu0 0
    %2933 = vmatprep.subr.bf16.mxu0 0
    %2934 = vmatpush1.bf16.msra.mxu0 0
    %2935 = vmatprep.subr.bf16.mxu0 0
    %2936 = vmatpush1.bf16.msra.mxu0 0
    %2937 = vmatprep.subr.bf16.mxu0 0
    %2938 = vmatpush1.bf16.msra.mxu0 0
    %2939 = vmatprep.subr.bf16.mxu0 0
    %2940 = vmatpush1.bf16.msra.mxu0 0
    %2941 = vmatprep.subr.bf16.mxu0 0
    %2942 = vmatpush1.bf16.msra.mxu0 0
    %2943 = vmatprep.subr.bf16.mxu0 0
    %2944 = vmatpush1.bf16.msra.mxu0 0
    %2945 = vmatprep.subr.bf16.mxu0 0
    %2946 = vmatpush1.bf16.msra.mxu0 0
    %2947 = vmatprep.mubr.bf16.mxu0 0
    %2948 = vmatmul.mubr.bf16.gmra.mrb[0].mxu0 %v2288
    %v2949 = vpop.f32.mrb[0].mxu0
    %v2950 = vadd.f32 %v2913, %v2949
    %v2951 = vpop.f32.mrb[0].mxu0
    %v2952 = vpop.f32.mrb[0].mxu0
    %v2953 = vadd.f32 %v2913, %v2952
    %v2954 = vpop.f32.mrb[0].mxu0
    %2955 = vdwg.mxu0
    %v2956 = vpack.c.bf16 %v2953, %v2950
    %v2958 = vsel %vm533, %v2818, 0
    %v2961 = vsel %vm533, %v2887, 0
    %2963 = vmatprep.subr.bf16.mxu0 0
    %2964 = vmatpush1.bf16.xpose.msra.mxu0 %v2961
    %2965 = vmatprep.subr.bf16.mxu0 0
    %2966 = vmatpush1.bf16.xpose.msra.mxu0 0
    %2967 = vmatprep.subr.bf16.mxu0 0
    %2968 = vmatpush1.bf16.xpose.msra.mxu0 0
    %2969 = vmatprep.subr.bf16.mxu0 0
    %2970 = vmatpush1.bf16.xpose.msra.mxu0 0
    %2971 = vmatprep.subr.bf16.mxu0 0
    %2972 = vmatpush1.bf16.xpose.msra.mxu0 0
    %2973 = vmatprep.subr.bf16.mxu0 0
    %2974 = vmatpush1.bf16.xpose.msra.mxu0 0
    %2975 = vmatprep.subr.bf16.mxu0 0
    %2976 = vmatpush1.bf16.xpose.msra.mxu0 0
    %2977 = vmatprep.subr.bf16.mxu0 0
    %2978 = vmatpush1.bf16.xpose.msra.mxu0 0
    %2979 = vmatprep.subr.bf16.mxu0 0
    %2980 = vmatpush1.bf16.xpose.msra.mxu0 0
    %2981 = vmatprep.subr.bf16.mxu0 0
    %2982 = vmatpush1.bf16.xpose.msra.mxu0 0
    %2983 = vmatprep.subr.bf16.mxu0 0
    %2984 = vmatpush1.bf16.xpose.msra.mxu0 0
    %2985 = vmatprep.subr.bf16.mxu0 0
    %2986 = vmatpush1.bf16.xpose.msra.mxu0 0
    %2987 = vmatprep.subr.bf16.mxu0 0
    %2988 = vmatpush1.bf16.xpose.msra.mxu0 0
    %2989 = vmatprep.subr.bf16.mxu0 0
    %2990 = vmatpush1.bf16.xpose.msra.mxu0 0
    %2991 = vmatprep.subr.bf16.mxu0 0
    %2992 = vmatpush1.bf16.xpose.msra.mxu0 0
    %2993 = vmatprep.subr.bf16.mxu0 0
    %2994 = vmatpush1.bf16.xpose.msra.mxu0 0
    %2995 = vmatprep.mubr.bf16.mxu0 0
    %2996 = vmatmul.mubr.bf16.gmra.mrb[0].mxu0 %v2958
    %v2997 = vpop.f32.mrb[0].mxu0
    %v2998 = vadd.f32 %v189, %v2997
    %v2999 = vpop.f32.mrb[0].mxu0
    %v3000 = vpop.f32.mrb[0].mxu0
    %v3001 = vadd.f32 %v190, %v3000
    %v3002 = vpop.f32.mrb[0].mxu0
    %3003 = vdwg.mxu0
    %v3004 = vsel %vm581, %v2998, -inf
    %3005 = vmax.xlane.f32.xlu0 %v3004
    %v3006 = vpop.xlane.xlu0 %3005
    %v3007 = vsel %vm581, %v3001, -inf
    %3008 = vmax.xlane.f32.xlu0 %v3007
    %v3009 = vpop.xlane.xlu0 %3008
    %v3010 = vsub.f32 %v2998, %v3006
    %v3011 = vsub.f32 %v3001, %v3009
    %v3012 = vmul.f32 %v3010, 1.442695
    %v3013 = vpow.pop %v3012
    %v3014 = vmul.f32 %v3011, 1.442695
    %v3015 = vpow.pop %v3014
    %v3016 = vsel %vm581, %v3013, 0.0
    %3017 = vadd.xlane.f32.xlu0 %v3016
    %v3018 = vpop.xlane.xlu0 %3017
    %v3019 = vsel %vm581, %v3015, 0.0
    %3020 = vadd.xlane.f32.xlu0 %v3019
    %v3021 = vpop.xlane.xlu0 %3020
    %v3022 = vrcp.pop %v3018
    %v3023 = vrcp.pop %v3021
    %v3024 = vmul.f32 %v3013, %v3022
    %v3025 = vmul.f32 %v3015, %v3023
    %v3026 = vpack.c.bf16 %v3025, %v3024
    %v3028 = vsel %vm581, %v3026, 0
    %3030 = vmatprep.subr.bf16.mxu0 0
    %3031 = vmatpush1.bf16.msra.mxu0 %v2956
    %3032 = vmatprep.subr.bf16.mxu0 0
    %3033 = vmatpush1.bf16.msra.mxu0 0
    %3034 = vmatprep.subr.bf16.mxu0 0
    %3035 = vmatpush1.bf16.msra.mxu0 0
    %3036 = vmatprep.subr.bf16.mxu0 0
    %3037 = vmatpush1.bf16.msra.mxu0 0
    %3038 = vmatprep.subr.bf16.mxu0 0
    %3039 = vmatpush1.bf16.msra.mxu0 0
    %3040 = vmatprep.subr.bf16.mxu0 0
    %3041 = vmatpush1.bf16.msra.mxu0 0
    %3042 = vmatprep.subr.bf16.mxu0 0
    %3043 = vmatpush1.bf16.msra.mxu0 0
    %3044 = vmatprep.subr.bf16.mxu0 0
    %3045 = vmatpush1.bf16.msra.mxu0 0
    %3046 = vmatprep.subr.bf16.mxu0 0
    %3047 = vmatpush1.bf16.msra.mxu0 0
    %3048 = vmatprep.subr.bf16.mxu0 0
    %3049 = vmatpush1.bf16.msra.mxu0 0
    %3050 = vmatprep.subr.bf16.mxu0 0
    %3051 = vmatpush1.bf16.msra.mxu0 0
    %3052 = vmatprep.subr.bf16.mxu0 0
    %3053 = vmatpush1.bf16.msra.mxu0 0
    %3054 = vmatprep.subr.bf16.mxu0 0
    %3055 = vmatpush1.bf16.msra.mxu0 0
    %3056 = vmatprep.subr.bf16.mxu0 0
    %3057 = vmatpush1.bf16.msra.mxu0 0
    %3058 = vmatprep.subr.bf16.mxu0 0
    %3059 = vmatpush1.bf16.msra.mxu0 0
    %3060 = vmatprep.subr.bf16.mxu0 0
    %3061 = vmatpush1.bf16.msra.mxu0 0
    %3062 = vmatprep.mubr.bf16.mxu0 0
    %3063 = vmatmul.mubr.bf16.gmra.mrb[0].mxu0 %v3028
    %v3064 = vpop.f32.mrb[0].mxu0
    %v3065 = vadd.f32 0.0, %v3064
    %v3066 = vpop.f32.mrb[0].mxu0
    %v3067 = vpop.f32.mrb[0].mxu0
    %v3068 = vadd.f32 0.0, %v3067
    %v3069 = vpop.f32.mrb[0].mxu0
    %3070 = vdwg.mxu0
    %v3071 = vpack.c.bf16 %v3068, %v3065
    %v3072 = vld [vmem:[%s2745 + $0x10] sm:$0xf]
    %v3073 = vld [vmem:[%s2745 + $0x14] sm:$0xf]
    %v3074 = vld [vmem:[%s2745 + $0x18] sm:$0xf]
    %v3075 = vld [vmem:[%s2745 + $0x1c] sm:$0xf]
    %v3080 = vunpack.c.l.b16 %v3072
    %v3081 = vunpack.c.l.b16 %v3073
    %v3082 = vunpack.c.l.b16 %v3074
    %v3083 = vunpack.c.l.b16 %v3075
    %v3084 = vpack.c.b16 %v3081, %v3080
    %v3085 = vpack.c.b16 %v3083, %v3082
    %v3089 = vsel %vm533, %v3071, 0
    %3091 = vmatprep.subr.bf16.mxu0 0
    %3092 = vmatpush1.bf16.msra.mxu0 %v3084
    %3093 = vmatprep.subr.bf16.mxu0 0
    %3094 = vmatpush1.bf16.msra.mxu0 %v3085
    %3095 = vmatprep.subr.bf16.mxu0 0
    %3096 = vmatpush1.bf16.msra.mxu0 0
    %3097 = vmatprep.subr.bf16.mxu0 0
    %3098 = vmatpush1.bf16.msra.mxu0 0
    %3099 = vmatprep.subr.bf16.mxu0 0
    %3100 = vmatpush1.bf16.msra.mxu0 0
    %3101 = vmatprep.subr.bf16.mxu0 0
    %3102 = vmatpush1.bf16.msra.mxu0 0
    %3103 = vmatprep.subr.bf16.mxu0 0
    %3104 = vmatpush1.bf16.msra.mxu0 0
    %3105 = vmatprep.subr.bf16.mxu0 0
    %3106 = vmatpush1.bf16.msra.mxu0 0
    %3107 = vmatprep.subr.bf16.mxu0 0
    %3108 = vmatpush1.bf16.msra.mxu0 0
    %3109 = vmatprep.subr.bf16.mxu0 0
    %3110 = vmatpush1.bf16.msra.mxu0 0
    %3111 = vmatprep.subr.bf16.mxu0 0
    %3112 = vmatpush1.bf16.msra.mxu0 0
    %3113 = vmatprep.subr.bf16.mxu0 0
    %3114 = vmatpush1.bf16.msra.mxu0 0
    %3115 = vmatprep.subr.bf16.mxu0 0
    %3116 = vmatpush1.bf16.msra.mxu0 0
    %3117 = vmatprep.subr.bf16.mxu0 0
    %3118 = vmatpush1.bf16.msra.mxu0 0
    %3119 = vmatprep.subr.bf16.mxu0 0
    %3120 = vmatpush1.bf16.msra.mxu0 0
    %3121 = vmatprep.subr.bf16.mxu0 0
    %3122 = vmatpush1.bf16.msra.mxu0 0
    %3123 = vmatprep.mubr.bf16.mxu0 0
    %3124 = vmatmul.mubr.bf16.gmra.mrb[0].mxu0 %v3089
    %v3125 = vpop.f32.mrb[0].mxu0
    %v3126 = vadd.f32 0.0, %v3125
    %v3127 = vpop.f32.mrb[0].mxu0
    %v3128 = vpop.f32.mrb[0].mxu0
    %v3129 = vadd.f32 0.0, %v3128
    %v3130 = vpop.f32.mrb[0].mxu0
    %3131 = vdwg.mxu0
    %v3136 = vunpack.c.l.b16 %v2746
    %v3137 = vunpack.c.l.b16 %v2747
    %v3138 = vunpack.c.l.b16 %v2748
    %v3139 = vunpack.c.l.b16 %v2749
    %v3140 = vpack.c.b16 %v3137, %v3136
    %v3141 = vpack.c.b16 %v3139, %v3138
    %v3145 = vsel %vm533, %v2744, 0
    %3147 = vmatprep.subr.bf16.mxu0 0
    %3148 = vmatpush1.bf16.msra.mxu0 %v3140
    %3149 = vmatprep.subr.bf16.mxu0 0
    %3150 = vmatpush1.bf16.msra.mxu0 %v3141
    %3151 = vmatprep.subr.bf16.mxu0 0
    %3152 = vmatpush1.bf16.msra.mxu0 0
    %3153 = vmatprep.subr.bf16.mxu0 0
    %3154 = vmatpush1.bf16.msra.mxu0 0
    %3155 = vmatprep.subr.bf16.mxu0 0
    %3156 = vmatpush1.bf16.msra.mxu0 0
    %3157 = vmatprep.subr.bf16.mxu0 0
    %3158 = vmatpush1.bf16.msra.mxu0 0
    %3159 = vmatprep.subr.bf16.mxu0 0
    %3160 = vmatpush1.bf16.msra.mxu0 0
    %3161 = vmatprep.subr.bf16.mxu0 0
    %3162 = vmatpush1.bf16.msra.mxu0 0
    %3163 = vmatprep.subr.bf16.mxu0 0
    %3164 = vmatpush1.bf16.msra.mxu0 0
    %3165 = vmatprep.subr.bf16.mxu0 0
    %3166 = vmatpush1.bf16.msra.mxu0 0
    %3167 = vmatprep.subr.bf16.mxu0 0
    %3168 = vmatpush1.bf16.msra.mxu0 0
    %3169 = vmatprep.subr.bf16.mxu0 0
    %3170 = vmatpush1.bf16.msra.mxu0 0
    %3171 = vmatprep.subr.bf16.mxu0 0
    %3172 = vmatpush1.bf16.msra.mxu0 0
    %3173 = vmatprep.subr.bf16.mxu0 0
    %3174 = vmatpush1.bf16.msra.mxu0 0
    %3175 = vmatprep.subr.bf16.mxu0 0
    %3176 = vmatpush1.bf16.msra.mxu0 0
    %3177 = vmatprep.subr.bf16.mxu0 0
    %3178 = vmatpush1.bf16.msra.mxu0 0
    %3179 = vmatprep.mubr.bf16.mxu0 0
    %3180 = vmatmul.mubr.bf16.gmra.mrb[0].mxu0 %v3145
    %v3181 = vpop.f32.mrb[0].mxu0
    %v3182 = vadd.f32 %v3126, %v3181
    %v3183 = vpop.f32.mrb[0].mxu0
    %v3184 = vpop.f32.mrb[0].mxu0
    %v3185 = vadd.f32 %v3129, %v3184
    %v3186 = vpop.f32.mrb[0].mxu0
    %3187 = vdwg.mxu0
    %3188 = vrot.lane.b32.xlu0 %v2346, 64
    %v3189 = vpop.permute.xlu0 %3188
    %3190 = vrot.lane.b32.xlu0 %v2347, 64
    %v3191 = vpop.permute.xlu0 %3190
    %3192 = vrot.lane.b32.xlu0 %v2348, 64
    %v3193 = vpop.permute.xlu0 %3192
    %3194 = vrot.lane.b32.xlu0 %v2349, 64
    %v3195 = vpop.permute.xlu0 %3194
    %3196 = vrot.lane.b32.xlu0 %v2350, 64
    %v3197 = vpop.permute.xlu0 %3196
    %3198 = vrot.lane.b32.xlu0 %v2351, 64
    %v3199 = vpop.permute.xlu0 %3198
    %3200 = vrot.lane.b32.xlu0 %v2352, 64
    %v3201 = vpop.permute.xlu0 %3200
    %3202 = vrot.lane.b32.xlu0 %v2353, 64
    %v3203 = vpop.permute.xlu0 %3202
    %3212 = vrot.lane.b32.xlu0 %v2312, 64
    %v3213 = vpop.permute.xlu0 %3212
    %3215 = vmatprep.subr.bf16.mxu0 0
    %3216 = vmatpush1.bf16.msra.mxu0 %v3189
    %3217 = vmatprep.subr.bf16.mxu0 0
    %3218 = vmatpush1.bf16.msra.mxu0 %v3191
    %3219 = vmatprep.subr.bf16.mxu0 0
    %3220 = vmatpush1.bf16.msra.mxu0 %v3193
    %3221 = vmatprep.subr.bf16.mxu0 0
    %3222 = vmatpush1.bf16.msra.mxu0 %v3195
    %3223 = vmatprep.subr.bf16.mxu0 0
    %3224 = vmatpush1.bf16.msra.mxu0 %v3197
    %3225 = vmatprep.subr.bf16.mxu0 0
    %3226 = vmatpush1.bf16.msra.mxu0 %v3199
    %3227 = vmatprep.subr.bf16.mxu0 0
    %3228 = vmatpush1.bf16.msra.mxu0 %v3201
    %3229 = vmatprep.subr.bf16.mxu0 0
    %3230 = vmatpush1.bf16.msra.mxu0 %v3203
    %3231 = vmatprep.subr.bf16.mxu0 0
    %3232 = vmatpush1.bf16.msra.mxu0 0
    %3233 = vmatprep.subr.bf16.mxu0 0
    %3234 = vmatpush1.bf16.msra.mxu0 0
    %3235 = vmatprep.subr.bf16.mxu0 0
    %3236 = vmatpush1.bf16.msra.mxu0 0
    %3237 = vmatprep.subr.bf16.mxu0 0
    %3238 = vmatpush1.bf16.msra.mxu0 0
    %3239 = vmatprep.subr.bf16.mxu0 0
    %3240 = vmatpush1.bf16.msra.mxu0 0
    %3241 = vmatprep.subr.bf16.mxu0 0
    %3242 = vmatpush1.bf16.msra.mxu0 0
    %3243 = vmatprep.subr.bf16.mxu0 0
    %3244 = vmatpush1.bf16.msra.mxu0 0
    %3245 = vmatprep.subr.bf16.mxu0 0
    %3246 = vmatpush1.bf16.msra.mxu0 0
    %3247 = vmatprep.mubr.bf16.mxu0 0
    %3248 = vmatmul.mubr.bf16.gmra.mrb[0].mxu0 %v2288
    %v3249 = vpop.f32.mrb[0].mxu0
    %v3250 = vadd.f32 %v3213, %v3249
    %v3251 = vpop.f32.mrb[0].mxu0
    %v3252 = vpop.f32.mrb[0].mxu0
    %v3253 = vadd.f32 %v3213, %v3252
    %v3254 = vpop.f32.mrb[0].mxu0
    %3255 = vdwg.mxu0
    %v3256 = vpack.c.bf16 %v3253, %v3250
    %3257 = vrot.lane.b32.xlu0 %v2459, 64
    %v3258 = vpop.permute.xlu0 %3257
    %3259 = vrot.lane.b32.xlu0 %v2460, 64
    %v3260 = vpop.permute.xlu0 %3259
    %3261 = vrot.lane.b32.xlu0 %v2461, 64
    %v3262 = vpop.permute.xlu0 %3261
    %3263 = vrot.lane.b32.xlu0 %v2462, 64
    %v3264 = vpop.permute.xlu0 %3263
    %3265 = vrot.lane.b32.xlu0 %v2463, 64
    %v3266 = vpop.permute.xlu0 %3265
    %3267 = vrot.lane.b32.xlu0 %v2464, 64
    %v3268 = vpop.permute.xlu0 %3267
    %3269 = vrot.lane.b32.xlu0 %v2465, 64
    %v3270 = vpop.permute.xlu0 %3269
    %3271 = vrot.lane.b32.xlu0 %v2466, 64
    %v3272 = vpop.permute.xlu0 %3271
    %3281 = vrot.lane.b32.xlu0 %v2425, 64
    %v3282 = vpop.permute.xlu0 %3281
    %3284 = vmatprep.subr.bf16.mxu0 0
    %3285 = vmatpush1.bf16.msra.mxu0 %v3258
    %3286 = vmatprep.subr.bf16.mxu0 0
    %3287 = vmatpush1.bf16.msra.mxu0 %v3260
    %3288 = vmatprep.subr.bf16.mxu0 0
    %3289 = vmatpush1.bf16.msra.mxu0 %v3262
    %3290 = vmatprep.subr.bf16.mxu0 0
    %3291 = vmatpush1.bf16.msra.mxu0 %v3264
    %3292 = vmatprep.subr.bf16.mxu0 0
    %3293 = vmatpush1.bf16.msra.mxu0 %v3266
    %3294 = vmatprep.subr.bf16.mxu0 0
    %3295 = vmatpush1.bf16.msra.mxu0 %v3268
    %3296 = vmatprep.subr.bf16.mxu0 0
    %3297 = vmatpush1.bf16.msra.mxu0 %v3270
    %3298 = vmatprep.subr.bf16.mxu0 0
    %3299 = vmatpush1.bf16.msra.mxu0 %v3272
    %3300 = vmatprep.subr.bf16.mxu0 0
    %3301 = vmatpush1.bf16.msra.mxu0 0
    %3302 = vmatprep.subr.bf16.mxu0 0
    %3303 = vmatpush1.bf16.msra.mxu0 0
    %3304 = vmatprep.subr.bf16.mxu0 0
    %3305 = vmatpush1.bf16.msra.mxu0 0
    %3306 = vmatprep.subr.bf16.mxu0 0
    %3307 = vmatpush1.bf16.msra.mxu0 0
    %3308 = vmatprep.subr.bf16.mxu0 0
    %3309 = vmatpush1.bf16.msra.mxu0 0
    %3310 = vmatprep.subr.bf16.mxu0 0
    %3311 = vmatpush1.bf16.msra.mxu0 0
    %3312 = vmatprep.subr.bf16.mxu0 0
    %3313 = vmatpush1.bf16.msra.mxu0 0
    %3314 = vmatprep.subr.bf16.mxu0 0
    %3315 = vmatpush1.bf16.msra.mxu0 0
    %3316 = vmatprep.mubr.bf16.mxu0 0
    %3317 = vmatmul.mubr.bf16.gmra.mrb[0].mxu0 %v2288
    %v3318 = vpop.f32.mrb[0].mxu0
    %v3319 = vadd.f32 %v3282, %v3318
    %v3320 = vpop.f32.mrb[0].mxu0
    %v3321 = vpop.f32.mrb[0].mxu0
    %v3322 = vadd.f32 %v3282, %v3321
    %v3323 = vpop.f32.mrb[0].mxu0
    %3324 = vdwg.mxu0
    %v3325 = vpack.c.bf16 %v3322, %v3319
    %3326 = vrot.lane.b32.xlu0 %v2572, 64
    %v3327 = vpop.permute.xlu0 %3326
    %3328 = vrot.lane.b32.xlu0 %v2573, 64
    %v3329 = vpop.permute.xlu0 %3328
    %3330 = vrot.lane.b32.xlu0 %v2574, 64
    %v3331 = vpop.permute.xlu0 %3330
    %3332 = vrot.lane.b32.xlu0 %v2575, 64
    %v3333 = vpop.permute.xlu0 %3332
    %3334 = vrot.lane.b32.xlu0 %v2576, 64
    %v3335 = vpop.permute.xlu0 %3334
    %3336 = vrot.lane.b32.xlu0 %v2577, 64
    %v3337 = vpop.permute.xlu0 %3336
    %3338 = vrot.lane.b32.xlu0 %v2578, 64
    %v3339 = vpop.permute.xlu0 %3338
    %3340 = vrot.lane.b32.xlu0 %v2579, 64
    %v3341 = vpop.permute.xlu0 %3340
    %3350 = vrot.lane.b32.xlu0 %v2538, 64
    %v3351 = vpop.permute.xlu0 %3350
    %3353 = vmatprep.subr.bf16.mxu0 0
    %3354 = vmatpush1.bf16.msra.mxu0 %v3327
    %3355 = vmatprep.subr.bf16.mxu0 0
    %3356 = vmatpush1.bf16.msra.mxu0 %v3329
    %3357 = vmatprep.subr.bf16.mxu0 0
    %3358 = vmatpush1.bf16.msra.mxu0 %v3331
    %3359 = vmatprep.subr.bf16.mxu0 0
    %3360 = vmatpush1.bf16.msra.mxu0 %v3333
    %3361 = vmatprep.subr.bf16.mxu0 0
    %3362 = vmatpush1.bf16.msra.mxu0 %v3335
    %3363 = vmatprep.subr.bf16.mxu0 0
    %3364 = vmatpush1.bf16.msra.mxu0 %v3337
    %3365 = vmatprep.subr.bf16.mxu0 0
    %3366 = vmatpush1.bf16.msra.mxu0 %v3339
    %3367 = vmatprep.subr.bf16.mxu0 0
    %3368 = vmatpush1.bf16.msra.mxu0 %v3341
    %3369 = vmatprep.subr.bf16.mxu0 0
    %3370 = vmatpush1.bf16.msra.mxu0 0
    %3371 = vmatprep.subr.bf16.mxu0 0
    %3372 = vmatpush1.bf16.msra.mxu0 0
    %3373 = vmatprep.subr.bf16.mxu0 0
    %3374 = vmatpush1.bf16.msra.mxu0 0
    %3375 = vmatprep.subr.bf16.mxu0 0
    %3376 = vmatpush1.bf16.msra.mxu0 0
    %3377 = vmatprep.subr.bf16.mxu0 0
    %3378 = vmatpush1.bf16.msra.mxu0 0
    %3379 = vmatprep.subr.bf16.mxu0 0
    %3380 = vmatpush1.bf16.msra.mxu0 0
    %3381 = vmatprep.subr.bf16.mxu0 0
    %3382 = vmatpush1.bf16.msra.mxu0 0
    %3383 = vmatprep.subr.bf16.mxu0 0
    %3384 = vmatpush1.bf16.msra.mxu0 0
    %3385 = vmatprep.mubr.bf16.mxu0 0
    %3386 = vmatmul.mubr.bf16.gmra.mrb[0].mxu0 %v2288
    %v3387 = vpop.f32.mrb[0].mxu0
    %v3388 = vadd.f32 %v3351, %v3387
    %v3389 = vpop.f32.mrb[0].mxu0
    %v3390 = vpop.f32.mrb[0].mxu0
    %v3391 = vadd.f32 %v3351, %v3390
    %v3392 = vpop.f32.mrb[0].mxu0
    %3393 = vdwg.mxu0
    %v3394 = vpack.c.bf16 %v3391, %v3388
    %v3396 = vsel %vm533, %v3256, 0
    %v3399 = vsel %vm533, %v3325, 0
    %3401 = vmatprep.subr.bf16.mxu0 0
    %3402 = vmatpush1.bf16.xpose.msra.mxu0 %v3399
    %3403 = vmatprep.subr.bf16.mxu0 0
    %3404 = vmatpush1.bf16.xpose.msra.mxu0 0
    %3405 = vmatprep.subr.bf16.mxu0 0
    %3406 = vmatpush1.bf16.xpose.msra.mxu0 0
    %3407 = vmatprep.subr.bf16.mxu0 0
    %3408 = vmatpush1.bf16.xpose.msra.mxu0 0
    %3409 = vmatprep.subr.bf16.mxu0 0
    %3410 = vmatpush1.bf16.xpose.msra.mxu0 0
    %3411 = vmatprep.subr.bf16.mxu0 0
    %3412 = vmatpush1.bf16.xpose.msra.mxu0 0
    %3413 = vmatprep.subr.bf16.mxu0 0
    %3414 = vmatpush1.bf16.xpose.msra.mxu0 0
    %3415 = vmatprep.subr.bf16.mxu0 0
    %3416 = vmatpush1.bf16.xpose.msra.mxu0 0
    %3417 = vmatprep.subr.bf16.mxu0 0
    %3418 = vmatpush1.bf16.xpose.msra.mxu0 0
    %3419 = vmatprep.subr.bf16.mxu0 0
    %3420 = vmatpush1.bf16.xpose.msra.mxu0 0
    %3421 = vmatprep.subr.bf16.mxu0 0
    %3422 = vmatpush1.bf16.xpose.msra.mxu0 0
    %3423 = vmatprep.subr.bf16.mxu0 0
    %3424 = vmatpush1.bf16.xpose.msra.mxu0 0
    %3425 = vmatprep.subr.bf16.mxu0 0
    %3426 = vmatpush1.bf16.xpose.msra.mxu0 0
    %3427 = vmatprep.subr.bf16.mxu0 0
    %3428 = vmatpush1.bf16.xpose.msra.mxu0 0
    %3429 = vmatprep.subr.bf16.mxu0 0
    %3430 = vmatpush1.bf16.xpose.msra.mxu0 0
    %3431 = vmatprep.subr.bf16.mxu0 0
    %3432 = vmatpush1.bf16.xpose.msra.mxu0 0
    %3433 = vmatprep.mubr.bf16.mxu0 0
    %3434 = vmatmul.mubr.bf16.gmra.mrb[0].mxu0 %v3396
    %v3435 = vpop.f32.mrb[0].mxu0
    %v3436 = vadd.f32 %v189, %v3435
    %v3437 = vpop.f32.mrb[0].mxu0
    %v3438 = vpop.f32.mrb[0].mxu0
    %v3439 = vadd.f32 %v190, %v3438
    %v3440 = vpop.f32.mrb[0].mxu0
    %3441 = vdwg.mxu0
    %v3442 = vsel %vm581, %v3436, -inf
    %3443 = vmax.xlane.f32.xlu0 %v3442
    %v3444 = vpop.xlane.xlu0 %3443
    %v3445 = vsel %vm581, %v3439, -inf
    %3446 = vmax.xlane.f32.xlu0 %v3445
    %v3447 = vpop.xlane.xlu0 %3446
    %v3448 = vsub.f32 %v3436, %v3444
    %v3449 = vsub.f32 %v3439, %v3447
    %v3450 = vmul.f32 %v3448, 1.442695
    %v3451 = vpow.pop %v3450
    %v3452 = vmul.f32 %v3449, 1.442695
    %v3453 = vpow.pop %v3452
    %v3454 = vsel %vm581, %v3451, 0.0
    %3455 = vadd.xlane.f32.xlu0 %v3454
    %v3456 = vpop.xlane.xlu0 %3455
    %v3457 = vsel %vm581, %v3453, 0.0
    %3458 = vadd.xlane.f32.xlu0 %v3457
    %v3459 = vpop.xlane.xlu0 %3458
    %v3460 = vrcp.pop %v3456
    %v3461 = vrcp.pop %v3459
    %v3462 = vmul.f32 %v3451, %v3460
    %v3463 = vmul.f32 %v3453, %v3461
    %v3464 = vpack.c.bf16 %v3463, %v3462
    %v3466 = vsel %vm581, %v3464, 0
    %3468 = vmatprep.subr.bf16.mxu0 0
    %3469 = vmatpush1.bf16.msra.mxu0 %v3394
    %3470 = vmatprep.subr.bf16.mxu0 0
    %3471 = vmatpush1.bf16.msra.mxu0 0
    %3472 = vmatprep.subr.bf16.mxu0 0
    %3473 = vmatpush1.bf16.msra.mxu0 0
    %3474 = vmatprep.subr.bf16.mxu0 0
    %3475 = vmatpush1.bf16.msra.mxu0 0
    %3476 = vmatprep.subr.bf16.mxu0 0
    %3477 = vmatpush1.bf16.msra.mxu0 0
    %3478 = vmatprep.subr.bf16.mxu0 0
    %3479 = vmatpush1.bf16.msra.mxu0 0
    %3480 = vmatprep.subr.bf16.mxu0 0
    %3481 = vmatpush1.bf16.msra.mxu0 0
    %3482 = vmatprep.subr.bf16.mxu0 0
    %3483 = vmatpush1.bf16.msra.mxu0 0
    %3484 = vmatprep.subr.bf16.mxu0 0
    %3485 = vmatpush1.bf16.msra.mxu0 0
    %3486 = vmatprep.subr.bf16.mxu0 0
    %3487 = vmatpush1.bf16.msra.mxu0 0
    %3488 = vmatprep.subr.bf16.mxu0 0
    %3489 = vmatpush1.bf16.msra.mxu0 0
    %3490 = vmatprep.subr.bf16.mxu0 0
    %3491 = vmatpush1.bf16.msra.mxu0 0
    %3492 = vmatprep.subr.bf16.mxu0 0
    %3493 = vmatpush1.bf16.msra.mxu0 0
    %3494 = vmatprep.subr.bf16.mxu0 0
    %3495 = vmatpush1.bf16.msra.mxu0 0
    %3496 = vmatprep.subr.bf16.mxu0 0
    %3497 = vmatpush1.bf16.msra.mxu0 0
    %3498 = vmatprep.subr.bf16.mxu0 0
    %3499 = vmatpush1.bf16.msra.mxu0 0
    %3500 = vmatprep.mubr.bf16.mxu0 0
    %3501 = vmatmul.mubr.bf16.gmra.mrb[0].mxu0 %v3466
    %v3502 = vpop.f32.mrb[0].mxu0
    %v3503 = vadd.f32 0.0, %v3502
    %v3504 = vpop.f32.mrb[0].mxu0
    %v3505 = vpop.f32.mrb[0].mxu0
    %v3506 = vadd.f32 0.0, %v3505
    %v3507 = vpop.f32.mrb[0].mxu0
    %3508 = vdwg.mxu0
    %v3509 = vpack.c.bf16 %v3506, %v3503
    %v3510 = vld [vmem:[%s2745 + $0x20] sm:$0xf]
    %v3511 = vld [vmem:[%s2745 + $0x24] sm:$0xf]
    %v3512 = vld [vmem:[%s2745 + $0x28] sm:$0xf]
    %v3513 = vld [vmem:[%s2745 + $0x2c] sm:$0xf]
    %v3518 = vunpack.c.l.b16 %v3510
    %v3519 = vunpack.c.l.b16 %v3511
    %v3520 = vunpack.c.l.b16 %v3512
    %v3521 = vunpack.c.l.b16 %v3513
    %v3522 = vpack.c.b16 %v3519, %v3518
    %v3523 = vpack.c.b16 %v3521, %v3520
    %v3527 = vsel %vm533, %v3509, 0
    %3529 = vmatprep.subr.bf16.mxu0 0
    %3530 = vmatpush1.bf16.msra.mxu0 %v3522
    %3531 = vmatprep.subr.bf16.mxu0 0
    %3532 = vmatpush1.bf16.msra.mxu0 %v3523
    %3533 = vmatprep.subr.bf16.mxu0 0
    %3534 = vmatpush1.bf16.msra.mxu0 0
    %3535 = vmatprep.subr.bf16.mxu0 0
    %3536 = vmatpush1.bf16.msra.mxu0 0
    %3537 = vmatprep.subr.bf16.mxu0 0
    %3538 = vmatpush1.bf16.msra.mxu0 0
    %3539 = vmatprep.subr.bf16.mxu0 0
    %3540 = vmatpush1.bf16.msra.mxu0 0
    %3541 = vmatprep.subr.bf16.mxu0 0
    %3542 = vmatpush1.bf16.msra.mxu0 0
    %3543 = vmatprep.subr.bf16.mxu0 0
    %3544 = vmatpush1.bf16.msra.mxu0 0
    %3545 = vmatprep.subr.bf16.mxu0 0
    %3546 = vmatpush1.bf16.msra.mxu0 0
    %3547 = vmatprep.subr.bf16.mxu0 0
    %3548 = vmatpush1.bf16.msra.mxu0 0
    %3549 = vmatprep.subr.bf16.mxu0 0
    %3550 = vmatpush1.bf16.msra.mxu0 0
    %3551 = vmatprep.subr.bf16.mxu0 0
    %3552 = vmatpush1.bf16.msra.mxu0 0
    %3553 = vmatprep.subr.bf16.mxu0 0
    %3554 = vmatpush1.bf16.msra.mxu0 0
    %3555 = vmatprep.subr.bf16.mxu0 0
    %3556 = vmatpush1.bf16.msra.mxu0 0
    %3557 = vmatprep.subr.bf16.mxu0 0
    %3558 = vmatpush1.bf16.msra.mxu0 0
    %3559 = vmatprep.subr.bf16.mxu0 0
    %3560 = vmatpush1.bf16.msra.mxu0 0
    %3561 = vmatprep.mubr.bf16.mxu0 0
    %3562 = vmatmul.mubr.bf16.gmra.mrb[0].mxu0 %v3527
    %v3563 = vpop.f32.mrb[0].mxu0
    %v3564 = vadd.f32 0.0, %v3563
    %v3565 = vpop.f32.mrb[0].mxu0
    %v3566 = vpop.f32.mrb[0].mxu0
    %v3567 = vadd.f32 0.0, %v3566
    %v3568 = vpop.f32.mrb[0].mxu0
    %3569 = vdwg.mxu0
    %v3570 = vadd.f32 %v3182, %v3564
    %v3571 = vadd.f32 %v3185, %v3567
    %3572 = vrot.lane.b32.xlu0 %v2346, 32
    %v3573 = vpop.permute.xlu0 %3572
    %3574 = vrot.lane.b32.xlu0 %v2347, 32
    %v3575 = vpop.permute.xlu0 %3574
    %3576 = vrot.lane.b32.xlu0 %v2348, 32
    %v3577 = vpop.permute.xlu0 %3576
    %3578 = vrot.lane.b32.xlu0 %v2349, 32
    %v3579 = vpop.permute.xlu0 %3578
    %3580 = vrot.lane.b32.xlu0 %v2350, 32
    %v3581 = vpop.permute.xlu0 %3580
    %3582 = vrot.lane.b32.xlu0 %v2351, 32
    %v3583 = vpop.permute.xlu0 %3582
    %3584 = vrot.lane.b32.xlu0 %v2352, 32
    %v3585 = vpop.permute.xlu0 %3584
    %3586 = vrot.lane.b32.xlu0 %v2353, 32
    %v3587 = vpop.permute.xlu0 %3586
    %3596 = vrot.lane.b32.xlu0 %v2312, 32
    %v3597 = vpop.permute.xlu0 %3596
    %3599 = vmatprep.subr.bf16.mxu0 0
    %3600 = vmatpush1.bf16.msra.mxu0 %v3573
    %3601 = vmatprep.subr.bf16.mxu0 0
    %3602 = vmatpush1.bf16.msra.mxu0 %v3575
    %3603 = vmatprep.subr.bf16.mxu0 0
    %3604 = vmatpush1.bf16.msra.mxu0 %v3577
    %3605 = vmatprep.subr.bf16.mxu0 0
    %3606 = vmatpush1.bf16.msra.mxu0 %v3579
    %3607 = vmatprep.subr.bf16.mxu0 0
    %3608 = vmatpush1.bf16.msra.mxu0 %v3581
    %3609 = vmatprep.subr.bf16.mxu0 0
    %3610 = vmatpush1.bf16.msra.mxu0 %v3583
    %3611 = vmatprep.subr.bf16.mxu0 0
    %3612 = vmatpush1.bf16.msra.mxu0 %v3585
    %3613 = vmatprep.subr.bf16.mxu0 0
    %3614 = vmatpush1.bf16.msra.mxu0 %v3587
    %3615 = vmatprep.subr.bf16.mxu0 0
    %3616 = vmatpush1.bf16.msra.mxu0 0
    %3617 = vmatprep.subr.bf16.mxu0 0
    %3618 = vmatpush1.bf16.msra.mxu0 0
    %3619 = vmatprep.subr.bf16.mxu0 0
    %3620 = vmatpush1.bf16.msra.mxu0 0
    %3621 = vmatprep.subr.bf16.mxu0 0
    %3622 = vmatpush1.bf16.msra.mxu0 0
    %3623 = vmatprep.subr.bf16.mxu0 0
    %3624 = vmatpush1.bf16.msra.mxu0 0
    %3625 = vmatprep.subr.bf16.mxu0 0
    %3626 = vmatpush1.bf16.msra.mxu0 0
    %3627 = vmatprep.subr.bf16.mxu0 0
    %3628 = vmatpush1.bf16.msra.mxu0 0
    %3629 = vmatprep.subr.bf16.mxu0 0
    %3630 = vmatpush1.bf16.msra.mxu0 0
    %3631 = vmatprep.mubr.bf16.mxu0 0
    %3632 = vmatmul.mubr.bf16.gmra.mrb[0].mxu0 %v2288
    %v3633 = vpop.f32.mrb[0].mxu0
    %v3634 = vadd.f32 %v3597, %v3633
    %v3635 = vpop.f32.mrb[0].mxu0
    %v3636 = vpop.f32.mrb[0].mxu0
    %v3637 = vadd.f32 %v3597, %v3636
    %v3638 = vpop.f32.mrb[0].mxu0
    %3639 = vdwg.mxu0
    %v3640 = vpack.c.bf16 %v3637, %v3634
    %3641 = vrot.lane.b32.xlu0 %v2459, 32
    %v3642 = vpop.permute.xlu0 %3641
    %3643 = vrot.lane.b32.xlu0 %v2460, 32
    %v3644 = vpop.permute.xlu0 %3643
    %3645 = vrot.lane.b32.xlu0 %v2461, 32
    %v3646 = vpop.permute.xlu0 %3645
    %3647 = vrot.lane.b32.xlu0 %v2462, 32
    %v3648 = vpop.permute.xlu0 %3647
    %3649 = vrot.lane.b32.xlu0 %v2463, 32
    %v3650 = vpop.permute.xlu0 %3649
    %3651 = vrot.lane.b32.xlu0 %v2464, 32
    %v3652 = vpop.permute.xlu0 %3651
    %3653 = vrot.lane.b32.xlu0 %v2465, 32
    %v3654 = vpop.permute.xlu0 %3653
    %3655 = vrot.lane.b32.xlu0 %v2466, 32
    %v3656 = vpop.permute.xlu0 %3655
    %3665 = vrot.lane.b32.xlu0 %v2425, 32
    %v3666 = vpop.permute.xlu0 %3665
    %3668 = vmatprep.subr.bf16.mxu0 0
    %3669 = vmatpush1.bf16.msra.mxu0 %v3642
    %3670 = vmatprep.subr.bf16.mxu0 0
    %3671 = vmatpush1.bf16.msra.mxu0 %v3644
    %3672 = vmatprep.subr.bf16.mxu0 0
    %3673 = vmatpush1.bf16.msra.mxu0 %v3646
    %3674 = vmatprep.subr.bf16.mxu0 0
    %3675 = vmatpush1.bf16.msra.mxu0 %v3648
    %3676 = vmatprep.subr.bf16.mxu0 0
    %3677 = vmatpush1.bf16.msra.mxu0 %v3650
    %3678 = vmatprep.subr.bf16.mxu0 0
    %3679 = vmatpush1.bf16.msra.mxu0 %v3652
    %3680 = vmatprep.subr.bf16.mxu0 0
    %3681 = vmatpush1.bf16.msra.mxu0 %v3654
    %3682 = vmatprep.subr.bf16.mxu0 0
    %3683 = vmatpush1.bf16.msra.mxu0 %v3656
    %3684 = vmatprep.subr.bf16.mxu0 0
    %3685 = vmatpush1.bf16.msra.mxu0 0
    %3686 = vmatprep.subr.bf16.mxu0 0
    %3687 = vmatpush1.bf16.msra.mxu0 0
    %3688 = vmatprep.subr.bf16.mxu0 0
    %3689 = vmatpush1.bf16.msra.mxu0 0
    %3690 = vmatprep.subr.bf16.mxu0 0
    %3691 = vmatpush1.bf16.msra.mxu0 0
    %3692 = vmatprep.subr.bf16.mxu0 0
    %3693 = vmatpush1.bf16.msra.mxu0 0
    %3694 = vmatprep.subr.bf16.mxu0 0
    %3695 = vmatpush1.bf16.msra.mxu0 0
    %3696 = vmatprep.subr.bf16.mxu0 0
    %3697 = vmatpush1.bf16.msra.mxu0 0
    %3698 = vmatprep.subr.bf16.mxu0 0
    %3699 = vmatpush1.bf16.msra.mxu0 0
    %3700 = vmatprep.mubr.bf16.mxu0 0
    %3701 = vmatmul.mubr.bf16.gmra.mrb[0].mxu0 %v2288
    %v3702 = vpop.f32.mrb[0].mxu0
    %v3703 = vadd.f32 %v3666, %v3702
    %v3704 = vpop.f32.mrb[0].mxu0
    %v3705 = vpop.f32.mrb[0].mxu0
    %v3706 = vadd.f32 %v3666, %v3705
    %v3707 = vpop.f32.mrb[0].mxu0
    %3708 = vdwg.mxu0
    %v3709 = vpack.c.bf16 %v3706, %v3703
    %3710 = vrot.lane.b32.xlu0 %v2572, 32
    %v3711 = vpop.permute.xlu0 %3710
    %3712 = vrot.lane.b32.xlu0 %v2573, 32
    %v3713 = vpop.permute.xlu0 %3712
    %3714 = vrot.lane.b32.xlu0 %v2574, 32
    %v3715 = vpop.permute.xlu0 %3714
    %3716 = vrot.lane.b32.xlu0 %v2575, 32
    %v3717 = vpop.permute.xlu0 %3716
    %3718 = vrot.lane.b32.xlu0 %v2576, 32
    %v3719 = vpop.permute.xlu0 %3718
    %3720 = vrot.lane.b32.xlu0 %v2577, 32
    %v3721 = vpop.permute.xlu0 %3720
    %3722 = vrot.lane.b32.xlu0 %v2578, 32
    %v3723 = vpop.permute.xlu0 %3722
    %3724 = vrot.lane.b32.xlu0 %v2579, 32
    %v3725 = vpop.permute.xlu0 %3724
    %3734 = vrot.lane.b32.xlu0 %v2538, 32
    %v3735 = vpop.permute.xlu0 %3734
    %3737 = vmatprep.subr.bf16.mxu0 0
    %3738 = vmatpush1.bf16.msra.mxu0 %v3711
    %3739 = vmatprep.subr.bf16.mxu0 0
    %3740 = vmatpush1.bf16.msra.mxu0 %v3713
    %3741 = vmatprep.subr.bf16.mxu0 0
    %3742 = vmatpush1.bf16.msra.mxu0 %v3715
    %3743 = vmatprep.subr.bf16.mxu0 0
    %3744 = vmatpush1.bf16.msra.mxu0 %v3717
    %3745 = vmatprep.subr.bf16.mxu0 0
    %3746 = vmatpush1.bf16.msra.mxu0 %v3719
    %3747 = vmatprep.subr.bf16.mxu0 0
    %3748 = vmatpush1.bf16.msra.mxu0 %v3721
    %3749 = vmatprep.subr.bf16.mxu0 0
    %3750 = vmatpush1.bf16.msra.mxu0 %v3723
    %3751 = vmatprep.subr.bf16.mxu0 0
    %3752 = vmatpush1.bf16.msra.mxu0 %v3725
    %3753 = vmatprep.subr.bf16.mxu0 0
    %3754 = vmatpush1.bf16.msra.mxu0 0
    %3755 = vmatprep.subr.bf16.mxu0 0
    %3756 = vmatpush1.bf16.msra.mxu0 0
    %3757 = vmatprep.subr.bf16.mxu0 0
    %3758 = vmatpush1.bf16.msra.mxu0 0
    %3759 = vmatprep.subr.bf16.mxu0 0
    %3760 = vmatpush1.bf16.msra.mxu0 0
    %3761 = vmatprep.subr.bf16.mxu0 0
    %3762 = vmatpush1.bf16.msra.mxu0 0
    %3763 = vmatprep.subr.bf16.mxu0 0
    %3764 = vmatpush1.bf16.msra.mxu0 0
    %3765 = vmatprep.subr.bf16.mxu0 0
    %3766 = vmatpush1.bf16.msra.mxu0 0
    %3767 = vmatprep.subr.bf16.mxu0 0
    %3768 = vmatpush1.bf16.msra.mxu0 0
    %3769 = vmatprep.mubr.bf16.mxu0 0
    %3770 = vmatmul.mubr.bf16.gmra.mrb[0].mxu0 %v2288
    %v3771 = vpop.f32.mrb[0].mxu0
    %v3772 = vadd.f32 %v3735, %v3771
    %v3773 = vpop.f32.mrb[0].mxu0
    %v3774 = vpop.f32.mrb[0].mxu0
    %v3775 = vadd.f32 %v3735, %v3774
    %v3776 = vpop.f32.mrb[0].mxu0
    %3777 = vdwg.mxu0
    %v3778 = vpack.c.bf16 %v3775, %v3772
    %v3780 = vsel %vm533, %v3640, 0
    %v3783 = vsel %vm533, %v3709, 0
    %3785 = vmatprep.subr.bf16.mxu0 0
    %3786 = vmatpush1.bf16.xpose.msra.mxu0 %v3783
    %3787 = vmatprep.subr.bf16.mxu0 0
    %3788 = vmatpush1.bf16.xpose.msra.mxu0 0
    %3789 = vmatprep.subr.bf16.mxu0 0
    %3790 = vmatpush1.bf16.xpose.msra.mxu0 0
    %3791 = vmatprep.subr.bf16.mxu0 0
    %3792 = vmatpush1.bf16.xpose.msra.mxu0 0
    %3793 = vmatprep.subr.bf16.mxu0 0
    %3794 = vmatpush1.bf16.xpose.msra.mxu0 0
    %3795 = vmatprep.subr.bf16.mxu0 0
    %3796 = vmatpush1.bf16.xpose.msra.mxu0 0
    %3797 = vmatprep.subr.bf16.mxu0 0
    %3798 = vmatpush1.bf16.xpose.msra.mxu0 0
    %3799 = vmatprep.subr.bf16.mxu0 0
    %3800 = vmatpush1.bf16.xpose.msra.mxu0 0
    %3801 = vmatprep.subr.bf16.mxu0 0
    %3802 = vmatpush1.bf16.xpose.msra.mxu0 0
    %3803 = vmatprep.subr.bf16.mxu0 0
    %3804 = vmatpush1.bf16.xpose.msra.mxu0 0
    %3805 = vmatprep.subr.bf16.mxu0 0
    %3806 = vmatpush1.bf16.xpose.msra.mxu0 0
    %3807 = vmatprep.subr.bf16.mxu0 0
    %3808 = vmatpush1.bf16.xpose.msra.mxu0 0
    %3809 = vmatprep.subr.bf16.mxu0 0
    %3810 = vmatpush1.bf16.xpose.msra.mxu0 0
    %3811 = vmatprep.subr.bf16.mxu0 0
    %3812 = vmatpush1.bf16.xpose.msra.mxu0 0
    %3813 = vmatprep.subr.bf16.mxu0 0
    %3814 = vmatpush1.bf16.xpose.msra.mxu0 0
    %3815 = vmatprep.subr.bf16.mxu0 0
    %3816 = vmatpush1.bf16.xpose.msra.mxu0 0
    %3817 = vmatprep.mubr.bf16.mxu0 0
    %3818 = vmatmul.mubr.bf16.gmra.mrb[0].mxu0 %v3780
    %v3819 = vpop.f32.mrb[0].mxu0
    %v3820 = vadd.f32 %v189, %v3819
    %v3821 = vpop.f32.mrb[0].mxu0
    %v3822 = vpop.f32.mrb[0].mxu0
    %v3823 = vadd.f32 %v190, %v3822
    %v3824 = vpop.f32.mrb[0].mxu0
    %3825 = vdwg.mxu0
    %v3826 = vsel %vm581, %v3820, -inf
    %3827 = vmax.xlane.f32.xlu0 %v3826
    %v3828 = vpop.xlane.xlu0 %3827
    %v3829 = vsel %vm581, %v3823, -inf
    %3830 = vmax.xlane.f32.xlu0 %v3829
    %v3831 = vpop.xlane.xlu0 %3830
    %v3832 = vsub.f32 %v3820, %v3828
    %v3833 = vsub.f32 %v3823, %v3831
    %v3834 = vmul.f32 %v3832, 1.442695
    %v3835 = vpow.pop %v3834
    %v3836 = vmul.f32 %v3833, 1.442695
    %v3837 = vpow.pop %v3836
    %v3838 = vsel %vm581, %v3835, 0.0
    %3839 = vadd.xlane.f32.xlu0 %v3838
    %v3840 = vpop.xlane.xlu0 %3839
    %v3841 = vsel %vm581, %v3837, 0.0
    %3842 = vadd.xlane.f32.xlu0 %v3841
    %v3843 = vpop.xlane.xlu0 %3842
    %v3844 = vrcp.pop %v3840
    %v3845 = vrcp.pop %v3843
    %v3846 = vmul.f32 %v3835, %v3844
    %v3847 = vmul.f32 %v3837, %v3845
    %v3848 = vpack.c.bf16 %v3847, %v3846
    %v3850 = vsel %vm581, %v3848, 0
    %3852 = vmatprep.subr.bf16.mxu0 0
    %3853 = vmatpush1.bf16.msra.mxu0 %v3778
    %3854 = vmatprep.subr.bf16.mxu0 0
    %3855 = vmatpush1.bf16.msra.mxu0 0
    %3856 = vmatprep.subr.bf16.mxu0 0
    %3857 = vmatpush1.bf16.msra.mxu0 0
    %3858 = vmatprep.subr.bf16.mxu0 0
    %3859 = vmatpush1.bf16.msra.mxu0 0
    %3860 = vmatprep.subr.bf16.mxu0 0
    %3861 = vmatpush1.bf16.msra.mxu0 0
    %3862 = vmatprep.subr.bf16.mxu0 0
    %3863 = vmatpush1.bf16.msra.mxu0 0
    %3864 = vmatprep.subr.bf16.mxu0 0
    %3865 = vmatpush1.bf16.msra.mxu0 0
    %3866 = vmatprep.subr.bf16.mxu0 0
    %3867 = vmatpush1.bf16.msra.mxu0 0
    %3868 = vmatprep.subr.bf16.mxu0 0
    %3869 = vmatpush1.bf16.msra.mxu0 0
    %3870 = vmatprep.subr.bf16.mxu0 0
    %3871 = vmatpush1.bf16.msra.mxu0 0
    %3872 = vmatprep.subr.bf16.mxu0 0
    %3873 = vmatpush1.bf16.msra.mxu0 0
    %3874 = vmatprep.subr.bf16.mxu0 0
    %3875 = vmatpush1.bf16.msra.mxu0 0
    %3876 = vmatprep.subr.bf16.mxu0 0
    %3877 = vmatpush1.bf16.msra.mxu0 0
    %3878 = vmatprep.subr.bf16.mxu0 0
    %3879 = vmatpush1.bf16.msra.mxu0 0
    %3880 = vmatprep.subr.bf16.mxu0 0
    %3881 = vmatpush1.bf16.msra.mxu0 0
    %3882 = vmatprep.subr.bf16.mxu0 0
    %3883 = vmatpush1.bf16.msra.mxu0 0
    %3884 = vmatprep.mubr.bf16.mxu0 0
    %3885 = vmatmul.mubr.bf16.gmra.mrb[0].mxu0 %v3850
    %v3886 = vpop.f32.mrb[0].mxu0
    %v3887 = vadd.f32 0.0, %v3886
    %v3888 = vpop.f32.mrb[0].mxu0
    %v3889 = vpop.f32.mrb[0].mxu0
    %v3890 = vadd.f32 0.0, %v3889
    %v3891 = vpop.f32.mrb[0].mxu0
    %3892 = vdwg.mxu0
    %v3893 = vpack.c.bf16 %v3890, %v3887
    %v3894 = vld [vmem:[%s2745 + $0x30] sm:$0xf]
    %v3895 = vld [vmem:[%s2745 + $0x34] sm:$0xf]
    %v3896 = vld [vmem:[%s2745 + $0x38] sm:$0xf]
    %v3897 = vld [vmem:[%s2745 + $0x3c] sm:$0xf]
    %v3902 = vunpack.c.l.b16 %v3894
    %v3903 = vunpack.c.l.b16 %v3895
    %v3904 = vunpack.c.l.b16 %v3896
    %v3905 = vunpack.c.l.b16 %v3897
    %v3906 = vpack.c.b16 %v3903, %v3902
    %v3907 = vpack.c.b16 %v3905, %v3904
    %v3911 = vsel %vm533, %v3893, 0
    %3913 = vmatprep.subr.bf16.mxu0 0
    %3914 = vmatpush1.bf16.msra.mxu0 %v3906
    %3915 = vmatprep.subr.bf16.mxu0 0
    %3916 = vmatpush1.bf16.msra.mxu0 %v3907
    %3917 = vmatprep.subr.bf16.mxu0 0
    %3918 = vmatpush1.bf16.msra.mxu0 0
    %3919 = vmatprep.subr.bf16.mxu0 0
    %3920 = vmatpush1.bf16.msra.mxu0 0
    %3921 = vmatprep.subr.bf16.mxu0 0
    %3922 = vmatpush1.bf16.msra.mxu0 0
    %3923 = vmatprep.subr.bf16.mxu0 0
    %3924 = vmatpush1.bf16.msra.mxu0 0
    %3925 = vmatprep.subr.bf16.mxu0 0
    %3926 = vmatpush1.bf16.msra.mxu0 0
    %3927 = vmatprep.subr.bf16.mxu0 0
    %3928 = vmatpush1.bf16.msra.mxu0 0
    %3929 = vmatprep.subr.bf16.mxu0 0
    %3930 = vmatpush1.bf16.msra.mxu0 0
    %3931 = vmatprep.subr.bf16.mxu0 0
    %3932 = vmatpush1.bf16.msra.mxu0 0
    %3933 = vmatprep.subr.bf16.mxu0 0
    %3934 = vmatpush1.bf16.msra.mxu0 0
    %3935 = vmatprep.subr.bf16.mxu0 0
    %3936 = vmatpush1.bf16.msra.mxu0 0
    %3937 = vmatprep.subr.bf16.mxu0 0
    %3938 = vmatpush1.bf16.msra.mxu0 0
    %3939 = vmatprep.subr.bf16.mxu0 0
    %3940 = vmatpush1.bf16.msra.mxu0 0
    %3941 = vmatprep.subr.bf16.mxu0 0
    %3942 = vmatpush1.bf16.msra.mxu0 0
    %3943 = vmatprep.subr.bf16.mxu0 0
    %3944 = vmatpush1.bf16.msra.mxu0 0
    %3945 = vmatprep.mubr.bf16.mxu0 0
    %3946 = vmatmul.mubr.bf16.gmra.mrb[0].mxu0 %v3911
    %v3947 = vpop.f32.mrb[0].mxu0
    %v3948 = vadd.f32 0.0, %v3947
    %v3949 = vpop.f32.mrb[0].mxu0
    %v3950 = vpop.f32.mrb[0].mxu0
    %v3951 = vadd.f32 0.0, %v3950
    %v3952 = vpop.f32.mrb[0].mxu0
    %3953 = vdwg.mxu0
    %v3954 = vadd.f32 %v3570, %v3948
    %v3955 = vadd.f32 %v3571, %v3951
    %s3956 = scalar_lea.vmem %s4, 1
    %v3957 = vld [vmem:[%s3956] sm:$0x1]
    %v3959 = vlaneseq
    %v3960 = vshrl.u32 %v3959, 7
    %v3961 = vsub.s32 0, %v3960
    %v3962 = vrot.slane %v3957, %v3961
    %v3964 = vadd.f32 %v3954, %v3962
    %v3965 = vadd.f32 %v3955, %v3962
    %v3966 = vadd.f32 %v2286, %v3964
    %v3967 = vadd.f32 %v2287, %v3965
    %s3968 = scalar_lea.vmem %s5, 1
    %v3969 = vld [vmem:[%s3968] sm:$0x1]
    %s3970 = scalar_lea.vmem %s6, 1
    %v3971 = vld [vmem:[%s3970] sm:$0x1]
    %3972 = vadd.xlane.f32.xlu0 %v3966
    %v3973 = vpop.xlane.xlu0 %3972
    %3974 = vadd.xlane.f32.xlu0 %v3967
    %v3975 = vpop.xlane.xlu0 %3974
    %v3976 = vmul.f32 %v3973, %v1877
    %v3977 = vmul.f32 %v3975, %v1877
    %v3978 = vsub.f32 %v3966, %v3976
    %v3979 = vsub.f32 %v3967, %v3977
    %v3980 = vmul.f32 %v3978, %v3978
    %v3981 = vmul.f32 %v3979, %v3979
    %3982 = vadd.xlane.f32.xlu0 %v3980
    %v3983 = vpop.xlane.xlu0 %3982
    %3984 = vadd.xlane.f32.xlu0 %v3981
    %v3985 = vpop.xlane.xlu0 %3984
    %v3986 = vmul.f32 %v3983, %v1877
    %v3987 = vmul.f32 %v3985, %v1877
    %v3988 = vadd.f32 %v3986, 1e-05
    %v3989 = vadd.f32 %v3987, 1e-05
    %v3990 = vrsqrt.pop %v3988
    %v3991 = vrsqrt.pop %v3989
    %v3992 = vmul.f32 %v3978, %v3990
    %v3993 = vmul.f32 %v3979, %v3991
    %v3995 = vlaneseq
    %v3996 = vshrl.u32 %v3995, 7
    %v3997 = vsub.s32 0, %v3996
    %v3998 = vrot.slane %v3969, %v3997
    %v4000 = vmul.f32 %v3992, %v3998
    %v4001 = vmul.f32 %v3993, %v3998
    %v4003 = vlaneseq
    %v4004 = vshrl.u32 %v4003, 7
    %v4005 = vsub.s32 0, %v4004
    %v4006 = vrot.slane %v3971, %v4005
    %v4008 = vadd.f32 %v4000, %v4006
    %v4009 = vadd.f32 %v4001, %v4006
    %v4010 = vpack.c.bf16 %v4009, %v4008
    %s4011 = scalar_lea.vmem [#allocation9], 128
    %v4012 = vld [vmem:[%s4011] sm:$0xff]
    %v4013 = vld [vmem:[%s4011 + $0x8] sm:$0xff]
    %v4014 = vld [vmem:[%s4011 + $0x10] sm:$0xff]
    %v4015 = vld [vmem:[%s4011 + $0x18] sm:$0xff]
    %v4016 = vld [vmem:[%s4011 + $0x20] sm:$0xff]
    %v4017 = vld [vmem:[%s4011 + $0x28] sm:$0xff]
    %v4018 = vld [vmem:[%s4011 + $0x30] sm:$0xff]
    %v4019 = vld [vmem:[%s4011 + $0x38] sm:$0xff]
    %v4020 = vld [vmem:[%s4011 + $0x40] sm:$0xff]
    %v4021 = vld [vmem:[%s4011 + $0x48] sm:$0xff]
    %v4022 = vld [vmem:[%s4011 + $0x50] sm:$0xff]
    %v4023 = vld [vmem:[%s4011 + $0x58] sm:$0xff]
    %v4024 = vld [vmem:[%s4011 + $0x60] sm:$0xff]
    %v4025 = vld [vmem:[%s4011 + $0x68] sm:$0xff]
    %v4026 = vld [vmem:[%s4011 + $0x70] sm:$0xff]
    %v4027 = vld [vmem:[%s4011 + $0x78] sm:$0xff]
    %s4028 = scalar_lea.vmem %s8, 2
    %v4029 = vld [vmem:[%s4028] sm:$0x3]
    %v4031 = vlaneseq
    %v4032 = vshrl.u32 %v4031, 7
    %v4033 = vsub.s32 0, %v4032
    %v4034 = vrot.slane %v4029, %v4033
    %v4035 = vlaneseq
    %v4036 = vshrl.u32 %v4035, 7
    %v4037 = vsub.s32 1, %v4036
    %v4038 = vrot.slane %v4029, %v4037
    %v4057 = vunpack.c.l.b16 %v4012
    %v4058 = vunpack.c.h.b16 %v4012
    %v4059 = vunpack.c.l.b16 %v4013
    %v4060 = vunpack.c.h.b16 %v4013
    %v4061 = vunpack.c.l.b16 %v4014
    %v4062 = vunpack.c.h.b16 %v4014
    %v4063 = vunpack.c.l.b16 %v4015
    %v4064 = vunpack.c.h.b16 %v4015
    %v4065 = vunpack.c.l.b16 %v4016
    %v4066 = vunpack.c.h.b16 %v4016
    %v4067 = vunpack.c.l.b16 %v4017
    %v4068 = vunpack.c.h.b16 %v4017
    %v4069 = vunpack.c.l.b16 %v4018
    %v4070 = vunpack.c.h.b16 %v4018
    %v4071 = vunpack.c.l.b16 %v4019
    %v4072 = vunpack.c.h.b16 %v4019
    %v4073 = vunpack.c.l.b16 %v4020
    %v4074 = vunpack.c.h.b16 %v4020
    %v4075 = vunpack.c.l.b16 %v4021
    %v4076 = vunpack.c.h.b16 %v4021
    %v4077 = vunpack.c.l.b16 %v4022
    %v4078 = vunpack.c.h.b16 %v4022
    %v4079 = vunpack.c.l.b16 %v4023
    %v4080 = vunpack.c.h.b16 %v4023
    %v4081 = vunpack.c.l.b16 %v4024
    %v4082 = vunpack.c.h.b16 %v4024
    %v4083 = vunpack.c.l.b16 %v4025
    %v4084 = vunpack.c.h.b16 %v4025
    %v4085 = vunpack.c.l.b16 %v4026
    %v4086 = vunpack.c.h.b16 %v4026
    %v4087 = vunpack.c.l.b16 %v4027
    %v4088 = vunpack.c.h.b16 %v4027
    %v4089 = vpack.c.b16 %v4059, %v4057
    %v4090 = vpack.c.b16 %v4060, %v4058
    %v4091 = vpack.c.b16 %v4063, %v4061
    %v4092 = vpack.c.b16 %v4064, %v4062
    %v4093 = vpack.c.b16 %v4067, %v4065
    %v4094 = vpack.c.b16 %v4068, %v4066
    %v4095 = vpack.c.b16 %v4071, %v4069
    %v4096 = vpack.c.b16 %v4072, %v4070
    %v4097 = vpack.c.b16 %v4075, %v4073
    %v4098 = vpack.c.b16 %v4076, %v4074
    %v4099 = vpack.c.b16 %v4079, %v4077
    %v4100 = vpack.c.b16 %v4080, %v4078
    %v4101 = vpack.c.b16 %v4083, %v4081
    %v4102 = vpack.c.b16 %v4084, %v4082
    %v4103 = vpack.c.b16 %v4087, %v4085
    %v4104 = vpack.c.b16 %v4088, %v4086
    %4121 = vmatprep.subr.bf16.mxu0 %v4090
    %4122 = vmatpush1.bf16.msra.mxu0 %v4089
    %4123 = vmatprep.subr.bf16.mxu0 %v4092
    %4124 = vmatpush1.bf16.msra.mxu0 %v4091
    %4125 = vmatprep.subr.bf16.mxu0 %v4094
    %4126 = vmatpush1.bf16.msra.mxu0 %v4093
    %4127 = vmatprep.subr.bf16.mxu0 %v4096
    %4128 = vmatpush1.bf16.msra.mxu0 %v4095
    %4129 = vmatprep.subr.bf16.mxu0 %v4098
    %4130 = vmatpush1.bf16.msra.mxu0 %v4097
    %4131 = vmatprep.subr.bf16.mxu0 %v4100
    %4132 = vmatpush1.bf16.msra.mxu0 %v4099
    %4133 = vmatprep.subr.bf16.mxu0 %v4102
    %4134 = vmatpush1.bf16.msra.mxu0 %v4101
    %4135 = vmatprep.subr.bf16.mxu0 %v4104
    %4136 = vmatpush1.bf16.msra.mxu0 %v4103
    %4137 = vmatprep.subr.bf16.mxu0 0
    %4138 = vmatpush1.bf16.msra.mxu0 0
    %4139 = vmatprep.subr.bf16.mxu0 0
    %4140 = vmatpush1.bf16.msra.mxu0 0
    %4141 = vmatprep.subr.bf16.mxu0 0
    %4142 = vmatpush1.bf16.msra.mxu0 0
    %4143 = vmatprep.subr.bf16.mxu0 0
    %4144 = vmatpush1.bf16.msra.mxu0 0
    %4145 = vmatprep.subr.bf16.mxu0 0
    %4146 = vmatpush1.bf16.msra.mxu0 0
    %4147 = vmatprep.subr.bf16.mxu0 0
    %4148 = vmatpush1.bf16.msra.mxu0 0
    %4149 = vmatprep.subr.bf16.mxu0 0
    %4150 = vmatpush1.bf16.msra.mxu0 0
    %4151 = vmatprep.subr.bf16.mxu0 0
    %4152 = vmatpush1.bf16.msra.mxu0 0
    %4153 = vmatprep.mubr.bf16.mxu0 0
    %4154 = vmatmul.mubr.bf16.gmra.mrb[0].mxu0 %v4010
    %v4155 = vpop.f32.mrb[0].mxu0
    %v4156 = vadd.f32 %v4034, %v4155
    %v4157 = vpop.f32.mrb[0].mxu0
    %v4158 = vadd.f32 %v4038, %v4157
    %v4159 = vpop.f32.mrb[0].mxu0
    %v4160 = vadd.f32 %v4034, %v4159
    %v4161 = vpop.f32.mrb[0].mxu0
    %v4162 = vadd.f32 %v4038, %v4161
    %4163 = vdwg.mxu0
    %v4164 = vmax.f32 %v4156, 0.0
    %v4165 = vmax.f32 %v4158, 0.0
    %v4166 = vmax.f32 %v4160, 0.0
    %v4167 = vmax.f32 %v4162, 0.0
    %v4168 = vpack.c.bf16 %v4166, %v4164
    %v4169 = vpack.c.bf16 %v4167, %v4165
    %s4170 = scalar_lea.vmem [#allocation10], 128
    %v4171 = vld [vmem:[%s4170] sm:$0xf]
    %v4172 = vld [vmem:[%s4170 + $0x4] sm:$0xf]
    %v4173 = vld [vmem:[%s4170 + $0x8] sm:$0xf]
    %v4174 = vld [vmem:[%s4170 + $0xc] sm:$0xf]
    %v4175 = vld [vmem:[%s4170 + $0x10] sm:$0xf]
    %v4176 = vld [vmem:[%s4170 + $0x14] sm:$0xf]
    %v4177 = vld [vmem:[%s4170 + $0x18] sm:$0xf]
    %v4178 = vld [vmem:[%s4170 + $0x1c] sm:$0xf]
    %v4179 = vld [vmem:[%s4170 + $0x20] sm:$0xf]
    %v4180 = vld [vmem:[%s4170 + $0x24] sm:$0xf]
    %v4181 = vld [vmem:[%s4170 + $0x28] sm:$0xf]
    %v4182 = vld [vmem:[%s4170 + $0x2c] sm:$0xf]
    %v4183 = vld [vmem:[%s4170 + $0x30] sm:$0xf]
    %v4184 = vld [vmem:[%s4170 + $0x34] sm:$0xf]
    %v4185 = vld [vmem:[%s4170 + $0x38] sm:$0xf]
    %v4186 = vld [vmem:[%s4170 + $0x3c] sm:$0xf]
    %v4187 = vld [vmem:[%s4170 + $0x40] sm:$0xf]
    %v4188 = vld [vmem:[%s4170 + $0x44] sm:$0xf]
    %v4189 = vld [vmem:[%s4170 + $0x48] sm:$0xf]
    %v4190 = vld [vmem:[%s4170 + $0x4c] sm:$0xf]
    %v4191 = vld [vmem:[%s4170 + $0x50] sm:$0xf]
    %v4192 = vld [vmem:[%s4170 + $0x54] sm:$0xf]
    %v4193 = vld [vmem:[%s4170 + $0x58] sm:$0xf]
    %v4194 = vld [vmem:[%s4170 + $0x5c] sm:$0xf]
    %v4195 = vld [vmem:[%s4170 + $0x60] sm:$0xf]
    %v4196 = vld [vmem:[%s4170 + $0x64] sm:$0xf]
    %v4197 = vld [vmem:[%s4170 + $0x68] sm:$0xf]
    %v4198 = vld [vmem:[%s4170 + $0x6c] sm:$0xf]
    %v4199 = vld [vmem:[%s4170 + $0x70] sm:$0xf]
    %v4200 = vld [vmem:[%s4170 + $0x74] sm:$0xf]
    %v4201 = vld [vmem:[%s4170 + $0x78] sm:$0xf]
    %v4202 = vld [vmem:[%s4170 + $0x7c] sm:$0xf]
    %s4203 = scalar_lea.vmem %s10, 1
    %v4204 = vld [vmem:[%s4203] sm:$0x1]
    %v4206 = vlaneseq
    %v4207 = vshrl.u32 %v4206, 7
    %v4208 = vsub.s32 0, %v4207
    %v4209 = vrot.slane %v4204, %v4208
    %v4243 = vunpack.c.l.b16 %v4171
    %v4244 = vunpack.c.l.b16 %v4172
    %v4245 = vunpack.c.l.b16 %v4173
    %v4246 = vunpack.c.l.b16 %v4174
    %v4247 = vunpack.c.l.b16 %v4175
    %v4248 = vunpack.c.l.b16 %v4176
    %v4249 = vunpack.c.l.b16 %v4177
    %v4250 = vunpack.c.l.b16 %v4178
    %v4251 = vunpack.c.l.b16 %v4179
    %v4252 = vunpack.c.l.b16 %v4180
    %v4253 = vunpack.c.l.b16 %v4181
    %v4254 = vunpack.c.l.b16 %v4182
    %v4255 = vunpack.c.l.b16 %v4183
    %v4256 = vunpack.c.l.b16 %v4184
    %v4257 = vunpack.c.l.b16 %v4185
    %v4258 = vunpack.c.l.b16 %v4186
    %v4259 = vunpack.c.l.b16 %v4187
    %v4260 = vunpack.c.l.b16 %v4188
    %v4261 = vunpack.c.l.b16 %v4189
    %v4262 = vunpack.c.l.b16 %v4190
    %v4263 = vunpack.c.l.b16 %v4191
    %v4264 = vunpack.c.l.b16 %v4192
    %v4265 = vunpack.c.l.b16 %v4193
    %v4266 = vunpack.c.l.b16 %v4194
    %v4267 = vunpack.c.l.b16 %v4195
    %v4268 = vunpack.c.l.b16 %v4196
    %v4269 = vunpack.c.l.b16 %v4197
    %v4270 = vunpack.c.l.b16 %v4198
    %v4271 = vunpack.c.l.b16 %v4199
    %v4272 = vunpack.c.l.b16 %v4200
    %v4273 = vunpack.c.l.b16 %v4201
    %v4274 = vunpack.c.l.b16 %v4202
    %v4275 = vpack.c.b16 %v4244, %v4243
    %v4276 = vpack.c.b16 %v4246, %v4245
    %v4277 = vpack.c.b16 %v4248, %v4247
    %v4278 = vpack.c.b16 %v4250, %v4249
    %v4279 = vpack.c.b16 %v4252, %v4251
    %v4280 = vpack.c.b16 %v4254, %v4253
    %v4281 = vpack.c.b16 %v4256, %v4255
    %v4282 = vpack.c.b16 %v4258, %v4257
    %v4283 = vpack.c.b16 %v4260, %v4259
    %v4284 = vpack.c.b16 %v4262, %v4261
    %v4285 = vpack.c.b16 %v4264, %v4263
    %v4286 = vpack.c.b16 %v4266, %v4265
    %v4287 = vpack.c.b16 %v4268, %v4267
    %v4288 = vpack.c.b16 %v4270, %v4269
    %v4289 = vpack.c.b16 %v4272, %v4271
    %v4290 = vpack.c.b16 %v4274, %v4273
    %4307 = vmatprep.subr.bf16.mxu0 0
    %4308 = vmatpush1.bf16.msra.mxu0 %v4275
    %4309 = vmatprep.subr.bf16.mxu0 0
    %4310 = vmatpush1.bf16.msra.mxu0 %v4276
    %4311 = vmatprep.subr.bf16.mxu0 0
    %4312 = vmatpush1.bf16.msra.mxu0 %v4277
    %4313 = vmatprep.subr.bf16.mxu0 0
    %4314 = vmatpush1.bf16.msra.mxu0 %v4278
    %4315 = vmatprep.subr.bf16.mxu0 0
    %4316 = vmatpush1.bf16.msra.mxu0 %v4279
    %4317 = vmatprep.subr.bf16.mxu0 0
    %4318 = vmatpush1.bf16.msra.mxu0 %v4280
    %4319 = vmatprep.subr.bf16.mxu0 0
    %4320 = vmatpush1.bf16.msra.mxu0 %v4281
    %4321 = vmatprep.subr.bf16.mxu0 0
    %4322 = vmatpush1.bf16.msra.mxu0 %v4282
    %4323 = vmatprep.subr.bf16.mxu0 0
    %4324 = vmatpush1.bf16.msra.mxu0 %v4283
    %4325 = vmatprep.subr.bf16.mxu0 0
    %4326 = vmatpush1.bf16.msra.mxu0 %v4284
    %4327 = vmatprep.subr.bf16.mxu0 0
    %4328 = vmatpush1.bf16.msra.mxu0 %v4285
    %4329 = vmatprep.subr.bf16.mxu0 0
    %4330 = vmatpush1.bf16.msra.mxu0 %v4286
    %4331 = vmatprep.subr.bf16.mxu0 0
    %4332 = vmatpush1.bf16.msra.mxu0 %v4287
    %4333 = vmatprep.subr.bf16.mxu0 0
    %4334 = vmatpush1.bf16.msra.mxu0 %v4288
    %4335 = vmatprep.subr.bf16.mxu0 0
    %4336 = vmatpush1.bf16.msra.mxu0 %v4289
    %4337 = vmatprep.subr.bf16.mxu0 0
    %4338 = vmatpush1.bf16.msra.mxu0 %v4290
    %4339 = vmatprep.mubr.bf16.mxu0 %v4169
    %4340 = vmatmul.mubr.bf16.gmra.mrb[0].mxu0 %v4168
    %v4341 = vpop.f32.mrb[0].mxu0
    %v4342 = vadd.f32 %v4209, %v4341
    %v4343 = vpop.f32.mrb[0].mxu0
    %v4344 = vpop.f32.mrb[0].mxu0
    %v4345 = vadd.f32 %v4209, %v4344
    %v4346 = vpop.f32.mrb[0].mxu0
    %4347 = vdwg.mxu0
    %v4348 = vadd.f32 %v4008, %v4342
    %v4349 = vadd.f32 %v4009, %v4345
    %s4350 = scalar_lea.vmem %s11, 1
    %v4351 = vld [vmem:[%s4350] sm:$0x1]
    %s4352 = scalar_lea.vmem %s12, 1
    %v4353 = vld [vmem:[%s4352] sm:$0x1]
    %4354 = vadd.xlane.f32.xlu0 %v4348
    %v4355 = vpop.xlane.xlu0 %4354
    %4356 = vadd.xlane.f32.xlu0 %v4349
    %v4357 = vpop.xlane.xlu0 %4356
    %v4358 = vmul.f32 %v4355, %v1877
    %v4359 = vmul.f32 %v4357, %v1877
    %v4360 = vsub.f32 %v4348, %v4358
    %v4361 = vsub.f32 %v4349, %v4359
    %v4362 = vmul.f32 %v4360, %v4360
    %v4363 = vmul.f32 %v4361, %v4361
    %4364 = vadd.xlane.f32.xlu0 %v4362
    %v4365 = vpop.xlane.xlu0 %4364
    %4366 = vadd.xlane.f32.xlu0 %v4363
    %v4367 = vpop.xlane.xlu0 %4366
    %v4368 = vmul.f32 %v4365, %v1877
    %v4369 = vmul.f32 %v4367, %v1877
    %v4370 = vadd.f32 %v4368, 1e-05
    %v4371 = vadd.f32 %v4369, 1e-05
    %v4372 = vrsqrt.pop %v4370
    %v4373 = vrsqrt.pop %v4371
    %v4374 = vmul.f32 %v4360, %v4372
    %v4375 = vmul.f32 %v4361, %v4373
    %v4377 = vlaneseq
    %v4378 = vshrl.u32 %v4377, 7
    %v4379 = vsub.s32 0, %v4378
    %v4380 = vrot.slane %v4351, %v4379
    %v4382 = vmul.f32 %v4374, %v4380
    %v4383 = vmul.f32 %v4375, %v4380
    %v4385 = vlaneseq
    %v4386 = vshrl.u32 %v4385, 7
    %v4387 = vsub.s32 0, %v4386
    %v4388 = vrot.slane %v4353, %v4387
    %v4390 = vadd.f32 %v4382, %v4388
    %v4391 = vadd.f32 %v4383, %v4388
    %v4392 = vpack.c.bf16 %v4391, %v4390
    %s4393 = scalar_lea.vmem [#allocation4], 384
    %v4394 = vld [vmem:[%s4393] sm:$0xf]
    %v4395 = vld [vmem:[%s4393 + $0xc] sm:$0xf]
    %v4396 = vld [vmem:[%s4393 + $0x18] sm:$0xf]
    %v4397 = vld [vmem:[%s4393 + $0x24] sm:$0xf]
    %v4398 = vld [vmem:[%s4393 + $0x30] sm:$0xf]
    %v4399 = vld [vmem:[%s4393 + $0x3c] sm:$0xf]
    %v4400 = vld [vmem:[%s4393 + $0x48] sm:$0xf]
    %v4401 = vld [vmem:[%s4393 + $0x54] sm:$0xf]
    %v4402 = vld [vmem:[%s4393 + $0x60] sm:$0xf]
    %v4403 = vld [vmem:[%s4393 + $0x6c] sm:$0xf]
    %v4404 = vld [vmem:[%s4393 + $0x78] sm:$0xf]
    %v4405 = vld [vmem:[%s4393 + $0x84] sm:$0xf]
    %v4406 = vld [vmem:[%s4393 + $0x90] sm:$0xf]
    %v4407 = vld [vmem:[%s4393 + $0x9c] sm:$0xf]
    %v4408 = vld [vmem:[%s4393 + $0xa8] sm:$0xf]
    %v4409 = vld [vmem:[%s4393 + $0xb4] sm:$0xf]
    %s4410 = scalar_lea.vmem [#allocation6], 6
    %v4411 = vld [vmem:[%s4410] sm:$0x1]
    %v4413 = vlaneseq
    %v4414 = vshrl.u32 %v4413, 7
    %v4415 = vsub.s32 0, %v4414
    %v4416 = vrot.slane %v4411, %v4415
    %v4434 = vunpack.c.l.b16 %v4394
    %v4435 = vunpack.c.l.b16 %v4395
    %v4436 = vunpack.c.l.b16 %v4396
    %v4437 = vunpack.c.l.b16 %v4397
    %v4438 = vunpack.c.l.b16 %v4398
    %v4439 = vunpack.c.l.b16 %v4399
    %v4440 = vunpack.c.l.b16 %v4400
    %v4441 = vunpack.c.l.b16 %v4401
    %v4442 = vunpack.c.l.b16 %v4402
    %v4443 = vunpack.c.l.b16 %v4403
    %v4444 = vunpack.c.l.b16 %v4404
    %v4445 = vunpack.c.l.b16 %v4405
    %v4446 = vunpack.c.l.b16 %v4406
    %v4447 = vunpack.c.l.b16 %v4407
    %v4448 = vunpack.c.l.b16 %v4408
    %v4449 = vunpack.c.l.b16 %v4409
    %v4450 = vpack.c.b16 %v4435, %v4434
    %v4451 = vpack.c.b16 %v4437, %v4436
    %v4452 = vpack.c.b16 %v4439, %v4438
    %v4453 = vpack.c.b16 %v4441, %v4440
    %v4454 = vpack.c.b16 %v4443, %v4442
    %v4455 = vpack.c.b16 %v4445, %v4444
    %v4456 = vpack.c.b16 %v4447, %v4446
    %v4457 = vpack.c.b16 %v4449, %v4448
    %4466 = vmatprep.subr.bf16.mxu0 0
    %4467 = vmatpush1.bf16.msra.mxu0 %v4450
    %4468 = vmatprep.subr.bf16.mxu0 0
    %4469 = vmatpush1.bf16.msra.mxu0 %v4451
    %4470 = vmatprep.subr.bf16.mxu0 0
    %4471 = vmatpush1.bf16.msra.mxu0 %v4452
    %4472 = vmatprep.subr.bf16.mxu0 0
    %4473 = vmatpush1.bf16.msra.mxu0 %v4453
    %4474 = vmatprep.subr.bf16.mxu0 0
    %4475 = vmatpush1.bf16.msra.mxu0 %v4454
    %4476 = vmatprep.subr.bf16.mxu0 0
    %4477 = vmatpush1.bf16.msra.mxu0 %v4455
    %4478 = vmatprep.subr.bf16.mxu0 0
    %4479 = vmatpush1.bf16.msra.mxu0 %v4456
    %4480 = vmatprep.subr.bf16.mxu0 0
    %4481 = vmatpush1.bf16.msra.mxu0 %v4457
    %4482 = vmatprep.subr.bf16.mxu0 0
    %4483 = vmatpush1.bf16.msra.mxu0 0
    %4484 = vmatprep.subr.bf16.mxu0 0
    %4485 = vmatpush1.bf16.msra.mxu0 0
    %4486 = vmatprep.subr.bf16.mxu0 0
    %4487 = vmatpush1.bf16.msra.mxu0 0
    %4488 = vmatprep.subr.bf16.mxu0 0
    %4489 = vmatpush1.bf16.msra.mxu0 0
    %4490 = vmatprep.subr.bf16.mxu0 0
    %4491 = vmatpush1.bf16.msra.mxu0 0
    %4492 = vmatprep.subr.bf16.mxu0 0
    %4493 = vmatpush1.bf16.msra.mxu0 0
    %4494 = vmatprep.subr.bf16.mxu0 0
    %4495 = vmatpush1.bf16.msra.mxu0 0
    %4496 = vmatprep.subr.bf16.mxu0 0
    %4497 = vmatpush1.bf16.msra.mxu0 0
    %4498 = vmatprep.mubr.bf16.mxu0 0
    %4499 = vmatmul.mubr.bf16.gmra.mrb[0].mxu0 %v4392
    %v4500 = vpop.f32.mrb[0].mxu0
    %v4501 = vadd.f32 %v4416, %v4500
    %v4502 = vpop.f32.mrb[0].mxu0
    %v4503 = vpop.f32.mrb[0].mxu0
    %v4504 = vadd.f32 %v4416, %v4503
    %v4505 = vpop.f32.mrb[0].mxu0
    %4506 = vdwg.mxu0
    %v4507 = vpack.c.bf16 %v4504, %v4501
    %v4508 = vld [vmem:[%s4393 + $0x4] sm:$0xf]
    %v4509 = vld [vmem:[%s4393 + $0x10] sm:$0xf]
    %v4510 = vld [vmem:[%s4393 + $0x1c] sm:$0xf]
    %v4511 = vld [vmem:[%s4393 + $0x28] sm:$0xf]
    %v4512 = vld [vmem:[%s4393 + $0x34] sm:$0xf]
    %v4513 = vld [vmem:[%s4393 + $0x40] sm:$0xf]
    %v4514 = vld [vmem:[%s4393 + $0x4c] sm:$0xf]
    %v4515 = vld [vmem:[%s4393 + $0x58] sm:$0xf]
    %v4516 = vld [vmem:[%s4393 + $0x64] sm:$0xf]
    %v4517 = vld [vmem:[%s4393 + $0x70] sm:$0xf]
    %v4518 = vld [vmem:[%s4393 + $0x7c] sm:$0xf]
    %v4519 = vld [vmem:[%s4393 + $0x88] sm:$0xf]
    %v4520 = vld [vmem:[%s4393 + $0x94] sm:$0xf]
    %v4521 = vld [vmem:[%s4393 + $0xa0] sm:$0xf]
    %v4522 = vld [vmem:[%s4393 + $0xac] sm:$0xf]
    %v4523 = vld [vmem:[%s4393 + $0xb8] sm:$0xf]
    %v4524 = vld [vmem:[%s4410 + $0x1] sm:$0x1]
    %v4526 = vlaneseq
    %v4527 = vshrl.u32 %v4526, 7
    %v4528 = vsub.s32 0, %v4527
    %v4529 = vrot.slane %v4524, %v4528
    %v4547 = vunpack.c.l.b16 %v4508
    %v4548 = vunpack.c.l.b16 %v4509
    %v4549 = vunpack.c.l.b16 %v4510
    %v4550 = vunpack.c.l.b16 %v4511
    %v4551 = vunpack.c.l.b16 %v4512
    %v4552 = vunpack.c.l.b16 %v4513
    %v4553 = vunpack.c.l.b16 %v4514
    %v4554 = vunpack.c.l.b16 %v4515
    %v4555 = vunpack.c.l.b16 %v4516
    %v4556 = vunpack.c.l.b16 %v4517
    %v4557 = vunpack.c.l.b16 %v4518
    %v4558 = vunpack.c.l.b16 %v4519
    %v4559 = vunpack.c.l.b16 %v4520
    %v4560 = vunpack.c.l.b16 %v4521
    %v4561 = vunpack.c.l.b16 %v4522
    %v4562 = vunpack.c.l.b16 %v4523
    %v4563 = vpack.c.b16 %v4548, %v4547
    %v4564 = vpack.c.b16 %v4550, %v4549
    %v4565 = vpack.c.b16 %v4552, %v4551
    %v4566 = vpack.c.b16 %v4554, %v4553
    %v4567 = vpack.c.b16 %v4556, %v4555
    %v4568 = vpack.c.b16 %v4558, %v4557
    %v4569 = vpack.c.b16 %v4560, %v4559
    %v4570 = vpack.c.b16 %v4562, %v4561
    %4579 = vmatprep.subr.bf16.mxu0 0
    %4580 = vmatpush1.bf16.msra.mxu0 %v4563
    %4581 = vmatprep.subr.bf16.mxu0 0
    %4582 = vmatpush1.bf16.msra.mxu0 %v4564
    %4583 = vmatprep.subr.bf16.mxu0 0
    %4584 = vmatpush1.bf16.msra.mxu0 %v4565
    %4585 = vmatprep.subr.bf16.mxu0 0
    %4586 = vmatpush1.bf16.msra.mxu0 %v4566
    %4587 = vmatprep.subr.bf16.mxu0 0
    %4588 = vmatpush1.bf16.msra.mxu0 %v4567
    %4589 = vmatprep.subr.bf16.mxu0 0
    %4590 = vmatpush1.bf16.msra.mxu0 %v4568
    %4591 = vmatprep.subr.bf16.mxu0 0
    %4592 = vmatpush1.bf16.msra.mxu0 %v4569
    %4593 = vmatprep.subr.bf16.mxu0 0
    %4594 = vmatpush1.bf16.msra.mxu0 %v4570
    %4595 = vmatprep.subr.bf16.mxu0 0
    %4596 = vmatpush1.bf16.msra.mxu0 0
    %4597 = vmatprep.subr.bf16.mxu0 0
    %4598 = vmatpush1.bf16.msra.mxu0 0
    %4599 = vmatprep.subr.bf16.mxu0 0
    %4600 = vmatpush1.bf16.msra.mxu0 0
    %4601 = vmatprep.subr.bf16.mxu0 0
    %4602 = vmatpush1.bf16.msra.mxu0 0
    %4603 = vmatprep.subr.bf16.mxu0 0
    %4604 = vmatpush1.bf16.msra.mxu0 0
    %4605 = vmatprep.subr.bf16.mxu0 0
    %4606 = vmatpush1.bf16.msra.mxu0 0
    %4607 = vmatprep.subr.bf16.mxu0 0
    %4608 = vmatpush1.bf16.msra.mxu0 0
    %4609 = vmatprep.subr.bf16.mxu0 0
    %4610 = vmatpush1.bf16.msra.mxu0 0
    %4611 = vmatprep.mubr.bf16.mxu0 0
    %4612 = vmatmul.mubr.bf16.gmra.mrb[0].mxu0 %v4392
    %v4613 = vpop.f32.mrb[0].mxu0
    %v4614 = vadd.f32 %v4529, %v4613
    %v4615 = vpop.f32.mrb[0].mxu0
    %v4616 = vpop.f32.mrb[0].mxu0
    %v4617 = vadd.f32 %v4529, %v4616
    %v4618 = vpop.f32.mrb[0].mxu0
    %4619 = vdwg.mxu0
    %v4620 = vpack.c.bf16 %v4617, %v4614
    %v4621 = vld [vmem:[%s4393 + $0x8] sm:$0xf]
    %v4622 = vld [vmem:[%s4393 + $0x14] sm:$0xf]
    %v4623 = vld [vmem:[%s4393 + $0x20] sm:$0xf]
    %v4624 = vld [vmem:[%s4393 + $0x2c] sm:$0xf]
    %v4625 = vld [vmem:[%s4393 + $0x38] sm:$0xf]
    %v4626 = vld [vmem:[%s4393 + $0x44] sm:$0xf]
    %v4627 = vld [vmem:[%s4393 + $0x50] sm:$0xf]
    %v4628 = vld [vmem:[%s4393 + $0x5c] sm:$0xf]
    %v4629 = vld [vmem:[%s4393 + $0x68] sm:$0xf]
    %v4630 = vld [vmem:[%s4393 + $0x74] sm:$0xf]
    %v4631 = vld [vmem:[%s4393 + $0x80] sm:$0xf]
    %v4632 = vld [vmem:[%s4393 + $0x8c] sm:$0xf]
    %v4633 = vld [vmem:[%s4393 + $0x98] sm:$0xf]
    %v4634 = vld [vmem:[%s4393 + $0xa4] sm:$0xf]
    %v4635 = vld [vmem:[%s4393 + $0xb0] sm:$0xf]
    %v4636 = vld [vmem:[%s4393 + $0xbc] sm:$0xf]
    %v4637 = vld [vmem:[%s4410 + $0x2] sm:$0x1]
    %v4639 = vlaneseq
    %v4640 = vshrl.u32 %v4639, 7
    %v4641 = vsub.s32 0, %v4640
    %v4642 = vrot.slane %v4637, %v4641
    %v4660 = vunpack.c.l.b16 %v4621
    %v4661 = vunpack.c.l.b16 %v4622
    %v4662 = vunpack.c.l.b16 %v4623
    %v4663 = vunpack.c.l.b16 %v4624
    %v4664 = vunpack.c.l.b16 %v4625
    %v4665 = vunpack.c.l.b16 %v4626
    %v4666 = vunpack.c.l.b16 %v4627
    %v4667 = vunpack.c.l.b16 %v4628
    %v4668 = vunpack.c.l.b16 %v4629
    %v4669 = vunpack.c.l.b16 %v4630
    %v4670 = vunpack.c.l.b16 %v4631
    %v4671 = vunpack.c.l.b16 %v4632
    %v4672 = vunpack.c.l.b16 %v4633
    %v4673 = vunpack.c.l.b16 %v4634
    %v4674 = vunpack.c.l.b16 %v4635
    %v4675 = vunpack.c.l.b16 %v4636
    %v4676 = vpack.c.b16 %v4661, %v4660
    %v4677 = vpack.c.b16 %v4663, %v4662
    %v4678 = vpack.c.b16 %v4665, %v4664
    %v4679 = vpack.c.b16 %v4667, %v4666
    %v4680 = vpack.c.b16 %v4669, %v4668
    %v4681 = vpack.c.b16 %v4671, %v4670
    %v4682 = vpack.c.b16 %v4673, %v4672
    %v4683 = vpack.c.b16 %v4675, %v4674
    %4692 = vmatprep.subr.bf16.mxu0 0
    %4693 = vmatpush1.bf16.msra.mxu0 %v4676
    %4694 = vmatprep.subr.bf16.mxu0 0
    %4695 = vmatpush1.bf16.msra.mxu0 %v4677
    %4696 = vmatprep.subr.bf16.mxu0 0
    %4697 = vmatpush1.bf16.msra.mxu0 %v4678
    %4698 = vmatprep.subr.bf16.mxu0 0
    %4699 = vmatpush1.bf16.msra.mxu0 %v4679
    %4700 = vmatprep.subr.bf16.mxu0 0
    %4701 = vmatpush1.bf16.msra.mxu0 %v4680
    %4702 = vmatprep.subr.bf16.mxu0 0
    %4703 = vmatpush1.bf16.msra.mxu0 %v4681
    %4704 = vmatprep.subr.bf16.mxu0 0
    %4705 = vmatpush1.bf16.msra.mxu0 %v4682
    %4706 = vmatprep.subr.bf16.mxu0 0
    %4707 = vmatpush1.bf16.msra.mxu0 %v4683
    %4708 = vmatprep.subr.bf16.mxu0 0
    %4709 = vmatpush1.bf16.msra.mxu0 0
    %4710 = vmatprep.subr.bf16.mxu0 0
    %4711 = vmatpush1.bf16.msra.mxu0 0
    %4712 = vmatprep.subr.bf16.mxu0 0
    %4713 = vmatpush1.bf16.msra.mxu0 0
    %4714 = vmatprep.subr.bf16.mxu0 0
    %4715 = vmatpush1.bf16.msra.mxu0 0
    %4716 = vmatprep.subr.bf16.mxu0 0
    %4717 = vmatpush1.bf16.msra.mxu0 0
    %4718 = vmatprep.subr.bf16.mxu0 0
    %4719 = vmatpush1.bf16.msra.mxu0 0
    %4720 = vmatprep.subr.bf16.mxu0 0
    %4721 = vmatpush1.bf16.msra.mxu0 0
    %4722 = vmatprep.subr.bf16.mxu0 0
    %4723 = vmatpush1.bf16.msra.mxu0 0
    %4724 = vmatprep.mubr.bf16.mxu0 0
    %4725 = vmatmul.mubr.bf16.gmra.mrb[0].mxu0 %v4392
    %v4726 = vpop.f32.mrb[0].mxu0
    %v4727 = vadd.f32 %v4642, %v4726
    %v4728 = vpop.f32.mrb[0].mxu0
    %v4729 = vpop.f32.mrb[0].mxu0
    %v4730 = vadd.f32 %v4642, %v4729
    %v4731 = vpop.f32.mrb[0].mxu0
    %4732 = vdwg.mxu0
    %v4733 = vpack.c.bf16 %v4730, %v4727
    %v4735 = vsel %vm533, %v4507, 0
    %v4738 = vsel %vm533, %v4620, 0
    %4740 = vmatprep.subr.bf16.mxu0 0
    %4741 = vmatpush1.bf16.xpose.msra.mxu0 %v4738
    %4742 = vmatprep.subr.bf16.mxu0 0
    %4743 = vmatpush1.bf16.xpose.msra.mxu0 0
    %4744 = vmatprep.subr.bf16.mxu0 0
    %4745 = vmatpush1.bf16.xpose.msra.mxu0 0
    %4746 = vmatprep.subr.bf16.mxu0 0
    %4747 = vmatpush1.bf16.xpose.msra.mxu0 0
    %4748 = vmatprep.subr.bf16.mxu0 0
    %4749 = vmatpush1.bf16.xpose.msra.mxu0 0
    %4750 = vmatprep.subr.bf16.mxu0 0
    %4751 = vmatpush1.bf16.xpose.msra.mxu0 0
    %4752 = vmatprep.subr.bf16.mxu0 0
    %4753 = vmatpush1.bf16.xpose.msra.mxu0 0
    %4754 = vmatprep.subr.bf16.mxu0 0
    %4755 = vmatpush1.bf16.xpose.msra.mxu0 0
    %4756 = vmatprep.subr.bf16.mxu0 0
    %4757 = vmatpush1.bf16.xpose.msra.mxu0 0
    %4758 = vmatprep.subr.bf16.mxu0 0
    %4759 = vmatpush1.bf16.xpose.msra.mxu0 0
    %4760 = vmatprep.subr.bf16.mxu0 0
    %4761 = vmatpush1.bf16.xpose.msra.mxu0 0
    %4762 = vmatprep.subr.bf16.mxu0 0
    %4763 = vmatpush1.bf16.xpose.msra.mxu0 0
    %4764 = vmatprep.subr.bf16.mxu0 0
    %4765 = vmatpush1.bf16.xpose.msra.mxu0 0
    %4766 = vmatprep.subr.bf16.mxu0 0
    %4767 = vmatpush1.bf16.xpose.msra.mxu0 0
    %4768 = vmatprep.subr.bf16.mxu0 0
    %4769 = vmatpush1.bf16.xpose.msra.mxu0 0
    %4770 = vmatprep.subr.bf16.mxu0 0
    %4771 = vmatpush1.bf16.xpose.msra.mxu0 0
    %4772 = vmatprep.mubr.bf16.mxu0 0
    %4773 = vmatmul.mubr.bf16.gmra.mrb[0].mxu0 %v4735
    %v4774 = vpop.f32.mrb[0].mxu0
    %v4775 = vadd.f32 %v189, %v4774
    %v4776 = vpop.f32.mrb[0].mxu0
    %v4777 = vpop.f32.mrb[0].mxu0
    %v4778 = vadd.f32 %v190, %v4777
    %v4779 = vpop.f32.mrb[0].mxu0
    %4780 = vdwg.mxu0
    %v4781 = vsel %vm581, %v4775, -inf
    %4782 = vmax.xlane.f32.xlu0 %v4781
    %v4783 = vpop.xlane.xlu0 %4782
    %v4784 = vsel %vm581, %v4778, -inf
    %4785 = vmax.xlane.f32.xlu0 %v4784
    %v4786 = vpop.xlane.xlu0 %4785
    %v4787 = vsub.f32 %v4775, %v4783
    %v4788 = vsub.f32 %v4778, %v4786
    %v4789 = vmul.f32 %v4787, 1.442695
    %v4790 = vpow.pop %v4789
    %v4791 = vmul.f32 %v4788, 1.442695
    %v4792 = vpow.pop %v4791
    %v4793 = vsel %vm581, %v4790, 0.0
    %4794 = vadd.xlane.f32.xlu0 %v4793
    %v4795 = vpop.xlane.xlu0 %4794
    %v4796 = vsel %vm581, %v4792, 0.0
    %4797 = vadd.xlane.f32.xlu0 %v4796
    %v4798 = vpop.xlane.xlu0 %4797
    %v4799 = vrcp.pop %v4795
    %v4800 = vrcp.pop %v4798
    %v4801 = vmul.f32 %v4790, %v4799
    %v4802 = vmul.f32 %v4792, %v4800
    %v4803 = vpack.c.bf16 %v4802, %v4801
    %v4805 = vsel %vm581, %v4803, 0
    %4807 = vmatprep.subr.bf16.mxu0 0
    %4808 = vmatpush1.bf16.msra.mxu0 %v4733
    %4809 = vmatprep.subr.bf16.mxu0 0
    %4810 = vmatpush1.bf16.msra.mxu0 0
    %4811 = vmatprep.subr.bf16.mxu0 0
    %4812 = vmatpush1.bf16.msra.mxu0 0
    %4813 = vmatprep.subr.bf16.mxu0 0
    %4814 = vmatpush1.bf16.msra.mxu0 0
    %4815 = vmatprep.subr.bf16.mxu0 0
    %4816 = vmatpush1.bf16.msra.mxu0 0
    %4817 = vmatprep.subr.bf16.mxu0 0
    %4818 = vmatpush1.bf16.msra.mxu0 0
    %4819 = vmatprep.subr.bf16.mxu0 0
    %4820 = vmatpush1.bf16.msra.mxu0 0
    %4821 = vmatprep.subr.bf16.mxu0 0
    %4822 = vmatpush1.bf16.msra.mxu0 0
    %4823 = vmatprep.subr.bf16.mxu0 0
    %4824 = vmatpush1.bf16.msra.mxu0 0
    %4825 = vmatprep.subr.bf16.mxu0 0
    %4826 = vmatpush1.bf16.msra.mxu0 0
    %4827 = vmatprep.subr.bf16.mxu0 0
    %4828 = vmatpush1.bf16.msra.mxu0 0
    %4829 = vmatprep.subr.bf16.mxu0 0
    %4830 = vmatpush1.bf16.msra.mxu0 0
    %4831 = vmatprep.subr.bf16.mxu0 0
    %4832 = vmatpush1.bf16.msra.mxu0 0
    %4833 = vmatprep.subr.bf16.mxu0 0
    %4834 = vmatpush1.bf16.msra.mxu0 0
    %4835 = vmatprep.subr.bf16.mxu0 0
    %4836 = vmatpush1.bf16.msra.mxu0 0
    %4837 = vmatprep.subr.bf16.mxu0 0
    %4838 = vmatpush1.bf16.msra.mxu0 0
    %4839 = vmatprep.mubr.bf16.mxu0 0
    %4840 = vmatmul.mubr.bf16.gmra.mrb[0].mxu0 %v4805
    %v4841 = vpop.f32.mrb[0].mxu0
    %v4842 = vadd.f32 0.0, %v4841
    %v4843 = vpop.f32.mrb[0].mxu0
    %v4844 = vpop.f32.mrb[0].mxu0
    %v4845 = vadd.f32 0.0, %v4844
    %v4846 = vpop.f32.mrb[0].mxu0
    %4847 = vdwg.mxu0
    %v4848 = vpack.c.bf16 %v4845, %v4842
    %s4849 = scalar_lea.vmem [#allocation7], 128
    %v4850 = vld [vmem:[%s4849] sm:$0xf]
    %v4851 = vld [vmem:[%s4849 + $0x4] sm:$0xf]
    %v4852 = vld [vmem:[%s4849 + $0x8] sm:$0xf]
    %v4853 = vld [vmem:[%s4849 + $0xc] sm:$0xf]
    %4854 = vrot.lane.b32.xlu0 %v4450, 96
    %v4855 = vpop.permute.xlu0 %4854
    %4856 = vrot.lane.b32.xlu0 %v4451, 96
    %v4857 = vpop.permute.xlu0 %4856
    %4858 = vrot.lane.b32.xlu0 %v4452, 96
    %v4859 = vpop.permute.xlu0 %4858
    %4860 = vrot.lane.b32.xlu0 %v4453, 96
    %v4861 = vpop.permute.xlu0 %4860
    %4862 = vrot.lane.b32.xlu0 %v4454, 96
    %v4863 = vpop.permute.xlu0 %4862
    %4864 = vrot.lane.b32.xlu0 %v4455, 96
    %v4865 = vpop.permute.xlu0 %4864
    %4866 = vrot.lane.b32.xlu0 %v4456, 96
    %v4867 = vpop.permute.xlu0 %4866
    %4868 = vrot.lane.b32.xlu0 %v4457, 96
    %v4869 = vpop.permute.xlu0 %4868
    %4878 = vrot.lane.b32.xlu0 %v4416, 96
    %v4879 = vpop.permute.xlu0 %4878
    %4881 = vmatprep.subr.bf16.mxu0 0
    %4882 = vmatpush1.bf16.msra.mxu0 %v4855
    %4883 = vmatprep.subr.bf16.mxu0 0
    %4884 = vmatpush1.bf16.msra.mxu0 %v4857
    %4885 = vmatprep.subr.bf16.mxu0 0
    %4886 = vmatpush1.bf16.msra.mxu0 %v4859
    %4887 = vmatprep.subr.bf16.mxu0 0
    %4888 = vmatpush1.bf16.msra.mxu0 %v4861
    %4889 = vmatprep.subr.bf16.mxu0 0
    %4890 = vmatpush1.bf16.msra.mxu0 %v4863
    %4891 = vmatprep.subr.bf16.mxu0 0
    %4892 = vmatpush1.bf16.msra.mxu0 %v4865
    %4893 = vmatprep.subr.bf16.mxu0 0
    %4894 = vmatpush1.bf16.msra.mxu0 %v4867
    %4895 = vmatprep.subr.bf16.mxu0 0
    %4896 = vmatpush1.bf16.msra.mxu0 %v4869
    %4897 = vmatprep.subr.bf16.mxu0 0
    %4898 = vmatpush1.bf16.msra.mxu0 0
    %4899 = vmatprep.subr.bf16.mxu0 0
    %4900 = vmatpush1.bf16.msra.mxu0 0
    %4901 = vmatprep.subr.bf16.mxu0 0
    %4902 = vmatpush1.bf16.msra.mxu0 0
    %4903 = vmatprep.subr.bf16.mxu0 0
    %4904 = vmatpush1.bf16.msra.mxu0 0
    %4905 = vmatprep.subr.bf16.mxu0 0
    %4906 = vmatpush1.bf16.msra.mxu0 0
    %4907 = vmatprep.subr.bf16.mxu0 0
    %4908 = vmatpush1.bf16.msra.mxu0 0
    %4909 = vmatprep.subr.bf16.mxu0 0
    %4910 = vmatpush1.bf16.msra.mxu0 0
    %4911 = vmatprep.subr.bf16.mxu0 0
    %4912 = vmatpush1.bf16.msra.mxu0 0
    %4913 = vmatprep.mubr.bf16.mxu0 0
    %4914 = vmatmul.mubr.bf16.gmra.mrb[0].mxu0 %v4392
    %v4915 = vpop.f32.mrb[0].mxu0
    %v4916 = vadd.f32 %v4879, %v4915
    %v4917 = vpop.f32.mrb[0].mxu0
    %v4918 = vpop.f32.mrb[0].mxu0
    %v4919 = vadd.f32 %v4879, %v4918
    %v4920 = vpop.f32.mrb[0].mxu0
    %4921 = vdwg.mxu0
    %v4922 = vpack.c.bf16 %v4919, %v4916
    %4923 = vrot.lane.b32.xlu0 %v4563, 96
    %v4924 = vpop.permute.xlu0 %4923
    %4925 = vrot.lane.b32.xlu0 %v4564, 96
    %v4926 = vpop.permute.xlu0 %4925
    %4927 = vrot.lane.b32.xlu0 %v4565, 96
    %v4928 = vpop.permute.xlu0 %4927
    %4929 = vrot.lane.b32.xlu0 %v4566, 96
    %v4930 = vpop.permute.xlu0 %4929
    %4931 = vrot.lane.b32.xlu0 %v4567, 96
    %v4932 = vpop.permute.xlu0 %4931
    %4933 = vrot.lane.b32.xlu0 %v4568, 96
    %v4934 = vpop.permute.xlu0 %4933
    %4935 = vrot.lane.b32.xlu0 %v4569, 96
    %v4936 = vpop.permute.xlu0 %4935
    %4937 = vrot.lane.b32.xlu0 %v4570, 96
    %v4938 = vpop.permute.xlu0 %4937
    %4947 = vrot.lane.b32.xlu0 %v4529, 96
    %v4948 = vpop.permute.xlu0 %4947
    %4950 = vmatprep.subr.bf16.mxu0 0
    %4951 = vmatpush1.bf16.msra.mxu0 %v4924
    %4952 = vmatprep.subr.bf16.mxu0 0
    %4953 = vmatpush1.bf16.msra.mxu0 %v4926
    %4954 = vmatprep.subr.bf16.mxu0 0
    %4955 = vmatpush1.bf16.msra.mxu0 %v4928
    %4956 = vmatprep.subr.bf16.mxu0 0
    %4957 = vmatpush1.bf16.msra.mxu0 %v4930
    %4958 = vmatprep.subr.bf16.mxu0 0
    %4959 = vmatpush1.bf16.msra.mxu0 %v4932
    %4960 = vmatprep.subr.bf16.mxu0 0
    %4961 = vmatpush1.bf16.msra.mxu0 %v4934
    %4962 = vmatprep.subr.bf16.mxu0 0
    %4963 = vmatpush1.bf16.msra.mxu0 %v4936
    %4964 = vmatprep.subr.bf16.mxu0 0
    %4965 = vmatpush1.bf16.msra.mxu0 %v4938
    %4966 = vmatprep.subr.bf16.mxu0 0
    %4967 = vmatpush1.bf16.msra.mxu0 0
    %4968 = vmatprep.subr.bf16.mxu0 0
    %4969 = vmatpush1.bf16.msra.mxu0 0
    %4970 = vmatprep.subr.bf16.mxu0 0
    %4971 = vmatpush1.bf16.msra.mxu0 0
    %4972 = vmatprep.subr.bf16.mxu0 0
    %4973 = vmatpush1.bf16.msra.mxu0 0
    %4974 = vmatprep.subr.bf16.mxu0 0
    %4975 = vmatpush1.bf16.msra.mxu0 0
    %4976 = vmatprep.subr.bf16.mxu0 0
    %4977 = vmatpush1.bf16.msra.mxu0 0
    %4978 = vmatprep.subr.bf16.mxu0 0
    %4979 = vmatpush1.bf16.msra.mxu0 0
    %4980 = vmatprep.subr.bf16.mxu0 0
    %4981 = vmatpush1.bf16.msra.mxu0 0
    %4982 = vmatprep.mubr.bf16.mxu0 0
    %4983 = vmatmul.mubr.bf16.gmra.mrb[0].mxu0 %v4392
    %v4984 = vpop.f32.mrb[0].mxu0
    %v4985 = vadd.f32 %v4948, %v4984
    %v4986 = vpop.f32.mrb[0].mxu0
    %v4987 = vpop.f32.mrb[0].mxu0
    %v4988 = vadd.f32 %v4948, %v4987
    %v4989 = vpop.f32.mrb[0].mxu0
    %4990 = vdwg.mxu0
    %v4991 = vpack.c.bf16 %v4988, %v4985
    %4992 = vrot.lane.b32.xlu0 %v4676, 96
    %v4993 = vpop.permute.xlu0 %4992
    %4994 = vrot.lane.b32.xlu0 %v4677, 96
    %v4995 = vpop.permute.xlu0 %4994
    %4996 = vrot.lane.b32.xlu0 %v4678, 96
    %v4997 = vpop.permute.xlu0 %4996
    %4998 = vrot.lane.b32.xlu0 %v4679, 96
    %v4999 = vpop.permute.xlu0 %4998
    %5000 = vrot.lane.b32.xlu0 %v4680, 96
    %v5001 = vpop.permute.xlu0 %5000
    %5002 = vrot.lane.b32.xlu0 %v4681, 96
    %v5003 = vpop.permute.xlu0 %5002
    %5004 = vrot.lane.b32.xlu0 %v4682, 96
    %v5005 = vpop.permute.xlu0 %5004
    %5006 = vrot.lane.b32.xlu0 %v4683, 96
    %v5007 = vpop.permute.xlu0 %5006
    %5016 = vrot.lane.b32.xlu0 %v4642, 96
    %v5017 = vpop.permute.xlu0 %5016
    %5019 = vmatprep.subr.bf16.mxu0 0
    %5020 = vmatpush1.bf16.msra.mxu0 %v4993
    %5021 = vmatprep.subr.bf16.mxu0 0
    %5022 = vmatpush1.bf16.msra.mxu0 %v4995
    %5023 = vmatprep.subr.bf16.mxu0 0
    %5024 = vmatpush1.bf16.msra.mxu0 %v4997
    %5025 = vmatprep.subr.bf16.mxu0 0
    %5026 = vmatpush1.bf16.msra.mxu0 %v4999
    %5027 = vmatprep.subr.bf16.mxu0 0
    %5028 = vmatpush1.bf16.msra.mxu0 %v5001
    %5029 = vmatprep.subr.bf16.mxu0 0
    %5030 = vmatpush1.bf16.msra.mxu0 %v5003
    %5031 = vmatprep.subr.bf16.mxu0 0
    %5032 = vmatpush1.bf16.msra.mxu0 %v5005
    %5033 = vmatprep.subr.bf16.mxu0 0
    %5034 = vmatpush1.bf16.msra.mxu0 %v5007
    %5035 = vmatprep.subr.bf16.mxu0 0
    %5036 = vmatpush1.bf16.msra.mxu0 0
    %5037 = vmatprep.subr.bf16.mxu0 0
    %5038 = vmatpush1.bf16.msra.mxu0 0
    %5039 = vmatprep.subr.bf16.mxu0 0
    %5040 = vmatpush1.bf16.msra.mxu0 0
    %5041 = vmatprep.subr.bf16.mxu0 0
    %5042 = vmatpush1.bf16.msra.mxu0 0
    %5043 = vmatprep.subr.bf16.mxu0 0
    %5044 = vmatpush1.bf16.msra.mxu0 0
    %5045 = vmatprep.subr.bf16.mxu0 0
    %5046 = vmatpush1.bf16.msra.mxu0 0
    %5047 = vmatprep.subr.bf16.mxu0 0
    %5048 = vmatpush1.bf16.msra.mxu0 0
    %5049 = vmatprep.subr.bf16.mxu0 0
    %5050 = vmatpush1.bf16.msra.mxu0 0
    %5051 = vmatprep.mubr.bf16.mxu0 0
    %5052 = vmatmul.mubr.bf16.gmra.mrb[0].mxu0 %v4392
    %v5053 = vpop.f32.mrb[0].mxu0
    %v5054 = vadd.f32 %v5017, %v5053
    %v5055 = vpop.f32.mrb[0].mxu0
    %v5056 = vpop.f32.mrb[0].mxu0
    %v5057 = vadd.f32 %v5017, %v5056
    %v5058 = vpop.f32.mrb[0].mxu0
    %5059 = vdwg.mxu0
    %v5060 = vpack.c.bf16 %v5057, %v5054
    %v5062 = vsel %vm533, %v4922, 0
    %v5065 = vsel %vm533, %v4991, 0
    %5067 = vmatprep.subr.bf16.mxu0 0
    %5068 = vmatpush1.bf16.xpose.msra.mxu0 %v5065
    %5069 = vmatprep.subr.bf16.mxu0 0
    %5070 = vmatpush1.bf16.xpose.msra.mxu0 0
    %5071 = vmatprep.subr.bf16.mxu0 0
    %5072 = vmatpush1.bf16.xpose.msra.mxu0 0
    %5073 = vmatprep.subr.bf16.mxu0 0
    %5074 = vmatpush1.bf16.xpose.msra.mxu0 0
    %5075 = vmatprep.subr.bf16.mxu0 0
    %5076 = vmatpush1.bf16.xpose.msra.mxu0 0
    %5077 = vmatprep.subr.bf16.mxu0 0
    %5078 = vmatpush1.bf16.xpose.msra.mxu0 0
    %5079 = vmatprep.subr.bf16.mxu0 0
    %5080 = vmatpush1.bf16.xpose.msra.mxu0 0
    %5081 = vmatprep.subr.bf16.mxu0 0
    %5082 = vmatpush1.bf16.xpose.msra.mxu0 0
    %5083 = vmatprep.subr.bf16.mxu0 0
    %5084 = vmatpush1.bf16.xpose.msra.mxu0 0
    %5085 = vmatprep.subr.bf16.mxu0 0
    %5086 = vmatpush1.bf16.xpose.msra.mxu0 0
    %5087 = vmatprep.subr.bf16.mxu0 0
    %5088 = vmatpush1.bf16.xpose.msra.mxu0 0
    %5089 = vmatprep.subr.bf16.mxu0 0
    %5090 = vmatpush1.bf16.xpose.msra.mxu0 0
    %5091 = vmatprep.subr.bf16.mxu0 0
    %5092 = vmatpush1.bf16.xpose.msra.mxu0 0
    %5093 = vmatprep.subr.bf16.mxu0 0
    %5094 = vmatpush1.bf16.xpose.msra.mxu0 0
    %5095 = vmatprep.subr.bf16.mxu0 0
    %5096 = vmatpush1.bf16.xpose.msra.mxu0 0
    %5097 = vmatprep.subr.bf16.mxu0 0
    %5098 = vmatpush1.bf16.xpose.msra.mxu0 0
    %5099 = vmatprep.mubr.bf16.mxu0 0
    %5100 = vmatmul.mubr.bf16.gmra.mrb[0].mxu0 %v5062
    %v5101 = vpop.f32.mrb[0].mxu0
    %v5102 = vadd.f32 %v189, %v5101
    %v5103 = vpop.f32.mrb[0].mxu0
    %v5104 = vpop.f32.mrb[0].mxu0
    %v5105 = vadd.f32 %v190, %v5104
    %v5106 = vpop.f32.mrb[0].mxu0
    %5107 = vdwg.mxu0
    %v5108 = vsel %vm581, %v5102, -inf
    %5109 = vmax.xlane.f32.xlu0 %v5108
    %v5110 = vpop.xlane.xlu0 %5109
    %v5111 = vsel %vm581, %v5105, -inf
    %5112 = vmax.xlane.f32.xlu0 %v5111
    %v5113 = vpop.xlane.xlu0 %5112
    %v5114 = vsub.f32 %v5102, %v5110
    %v5115 = vsub.f32 %v5105, %v5113
    %v5116 = vmul.f32 %v5114, 1.442695
    %v5117 = vpow.pop %v5116
    %v5118 = vmul.f32 %v5115, 1.442695
    %v5119 = vpow.pop %v5118
    %v5120 = vsel %vm581, %v5117, 0.0
    %5121 = vadd.xlane.f32.xlu0 %v5120
    %v5122 = vpop.xlane.xlu0 %5121
    %v5123 = vsel %vm581, %v5119, 0.0
    %5124 = vadd.xlane.f32.xlu0 %v5123
    %v5125 = vpop.xlane.xlu0 %5124
    %v5126 = vrcp.pop %v5122
    %v5127 = vrcp.pop %v5125
    %v5128 = vmul.f32 %v5117, %v5126
    %v5129 = vmul.f32 %v5119, %v5127
    %v5130 = vpack.c.bf16 %v5129, %v5128
    %v5132 = vsel %vm581, %v5130, 0
    %5134 = vmatprep.subr.bf16.mxu0 0
    %5135 = vmatpush1.bf16.msra.mxu0 %v5060
    %5136 = vmatprep.subr.bf16.mxu0 0
    %5137 = vmatpush1.bf16.msra.mxu0 0
    %5138 = vmatprep.subr.bf16.mxu0 0
    %5139 = vmatpush1.bf16.msra.mxu0 0
    %5140 = vmatprep.subr.bf16.mxu0 0
    %5141 = vmatpush1.bf16.msra.mxu0 0
    %5142 = vmatprep.subr.bf16.mxu0 0
    %5143 = vmatpush1.bf16.msra.mxu0 0
    %5144 = vmatprep.subr.bf16.mxu0 0
    %5145 = vmatpush1.bf16.msra.mxu0 0
    %5146 = vmatprep.subr.bf16.mxu0 0
    %5147 = vmatpush1.bf16.msra.mxu0 0
    %5148 = vmatprep.subr.bf16.mxu0 0
    %5149 = vmatpush1.bf16.msra.mxu0 0
    %5150 = vmatprep.subr.bf16.mxu0 0
    %5151 = vmatpush1.bf16.msra.mxu0 0
    %5152 = vmatprep.subr.bf16.mxu0 0
    %5153 = vmatpush1.bf16.msra.mxu0 0
    %5154 = vmatprep.subr.bf16.mxu0 0
    %5155 = vmatpush1.bf16.msra.mxu0 0
    %5156 = vmatprep.subr.bf16.mxu0 0
    %5157 = vmatpush1.bf16.msra.mxu0 0
    %5158 = vmatprep.subr.bf16.mxu0 0
    %5159 = vmatpush1.bf16.msra.mxu0 0
    %5160 = vmatprep.subr.bf16.mxu0 0
    %5161 = vmatpush1.bf16.msra.mxu0 0
    %5162 = vmatprep.subr.bf16.mxu0 0
    %5163 = vmatpush1.bf16.msra.mxu0 0
    %5164 = vmatprep.subr.bf16.mxu0 0
    %5165 = vmatpush1.bf16.msra.mxu0 0
    %5166 = vmatprep.mubr.bf16.mxu0 0
    %5167 = vmatmul.mubr.bf16.gmra.mrb[0].mxu0 %v5132
    %v5168 = vpop.f32.mrb[0].mxu0
    %v5169 = vadd.f32 0.0, %v5168
    %v5170 = vpop.f32.mrb[0].mxu0
    %v5171 = vpop.f32.mrb[0].mxu0
    %v5172 = vadd.f32 0.0, %v5171
    %v5173 = vpop.f32.mrb[0].mxu0
    %5174 = vdwg.mxu0
    %v5175 = vpack.c.bf16 %v5172, %v5169
    %v5176 = vld [vmem:[%s4849 + $0x10] sm:$0xf]
    %v5177 = vld [vmem:[%s4849 + $0x14] sm:$0xf]
    %v5178 = vld [vmem:[%s4849 + $0x18] sm:$0xf]
    %v5179 = vld [vmem:[%s4849 + $0x1c] sm:$0xf]
    %v5184 = vunpack.c.l.b16 %v5176
    %v5185 = vunpack.c.l.b16 %v5177
    %v5186 = vunpack.c.l.b16 %v5178
    %v5187 = vunpack.c.l.b16 %v5179
    %v5188 = vpack.c.b16 %v5185, %v5184
    %v5189 = vpack.c.b16 %v5187, %v5186
    %v5193 = vsel %vm533, %v5175, 0
    %5195 = vmatprep.subr.bf16.mxu0 0
    %5196 = vmatpush1.bf16.msra.mxu0 %v5188
    %5197 = vmatprep.subr.bf16.mxu0 0
    %5198 = vmatpush1.bf16.msra.mxu0 %v5189
    %5199 = vmatprep.subr.bf16.mxu0 0
    %5200 = vmatpush1.bf16.msra.mxu0 0
    %5201 = vmatprep.subr.bf16.mxu0 0
    %5202 = vmatpush1.bf16.msra.mxu0 0
    %5203 = vmatprep.subr.bf16.mxu0 0
    %5204 = vmatpush1.bf16.msra.mxu0 0
    %5205 = vmatprep.subr.bf16.mxu0 0
    %5206 = vmatpush1.bf16.msra.mxu0 0
    %5207 = vmatprep.subr.bf16.mxu0 0
    %5208 = vmatpush1.bf16.msra.mxu0 0
    %5209 = vmatprep.subr.bf16.mxu0 0
    %5210 = vmatpush1.bf16.msra.mxu0 0
    %5211 = vmatprep.subr.bf16.mxu0 0
    %5212 = vmatpush1.bf16.msra.mxu0 0
    %5213 = vmatprep.subr.bf16.mxu0 0
    %5214 = vmatpush1.bf16.msra.mxu0 0
    %5215 = vmatprep.subr.bf16.mxu0 0
    %5216 = vmatpush1.bf16.msra.mxu0 0
    %5217 = vmatprep.subr.bf16.mxu0 0
    %5218 = vmatpush1.bf16.msra.mxu0 0
    %5219 = vmatprep.subr.bf16.mxu0 0
    %5220 = vmatpush1.bf16.msra.mxu0 0
    %5221 = vmatprep.subr.bf16.mxu0 0
    %5222 = vmatpush1.bf16.msra.mxu0 0
    %5223 = vmatprep.subr.bf16.mxu0 0
    %5224 = vmatpush1.bf16.msra.mxu0 0
    %5225 = vmatprep.subr.bf16.mxu0 0
    %5226 = vmatpush1.bf16.msra.mxu0 0
    %5227 = vmatprep.mubr.bf16.mxu0 0
    %5228 = vmatmul.mubr.bf16.gmra.mrb[0].mxu0 %v5193
    %v5229 = vpop.f32.mrb[0].mxu0
    %v5230 = vadd.f32 0.0, %v5229
    %v5231 = vpop.f32.mrb[0].mxu0
    %v5232 = vpop.f32.mrb[0].mxu0
    %v5233 = vadd.f32 0.0, %v5232
    %v5234 = vpop.f32.mrb[0].mxu0
    %5235 = vdwg.mxu0
    %v5240 = vunpack.c.l.b16 %v4850
    %v5241 = vunpack.c.l.b16 %v4851
    %v5242 = vunpack.c.l.b16 %v4852
    %v5243 = vunpack.c.l.b16 %v4853
    %v5244 = vpack.c.b16 %v5241, %v5240
    %v5245 = vpack.c.b16 %v5243, %v5242
    %v5249 = vsel %vm533, %v4848, 0
    %5251 = vmatprep.subr.bf16.mxu0 0
    %5252 = vmatpush1.bf16.msra.mxu0 %v5244
    %5253 = vmatprep.subr.bf16.mxu0 0
    %5254 = vmatpush1.bf16.msra.mxu0 %v5245
    %5255 = vmatprep.subr.bf16.mxu0 0
    %5256 = vmatpush1.bf16.msra.mxu0 0
    %5257 = vmatprep.subr.bf16.mxu0 0
    %5258 = vmatpush1.bf16.msra.mxu0 0
    %5259 = vmatprep.subr.bf16.mxu0 0
    %5260 = vmatpush1.bf16.msra.mxu0 0
    %5261 = vmatprep.subr.bf16.mxu0 0
    %5262 = vmatpush1.bf16.msra.mxu0 0
    %5263 = vmatprep.subr.bf16.mxu0 0
    %5264 = vmatpush1.bf16.msra.mxu0 0
    %5265 = vmatprep.subr.bf16.mxu0 0
    %5266 = vmatpush1.bf16.msra.mxu0 0
    %5267 = vmatprep.subr.bf16.mxu0 0
    %5268 = vmatpush1.bf16.msra.mxu0 0
    %5269 = vmatprep.subr.bf16.mxu0 0
    %5270 = vmatpush1.bf16.msra.mxu0 0
    %5271 = vmatprep.subr.bf16.mxu0 0
    %5272 = vmatpush1.bf16.msra.mxu0 0
    %5273 = vmatprep.subr.bf16.mxu0 0
    %5274 = vmatpush1.bf16.msra.mxu0 0
    %5275 = vmatprep.subr.bf16.mxu0 0
    %5276 = vmatpush1.bf16.msra.mxu0 0
    %5277 = vmatprep.subr.bf16.mxu0 0
    %5278 = vmatpush1.bf16.msra.mxu0 0
    %5279 = vmatprep.subr.bf16.mxu0 0
    %5280 = vmatpush1.bf16.msra.mxu0 0
    %5281 = vmatprep.subr.bf16.mxu0 0
    %5282 = vmatpush1.bf16.msra.mxu0 0
    %5283 = vmatprep.mubr.bf16.mxu0 0
    %5284 = vmatmul.mubr.bf16.gmra.mrb[0].mxu0 %v5249
    %v5285 = vpop.f32.mrb[0].mxu0
    %v5286 = vadd.f32 %v5230, %v5285
    %v5287 = vpop.f32.mrb[0].mxu0
    %v5288 = vpop.f32.mrb[0].mxu0
    %v5289 = vadd.f32 %v5233, %v5288
    %v5290 = vpop.f32.mrb[0].mxu0
    %5291 = vdwg.mxu0
    %5292 = vrot.lane.b32.xlu0 %v4450, 64
    %v5293 = vpop.permute.xlu0 %5292
    %5294 = vrot.lane.b32.xlu0 %v4451, 64
    %v5295 = vpop.permute.xlu0 %5294
    %5296 = vrot.lane.b32.xlu0 %v4452, 64
    %v5297 = vpop.permute.xlu0 %5296
    %5298 = vrot.lane.b32.xlu0 %v4453, 64
    %v5299 = vpop.permute.xlu0 %5298
    %5300 = vrot.lane.b32.xlu0 %v4454, 64
    %v5301 = vpop.permute.xlu0 %5300
    %5302 = vrot.lane.b32.xlu0 %v4455, 64
    %v5303 = vpop.permute.xlu0 %5302
    %5304 = vrot.lane.b32.xlu0 %v4456, 64
    %v5305 = vpop.permute.xlu0 %5304
    %5306 = vrot.lane.b32.xlu0 %v4457, 64
    %v5307 = vpop.permute.xlu0 %5306
    %5316 = vrot.lane.b32.xlu0 %v4416, 64
    %v5317 = vpop.permute.xlu0 %5316
    %5319 = vmatprep.subr.bf16.mxu0 0
    %5320 = vmatpush1.bf16.msra.mxu0 %v5293
    %5321 = vmatprep.subr.bf16.mxu0 0
    %5322 = vmatpush1.bf16.msra.mxu0 %v5295
    %5323 = vmatprep.subr.bf16.mxu0 0
    %5324 = vmatpush1.bf16.msra.mxu0 %v5297
    %5325 = vmatprep.subr.bf16.mxu0 0
    %5326 = vmatpush1.bf16.msra.mxu0 %v5299
    %5327 = vmatprep.subr.bf16.mxu0 0
    %5328 = vmatpush1.bf16.msra.mxu0 %v5301
    %5329 = vmatprep.subr.bf16.mxu0 0
    %5330 = vmatpush1.bf16.msra.mxu0 %v5303
    %5331 = vmatprep.subr.bf16.mxu0 0
    %5332 = vmatpush1.bf16.msra.mxu0 %v5305
    %5333 = vmatprep.subr.bf16.mxu0 0
    %5334 = vmatpush1.bf16.msra.mxu0 %v5307
    %5335 = vmatprep.subr.bf16.mxu0 0
    %5336 = vmatpush1.bf16.msra.mxu0 0
    %5337 = vmatprep.subr.bf16.mxu0 0
    %5338 = vmatpush1.bf16.msra.mxu0 0
    %5339 = vmatprep.subr.bf16.mxu0 0
    %5340 = vmatpush1.bf16.msra.mxu0 0
    %5341 = vmatprep.subr.bf16.mxu0 0
    %5342 = vmatpush1.bf16.msra.mxu0 0
    %5343 = vmatprep.subr.bf16.mxu0 0
    %5344 = vmatpush1.bf16.msra.mxu0 0
    %5345 = vmatprep.subr.bf16.mxu0 0
    %5346 = vmatpush1.bf16.msra.mxu0 0
    %5347 = vmatprep.subr.bf16.mxu0 0
    %5348 = vmatpush1.bf16.msra.mxu0 0
    %5349 = vmatprep.subr.bf16.mxu0 0
    %5350 = vmatpush1.bf16.msra.mxu0 0
    %5351 = vmatprep.mubr.bf16.mxu0 0
    %5352 = vmatmul.mubr.bf16.gmra.mrb[0].mxu0 %v4392
    %v5353 = vpop.f32.mrb[0].mxu0
    %v5354 = vadd.f32 %v5317, %v5353
    %v5355 = vpop.f32.mrb[0].mxu0
    %v5356 = vpop.f32.mrb[0].mxu0
    %v5357 = vadd.f32 %v5317, %v5356
    %v5358 = vpop.f32.mrb[0].mxu0
    %5359 = vdwg.mxu0
    %v5360 = vpack.c.bf16 %v5357, %v5354
    %5361 = vrot.lane.b32.xlu0 %v4563, 64
    %v5362 = vpop.permute.xlu0 %5361
    %5363 = vrot.lane.b32.xlu0 %v4564, 64
    %v5364 = vpop.permute.xlu0 %5363
    %5365 = vrot.lane.b32.xlu0 %v4565, 64
    %v5366 = vpop.permute.xlu0 %5365
    %5367 = vrot.lane.b32.xlu0 %v4566, 64
    %v5368 = vpop.permute.xlu0 %5367
    %5369 = vrot.lane.b32.xlu0 %v4567, 64
    %v5370 = vpop.permute.xlu0 %5369
    %5371 = vrot.lane.b32.xlu0 %v4568, 64
    %v5372 = vpop.permute.xlu0 %5371
    %5373 = vrot.lane.b32.xlu0 %v4569, 64
    %v5374 = vpop.permute.xlu0 %5373
    %5375 = vrot.lane.b32.xlu0 %v4570, 64
    %v5376 = vpop.permute.xlu0 %5375
    %5385 = vrot.lane.b32.xlu0 %v4529, 64
    %v5386 = vpop.permute.xlu0 %5385
    %5388 = vmatprep.subr.bf16.mxu0 0
    %5389 = vmatpush1.bf16.msra.mxu0 %v5362
    %5390 = vmatprep.subr.bf16.mxu0 0
    %5391 = vmatpush1.bf16.msra.mxu0 %v5364
    %5392 = vmatprep.subr.bf16.mxu0 0
    %5393 = vmatpush1.bf16.msra.mxu0 %v5366
    %5394 = vmatprep.subr.bf16.mxu0 0
    %5395 = vmatpush1.bf16.msra.mxu0 %v5368
    %5396 = vmatprep.subr.bf16.mxu0 0
    %5397 = vmatpush1.bf16.msra.mxu0 %v5370
    %5398 = vmatprep.subr.bf16.mxu0 0
    %5399 = vmatpush1.bf16.msra.mxu0 %v5372
    %5400 = vmatprep.subr.bf16.mxu0 0
    %5401 = vmatpush1.bf16.msra.mxu0 %v5374
    %5402 = vmatprep.subr.bf16.mxu0 0
    %5403 = vmatpush1.bf16.msra.mxu0 %v5376
    %5404 = vmatprep.subr.bf16.mxu0 0
    %5405 = vmatpush1.bf16.msra.mxu0 0
    %5406 = vmatprep.subr.bf16.mxu0 0
    %5407 = vmatpush1.bf16.msra.mxu0 0
    %5408 = vmatprep.subr.bf16.mxu0 0
    %5409 = vmatpush1.bf16.msra.mxu0 0
    %5410 = vmatprep.subr.bf16.mxu0 0
    %5411 = vmatpush1.bf16.msra.mxu0 0
    %5412 = vmatprep.subr.bf16.mxu0 0
    %5413 = vmatpush1.bf16.msra.mxu0 0
    %5414 = vmatprep.subr.bf16.mxu0 0
    %5415 = vmatpush1.bf16.msra.mxu0 0
    %5416 = vmatprep.subr.bf16.mxu0 0
    %5417 = vmatpush1.bf16.msra.mxu0 0
    %5418 = vmatprep.subr.bf16.mxu0 0
    %5419 = vmatpush1.bf16.msra.mxu0 0
    %5420 = vmatprep.mubr.bf16.mxu0 0
    %5421 = vmatmul.mubr.bf16.gmra.mrb[0].mxu0 %v4392
    %v5422 = vpop.f32.mrb[0].mxu0
    %v5423 = vadd.f32 %v5386, %v5422
    %v5424 = vpop.f32.mrb[0].mxu0
    %v5425 = vpop.f32.mrb[0].mxu0
    %v5426 = vadd.f32 %v5386, %v5425
    %v5427 = vpop.f32.mrb[0].mxu0
    %5428 = vdwg.mxu0
    %v5429 = vpack.c.bf16 %v5426, %v5423
    %5430 = vrot.lane.b32.xlu0 %v4676, 64
    %v5431 = vpop.permute.xlu0 %5430
    %5432 = vrot.lane.b32.xlu0 %v4677, 64
    %v5433 = vpop.permute.xlu0 %5432
    %5434 = vrot.lane.b32.xlu0 %v4678, 64
    %v5435 = vpop.permute.xlu0 %5434
    %5436 = vrot.lane.b32.xlu0 %v4679, 64
    %v5437 = vpop.permute.xlu0 %5436
    %5438 = vrot.lane.b32.xlu0 %v4680, 64
    %v5439 = vpop.permute.xlu0 %5438
    %5440 = vrot.lane.b32.xlu0 %v4681, 64
    %v5441 = vpop.permute.xlu0 %5440
    %5442 = vrot.lane.b32.xlu0 %v4682, 64
    %v5443 = vpop.permute.xlu0 %5442
    %5444 = vrot.lane.b32.xlu0 %v4683, 64
    %v5445 = vpop.permute.xlu0 %5444
    %5454 = vrot.lane.b32.xlu0 %v4642, 64
    %v5455 = vpop.permute.xlu0 %5454
    %5457 = vmatprep.subr.bf16.mxu0 0
    %5458 = vmatpush1.bf16.msra.mxu0 %v5431
    %5459 = vmatprep.subr.bf16.mxu0 0
    %5460 = vmatpush1.bf16.msra.mxu0 %v5433
    %5461 = vmatprep.subr.bf16.mxu0 0
    %5462 = vmatpush1.bf16.msra.mxu0 %v5435
    %5463 = vmatprep.subr.bf16.mxu0 0
    %5464 = vmatpush1.bf16.msra.mxu0 %v5437
    %5465 = vmatprep.subr.bf16.mxu0 0
    %5466 = vmatpush1.bf16.msra.mxu0 %v5439
    %5467 = vmatprep.subr.bf16.mxu0 0
    %5468 = vmatpush1.bf16.msra.mxu0 %v5441
    %5469 = vmatprep.subr.bf16.mxu0 0
    %5470 = vmatpush1.bf16.msra.mxu0 %v5443
    %5471 = vmatprep.subr.bf16.mxu0 0
    %5472 = vmatpush1.bf16.msra.mxu0 %v5445
    %5473 = vmatprep.subr.bf16.mxu0 0
    %5474 = vmatpush1.bf16.msra.mxu0 0
    %5475 = vmatprep.subr.bf16.mxu0 0
    %5476 = vmatpush1.bf16.msra.mxu0 0
    %5477 = vmatprep.subr.bf16.mxu0 0
    %5478 = vmatpush1.bf16.msra.mxu0 0
    %5479 = vmatprep.subr.bf16.mxu0 0
    %5480 = vmatpush1.bf16.msra.mxu0 0
    %5481 = vmatprep.subr.bf16.mxu0 0
    %5482 = vmatpush1.bf16.msra.mxu0 0
    %5483 = vmatprep.subr.bf16.mxu0 0
    %5484 = vmatpush1.bf16.msra.mxu0 0
    %5485 = vmatprep.subr.bf16.mxu0 0
    %5486 = vmatpush1.bf16.msra.mxu0 0
    %5487 = vmatprep.subr.bf16.mxu0 0
    %5488 = vmatpush1.bf16.msra.mxu0 0
    %5489 = vmatprep.mubr.bf16.mxu0 0
    %5490 = vmatmul.mubr.bf16.gmra.mrb[0].mxu0 %v4392
    %v5491 = vpop.f32.mrb[0].mxu0
    %v5492 = vadd.f32 %v5455, %v5491
    %v5493 = vpop.f32.mrb[0].mxu0
    %v5494 = vpop.f32.mrb[0].mxu0
    %v5495 = vadd.f32 %v5455, %v5494
    %v5496 = vpop.f32.mrb[0].mxu0
    %5497 = vdwg.mxu0
    %v5498 = vpack.c.bf16 %v5495, %v5492
    %v5500 = vsel %vm533, %v5360, 0
    %v5503 = vsel %vm533, %v5429, 0
    %5505 = vmatprep.subr.bf16.mxu0 0
    %5506 = vmatpush1.bf16.xpose.msra.mxu0 %v5503
    %5507 = vmatprep.subr.bf16.mxu0 0
    %5508 = vmatpush1.bf16.xpose.msra.mxu0 0
    %5509 = vmatprep.subr.bf16.mxu0 0
    %5510 = vmatpush1.bf16.xpose.msra.mxu0 0
    %5511 = vmatprep.subr.bf16.mxu0 0
    %5512 = vmatpush1.bf16.xpose.msra.mxu0 0
    %5513 = vmatprep.subr.bf16.mxu0 0
    %5514 = vmatpush1.bf16.xpose.msra.mxu0 0
    %5515 = vmatprep.subr.bf16.mxu0 0
    %5516 = vmatpush1.bf16.xpose.msra.mxu0 0
    %5517 = vmatprep.subr.bf16.mxu0 0
    %5518 = vmatpush1.bf16.xpose.msra.mxu0 0
    %5519 = vmatprep.subr.bf16.mxu0 0
    %5520 = vmatpush1.bf16.xpose.msra.mxu0 0
    %5521 = vmatprep.subr.bf16.mxu0 0
    %5522 = vmatpush1.bf16.xpose.msra.mxu0 0
    %5523 = vmatprep.subr.bf16.mxu0 0
    %5524 = vmatpush1.bf16.xpose.msra.mxu0 0
    %5525 = vmatprep.subr.bf16.mxu0 0
    %5526 = vmatpush1.bf16.xpose.msra.mxu0 0
    %5527 = vmatprep.subr.bf16.mxu0 0
    %5528 = vmatpush1.bf16.xpose.msra.mxu0 0
    %5529 = vmatprep.subr.bf16.mxu0 0
    %5530 = vmatpush1.bf16.xpose.msra.mxu0 0
    %5531 = vmatprep.subr.bf16.mxu0 0
    %5532 = vmatpush1.bf16.xpose.msra.mxu0 0
    %5533 = vmatprep.subr.bf16.mxu0 0
    %5534 = vmatpush1.bf16.xpose.msra.mxu0 0
    %5535 = vmatprep.subr.bf16.mxu0 0
    %5536 = vmatpush1.bf16.xpose.msra.mxu0 0
    %5537 = vmatprep.mubr.bf16.mxu0 0
    %5538 = vmatmul.mubr.bf16.gmra.mrb[0].mxu0 %v5500
    %v5539 = vpop.f32.mrb[0].mxu0
    %v5540 = vadd.f32 %v189, %v5539
    %v5541 = vpop.f32.mrb[0].mxu0
    %v5542 = vpop.f32.mrb[0].mxu0
    %v5543 = vadd.f32 %v190, %v5542
    %v5544 = vpop.f32.mrb[0].mxu0
    %5545 = vdwg.mxu0
    %v5546 = vsel %vm581, %v5540, -inf
    %5547 = vmax.xlane.f32.xlu0 %v5546
    %v5548 = vpop.xlane.xlu0 %5547
    %v5549 = vsel %vm581, %v5543, -inf
    %5550 = vmax.xlane.f32.xlu0 %v5549
    %v5551 = vpop.xlane.xlu0 %5550
    %v5552 = vsub.f32 %v5540, %v5548
    %v5553 = vsub.f32 %v5543, %v5551
    %v5554 = vmul.f32 %v5552, 1.442695
    %v5555 = vpow.pop %v5554
    %v5556 = vmul.f32 %v5553, 1.442695
    %v5557 = vpow.pop %v5556
    %v5558 = vsel %vm581, %v5555, 0.0
    %5559 = vadd.xlane.f32.xlu0 %v5558
    %v5560 = vpop.xlane.xlu0 %5559
    %v5561 = vsel %vm581, %v5557, 0.0
    %5562 = vadd.xlane.f32.xlu0 %v5561
    %v5563 = vpop.xlane.xlu0 %5562
    %v5564 = vrcp.pop %v5560
    %v5565 = vrcp.pop %v5563
    %v5566 = vmul.f32 %v5555, %v5564
    %v5567 = vmul.f32 %v5557, %v5565
    %v5568 = vpack.c.bf16 %v5567, %v5566
    %v5570 = vsel %vm581, %v5568, 0
    %5572 = vmatprep.subr.bf16.mxu0 0
    %5573 = vmatpush1.bf16.msra.mxu0 %v5498
    %5574 = vmatprep.subr.bf16.mxu0 0
    %5575 = vmatpush1.bf16.msra.mxu0 0
    %5576 = vmatprep.subr.bf16.mxu0 0
    %5577 = vmatpush1.bf16.msra.mxu0 0
    %5578 = vmatprep.subr.bf16.mxu0 0
    %5579 = vmatpush1.bf16.msra.mxu0 0
    %5580 = vmatprep.subr.bf16.mxu0 0
    %5581 = vmatpush1.bf16.msra.mxu0 0
    %5582 = vmatprep.subr.bf16.mxu0 0
    %5583 = vmatpush1.bf16.msra.mxu0 0
    %5584 = vmatprep.subr.bf16.mxu0 0
    %5585 = vmatpush1.bf16.msra.mxu0 0
    %5586 = vmatprep.subr.bf16.mxu0 0
    %5587 = vmatpush1.bf16.msra.mxu0 0
    %5588 = vmatprep.subr.bf16.mxu0 0
    %5589 = vmatpush1.bf16.msra.mxu0 0
    %5590 = vmatprep.subr.bf16.mxu0 0
    %5591 = vmatpush1.bf16.msra.mxu0 0
    %5592 = vmatprep.subr.bf16.mxu0 0
    %5593 = vmatpush1.bf16.msra.mxu0 0
    %5594 = vmatprep.subr.bf16.mxu0 0
    %5595 = vmatpush1.bf16.msra.mxu0 0
    %5596 = vmatprep.subr.bf16.mxu0 0
    %5597 = vmatpush1.bf16.msra.mxu0 0
    %5598 = vmatprep.subr.bf16.mxu0 0
    %5599 = vmatpush1.bf16.msra.mxu0 0
    %5600 = vmatprep.subr.bf16.mxu0 0
    %5601 = vmatpush1.bf16.msra.mxu0 0
    %5602 = vmatprep.subr.bf16.mxu0 0
    %5603 = vmatpush1.bf16.msra.mxu0 0
    %5604 = vmatprep.mubr.bf16.mxu0 0
    %5605 = vmatmul.mubr.bf16.gmra.mrb[0].mxu0 %v5570
    %v5606 = vpop.f32.mrb[0].mxu0
    %v5607 = vadd.f32 0.0, %v5606
    %v5608 = vpop.f32.mrb[0].mxu0
    %v5609 = vpop.f32.mrb[0].mxu0
    %v5610 = vadd.f32 0.0, %v5609
    %v5611 = vpop.f32.mrb[0].mxu0
    %5612 = vdwg.mxu0
    %v5613 = vpack.c.bf16 %v5610, %v5607
    %v5614 = vld [vmem:[%s4849 + $0x20] sm:$0xf]
    %v5615 = vld [vmem:[%s4849 + $0x24] sm:$0xf]
    %v5616 = vld [vmem:[%s4849 + $0x28] sm:$0xf]
    %v5617 = vld [vmem:[%s4849 + $0x2c] sm:$0xf]
    %v5622 = vunpack.c.l.b16 %v5614
    %v5623 = vunpack.c.l.b16 %v5615
    %v5624 = vunpack.c.l.b16 %v5616
    %v5625 = vunpack.c.l.b16 %v5617
    %v5626 = vpack.c.b16 %v5623, %v5622
    %v5627 = vpack.c.b16 %v5625, %v5624
    %v5631 = vsel %vm533, %v5613, 0
    %5633 = vmatprep.subr.bf16.mxu0 0
    %5634 = vmatpush1.bf16.msra.mxu0 %v5626
    %5635 = vmatprep.subr.bf16.mxu0 0
    %5636 = vmatpush1.bf16.msra.mxu0 %v5627
    %5637 = vmatprep.subr.bf16.mxu0 0
    %5638 = vmatpush1.bf16.msra.mxu0 0
    %5639 = vmatprep.subr.bf16.mxu0 0
    %5640 = vmatpush1.bf16.msra.mxu0 0
    %5641 = vmatprep.subr.bf16.mxu0 0
    %5642 = vmatpush1.bf16.msra.mxu0 0
    %5643 = vmatprep.subr.bf16.mxu0 0
    %5644 = vmatpush1.bf16.msra.mxu0 0
    %5645 = vmatprep.subr.bf16.mxu0 0
    %5646 = vmatpush1.bf16.msra.mxu0 0
    %5647 = vmatprep.subr.bf16.mxu0 0
    %5648 = vmatpush1.bf16.msra.mxu0 0
    %5649 = vmatprep.subr.bf16.mxu0 0
    %5650 = vmatpush1.bf16.msra.mxu0 0
    %5651 = vmatprep.subr.bf16.mxu0 0
    %5652 = vmatpush1.bf16.msra.mxu0 0
    %5653 = vmatprep.subr.bf16.mxu0 0
    %5654 = vmatpush1.bf16.msra.mxu0 0
    %5655 = vmatprep.subr.bf16.mxu0 0
    %5656 = vmatpush1.bf16.msra.mxu0 0
    %5657 = vmatprep.subr.bf16.mxu0 0
    %5658 = vmatpush1.bf16.msra.mxu0 0
    %5659 = vmatprep.subr.bf16.mxu0 0
    %5660 = vmatpush1.bf16.msra.mxu0 0
    %5661 = vmatprep.subr.bf16.mxu0 0
    %5662 = vmatpush1.bf16.msra.mxu0 0
    %5663 = vmatprep.subr.bf16.mxu0 0
    %5664 = vmatpush1.bf16.msra.mxu0 0
    %5665 = vmatprep.mubr.bf16.mxu0 0
    %5666 = vmatmul.mubr.bf16.gmra.mrb[0].mxu0 %v5631
    %v5667 = vpop.f32.mrb[0].mxu0
    %v5668 = vadd.f32 0.0, %v5667
    %v5669 = vpop.f32.mrb[0].mxu0
    %v5670 = vpop.f32.mrb[0].mxu0
    %v5671 = vadd.f32 0.0, %v5670
    %v5672 = vpop.f32.mrb[0].mxu0
    %5673 = vdwg.mxu0
    %v5674 = vadd.f32 %v5286, %v5668
    %v5675 = vadd.f32 %v5289, %v5671
    %5676 = vrot.lane.b32.xlu0 %v4450, 32
    %v5677 = vpop.permute.xlu0 %5676
    %5678 = vrot.lane.b32.xlu0 %v4451, 32
    %v5679 = vpop.permute.xlu0 %5678
    %5680 = vrot.lane.b32.xlu0 %v4452, 32
    %v5681 = vpop.permute.xlu0 %5680
    %5682 = vrot.lane.b32.xlu0 %v4453, 32
    %v5683 = vpop.permute.xlu0 %5682
    %5684 = vrot.lane.b32.xlu0 %v4454, 32
    %v5685 = vpop.permute.xlu0 %5684
    %5686 = vrot.lane.b32.xlu0 %v4455, 32
    %v5687 = vpop.permute.xlu0 %5686
    %5688 = vrot.lane.b32.xlu0 %v4456, 32
    %v5689 = vpop.permute.xlu0 %5688
    %5690 = vrot.lane.b32.xlu0 %v4457, 32
    %v5691 = vpop.permute.xlu0 %5690
    %5700 = vrot.lane.b32.xlu0 %v4416, 32
    %v5701 = vpop.permute.xlu0 %5700
    %5703 = vmatprep.subr.bf16.mxu0 0
    %5704 = vmatpush1.bf16.msra.mxu0 %v5677
    %5705 = vmatprep.subr.bf16.mxu0 0
    %5706 = vmatpush1.bf16.msra.mxu0 %v5679
    %5707 = vmatprep.subr.bf16.mxu0 0
    %5708 = vmatpush1.bf16.msra.mxu0 %v5681
    %5709 = vmatprep.subr.bf16.mxu0 0
    %5710 = vmatpush1.bf16.msra.mxu0 %v5683
    %5711 = vmatprep.subr.bf16.mxu0 0
    %5712 = vmatpush1.bf16.msra.mxu0 %v5685
    %5713 = vmatprep.subr.bf16.mxu0 0
    %5714 = vmatpush1.bf16.msra.mxu0 %v5687
    %5715 = vmatprep.subr.bf16.mxu0 0
    %5716 = vmatpush1.bf16.msra.mxu0 %v5689
    %5717 = vmatprep.subr.bf16.mxu0 0
    %5718 = vmatpush1.bf16.msra.mxu0 %v5691
    %5719 = vmatprep.subr.bf16.mxu0 0
    %5720 = vmatpush1.bf16.msra.mxu0 0
    %5721 = vmatprep.subr.bf16.mxu0 0
    %5722 = vmatpush1.bf16.msra.mxu0 0
    %5723 = vmatprep.subr.bf16.mxu0 0
    %5724 = vmatpush1.bf16.msra.mxu0 0
    %5725 = vmatprep.subr.bf16.mxu0 0
    %5726 = vmatpush1.bf16.msra.mxu0 0
    %5727 = vmatprep.subr.bf16.mxu0 0
    %5728 = vmatpush1.bf16.msra.mxu0 0
    %5729 = vmatprep.subr.bf16.mxu0 0
    %5730 = vmatpush1.bf16.msra.mxu0 0
    %5731 = vmatprep.subr.bf16.mxu0 0
    %5732 = vmatpush1.bf16.msra.mxu0 0
    %5733 = vmatprep.subr.bf16.mxu0 0
    %5734 = vmatpush1.bf16.msra.mxu0 0
    %5735 = vmatprep.mubr.bf16.mxu0 0
    %5736 = vmatmul.mubr.bf16.gmra.mrb[0].mxu0 %v4392
    %v5737 = vpop.f32.mrb[0].mxu0
    %v5738 = vadd.f32 %v5701, %v5737
    %v5739 = vpop.f32.mrb[0].mxu0
    %v5740 = vpop.f32.mrb[0].mxu0
    %v5741 = vadd.f32 %v5701, %v5740
    %v5742 = vpop.f32.mrb[0].mxu0
    %5743 = vdwg.mxu0
    %v5744 = vpack.c.bf16 %v5741, %v5738
    %5745 = vrot.lane.b32.xlu0 %v4563, 32
    %v5746 = vpop.permute.xlu0 %5745
    %5747 = vrot.lane.b32.xlu0 %v4564, 32
    %v5748 = vpop.permute.xlu0 %5747
    %5749 = vrot.lane.b32.xlu0 %v4565, 32
    %v5750 = vpop.permute.xlu0 %5749
    %5751 = vrot.lane.b32.xlu0 %v4566, 32
    %v5752 = vpop.permute.xlu0 %5751
    %5753 = vrot.lane.b32.xlu0 %v4567, 32
    %v5754 = vpop.permute.xlu0 %5753
    %5755 = vrot.lane.b32.xlu0 %v4568, 32
    %v5756 = vpop.permute.xlu0 %5755
    %5757 = vrot.lane.b32.xlu0 %v4569, 32
    %v5758 = vpop.permute.xlu0 %5757
    %5759 = vrot.lane.b32.xlu0 %v4570, 32
    %v5760 = vpop.permute.xlu0 %5759
    %5769 = vrot.lane.b32.xlu0 %v4529, 32
    %v5770 = vpop.permute.xlu0 %5769
    %5772 = vmatprep.subr.bf16.mxu0 0
    %5773 = vmatpush1.bf16.msra.mxu0 %v5746
    %5774 = vmatprep.subr.bf16.mxu0 0
    %5775 = vmatpush1.bf16.msra.mxu0 %v5748
    %5776 = vmatprep.subr.bf16.mxu0 0
    %5777 = vmatpush1.bf16.msra.mxu0 %v5750
    %5778 = vmatprep.subr.bf16.mxu0 0
    %5779 = vmatpush1.bf16.msra.mxu0 %v5752
    %5780 = vmatprep.subr.bf16.mxu0 0
    %5781 = vmatpush1.bf16.msra.mxu0 %v5754
    %5782 = vmatprep.subr.bf16.mxu0 0
    %5783 = vmatpush1.bf16.msra.mxu0 %v5756
    %5784 = vmatprep.subr.bf16.mxu0 0
    %5785 = vmatpush1.bf16.msra.mxu0 %v5758
    %5786 = vmatprep.subr.bf16.mxu0 0
    %5787 = vmatpush1.bf16.msra.mxu0 %v5760
    %5788 = vmatprep.subr.bf16.mxu0 0
    %5789 = vmatpush1.bf16.msra.mxu0 0
    %5790 = vmatprep.subr.bf16.mxu0 0
    %5791 = vmatpush1.bf16.msra.mxu0 0
    %5792 = vmatprep.subr.bf16.mxu0 0
    %5793 = vmatpush1.bf16.msra.mxu0 0
    %5794 = vmatprep.subr.bf16.mxu0 0
    %5795 = vmatpush1.bf16.msra.mxu0 0
    %5796 = vmatprep.subr.bf16.mxu0 0
    %5797 = vmatpush1.bf16.msra.mxu0 0
    %5798 = vmatprep.subr.bf16.mxu0 0
    %5799 = vmatpush1.bf16.msra.mxu0 0
    %5800 = vmatprep.subr.bf16.mxu0 0
    %5801 = vmatpush1.bf16.msra.mxu0 0
    %5802 = vmatprep.subr.bf16.mxu0 0
    %5803 = vmatpush1.bf16.msra.mxu0 0
    %5804 = vmatprep.mubr.bf16.mxu0 0
    %5805 = vmatmul.mubr.bf16.gmra.mrb[0].mxu0 %v4392
    %v5806 = vpop.f32.mrb[0].mxu0
    %v5807 = vadd.f32 %v5770, %v5806
    %v5808 = vpop.f32.mrb[0].mxu0
    %v5809 = vpop.f32.mrb[0].mxu0
    %v5810 = vadd.f32 %v5770, %v5809
    %v5811 = vpop.f32.mrb[0].mxu0
    %5812 = vdwg.mxu0
    %v5813 = vpack.c.bf16 %v5810, %v5807
    %5814 = vrot.lane.b32.xlu0 %v4676, 32
    %v5815 = vpop.permute.xlu0 %5814
    %5816 = vrot.lane.b32.xlu0 %v4677, 32
    %v5817 = vpop.permute.xlu0 %5816
    %5818 = vrot.lane.b32.xlu0 %v4678, 32
    %v5819 = vpop.permute.xlu0 %5818
    %5820 = vrot.lane.b32.xlu0 %v4679, 32
    %v5821 = vpop.permute.xlu0 %5820
    %5822 = vrot.lane.b32.xlu0 %v4680, 32
    %v5823 = vpop.permute.xlu0 %5822
    %5824 = vrot.lane.b32.xlu0 %v4681, 32
    %v5825 = vpop.permute.xlu0 %5824
    %5826 = vrot.lane.b32.xlu0 %v4682, 32
    %v5827 = vpop.permute.xlu0 %5826
    %5828 = vrot.lane.b32.xlu0 %v4683, 32
    %v5829 = vpop.permute.xlu0 %5828
    %5838 = vrot.lane.b32.xlu0 %v4642, 32
    %v5839 = vpop.permute.xlu0 %5838
    %5841 = vmatprep.subr.bf16.mxu0 0
    %5842 = vmatpush1.bf16.msra.mxu0 %v5815
    %5843 = vmatprep.subr.bf16.mxu0 0
    %5844 = vmatpush1.bf16.msra.mxu0 %v5817
    %5845 = vmatprep.subr.bf16.mxu0 0
    %5846 = vmatpush1.bf16.msra.mxu0 %v5819
    %5847 = vmatprep.subr.bf16.mxu0 0
    %5848 = vmatpush1.bf16.msra.mxu0 %v5821
    %5849 = vmatprep.subr.bf16.mxu0 0
    %5850 = vmatpush1.bf16.msra.mxu0 %v5823
    %5851 = vmatprep.subr.bf16.mxu0 0
    %5852 = vmatpush1.bf16.msra.mxu0 %v5825
    %5853 = vmatprep.subr.bf16.mxu0 0
    %5854 = vmatpush1.bf16.msra.mxu0 %v5827
    %5855 = vmatprep.subr.bf16.mxu0 0
    %5856 = vmatpush1.bf16.msra.mxu0 %v5829
    %5857 = vmatprep.subr.bf16.mxu0 0
    %5858 = vmatpush1.bf16.msra.mxu0 0
    %5859 = vmatprep.subr.bf16.mxu0 0
    %5860 = vmatpush1.bf16.msra.mxu0 0
    %5861 = vmatprep.subr.bf16.mxu0 0
    %5862 = vmatpush1.bf16.msra.mxu0 0
    %5863 = vmatprep.subr.bf16.mxu0 0
    %5864 = vmatpush1.bf16.msra.mxu0 0
    %5865 = vmatprep.subr.bf16.mxu0 0
    %5866 = vmatpush1.bf16.msra.mxu0 0
    %5867 = vmatprep.subr.bf16.mxu0 0
    %5868 = vmatpush1.bf16.msra.mxu0 0
    %5869 = vmatprep.subr.bf16.mxu0 0
    %5870 = vmatpush1.bf16.msra.mxu0 0
    %5871 = vmatprep.subr.bf16.mxu0 0
    %5872 = vmatpush1.bf16.msra.mxu0 0
    %5873 = vmatprep.mubr.bf16.mxu0 0
    %5874 = vmatmul.mubr.bf16.gmra.mrb[0].mxu0 %v4392
    %v5875 = vpop.f32.mrb[0].mxu0
    %v5876 = vadd.f32 %v5839, %v5875
    %v5877 = vpop.f32.mrb[0].mxu0
    %v5878 = vpop.f32.mrb[0].mxu0
    %v5879 = vadd.f32 %v5839, %v5878
    %v5880 = vpop.f32.mrb[0].mxu0
    %5881 = vdwg.mxu0
    %v5882 = vpack.c.bf16 %v5879, %v5876
    %v5884 = vsel %vm533, %v5744, 0
    %v5887 = vsel %vm533, %v5813, 0
    %5889 = vmatprep.subr.bf16.mxu0 0
    %5890 = vmatpush1.bf16.xpose.msra.mxu0 %v5887
    %5891 = vmatprep.subr.bf16.mxu0 0
    %5892 = vmatpush1.bf16.xpose.msra.mxu0 0
    %5893 = vmatprep.subr.bf16.mxu0 0
    %5894 = vmatpush1.bf16.xpose.msra.mxu0 0
    %5895 = vmatprep.subr.bf16.mxu0 0
    %5896 = vmatpush1.bf16.xpose.msra.mxu0 0
    %5897 = vmatprep.subr.bf16.mxu0 0
    %5898 = vmatpush1.bf16.xpose.msra.mxu0 0
    %5899 = vmatprep.subr.bf16.mxu0 0
    %5900 = vmatpush1.bf16.xpose.msra.mxu0 0
    %5901 = vmatprep.subr.bf16.mxu0 0
    %5902 = vmatpush1.bf16.xpose.msra.mxu0 0
    %5903 = vmatprep.subr.bf16.mxu0 0
    %5904 = vmatpush1.bf16.xpose.msra.mxu0 0
    %5905 = vmatprep.subr.bf16.mxu0 0
    %5906 = vmatpush1.bf16.xpose.msra.mxu0 0
    %5907 = vmatprep.subr.bf16.mxu0 0
    %5908 = vmatpush1.bf16.xpose.msra.mxu0 0
    %5909 = vmatprep.subr.bf16.mxu0 0
    %5910 = vmatpush1.bf16.xpose.msra.mxu0 0
    %5911 = vmatprep.subr.bf16.mxu0 0
    %5912 = vmatpush1.bf16.xpose.msra.mxu0 0
    %5913 = vmatprep.subr.bf16.mxu0 0
    %5914 = vmatpush1.bf16.xpose.msra.mxu0 0
    %5915 = vmatprep.subr.bf16.mxu0 0
    %5916 = vmatpush1.bf16.xpose.msra.mxu0 0
    %5917 = vmatprep.subr.bf16.mxu0 0
    %5918 = vmatpush1.bf16.xpose.msra.mxu0 0
    %5919 = vmatprep.subr.bf16.mxu0 0
    %5920 = vmatpush1.bf16.xpose.msra.mxu0 0
    %5921 = vmatprep.mubr.bf16.mxu0 0
    %5922 = vmatmul.mubr.bf16.gmra.mrb[0].mxu0 %v5884
    %v5923 = vpop.f32.mrb[0].mxu0
    %v5924 = vadd.f32 %v189, %v5923
    %v5925 = vpop.f32.mrb[0].mxu0
    %v5926 = vpop.f32.mrb[0].mxu0
    %v5927 = vadd.f32 %v190, %v5926
    %v5928 = vpop.f32.mrb[0].mxu0
    %5929 = vdwg.mxu0
    %v5930 = vsel %vm581, %v5924, -inf
    %5931 = vmax.xlane.f32.xlu0 %v5930
    %v5932 = vpop.xlane.xlu0 %5931
    %v5933 = vsel %vm581, %v5927, -inf
    %5934 = vmax.xlane.f32.xlu0 %v5933
    %v5935 = vpop.xlane.xlu0 %5934
    %v5936 = vsub.f32 %v5924, %v5932
    %v5937 = vsub.f32 %v5927, %v5935
    %v5938 = vmul.f32 %v5936, 1.442695
    %v5939 = vpow.pop %v5938
    %v5940 = vmul.f32 %v5937, 1.442695
    %v5941 = vpow.pop %v5940
    %v5942 = vsel %vm581, %v5939, 0.0
    %5943 = vadd.xlane.f32.xlu0 %v5942
    %v5944 = vpop.xlane.xlu0 %5943
    %v5945 = vsel %vm581, %v5941, 0.0
    %5946 = vadd.xlane.f32.xlu0 %v5945
    %v5947 = vpop.xlane.xlu0 %5946
    %v5948 = vrcp.pop %v5944
    %v5949 = vrcp.pop %v5947
    %v5950 = vmul.f32 %v5939, %v5948
    %v5951 = vmul.f32 %v5941, %v5949
    %v5952 = vpack.c.bf16 %v5951, %v5950
    %v5954 = vsel %vm581, %v5952, 0
    %5956 = vmatprep.subr.bf16.mxu0 0
    %5957 = vmatpush1.bf16.msra.mxu0 %v5882
    %5958 = vmatprep.subr.bf16.mxu0 0
    %5959 = vmatpush1.bf16.msra.mxu0 0
    %5960 = vmatprep.subr.bf16.mxu0 0
    %5961 = vmatpush1.bf16.msra.mxu0 0
    %5962 = vmatprep.subr.bf16.mxu0 0
    %5963 = vmatpush1.bf16.msra.mxu0 0
    %5964 = vmatprep.subr.bf16.mxu0 0
    %5965 = vmatpush1.bf16.msra.mxu0 0
    %5966 = vmatprep.subr.bf16.mxu0 0
    %5967 = vmatpush1.bf16.msra.mxu0 0
    %5968 = vmatprep.subr.bf16.mxu0 0
    %5969 = vmatpush1.bf16.msra.mxu0 0
    %5970 = vmatprep.subr.bf16.mxu0 0
    %5971 = vmatpush1.bf16.msra.mxu0 0
    %5972 = vmatprep.subr.bf16.mxu0 0
    %5973 = vmatpush1.bf16.msra.mxu0 0
    %5974 = vmatprep.subr.bf16.mxu0 0
    %5975 = vmatpush1.bf16.msra.mxu0 0
    %5976 = vmatprep.subr.bf16.mxu0 0
    %5977 = vmatpush1.bf16.msra.mxu0 0
    %5978 = vmatprep.subr.bf16.mxu0 0
    %5979 = vmatpush1.bf16.msra.mxu0 0
    %5980 = vmatprep.subr.bf16.mxu0 0
    %5981 = vmatpush1.bf16.msra.mxu0 0
    %5982 = vmatprep.subr.bf16.mxu0 0
    %5983 = vmatpush1.bf16.msra.mxu0 0
    %5984 = vmatprep.subr.bf16.mxu0 0
    %5985 = vmatpush1.bf16.msra.mxu0 0
    %5986 = vmatprep.subr.bf16.mxu0 0
    %5987 = vmatpush1.bf16.msra.mxu0 0
    %5988 = vmatprep.mubr.bf16.mxu0 0
    %5989 = vmatmul.mubr.bf16.gmra.mrb[0].mxu0 %v5954
    %v5990 = vpop.f32.mrb[0].mxu0
    %v5991 = vadd.f32 0.0, %v5990
    %v5992 = vpop.f32.mrb[0].mxu0
    %v5993 = vpop.f32.mrb[0].mxu0
    %v5994 = vadd.f32 0.0, %v5993
    %v5995 = vpop.f32.mrb[0].mxu0
    %5996 = vdwg.mxu0
    %v5997 = vpack.c.bf16 %v5994, %v5991
    %v5998 = vld [vmem:[%s4849 + $0x30] sm:$0xf]
    %v5999 = vld [vmem:[%s4849 + $0x34] sm:$0xf]
    %v6000 = vld [vmem:[%s4849 + $0x38] sm:$0xf]
    %v6001 = vld [vmem:[%s4849 + $0x3c] sm:$0xf]
    %v6006 = vunpack.c.l.b16 %v5998
    %v6007 = vunpack.c.l.b16 %v5999
    %v6008 = vunpack.c.l.b16 %v6000
    %v6009 = vunpack.c.l.b16 %v6001
    %v6010 = vpack.c.b16 %v6007, %v6006
    %v6011 = vpack.c.b16 %v6009, %v6008
    %v6015 = vsel %vm533, %v5997, 0
    %6017 = vmatprep.subr.bf16.mxu0 0
    %6018 = vmatpush1.bf16.msra.mxu0 %v6010
    %6019 = vmatprep.subr.bf16.mxu0 0
    %6020 = vmatpush1.bf16.msra.mxu0 %v6011
    %6021 = vmatprep.subr.bf16.mxu0 0
    %6022 = vmatpush1.bf16.msra.mxu0 0
    %6023 = vmatprep.subr.bf16.mxu0 0
    %6024 = vmatpush1.bf16.msra.mxu0 0
    %6025 = vmatprep.subr.bf16.mxu0 0
    %6026 = vmatpush1.bf16.msra.mxu0 0
    %6027 = vmatprep.subr.bf16.mxu0 0
    %6028 = vmatpush1.bf16.msra.mxu0 0
    %6029 = vmatprep.subr.bf16.mxu0 0
    %6030 = vmatpush1.bf16.msra.mxu0 0
    %6031 = vmatprep.subr.bf16.mxu0 0
    %6032 = vmatpush1.bf16.msra.mxu0 0
    %6033 = vmatprep.subr.bf16.mxu0 0
    %6034 = vmatpush1.bf16.msra.mxu0 0
    %6035 = vmatprep.subr.bf16.mxu0 0
    %6036 = vmatpush1.bf16.msra.mxu0 0
    %6037 = vmatprep.subr.bf16.mxu0 0
    %6038 = vmatpush1.bf16.msra.mxu0 0
    %6039 = vmatprep.subr.bf16.mxu0 0
    %6040 = vmatpush1.bf16.msra.mxu0 0
    %6041 = vmatprep.subr.bf16.mxu0 0
    %6042 = vmatpush1.bf16.msra.mxu0 0
    %6043 = vmatprep.subr.bf16.mxu0 0
    %6044 = vmatpush1.bf16.msra.mxu0 0
    %6045 = vmatprep.subr.bf16.mxu0 0
    %6046 = vmatpush1.bf16.msra.mxu0 0
    %6047 = vmatprep.subr.bf16.mxu0 0
    %6048 = vmatpush1.bf16.msra.mxu0 0
    %6049 = vmatprep.mubr.bf16.mxu0 0
    %6050 = vmatmul.mubr.bf16.gmra.mrb[0].mxu0 %v6015
    %v6051 = vpop.f32.mrb[0].mxu0
    %v6052 = vadd.f32 0.0, %v6051
    %v6053 = vpop.f32.mrb[0].mxu0
    %v6054 = vpop.f32.mrb[0].mxu0
    %v6055 = vadd.f32 0.0, %v6054
    %v6056 = vpop.f32.mrb[0].mxu0
    %6057 = vdwg.mxu0
    %v6058 = vadd.f32 %v5674, %v6052
    %v6059 = vadd.f32 %v5675, %v6055
    %s6060 = scalar_lea.vmem %s4, 2
    %v6061 = vld [vmem:[%s6060] sm:$0x1]
    %v6063 = vlaneseq
    %v6064 = vshrl.u32 %v6063, 7
    %v6065 = vsub.s32 0, %v6064
    %v6066 = vrot.slane %v6061, %v6065
    %v6068 = vadd.f32 %v6058, %v6066
    %v6069 = vadd.f32 %v6059, %v6066
    %v6070 = vadd.f32 %v4390, %v6068
    %v6071 = vadd.f32 %v4391, %v6069
    %s6072 = scalar_lea.vmem %s5, 2
    %v6073 = vld [vmem:[%s6072] sm:$0x1]
    %s6074 = scalar_lea.vmem %s6, 2
    %v6075 = vld [vmem:[%s6074] sm:$0x1]
    %6076 = vadd.xlane.f32.xlu0 %v6070
    %v6077 = vpop.xlane.xlu0 %6076
    %6078 = vadd.xlane.f32.xlu0 %v6071
    %v6079 = vpop.xlane.xlu0 %6078
    %v6080 = vmul.f32 %v6077, %v1877
    %v6081 = vmul.f32 %v6079, %v1877
    %v6082 = vsub.f32 %v6070, %v6080
    %v6083 = vsub.f32 %v6071, %v6081
    %v6084 = vmul.f32 %v6082, %v6082
    %v6085 = vmul.f32 %v6083, %v6083
    %6086 = vadd.xlane.f32.xlu0 %v6084
    %v6087 = vpop.xlane.xlu0 %6086
    %6088 = vadd.xlane.f32.xlu0 %v6085
    %v6089 = vpop.xlane.xlu0 %6088
    %v6090 = vmul.f32 %v6087, %v1877
    %v6091 = vmul.f32 %v6089, %v1877
    %v6092 = vadd.f32 %v6090, 1e-05
    %v6093 = vadd.f32 %v6091, 1e-05
    %v6094 = vrsqrt.pop %v6092
    %v6095 = vrsqrt.pop %v6093
    %v6096 = vmul.f32 %v6082, %v6094
    %v6097 = vmul.f32 %v6083, %v6095
    %v6099 = vlaneseq
    %v6100 = vshrl.u32 %v6099, 7
    %v6101 = vsub.s32 0, %v6100
    %v6102 = vrot.slane %v6073, %v6101
    %v6104 = vmul.f32 %v6096, %v6102
    %v6105 = vmul.f32 %v6097, %v6102
    %v6107 = vlaneseq
    %v6108 = vshrl.u32 %v6107, 7
    %v6109 = vsub.s32 0, %v6108
    %v6110 = vrot.slane %v6075, %v6109
    %v6112 = vadd.f32 %v6104, %v6110
    %v6113 = vadd.f32 %v6105, %v6110
    %v6114 = vpack.c.bf16 %v6113, %v6112
    %s6115 = scalar_lea.vmem [#allocation9], 256
    %v6116 = vld [vmem:[%s6115] sm:$0xff]
    %v6117 = vld [vmem:[%s6115 + $0x8] sm:$0xff]
    %v6118 = vld [vmem:[%s6115 + $0x10] sm:$0xff]
    %v6119 = vld [vmem:[%s6115 + $0x18] sm:$0xff]
    %v6120 = vld [vmem:[%s6115 + $0x20] sm:$0xff]
    %v6121 = vld [vmem:[%s6115 + $0x28] sm:$0xff]
    %v6122 = vld [vmem:[%s6115 + $0x30] sm:$0xff]
    %v6123 = vld [vmem:[%s6115 + $0x38] sm:$0xff]
    %v6124 = vld [vmem:[%s6115 + $0x40] sm:$0xff]
    %v6125 = vld [vmem:[%s6115 + $0x48] sm:$0xff]
    %v6126 = vld [vmem:[%s6115 + $0x50] sm:$0xff]
    %v6127 = vld [vmem:[%s6115 + $0x58] sm:$0xff]
    %v6128 = vld [vmem:[%s6115 + $0x60] sm:$0xff]
    %v6129 = vld [vmem:[%s6115 + $0x68] sm:$0xff]
    %v6130 = vld [vmem:[%s6115 + $0x70] sm:$0xff]
    %v6131 = vld [vmem:[%s6115 + $0x78] sm:$0xff]
    %s6132 = scalar_lea.vmem %s8, 4
    %v6133 = vld [vmem:[%s6132] sm:$0x3]
    %v6135 = vlaneseq
    %v6136 = vshrl.u32 %v6135, 7
    %v6137 = vsub.s32 0, %v6136
    %v6138 = vrot.slane %v6133, %v6137
    %v6139 = vlaneseq
    %v6140 = vshrl.u32 %v6139, 7
    %v6141 = vsub.s32 1, %v6140
    %v6142 = vrot.slane %v6133, %v6141
    %v6161 = vunpack.c.l.b16 %v6116
    %v6162 = vunpack.c.h.b16 %v6116
    %v6163 = vunpack.c.l.b16 %v6117
    %v6164 = vunpack.c.h.b16 %v6117
    %v6165 = vunpack.c.l.b16 %v6118
    %v6166 = vunpack.c.h.b16 %v6118
    %v6167 = vunpack.c.l.b16 %v6119
    %v6168 = vunpack.c.h.b16 %v6119
    %v6169 = vunpack.c.l.b16 %v6120
    %v6170 = vunpack.c.h.b16 %v6120
    %v6171 = vunpack.c.l.b16 %v6121
    %v6172 = vunpack.c.h.b16 %v6121
    %v6173 = vunpack.c.l.b16 %v6122
    %v6174 = vunpack.c.h.b16 %v6122
    %v6175 = vunpack.c.l.b16 %v6123
    %v6176 = vunpack.c.h.b16 %v6123
    %v6177 = vunpack.c.l.b16 %v6124
    %v6178 = vunpack.c.h.b16 %v6124
    %v6179 = vunpack.c.l.b16 %v6125
    %v6180 = vunpack.c.h.b16 %v6125
    %v6181 = vunpack.c.l.b16 %v6126
    %v6182 = vunpack.c.h.b16 %v6126
    %v6183 = vunpack.c.l.b16 %v6127
    %v6184 = vunpack.c.h.b16 %v6127
    %v6185 = vunpack.c.l.b16 %v6128
    %v6186 = vunpack.c.h.b16 %v6128
    %v6187 = vunpack.c.l.b16 %v6129
    %v6188 = vunpack.c.h.b16 %v6129
    %v6189 = vunpack.c.l.b16 %v6130
    %v6190 = vunpack.c.h.b16 %v6130
    %v6191 = vunpack.c.l.b16 %v6131
    %v6192 = vunpack.c.h.b16 %v6131
    %v6193 = vpack.c.b16 %v6163, %v6161
    %v6194 = vpack.c.b16 %v6164, %v6162
    %v6195 = vpack.c.b16 %v6167, %v6165
    %v6196 = vpack.c.b16 %v6168, %v6166
    %v6197 = vpack.c.b16 %v6171, %v6169
    %v6198 = vpack.c.b16 %v6172, %v6170
    %v6199 = vpack.c.b16 %v6175, %v6173
    %v6200 = vpack.c.b16 %v6176, %v6174
    %v6201 = vpack.c.b16 %v6179, %v6177
    %v6202 = vpack.c.b16 %v6180, %v6178
    %v6203 = vpack.c.b16 %v6183, %v6181
    %v6204 = vpack.c.b16 %v6184, %v6182
    %v6205 = vpack.c.b16 %v6187, %v6185
    %v6206 = vpack.c.b16 %v6188, %v6186
    %v6207 = vpack.c.b16 %v6191, %v6189
    %v6208 = vpack.c.b16 %v6192, %v6190
    %6225 = vmatprep.subr.bf16.mxu0 %v6194
    %6226 = vmatpush1.bf16.msra.mxu0 %v6193
    %6227 = vmatprep.subr.bf16.mxu0 %v6196
    %6228 = vmatpush1.bf16.msra.mxu0 %v6195
    %6229 = vmatprep.subr.bf16.mxu0 %v6198
    %6230 = vmatpush1.bf16.msra.mxu0 %v6197
    %6231 = vmatprep.subr.bf16.mxu0 %v6200
    %6232 = vmatpush1.bf16.msra.mxu0 %v6199
    %6233 = vmatprep.subr.bf16.mxu0 %v6202
    %6234 = vmatpush1.bf16.msra.mxu0 %v6201
    %6235 = vmatprep.subr.bf16.mxu0 %v6204
    %6236 = vmatpush1.bf16.msra.mxu0 %v6203
    %6237 = vmatprep.subr.bf16.mxu0 %v6206
    %6238 = vmatpush1.bf16.msra.mxu0 %v6205
    %6239 = vmatprep.subr.bf16.mxu0 %v6208
    %6240 = vmatpush1.bf16.msra.mxu0 %v6207
    %6241 = vmatprep.subr.bf16.mxu0 0
    %6242 = vmatpush1.bf16.msra.mxu0 0
    %6243 = vmatprep.subr.bf16.mxu0 0
    %6244 = vmatpush1.bf16.msra.mxu0 0
    %6245 = vmatprep.subr.bf16.mxu0 0
    %6246 = vmatpush1.bf16.msra.mxu0 0
    %6247 = vmatprep.subr.bf16.mxu0 0
    %6248 = vmatpush1.bf16.msra.mxu0 0
    %6249 = vmatprep.subr.bf16.mxu0 0
    %6250 = vmatpush1.bf16.msra.mxu0 0
    %6251 = vmatprep.subr.bf16.mxu0 0
    %6252 = vmatpush1.bf16.msra.mxu0 0
    %6253 = vmatprep.subr.bf16.mxu0 0
    %6254 = vmatpush1.bf16.msra.mxu0 0
    %6255 = vmatprep.subr.bf16.mxu0 0
    %6256 = vmatpush1.bf16.msra.mxu0 0
    %6257 = vmatprep.mubr.bf16.mxu0 0
    %6258 = vmatmul.mubr.bf16.gmra.mrb[0].mxu0 %v6114
    %v6259 = vpop.f32.mrb[0].mxu0
    %v6260 = vadd.f32 %v6138, %v6259
    %v6261 = vpop.f32.mrb[0].mxu0
    %v6262 = vadd.f32 %v6142, %v6261
    %v6263 = vpop.f32.mrb[0].mxu0
    %v6264 = vadd.f32 %v6138, %v6263
    %v6265 = vpop.f32.mrb[0].mxu0
    %v6266 = vadd.f32 %v6142, %v6265
    %6267 = vdwg.mxu0
    %v6268 = vmax.f32 %v6260, 0.0
    %v6269 = vmax.f32 %v6262, 0.0
    %v6270 = vmax.f32 %v6264, 0.0
    %v6271 = vmax.f32 %v6266, 0.0
    %v6272 = vpack.c.bf16 %v6270, %v6268
    %v6273 = vpack.c.bf16 %v6271, %v6269
    %s6274 = scalar_lea.vmem [#allocation10], 256
    %v6275 = vld [vmem:[%s6274] sm:$0xf]
    %v6276 = vld [vmem:[%s6274 + $0x4] sm:$0xf]
    %v6277 = vld [vmem:[%s6274 + $0x8] sm:$0xf]
    %v6278 = vld [vmem:[%s6274 + $0xc] sm:$0xf]
    %v6279 = vld [vmem:[%s6274 + $0x10] sm:$0xf]
    %v6280 = vld [vmem:[%s6274 + $0x14] sm:$0xf]
    %v6281 = vld [vmem:[%s6274 + $0x18] sm:$0xf]
    %v6282 = vld [vmem:[%s6274 + $0x1c] sm:$0xf]
    %v6283 = vld [vmem:[%s6274 + $0x20] sm:$0xf]
    %v6284 = vld [vmem:[%s6274 + $0x24] sm:$0xf]
    %v6285 = vld [vmem:[%s6274 + $0x28] sm:$0xf]
    %v6286 = vld [vmem:[%s6274 + $0x2c] sm:$0xf]
    %v6287 = vld [vmem:[%s6274 + $0x30] sm:$0xf]
    %v6288 = vld [vmem:[%s6274 + $0x34] sm:$0xf]
    %v6289 = vld [vmem:[%s6274 + $0x38] sm:$0xf]
    %v6290 = vld [vmem:[%s6274 + $0x3c] sm:$0xf]
    %v6291 = vld [vmem:[%s6274 + $0x40] sm:$0xf]
    %v6292 = vld [vmem:[%s6274 + $0x44] sm:$0xf]
    %v6293 = vld [vmem:[%s6274 + $0x48] sm:$0xf]
    %v6294 = vld [vmem:[%s6274 + $0x4c] sm:$0xf]
    %v6295 = vld [vmem:[%s6274 + $0x50] sm:$0xf]
    %v6296 = vld [vmem:[%s6274 + $0x54] sm:$0xf]
    %v6297 = vld [vmem:[%s6274 + $0x58] sm:$0xf]
    %v6298 = vld [vmem:[%s6274 + $0x5c] sm:$0xf]
    %v6299 = vld [vmem:[%s6274 + $0x60] sm:$0xf]
    %v6300 = vld [vmem:[%s6274 + $0x64] sm:$0xf]
    %v6301 = vld [vmem:[%s6274 + $0x68] sm:$0xf]
    %v6302 = vld [vmem:[%s6274 + $0x6c] sm:$0xf]
    %v6303 = vld [vmem:[%s6274 + $0x70] sm:$0xf]
    %v6304 = vld [vmem:[%s6274 + $0x74] sm:$0xf]
    %v6305 = vld [vmem:[%s6274 + $0x78] sm:$0xf]
    %v6306 = vld [vmem:[%s6274 + $0x7c] sm:$0xf]
    %s6307 = scalar_lea.vmem %s10, 2
    %v6308 = vld [vmem:[%s6307] sm:$0x1]
    %v6310 = vlaneseq
    %v6311 = vshrl.u32 %v6310, 7
    %v6312 = vsub.s32 0, %v6311
    %v6313 = vrot.slane %v6308, %v6312
    %v6347 = vunpack.c.l.b16 %v6275
    %v6348 = vunpack.c.l.b16 %v6276
    %v6349 = vunpack.c.l.b16 %v6277
    %v6350 = vunpack.c.l.b16 %v6278
    %v6351 = vunpack.c.l.b16 %v6279
    %v6352 = vunpack.c.l.b16 %v6280
    %v6353 = vunpack.c.l.b16 %v6281
    %v6354 = vunpack.c.l.b16 %v6282
    %v6355 = vunpack.c.l.b16 %v6283
    %v6356 = vunpack.c.l.b16 %v6284
    %v6357 = vunpack.c.l.b16 %v6285
    %v6358 = vunpack.c.l.b16 %v6286
    %v6359 = vunpack.c.l.b16 %v6287
    %v6360 = vunpack.c.l.b16 %v6288
    %v6361 = vunpack.c.l.b16 %v6289
    %v6362 = vunpack.c.l.b16 %v6290
    %v6363 = vunpack.c.l.b16 %v6291
    %v6364 = vunpack.c.l.b16 %v6292
    %v6365 = vunpack.c.l.b16 %v6293
    %v6366 = vunpack.c.l.b16 %v6294
    %v6367 = vunpack.c.l.b16 %v6295
    %v6368 = vunpack.c.l.b16 %v6296
    %v6369 = vunpack.c.l.b16 %v6297
    %v6370 = vunpack.c.l.b16 %v6298
    %v6371 = vunpack.c.l.b16 %v6299
    %v6372 = vunpack.c.l.b16 %v6300
    %v6373 = vunpack.c.l.b16 %v6301
    %v6374 = vunpack.c.l.b16 %v6302
    %v6375 = vunpack.c.l.b16 %v6303
    %v6376 = vunpack.c.l.b16 %v6304
    %v6377 = vunpack.c.l.b16 %v6305
    %v6378 = vunpack.c.l.b16 %v6306
    %v6379 = vpack.c.b16 %v6348, %v6347
    %v6380 = vpack.c.b16 %v6350, %v6349
    %v6381 = vpack.c.b16 %v6352, %v6351
    %v6382 = vpack.c.b16 %v6354, %v6353
    %v6383 = vpack.c.b16 %v6356, %v6355
    %v6384 = vpack.c.b16 %v6358, %v6357
    %v6385 = vpack.c.b16 %v6360, %v6359
    %v6386 = vpack.c.b16 %v6362, %v6361
    %v6387 = vpack.c.b16 %v6364, %v6363
    %v6388 = vpack.c.b16 %v6366, %v6365
    %v6389 = vpack.c.b16 %v6368, %v6367
    %v6390 = vpack.c.b16 %v6370, %v6369
    %v6391 = vpack.c.b16 %v6372, %v6371
    %v6392 = vpack.c.b16 %v6374, %v6373
    %v6393 = vpack.c.b16 %v6376, %v6375
    %v6394 = vpack.c.b16 %v6378, %v6377
    %6411 = vmatprep.subr.bf16.mxu0 0
    %6412 = vmatpush1.bf16.msra.mxu0 %v6379
    %6413 = vmatprep.subr.bf16.mxu0 0
    %6414 = vmatpush1.bf16.msra.mxu0 %v6380
    %6415 = vmatprep.subr.bf16.mxu0 0
    %6416 = vmatpush1.bf16.msra.mxu0 %v6381
    %6417 = vmatprep.subr.bf16.mxu0 0
    %6418 = vmatpush1.bf16.msra.mxu0 %v6382
    %6419 = vmatprep.subr.bf16.mxu0 0
    %6420 = vmatpush1.bf16.msra.mxu0 %v6383
    %6421 = vmatprep.subr.bf16.mxu0 0
    %6422 = vmatpush1.bf16.msra.mxu0 %v6384
    %6423 = vmatprep.subr.bf16.mxu0 0
    %6424 = vmatpush1.bf16.msra.mxu0 %v6385
    %6425 = vmatprep.subr.bf16.mxu0 0
    %6426 = vmatpush1.bf16.msra.mxu0 %v6386
    %6427 = vmatprep.subr.bf16.mxu0 0
    %6428 = vmatpush1.bf16.msra.mxu0 %v6387
    %6429 = vmatprep.subr.bf16.mxu0 0
    %6430 = vmatpush1.bf16.msra.mxu0 %v6388
    %6431 = vmatprep.subr.bf16.mxu0 0
    %6432 = vmatpush1.bf16.msra.mxu0 %v6389
    %6433 = vmatprep.subr.bf16.mxu0 0
    %6434 = vmatpush1.bf16.msra.mxu0 %v6390
    %6435 = vmatprep.subr.bf16.mxu0 0
    %6436 = vmatpush1.bf16.msra.mxu0 %v6391
    %6437 = vmatprep.subr.bf16.mxu0 0
    %6438 = vmatpush1.bf16.msra.mxu0 %v6392
    %6439 = vmatprep.subr.bf16.mxu0 0
    %6440 = vmatpush1.bf16.msra.mxu0 %v6393
    %6441 = vmatprep.subr.bf16.mxu0 0
    %6442 = vmatpush1.bf16.msra.mxu0 %v6394
    %6443 = vmatprep.mubr.bf16.mxu0 %v6273
    %6444 = vmatmul.mubr.bf16.gmra.mrb[0].mxu0 %v6272
    %v6445 = vpop.f32.mrb[0].mxu0
    %v6446 = vadd.f32 %v6313, %v6445
    %v6447 = vpop.f32.mrb[0].mxu0
    %v6448 = vpop.f32.mrb[0].mxu0
    %v6449 = vadd.f32 %v6313, %v6448
    %v6450 = vpop.f32.mrb[0].mxu0
    %6451 = vdwg.mxu0
    %v6452 = vadd.f32 %v6112, %v6446
    %v6453 = vadd.f32 %v6113, %v6449
    %s6454 = scalar_lea.vmem %s11, 2
    %v6455 = vld [vmem:[%s6454] sm:$0x1]
    %s6456 = scalar_lea.vmem %s12, 2
    %v6457 = vld [vmem:[%s6456] sm:$0x1]
    %6458 = vadd.xlane.f32.xlu0 %v6452
    %v6459 = vpop.xlane.xlu0 %6458
    %6460 = vadd.xlane.f32.xlu0 %v6453
    %v6461 = vpop.xlane.xlu0 %6460
    %v6462 = vmul.f32 %v6459, %v1877
    %v6463 = vmul.f32 %v6461, %v1877
    %v6464 = vsub.f32 %v6452, %v6462
    %v6465 = vsub.f32 %v6453, %v6463
    %v6466 = vmul.f32 %v6464, %v6464
    %v6467 = vmul.f32 %v6465, %v6465
    %6468 = vadd.xlane.f32.xlu0 %v6466
    %v6469 = vpop.xlane.xlu0 %6468
    %6470 = vadd.xlane.f32.xlu0 %v6467
    %v6471 = vpop.xlane.xlu0 %6470
    %v6472 = vmul.f32 %v6469, %v1877
    %v6473 = vmul.f32 %v6471, %v1877
    %v6474 = vadd.f32 %v6472, 1e-05
    %v6475 = vadd.f32 %v6473, 1e-05
    %v6476 = vrsqrt.pop %v6474
    %v6477 = vrsqrt.pop %v6475
    %v6478 = vmul.f32 %v6464, %v6476
    %v6479 = vmul.f32 %v6465, %v6477
    %v6481 = vlaneseq
    %v6482 = vshrl.u32 %v6481, 7
    %v6483 = vsub.s32 0, %v6482
    %v6484 = vrot.slane %v6455, %v6483
    %v6486 = vmul.f32 %v6478, %v6484
    %v6487 = vmul.f32 %v6479, %v6484
    %v6489 = vlaneseq
    %v6490 = vshrl.u32 %v6489, 7
    %v6491 = vsub.s32 0, %v6490
    %v6492 = vrot.slane %v6457, %v6491
    %v6494 = vadd.f32 %v6486, %v6492
    %v6495 = vadd.f32 %v6487, %v6492
    %v6496 = vpack.c.bf16 %v6495, %v6494
    %s6497 = scalar_lea.vmem [#allocation4], 576
    %v6498 = vld [vmem:[%s6497] sm:$0xf]
    %v6499 = vld [vmem:[%s6497 + $0xc] sm:$0xf]
    %v6500 = vld [vmem:[%s6497 + $0x18] sm:$0xf]
    %v6501 = vld [vmem:[%s6497 + $0x24] sm:$0xf]
    %v6502 = vld [vmem:[%s6497 + $0x30] sm:$0xf]
    %v6503 = vld [vmem:[%s6497 + $0x3c] sm:$0xf]
    %v6504 = vld [vmem:[%s6497 + $0x48] sm:$0xf]
    %v6505 = vld [vmem:[%s6497 + $0x54] sm:$0xf]
    %v6506 = vld [vmem:[%s6497 + $0x60] sm:$0xf]
    %v6507 = vld [vmem:[%s6497 + $0x6c] sm:$0xf]
    %v6508 = vld [vmem:[%s6497 + $0x78] sm:$0xf]
    %v6509 = vld [vmem:[%s6497 + $0x84] sm:$0xf]
    %v6510 = vld [vmem:[%s6497 + $0x90] sm:$0xf]
    %v6511 = vld [vmem:[%s6497 + $0x9c] sm:$0xf]
    %v6512 = vld [vmem:[%s6497 + $0xa8] sm:$0xf]
    %v6513 = vld [vmem:[%s6497 + $0xb4] sm:$0xf]
    %s6514 = scalar_lea.vmem [#allocation6], 9
    %v6515 = vld [vmem:[%s6514] sm:$0x1]
    %v6517 = vlaneseq
    %v6518 = vshrl.u32 %v6517, 7
    %v6519 = vsub.s32 0, %v6518
    %v6520 = vrot.slane %v6515, %v6519
    %v6538 = vunpack.c.l.b16 %v6498
    %v6539 = vunpack.c.l.b16 %v6499
    %v6540 = vunpack.c.l.b16 %v6500
    %v6541 = vunpack.c.l.b16 %v6501
    %v6542 = vunpack.c.l.b16 %v6502
    %v6543 = vunpack.c.l.b16 %v6503
    %v6544 = vunpack.c.l.b16 %v6504
    %v6545 = vunpack.c.l.b16 %v6505
    %v6546 = vunpack.c.l.b16 %v6506
    %v6547 = vunpack.c.l.b16 %v6507
    %v6548 = vunpack.c.l.b16 %v6508
    %v6549 = vunpack.c.l.b16 %v6509
    %v6550 = vunpack.c.l.b16 %v6510
    %v6551 = vunpack.c.l.b16 %v6511
    %v6552 = vunpack.c.l.b16 %v6512
    %v6553 = vunpack.c.l.b16 %v6513
    %v6554 = vpack.c.b16 %v6539, %v6538
    %v6555 = vpack.c.b16 %v6541, %v6540
    %v6556 = vpack.c.b16 %v6543, %v6542
    %v6557 = vpack.c.b16 %v6545, %v6544
    %v6558 = vpack.c.b16 %v6547, %v6546
    %v6559 = vpack.c.b16 %v6549, %v6548
    %v6560 = vpack.c.b16 %v6551, %v6550
    %v6561 = vpack.c.b16 %v6553, %v6552
    %6570 = vmatprep.subr.bf16.mxu0 0
    %6571 = vmatpush1.bf16.msra.mxu0 %v6554
    %6572 = vmatprep.subr.bf16.mxu0 0
    %6573 = vmatpush1.bf16.msra.mxu0 %v6555
    %6574 = vmatprep.subr.bf16.mxu0 0
    %6575 = vmatpush1.bf16.msra.mxu0 %v6556
    %6576 = vmatprep.subr.bf16.mxu0 0
    %6577 = vmatpush1.bf16.msra.mxu0 %v6557
    %6578 = vmatprep.subr.bf16.mxu0 0
    %6579 = vmatpush1.bf16.msra.mxu0 %v6558
    %6580 = vmatprep.subr.bf16.mxu0 0
    %6581 = vmatpush1.bf16.msra.mxu0 %v6559
    %6582 = vmatprep.subr.bf16.mxu0 0
    %6583 = vmatpush1.bf16.msra.mxu0 %v6560
    %6584 = vmatprep.subr.bf16.mxu0 0
    %6585 = vmatpush1.bf16.msra.mxu0 %v6561
    %6586 = vmatprep.subr.bf16.mxu0 0
    %6587 = vmatpush1.bf16.msra.mxu0 0
    %6588 = vmatprep.subr.bf16.mxu0 0
    %6589 = vmatpush1.bf16.msra.mxu0 0
    %6590 = vmatprep.subr.bf16.mxu0 0
    %6591 = vmatpush1.bf16.msra.mxu0 0
    %6592 = vmatprep.subr.bf16.mxu0 0
    %6593 = vmatpush1.bf16.msra.mxu0 0
    %6594 = vmatprep.subr.bf16.mxu0 0
    %6595 = vmatpush1.bf16.msra.mxu0 0
    %6596 = vmatprep.subr.bf16.mxu0 0
    %6597 = vmatpush1.bf16.msra.mxu0 0
    %6598 = vmatprep.subr.bf16.mxu0 0
    %6599 = vmatpush1.bf16.msra.mxu0 0
    %6600 = vmatprep.subr.bf16.mxu0 0
    %6601 = vmatpush1.bf16.msra.mxu0 0
    %6602 = vmatprep.mubr.bf16.mxu0 0
    %6603 = vmatmul.mubr.bf16.gmra.mrb[0].mxu0 %v6496
    %v6604 = vpop.f32.mrb[0].mxu0
    %v6605 = vadd.f32 %v6520, %v6604
    %v6606 = vpop.f32.mrb[0].mxu0
    %v6607 = vpop.f32.mrb[0].mxu0
    %v6608 = vadd.f32 %v6520, %v6607
    %v6609 = vpop.f32.mrb[0].mxu0
    %6610 = vdwg.mxu0
    %v6611 = vpack.c.bf16 %v6608, %v6605
    %v6612 = vld [vmem:[%s6497 + $0x4] sm:$0xf]
    %v6613 = vld [vmem:[%s6497 + $0x10] sm:$0xf]
    %v6614 = vld [vmem:[%s6497 + $0x1c] sm:$0xf]
    %v6615 = vld [vmem:[%s6497 + $0x28] sm:$0xf]
    %v6616 = vld [vmem:[%s6497 + $0x34] sm:$0xf]
    %v6617 = vld [vmem:[%s6497 + $0x40] sm:$0xf]
    %v6618 = vld [vmem:[%s6497 + $0x4c] sm:$0xf]
    %v6619 = vld [vmem:[%s6497 + $0x58] sm:$0xf]
    %v6620 = vld [vmem:[%s6497 + $0x64] sm:$0xf]
    %v6621 = vld [vmem:[%s6497 + $0x70] sm:$0xf]
    %v6622 = vld [vmem:[%s6497 + $0x7c] sm:$0xf]
    %v6623 = vld [vmem:[%s6497 + $0x88] sm:$0xf]
    %v6624 = vld [vmem:[%s6497 + $0x94] sm:$0xf]
    %v6625 = vld [vmem:[%s6497 + $0xa0] sm:$0xf]
    %v6626 = vld [vmem:[%s6497 + $0xac] sm:$0xf]
    %v6627 = vld [vmem:[%s6497 + $0xb8] sm:$0xf]
    %v6628 = vld [vmem:[%s6514 + $0x1] sm:$0x1]
    %v6630 = vlaneseq
    %v6631 = vshrl.u32 %v6630, 7
    %v6632 = vsub.s32 0, %v6631
    %v6633 = vrot.slane %v6628, %v6632
    %v6651 = vunpack.c.l.b16 %v6612
    %v6652 = vunpack.c.l.b16 %v6613
    %v6653 = vunpack.c.l.b16 %v6614
    %v6654 = vunpack.c.l.b16 %v6615
    %v6655 = vunpack.c.l.b16 %v6616
    %v6656 = vunpack.c.l.b16 %v6617
    %v6657 = vunpack.c.l.b16 %v6618
    %v6658 = vunpack.c.l.b16 %v6619
    %v6659 = vunpack.c.l.b16 %v6620
    %v6660 = vunpack.c.l.b16 %v6621
    %v6661 = vunpack.c.l.b16 %v6622
    %v6662 = vunpack.c.l.b16 %v6623
    %v6663 = vunpack.c.l.b16 %v6624
    %v6664 = vunpack.c.l.b16 %v6625
    %v6665 = vunpack.c.l.b16 %v6626
    %v6666 = vunpack.c.l.b16 %v6627
    %v6667 = vpack.c.b16 %v6652, %v6651
    %v6668 = vpack.c.b16 %v6654, %v6653
    %v6669 = vpack.c.b16 %v6656, %v6655
    %v6670 = vpack.c.b16 %v6658, %v6657
    %v6671 = vpack.c.b16 %v6660, %v6659
    %v6672 = vpack.c.b16 %v6662, %v6661
    %v6673 = vpack.c.b16 %v6664, %v6663
    %v6674 = vpack.c.b16 %v6666, %v6665
    %6683 = vmatprep.subr.bf16.mxu0 0
    %6684 = vmatpush1.bf16.msra.mxu0 %v6667
    %6685 = vmatprep.subr.bf16.mxu0 0
    %6686 = vmatpush1.bf16.msra.mxu0 %v6668
    %6687 = vmatprep.subr.bf16.mxu0 0
    %6688 = vmatpush1.bf16.msra.mxu0 %v6669
    %6689 = vmatprep.subr.bf16.mxu0 0
    %6690 = vmatpush1.bf16.msra.mxu0 %v6670
    %6691 = vmatprep.subr.bf16.mxu0 0
    %6692 = vmatpush1.bf16.msra.mxu0 %v6671
    %6693 = vmatprep.subr.bf16.mxu0 0
    %6694 = vmatpush1.bf16.msra.mxu0 %v6672
    %6695 = vmatprep.subr.bf16.mxu0 0
    %6696 = vmatpush1.bf16.msra.mxu0 %v6673
    %6697 = vmatprep.subr.bf16.mxu0 0
    %6698 = vmatpush1.bf16.msra.mxu0 %v6674
    %6699 = vmatprep.subr.bf16.mxu0 0
    %6700 = vmatpush1.bf16.msra.mxu0 0
    %6701 = vmatprep.subr.bf16.mxu0 0
    %6702 = vmatpush1.bf16.msra.mxu0 0
    %6703 = vmatprep.subr.bf16.mxu0 0
    %6704 = vmatpush1.bf16.msra.mxu0 0
    %6705 = vmatprep.subr.bf16.mxu0 0
    %6706 = vmatpush1.bf16.msra.mxu0 0
    %6707 = vmatprep.subr.bf16.mxu0 0
    %6708 = vmatpush1.bf16.msra.mxu0 0
    %6709 = vmatprep.subr.bf16.mxu0 0
    %6710 = vmatpush1.bf16.msra.mxu0 0
    %6711 = vmatprep.subr.bf16.mxu0 0
    %6712 = vmatpush1.bf16.msra.mxu0 0
    %6713 = vmatprep.subr.bf16.mxu0 0
    %6714 = vmatpush1.bf16.msra.mxu0 0
    %6715 = vmatprep.mubr.bf16.mxu0 0
    %6716 = vmatmul.mubr.bf16.gmra.mrb[0].mxu0 %v6496
    %v6717 = vpop.f32.mrb[0].mxu0
    %v6718 = vadd.f32 %v6633, %v6717
    %v6719 = vpop.f32.mrb[0].mxu0
    %v6720 = vpop.f32.mrb[0].mxu0
    %v6721 = vadd.f32 %v6633, %v6720
    %v6722 = vpop.f32.mrb[0].mxu0
    %6723 = vdwg.mxu0
    %v6724 = vpack.c.bf16 %v6721, %v6718
    %v6725 = vld [vmem:[%s6497 + $0x8] sm:$0xf]
    %v6726 = vld [vmem:[%s6497 + $0x14] sm:$0xf]
    %v6727 = vld [vmem:[%s6497 + $0x20] sm:$0xf]
    %v6728 = vld [vmem:[%s6497 + $0x2c] sm:$0xf]
    %v6729 = vld [vmem:[%s6497 + $0x38] sm:$0xf]
    %v6730 = vld [vmem:[%s6497 + $0x44] sm:$0xf]
    %v6731 = vld [vmem:[%s6497 + $0x50] sm:$0xf]
    %v6732 = vld [vmem:[%s6497 + $0x5c] sm:$0xf]
    %v6733 = vld [vmem:[%s6497 + $0x68] sm:$0xf]
    %v6734 = vld [vmem:[%s6497 + $0x74] sm:$0xf]
    %v6735 = vld [vmem:[%s6497 + $0x80] sm:$0xf]
    %v6736 = vld [vmem:[%s6497 + $0x8c] sm:$0xf]
    %v6737 = vld [vmem:[%s6497 + $0x98] sm:$0xf]
    %v6738 = vld [vmem:[%s6497 + $0xa4] sm:$0xf]
    %v6739 = vld [vmem:[%s6497 + $0xb0] sm:$0xf]
    %v6740 = vld [vmem:[%s6497 + $0xbc] sm:$0xf]
    %v6741 = vld [vmem:[%s6514 + $0x2] sm:$0x1]
    %v6743 = vlaneseq
    %v6744 = vshrl.u32 %v6743, 7
    %v6745 = vsub.s32 0, %v6744
    %v6746 = vrot.slane %v6741, %v6745
    %v6764 = vunpack.c.l.b16 %v6725
    %v6765 = vunpack.c.l.b16 %v6726
    %v6766 = vunpack.c.l.b16 %v6727
    %v6767 = vunpack.c.l.b16 %v6728
    %v6768 = vunpack.c.l.b16 %v6729
    %v6769 = vunpack.c.l.b16 %v6730
    %v6770 = vunpack.c.l.b16 %v6731
    %v6771 = vunpack.c.l.b16 %v6732
    %v6772 = vunpack.c.l.b16 %v6733
    %v6773 = vunpack.c.l.b16 %v6734
    %v6774 = vunpack.c.l.b16 %v6735
    %v6775 = vunpack.c.l.b16 %v6736
    %v6776 = vunpack.c.l.b16 %v6737
    %v6777 = vunpack.c.l.b16 %v6738
    %v6778 = vunpack.c.l.b16 %v6739
    %v6779 = vunpack.c.l.b16 %v6740
    %v6780 = vpack.c.b16 %v6765, %v6764
    %v6781 = vpack.c.b16 %v6767, %v6766
    %v6782 = vpack.c.b16 %v6769, %v6768
    %v6783 = vpack.c.b16 %v6771, %v6770
    %v6784 = vpack.c.b16 %v6773, %v6772
    %v6785 = vpack.c.b16 %v6775, %v6774
    %v6786 = vpack.c.b16 %v6777, %v6776
    %v6787 = vpack.c.b16 %v6779, %v6778
    %6796 = vmatprep.subr.bf16.mxu0 0
    %6797 = vmatpush1.bf16.msra.mxu0 %v6780
    %6798 = vmatprep.subr.bf16.mxu0 0
    %6799 = vmatpush1.bf16.msra.mxu0 %v6781
    %6800 = vmatprep.subr.bf16.mxu0 0
    %6801 = vmatpush1.bf16.msra.mxu0 %v6782
    %6802 = vmatprep.subr.bf16.mxu0 0
    %6803 = vmatpush1.bf16.msra.mxu0 %v6783
    %6804 = vmatprep.subr.bf16.mxu0 0
    %6805 = vmatpush1.bf16.msra.mxu0 %v6784
    %6806 = vmatprep.subr.bf16.mxu0 0
    %6807 = vmatpush1.bf16.msra.mxu0 %v6785
    %6808 = vmatprep.subr.bf16.mxu0 0
    %6809 = vmatpush1.bf16.msra.mxu0 %v6786
    %6810 = vmatprep.subr.bf16.mxu0 0
    %6811 = vmatpush1.bf16.msra.mxu0 %v6787
    %6812 = vmatprep.subr.bf16.mxu0 0
    %6813 = vmatpush1.bf16.msra.mxu0 0
    %6814 = vmatprep.subr.bf16.mxu0 0
    %6815 = vmatpush1.bf16.msra.mxu0 0
    %6816 = vmatprep.subr.bf16.mxu0 0
    %6817 = vmatpush1.bf16.msra.mxu0 0
    %6818 = vmatprep.subr.bf16.mxu0 0
    %6819 = vmatpush1.bf16.msra.mxu0 0
    %6820 = vmatprep.subr.bf16.mxu0 0
    %6821 = vmatpush1.bf16.msra.mxu0 0
    %6822 = vmatprep.subr.bf16.mxu0 0
    %6823 = vmatpush1.bf16.msra.mxu0 0
    %6824 = vmatprep.subr.bf16.mxu0 0
    %6825 = vmatpush1.bf16.msra.mxu0 0
    %6826 = vmatprep.subr.bf16.mxu0 0
    %6827 = vmatpush1.bf16.msra.mxu0 0
    %6828 = vmatprep.mubr.bf16.mxu0 0
    %6829 = vmatmul.mubr.bf16.gmra.mrb[0].mxu0 %v6496
    %v6830 = vpop.f32.mrb[0].mxu0
    %v6831 = vadd.f32 %v6746, %v6830
    %v6832 = vpop.f32.mrb[0].mxu0
    %v6833 = vpop.f32.mrb[0].mxu0
    %v6834 = vadd.f32 %v6746, %v6833
    %v6835 = vpop.f32.mrb[0].mxu0
    %6836 = vdwg.mxu0
    %v6837 = vpack.c.bf16 %v6834, %v6831
    %v6839 = vsel %vm533, %v6611, 0
    %v6842 = vsel %vm533, %v6724, 0
    %6844 = vmatprep.subr.bf16.mxu0 0
    %6845 = vmatpush1.bf16.xpose.msra.mxu0 %v6842
    %6846 = vmatprep.subr.bf16.mxu0 0
    %6847 = vmatpush1.bf16.xpose.msra.mxu0 0
    %6848 = vmatprep.subr.bf16.mxu0 0
    %6849 = vmatpush1.bf16.xpose.msra.mxu0 0
    %6850 = vmatprep.subr.bf16.mxu0 0
    %6851 = vmatpush1.bf16.xpose.msra.mxu0 0
    %6852 = vmatprep.subr.bf16.mxu0 0
    %6853 = vmatpush1.bf16.xpose.msra.mxu0 0
    %6854 = vmatprep.subr.bf16.mxu0 0
    %6855 = vmatpush1.bf16.xpose.msra.mxu0 0
    %6856 = vmatprep.subr.bf16.mxu0 0
    %6857 = vmatpush1.bf16.xpose.msra.mxu0 0
    %6858 = vmatprep.subr.bf16.mxu0 0
    %6859 = vmatpush1.bf16.xpose.msra.mxu0 0
    %6860 = vmatprep.subr.bf16.mxu0 0
    %6861 = vmatpush1.bf16.xpose.msra.mxu0 0
    %6862 = vmatprep.subr.bf16.mxu0 0
    %6863 = vmatpush1.bf16.xpose.msra.mxu0 0
    %6864 = vmatprep.subr.bf16.mxu0 0
    %6865 = vmatpush1.bf16.xpose.msra.mxu0 0
    %6866 = vmatprep.subr.bf16.mxu0 0
    %6867 = vmatpush1.bf16.xpose.msra.mxu0 0
    %6868 = vmatprep.subr.bf16.mxu0 0
    %6869 = vmatpush1.bf16.xpose.msra.mxu0 0
    %6870 = vmatprep.subr.bf16.mxu0 0
    %6871 = vmatpush1.bf16.xpose.msra.mxu0 0
    %6872 = vmatprep.subr.bf16.mxu0 0
    %6873 = vmatpush1.bf16.xpose.msra.mxu0 0
    %6874 = vmatprep.subr.bf16.mxu0 0
    %6875 = vmatpush1.bf16.xpose.msra.mxu0 0
    %6876 = vmatprep.mubr.bf16.mxu0 0
    %6877 = vmatmul.mubr.bf16.gmra.mrb[0].mxu0 %v6839
    %v6878 = vpop.f32.mrb[0].mxu0
    %v6879 = vadd.f32 %v189, %v6878
    %v6880 = vpop.f32.mrb[0].mxu0
    %v6881 = vpop.f32.mrb[0].mxu0
    %v6882 = vadd.f32 %v190, %v6881
    %v6883 = vpop.f32.mrb[0].mxu0
    %6884 = vdwg.mxu0
    %v6885 = vsel %vm581, %v6879, -inf
    %6886 = vmax.xlane.f32.xlu0 %v6885
    %v6887 = vpop.xlane.xlu0 %6886
    %v6888 = vsel %vm581, %v6882, -inf
    %6889 = vmax.xlane.f32.xlu0 %v6888
    %v6890 = vpop.xlane.xlu0 %6889
    %v6891 = vsub.f32 %v6879, %v6887
    %v6892 = vsub.f32 %v6882, %v6890
    %v6893 = vmul.f32 %v6891, 1.442695
    %v6894 = vpow.pop %v6893
    %v6895 = vmul.f32 %v6892, 1.442695
    %v6896 = vpow.pop %v6895
    %v6897 = vsel %vm581, %v6894, 0.0
    %6898 = vadd.xlane.f32.xlu0 %v6897
    %v6899 = vpop.xlane.xlu0 %6898
    %v6900 = vsel %vm581, %v6896, 0.0
    %6901 = vadd.xlane.f32.xlu0 %v6900
    %v6902 = vpop.xlane.xlu0 %6901
    %v6903 = vrcp.pop %v6899
    %v6904 = vrcp.pop %v6902
    %v6905 = vmul.f32 %v6894, %v6903
    %v6906 = vmul.f32 %v6896, %v6904
    %v6907 = vpack.c.bf16 %v6906, %v6905
    %v6909 = vsel %vm581, %v6907, 0
    %6911 = vmatprep.subr.bf16.mxu0 0
    %6912 = vmatpush1.bf16.msra.mxu0 %v6837
    %6913 = vmatprep.subr.bf16.mxu0 0
    %6914 = vmatpush1.bf16.msra.mxu0 0
    %6915 = vmatprep.subr.bf16.mxu0 0
    %6916 = vmatpush1.bf16.msra.mxu0 0
    %6917 = vmatprep.subr.bf16.mxu0 0
    %6918 = vmatpush1.bf16.msra.mxu0 0
    %6919 = vmatprep.subr.bf16.mxu0 0
    %6920 = vmatpush1.bf16.msra.mxu0 0
    %6921 = vmatprep.subr.bf16.mxu0 0
    %6922 = vmatpush1.bf16.msra.mxu0 0
    %6923 = vmatprep.subr.bf16.mxu0 0
    %6924 = vmatpush1.bf16.msra.mxu0 0
    %6925 = vmatprep.subr.bf16.mxu0 0
    %6926 = vmatpush1.bf16.msra.mxu0 0
    %6927 = vmatprep.subr.bf16.mxu0 0
    %6928 = vmatpush1.bf16.msra.mxu0 0
    %6929 = vmatprep.subr.bf16.mxu0 0
    %6930 = vmatpush1.bf16.msra.mxu0 0
    %6931 = vmatprep.subr.bf16.mxu0 0
    %6932 = vmatpush1.bf16.msra.mxu0 0
    %6933 = vmatprep.subr.bf16.mxu0 0
    %6934 = vmatpush1.bf16.msra.mxu0 0
    %6935 = vmatprep.subr.bf16.mxu0 0
    %6936 = vmatpush1.bf16.msra.mxu0 0
    %6937 = vmatprep.subr.bf16.mxu0 0
    %6938 = vmatpush1.bf16.msra.mxu0 0
    %6939 = vmatprep.subr.bf16.mxu0 0
    %6940 = vmatpush1.bf16.msra.mxu0 0
    %6941 = vmatprep.subr.bf16.mxu0 0
    %6942 = vmatpush1.bf16.msra.mxu0 0
    %6943 = vmatprep.mubr.bf16.mxu0 0
    %6944 = vmatmul.mubr.bf16.gmra.mrb[0].mxu0 %v6909
    %v6945 = vpop.f32.mrb[0].mxu0
    %v6946 = vadd.f32 0.0, %v6945
    %v6947 = vpop.f32.mrb[0].mxu0
    %v6948 = vpop.f32.mrb[0].mxu0
    %v6949 = vadd.f32 0.0, %v6948
    %v6950 = vpop.f32.mrb[0].mxu0
    %6951 = vdwg.mxu0
    %v6952 = vpack.c.bf16 %v6949, %v6946
    %s6953 = scalar_lea.vmem [#allocation7], 192
    %v6954 = vld [vmem:[%s6953] sm:$0xf]
    %v6955 = vld [vmem:[%s6953 + $0x4] sm:$0xf]
    %v6956 = vld [vmem:[%s6953 + $0x8] sm:$0xf]
    %v6957 = vld [vmem:[%s6953 + $0xc] sm:$0xf]
    %6958 = vrot.lane.b32.xlu0 %v6554, 96
    %v6959 = vpop.permute.xlu0 %6958
    %6960 = vrot.lane.b32.xlu0 %v6555, 96
    %v6961 = vpop.permute.xlu0 %6960
    %6962 = vrot.lane.b32.xlu0 %v6556, 96
    %v6963 = vpop.permute.xlu0 %6962
    %6964 = vrot.lane.b32.xlu0 %v6557, 96
    %v6965 = vpop.permute.xlu0 %6964
    %6966 = vrot.lane.b32.xlu0 %v6558, 96
    %v6967 = vpop.permute.xlu0 %6966
    %6968 = vrot.lane.b32.xlu0 %v6559, 96
    %v6969 = vpop.permute.xlu0 %6968
    %6970 = vrot.lane.b32.xlu0 %v6560, 96
    %v6971 = vpop.permute.xlu0 %6970
    %6972 = vrot.lane.b32.xlu0 %v6561, 96
    %v6973 = vpop.permute.xlu0 %6972
    %6982 = vrot.lane.b32.xlu0 %v6520, 96
    %v6983 = vpop.permute.xlu0 %6982
    %6985 = vmatprep.subr.bf16.mxu0 0
    %6986 = vmatpush1.bf16.msra.mxu0 %v6959
    %6987 = vmatprep.subr.bf16.mxu0 0
    %6988 = vmatpush1.bf16.msra.mxu0 %v6961
    %6989 = vmatprep.subr.bf16.mxu0 0
    %6990 = vmatpush1.bf16.msra.mxu0 %v6963
    %6991 = vmatprep.subr.bf16.mxu0 0
    %6992 = vmatpush1.bf16.msra.mxu0 %v6965
    %6993 = vmatprep.subr.bf16.mxu0 0
    %6994 = vmatpush1.bf16.msra.mxu0 %v6967
    %6995 = vmatprep.subr.bf16.mxu0 0
    %6996 = vmatpush1.bf16.msra.mxu0 %v6969
    %6997 = vmatprep.subr.bf16.mxu0 0
    %6998 = vmatpush1.bf16.msra.mxu0 %v6971
    %6999 = vmatprep.subr.bf16.mxu0 0
    %7000 = vmatpush1.bf16.msra.mxu0 %v6973
    %7001 = vmatprep.subr.bf16.mxu0 0
    %7002 = vmatpush1.bf16.msra.mxu0 0
    %7003 = vmatprep.subr.bf16.mxu0 0
    %7004 = vmatpush1.bf16.msra.mxu0 0
    %7005 = vmatprep.subr.bf16.mxu0 0
    %7006 = vmatpush1.bf16.msra.mxu0 0
    %7007 = vmatprep.subr.bf16.mxu0 0
    %7008 = vmatpush1.bf16.msra.mxu0 0
    %7009 = vmatprep.subr.bf16.mxu0 0
    %7010 = vmatpush1.bf16.msra.mxu0 0
    %7011 = vmatprep.subr.bf16.mxu0 0
    %7012 = vmatpush1.bf16.msra.mxu0 0
    %7013 = vmatprep.subr.bf16.mxu0 0
    %7014 = vmatpush1.bf16.msra.mxu0 0
    %7015 = vmatprep.subr.bf16.mxu0 0
    %7016 = vmatpush1.bf16.msra.mxu0 0
    %7017 = vmatprep.mubr.bf16.mxu0 0
    %7018 = vmatmul.mubr.bf16.gmra.mrb[0].mxu0 %v6496
    %v7019 = vpop.f32.mrb[0].mxu0
    %v7020 = vadd.f32 %v6983, %v7019
    %v7021 = vpop.f32.mrb[0].mxu0
    %v7022 = vpop.f32.mrb[0].mxu0
    %v7023 = vadd.f32 %v6983, %v7022
    %v7024 = vpop.f32.mrb[0].mxu0
    %7025 = vdwg.mxu0
    %v7026 = vpack.c.bf16 %v7023, %v7020
    %7027 = vrot.lane.b32.xlu0 %v6667, 96
    %v7028 = vpop.permute.xlu0 %7027
    %7029 = vrot.lane.b32.xlu0 %v6668, 96
    %v7030 = vpop.permute.xlu0 %7029
    %7031 = vrot.lane.b32.xlu0 %v6669, 96
    %v7032 = vpop.permute.xlu0 %7031
    %7033 = vrot.lane.b32.xlu0 %v6670, 96
    %v7034 = vpop.permute.xlu0 %7033
    %7035 = vrot.lane.b32.xlu0 %v6671, 96
    %v7036 = vpop.permute.xlu0 %7035
    %7037 = vrot.lane.b32.xlu0 %v6672, 96
    %v7038 = vpop.permute.xlu0 %7037
    %7039 = vrot.lane.b32.xlu0 %v6673, 96
    %v7040 = vpop.permute.xlu0 %7039
    %7041 = vrot.lane.b32.xlu0 %v6674, 96
    %v7042 = vpop.permute.xlu0 %7041
    %7051 = vrot.lane.b32.xlu0 %v6633, 96
    %v7052 = vpop.permute.xlu0 %7051
    %7054 = vmatprep.subr.bf16.mxu0 0
    %7055 = vmatpush1.bf16.msra.mxu0 %v7028
    %7056 = vmatprep.subr.bf16.mxu0 0
    %7057 = vmatpush1.bf16.msra.mxu0 %v7030
    %7058 = vmatprep.subr.bf16.mxu0 0
    %7059 = vmatpush1.bf16.msra.mxu0 %v7032
    %7060 = vmatprep.subr.bf16.mxu0 0
    %7061 = vmatpush1.bf16.msra.mxu0 %v7034
    %7062 = vmatprep.subr.bf16.mxu0 0
    %7063 = vmatpush1.bf16.msra.mxu0 %v7036
    %7064 = vmatprep.subr.bf16.mxu0 0
    %7065 = vmatpush1.bf16.msra.mxu0 %v7038
    %7066 = vmatprep.subr.bf16.mxu0 0
    %7067 = vmatpush1.bf16.msra.mxu0 %v7040
    %7068 = vmatprep.subr.bf16.mxu0 0
    %7069 = vmatpush1.bf16.msra.mxu0 %v7042
    %7070 = vmatprep.subr.bf16.mxu0 0
    %7071 = vmatpush1.bf16.msra.mxu0 0
    %7072 = vmatprep.subr.bf16.mxu0 0
    %7073 = vmatpush1.bf16.msra.mxu0 0
    %7074 = vmatprep.subr.bf16.mxu0 0
    %7075 = vmatpush1.bf16.msra.mxu0 0
    %7076 = vmatprep.subr.bf16.mxu0 0
    %7077 = vmatpush1.bf16.msra.mxu0 0
    %7078 = vmatprep.subr.bf16.mxu0 0
    %7079 = vmatpush1.bf16.msra.mxu0 0
    %7080 = vmatprep.subr.bf16.mxu0 0
    %7081 = vmatpush1.bf16.msra.mxu0 0
    %7082 = vmatprep.subr.bf16.mxu0 0
    %7083 = vmatpush1.bf16.msra.mxu0 0
    %7084 = vmatprep.subr.bf16.mxu0 0
    %7085 = vmatpush1.bf16.msra.mxu0 0
    %7086 = vmatprep.mubr.bf16.mxu0 0
    %7087 = vmatmul.mubr.bf16.gmra.mrb[0].mxu0 %v6496
    %v7088 = vpop.f32.mrb[0].mxu0
    %v7089 = vadd.f32 %v7052, %v7088
    %v7090 = vpop.f32.mrb[0].mxu0
    %v7091 = vpop.f32.mrb[0].mxu0
    %v7092 = vadd.f32 %v7052, %v7091
    %v7093 = vpop.f32.mrb[0].mxu0
    %7094 = vdwg.mxu0
    %v7095 = vpack.c.bf16 %v7092, %v7089
    %7096 = vrot.lane.b32.xlu0 %v6780, 96
    %v7097 = vpop.permute.xlu0 %7096
    %7098 = vrot.lane.b32.xlu0 %v6781, 96
    %v7099 = vpop.permute.xlu0 %7098
    %7100 = vrot.lane.b32.xlu0 %v6782, 96
    %v7101 = vpop.permute.xlu0 %7100
    %7102 = vrot.lane.b32.xlu0 %v6783, 96
    %v7103 = vpop.permute.xlu0 %7102
    %7104 = vrot.lane.b32.xlu0 %v6784, 96
    %v7105 = vpop.permute.xlu0 %7104
    %7106 = vrot.lane.b32.xlu0 %v6785, 96
    %v7107 = vpop.permute.xlu0 %7106
    %7108 = vrot.lane.b32.xlu0 %v6786, 96
    %v7109 = vpop.permute.xlu0 %7108
    %7110 = vrot.lane.b32.xlu0 %v6787, 96
    %v7111 = vpop.permute.xlu0 %7110
    %7120 = vrot.lane.b32.xlu0 %v6746, 96
    %v7121 = vpop.permute.xlu0 %7120
    %7123 = vmatprep.subr.bf16.mxu0 0
    %7124 = vmatpush1.bf16.msra.mxu0 %v7097
    %7125 = vmatprep.subr.bf16.mxu0 0
    %7126 = vmatpush1.bf16.msra.mxu0 %v7099
    %7127 = vmatprep.subr.bf16.mxu0 0
    %7128 = vmatpush1.bf16.msra.mxu0 %v7101
    %7129 = vmatprep.subr.bf16.mxu0 0
    %7130 = vmatpush1.bf16.msra.mxu0 %v7103
    %7131 = vmatprep.subr.bf16.mxu0 0
    %7132 = vmatpush1.bf16.msra.mxu0 %v7105
    %7133 = vmatprep.subr.bf16.mxu0 0
    %7134 = vmatpush1.bf16.msra.mxu0 %v7107
    %7135 = vmatprep.subr.bf16.mxu0 0
    %7136 = vmatpush1.bf16.msra.mxu0 %v7109
    %7137 = vmatprep.subr.bf16.mxu0 0
    %7138 = vmatpush1.bf16.msra.mxu0 %v7111
    %7139 = vmatprep.subr.bf16.mxu0 0
    %7140 = vmatpush1.bf16.msra.mxu0 0
    %7141 = vmatprep.subr.bf16.mxu0 0
    %7142 = vmatpush1.bf16.msra.mxu0 0
    %7143 = vmatprep.subr.bf16.mxu0 0
    %7144 = vmatpush1.bf16.msra.mxu0 0
    %7145 = vmatprep.subr.bf16.mxu0 0
    %7146 = vmatpush1.bf16.msra.mxu0 0
    %7147 = vmatprep.subr.bf16.mxu0 0
    %7148 = vmatpush1.bf16.msra.mxu0 0
    %7149 = vmatprep.subr.bf16.mxu0 0
    %7150 = vmatpush1.bf16.msra.mxu0 0
    %7151 = vmatprep.subr.bf16.mxu0 0
    %7152 = vmatpush1.bf16.msra.mxu0 0
    %7153 = vmatprep.subr.bf16.mxu0 0
    %7154 = vmatpush1.bf16.msra.mxu0 0
    %7155 = vmatprep.mubr.bf16.mxu0 0
    %7156 = vmatmul.mubr.bf16.gmra.mrb[0].mxu0 %v6496
    %v7157 = vpop.f32.mrb[0].mxu0
    %v7158 = vadd.f32 %v7121, %v7157
    %v7159 = vpop.f32.mrb[0].mxu0
    %v7160 = vpop.f32.mrb[0].mxu0
    %v7161 = vadd.f32 %v7121, %v7160
    %v7162 = vpop.f32.mrb[0].mxu0
    %7163 = vdwg.mxu0
    %v7164 = vpack.c.bf16 %v7161, %v7158
    %v7166 = vsel %vm533, %v7026, 0
    %v7169 = vsel %vm533, %v7095, 0
    %7171 = vmatprep.subr.bf16.mxu0 0
    %7172 = vmatpush1.bf16.xpose.msra.mxu0 %v7169
    %7173 = vmatprep.subr.bf16.mxu0 0
    %7174 = vmatpush1.bf16.xpose.msra.mxu0 0
    %7175 = vmatprep.subr.bf16.mxu0 0
    %7176 = vmatpush1.bf16.xpose.msra.mxu0 0
    %7177 = vmatprep.subr.bf16.mxu0 0
    %7178 = vmatpush1.bf16.xpose.msra.mxu0 0
    %7179 = vmatprep.subr.bf16.mxu0 0
    %7180 = vmatpush1.bf16.xpose.msra.mxu0 0
    %7181 = vmatprep.subr.bf16.mxu0 0
    %7182 = vmatpush1.bf16.xpose.msra.mxu0 0
    %7183 = vmatprep.subr.bf16.mxu0 0
    %7184 = vmatpush1.bf16.xpose.msra.mxu0 0
    %7185 = vmatprep.subr.bf16.mxu0 0
    %7186 = vmatpush1.bf16.xpose.msra.mxu0 0
    %7187 = vmatprep.subr.bf16.mxu0 0
    %7188 = vmatpush1.bf16.xpose.msra.mxu0 0
    %7189 = vmatprep.subr.bf16.mxu0 0
    %7190 = vmatpush1.bf16.xpose.msra.mxu0 0
    %7191 = vmatprep.subr.bf16.mxu0 0
    %7192 = vmatpush1.bf16.xpose.msra.mxu0 0
    %7193 = vmatprep.subr.bf16.mxu0 0
    %7194 = vmatpush1.bf16.xpose.msra.mxu0 0
    %7195 = vmatprep.subr.bf16.mxu0 0
    %7196 = vmatpush1.bf16.xpose.msra.mxu0 0
    %7197 = vmatprep.subr.bf16.mxu0 0
    %7198 = vmatpush1.bf16.xpose.msra.mxu0 0
    %7199 = vmatprep.subr.bf16.mxu0 0
    %7200 = vmatpush1.bf16.xpose.msra.mxu0 0
    %7201 = vmatprep.subr.bf16.mxu0 0
    %7202 = vmatpush1.bf16.xpose.msra.mxu0 0
    %7203 = vmatprep.mubr.bf16.mxu0 0
    %7204 = vmatmul.mubr.bf16.gmra.mrb[0].mxu0 %v7166
    %v7205 = vpop.f32.mrb[0].mxu0
    %v7206 = vadd.f32 %v189, %v7205
    %v7207 = vpop.f32.mrb[0].mxu0
    %v7208 = vpop.f32.mrb[0].mxu0
    %v7209 = vadd.f32 %v190, %v7208
    %v7210 = vpop.f32.mrb[0].mxu0
    %7211 = vdwg.mxu0
    %v7212 = vsel %vm581, %v7206, -inf
    %7213 = vmax.xlane.f32.xlu0 %v7212
    %v7214 = vpop.xlane.xlu0 %7213
    %v7215 = vsel %vm581, %v7209, -inf
    %7216 = vmax.xlane.f32.xlu0 %v7215
    %v7217 = vpop.xlane.xlu0 %7216
    %v7218 = vsub.f32 %v7206, %v7214
    %v7219 = vsub.f32 %v7209, %v7217
    %v7220 = vmul.f32 %v7218, 1.442695
    %v7221 = vpow.pop %v7220
    %v7222 = vmul.f32 %v7219, 1.442695
    %v7223 = vpow.pop %v7222
    %v7224 = vsel %vm581, %v7221, 0.0
    %7225 = vadd.xlane.f32.xlu0 %v7224
    %v7226 = vpop.xlane.xlu0 %7225
    %v7227 = vsel %vm581, %v7223, 0.0
    %7228 = vadd.xlane.f32.xlu0 %v7227
    %v7229 = vpop.xlane.xlu0 %7228
    %v7230 = vrcp.pop %v7226
    %v7231 = vrcp.pop %v7229
    %v7232 = vmul.f32 %v7221, %v7230
    %v7233 = vmul.f32 %v7223, %v7231
    %v7234 = vpack.c.bf16 %v7233, %v7232
    %v7236 = vsel %vm581, %v7234, 0
    %7238 = vmatprep.subr.bf16.mxu0 0
    %7239 = vmatpush1.bf16.msra.mxu0 %v7164
    %7240 = vmatprep.subr.bf16.mxu0 0
    %7241 = vmatpush1.bf16.msra.mxu0 0
    %7242 = vmatprep.subr.bf16.mxu0 0
    %7243 = vmatpush1.bf16.msra.mxu0 0
    %7244 = vmatprep.subr.bf16.mxu0 0
    %7245 = vmatpush1.bf16.msra.mxu0 0
    %7246 = vmatprep.subr.bf16.mxu0 0
    %7247 = vmatpush1.bf16.msra.mxu0 0
    %7248 = vmatprep.subr.bf16.mxu0 0
    %7249 = vmatpush1.bf16.msra.mxu0 0
    %7250 = vmatprep.subr.bf16.mxu0 0
    %7251 = vmatpush1.bf16.msra.mxu0 0
    %7252 = vmatprep.subr.bf16.mxu0 0
    %7253 = vmatpush1.bf16.msra.mxu0 0
    %7254 = vmatprep.subr.bf16.mxu0 0
    %7255 = vmatpush1.bf16.msra.mxu0 0
    %7256 = vmatprep.subr.bf16.mxu0 0
    %7257 = vmatpush1.bf16.msra.mxu0 0
    %7258 = vmatprep.subr.bf16.mxu0 0
    %7259 = vmatpush1.bf16.msra.mxu0 0
    %7260 = vmatprep.subr.bf16.mxu0 0
    %7261 = vmatpush1.bf16.msra.mxu0 0
    %7262 = vmatprep.subr.bf16.mxu0 0
    %7263 = vmatpush1.bf16.msra.mxu0 0
    %7264 = vmatprep.subr.bf16.mxu0 0
    %7265 = vmatpush1.bf16.msra.mxu0 0
    %7266 = vmatprep.subr.bf16.mxu0 0
    %7267 = vmatpush1.bf16.msra.mxu0 0
    %7268 = vmatprep.subr.bf16.mxu0 0
    %7269 = vmatpush1.bf16.msra.mxu0 0
    %7270 = vmatprep.mubr.bf16.mxu0 0
    %7271 = vmatmul.mubr.bf16.gmra.mrb[0].mxu0 %v7236
    %v7272 = vpop.f32.mrb[0].mxu0
    %v7273 = vadd.f32 0.0, %v7272
    %v7274 = vpop.f32.mrb[0].mxu0
    %v7275 = vpop.f32.mrb[0].mxu0
    %v7276 = vadd.f32 0.0, %v7275
    %v7277 = vpop.f32.mrb[0].mxu0
    %7278 = vdwg.mxu0
    %v7279 = vpack.c.bf16 %v7276, %v7273
    %v7280 = vld [vmem:[%s6953 + $0x10] sm:$0xf]
    %v7281 = vld [vmem:[%s6953 + $0x14] sm:$0xf]
    %v7282 = vld [vmem:[%s6953 + $0x18] sm:$0xf]
    %v7283 = vld [vmem:[%s6953 + $0x1c] sm:$0xf]
    %v7288 = vunpack.c.l.b16 %v7280
    %v7289 = vunpack.c.l.b16 %v7281
    %v7290 = vunpack.c.l.b16 %v7282
    %v7291 = vunpack.c.l.b16 %v7283
    %v7292 = vpack.c.b16 %v7289, %v7288
    %v7293 = vpack.c.b16 %v7291, %v7290
    %v7297 = vsel %vm533, %v7279, 0
    %7299 = vmatprep.subr.bf16.mxu0 0
    %7300 = vmatpush1.bf16.msra.mxu0 %v7292
    %7301 = vmatprep.subr.bf16.mxu0 0
    %7302 = vmatpush1.bf16.msra.mxu0 %v7293
    %7303 = vmatprep.subr.bf16.mxu0 0
    %7304 = vmatpush1.bf16.msra.mxu0 0
    %7305 = vmatprep.subr.bf16.mxu0 0
    %7306 = vmatpush1.bf16.msra.mxu0 0
    %7307 = vmatprep.subr.bf16.mxu0 0
    %7308 = vmatpush1.bf16.msra.mxu0 0
    %7309 = vmatprep.subr.bf16.mxu0 0
    %7310 = vmatpush1.bf16.msra.mxu0 0
    %7311 = vmatprep.subr.bf16.mxu0 0
    %7312 = vmatpush1.bf16.msra.mxu0 0
    %7313 = vmatprep.subr.bf16.mxu0 0
    %7314 = vmatpush1.bf16.msra.mxu0 0
    %7315 = vmatprep.subr.bf16.mxu0 0
    %7316 = vmatpush1.bf16.msra.mxu0 0
    %7317 = vmatprep.subr.bf16.mxu0 0
    %7318 = vmatpush1.bf16.msra.mxu0 0
    %7319 = vmatprep.subr.bf16.mxu0 0
    %7320 = vmatpush1.bf16.msra.mxu0 0
    %7321 = vmatprep.subr.bf16.mxu0 0
    %7322 = vmatpush1.bf16.msra.mxu0 0
    %7323 = vmatprep.subr.bf16.mxu0 0
    %7324 = vmatpush1.bf16.msra.mxu0 0
    %7325 = vmatprep.subr.bf16.mxu0 0
    %7326 = vmatpush1.bf16.msra.mxu0 0
    %7327 = vmatprep.subr.bf16.mxu0 0
    %7328 = vmatpush1.bf16.msra.mxu0 0
    %7329 = vmatprep.subr.bf16.mxu0 0
    %7330 = vmatpush1.bf16.msra.mxu0 0
    %7331 = vmatprep.mubr.bf16.mxu0 0
    %7332 = vmatmul.mubr.bf16.gmra.mrb[0].mxu0 %v7297
    %v7333 = vpop.f32.mrb[0].mxu0
    %v7334 = vadd.f32 0.0, %v7333
    %v7335 = vpop.f32.mrb[0].mxu0
    %v7336 = vpop.f32.mrb[0].mxu0
    %v7337 = vadd.f32 0.0, %v7336
    %v7338 = vpop.f32.mrb[0].mxu0
    %7339 = vdwg.mxu0
    %v7344 = vunpack.c.l.b16 %v6954
    %v7345 = vunpack.c.l.b16 %v6955
    %v7346 = vunpack.c.l.b16 %v6956
    %v7347 = vunpack.c.l.b16 %v6957
    %v7348 = vpack.c.b16 %v7345, %v7344
    %v7349 = vpack.c.b16 %v7347, %v7346
    %v7353 = vsel %vm533, %v6952, 0
    %7355 = vmatprep.subr.bf16.mxu0 0
    %7356 = vmatpush1.bf16.msra.mxu0 %v7348
    %7357 = vmatprep.subr.bf16.mxu0 0
    %7358 = vmatpush1.bf16.msra.mxu0 %v7349
    %7359 = vmatprep.subr.bf16.mxu0 0
    %7360 = vmatpush1.bf16.msra.mxu0 0
    %7361 = vmatprep.subr.bf16.mxu0 0
    %7362 = vmatpush1.bf16.msra.mxu0 0
    %7363 = vmatprep.subr.bf16.mxu0 0
    %7364 = vmatpush1.bf16.msra.mxu0 0
    %7365 = vmatprep.subr.bf16.mxu0 0
    %7366 = vmatpush1.bf16.msra.mxu0 0
    %7367 = vmatprep.subr.bf16.mxu0 0
    %7368 = vmatpush1.bf16.msra.mxu0 0
    %7369 = vmatprep.subr.bf16.mxu0 0
    %7370 = vmatpush1.bf16.msra.mxu0 0
    %7371 = vmatprep.subr.bf16.mxu0 0
    %7372 = vmatpush1.bf16.msra.mxu0 0
    %7373 = vmatprep.subr.bf16.mxu0 0
    %7374 = vmatpush1.bf16.msra.mxu0 0
    %7375 = vmatprep.subr.bf16.mxu0 0
    %7376 = vmatpush1.bf16.msra.mxu0 0
    %7377 = vmatprep.subr.bf16.mxu0 0
    %7378 = vmatpush1.bf16.msra.mxu0 0
    %7379 = vmatprep.subr.bf16.mxu0 0
    %7380 = vmatpush1.bf16.msra.mxu0 0
    %7381 = vmatprep.subr.bf16.mxu0 0
    %7382 = vmatpush1.bf16.msra.mxu0 0
    %7383 = vmatprep.subr.bf16.mxu0 0
    %7384 = vmatpush1.bf16.msra.mxu0 0
    %7385 = vmatprep.subr.bf16.mxu0 0
    %7386 = vmatpush1.bf16.msra.mxu0 0
    %7387 = vmatprep.mubr.bf16.mxu0 0
    %7388 = vmatmul.mubr.bf16.gmra.mrb[0].mxu0 %v7353
    %v7389 = vpop.f32.mrb[0].mxu0
    %v7390 = vadd.f32 %v7334, %v7389
    %v7391 = vpop.f32.mrb[0].mxu0
    %v7392 = vpop.f32.mrb[0].mxu0
    %v7393 = vadd.f32 %v7337, %v7392
    %v7394 = vpop.f32.mrb[0].mxu0
    %7395 = vdwg.mxu0
    %7396 = vrot.lane.b32.xlu0 %v6554, 64
    %v7397 = vpop.permute.xlu0 %7396
    %7398 = vrot.lane.b32.xlu0 %v6555, 64
    %v7399 = vpop.permute.xlu0 %7398
    %7400 = vrot.lane.b32.xlu0 %v6556, 64
    %v7401 = vpop.permute.xlu0 %7400
    %7402 = vrot.lane.b32.xlu0 %v6557, 64
    %v7403 = vpop.permute.xlu0 %7402
    %7404 = vrot.lane.b32.xlu0 %v6558, 64
    %v7405 = vpop.permute.xlu0 %7404
    %7406 = vrot.lane.b32.xlu0 %v6559, 64
    %v7407 = vpop.permute.xlu0 %7406
    %7408 = vrot.lane.b32.xlu0 %v6560, 64
    %v7409 = vpop.permute.xlu0 %7408
    %7410 = vrot.lane.b32.xlu0 %v6561, 64
    %v7411 = vpop.permute.xlu0 %7410
    %7420 = vrot.lane.b32.xlu0 %v6520, 64
    %v7421 = vpop.permute.xlu0 %7420
    %7423 = vmatprep.subr.bf16.mxu0 0
    %7424 = vmatpush1.bf16.msra.mxu0 %v7397
    %7425 = vmatprep.subr.bf16.mxu0 0
    %7426 = vmatpush1.bf16.msra.mxu0 %v7399
    %7427 = vmatprep.subr.bf16.mxu0 0
    %7428 = vmatpush1.bf16.msra.mxu0 %v7401
    %7429 = vmatprep.subr.bf16.mxu0 0
    %7430 = vmatpush1.bf16.msra.mxu0 %v7403
    %7431 = vmatprep.subr.bf16.mxu0 0
    %7432 = vmatpush1.bf16.msra.mxu0 %v7405
    %7433 = vmatprep.subr.bf16.mxu0 0
    %7434 = vmatpush1.bf16.msra.mxu0 %v7407
    %7435 = vmatprep.subr.bf16.mxu0 0
    %7436 = vmatpush1.bf16.msra.mxu0 %v7409
    %7437 = vmatprep.subr.bf16.mxu0 0
    %7438 = vmatpush1.bf16.msra.mxu0 %v7411
    %7439 = vmatprep.subr.bf16.mxu0 0
    %7440 = vmatpush1.bf16.msra.mxu0 0
    %7441 = vmatprep.subr.bf16.mxu0 0
    %7442 = vmatpush1.bf16.msra.mxu0 0
    %7443 = vmatprep.subr.bf16.mxu0 0
    %7444 = vmatpush1.bf16.msra.mxu0 0
    %7445 = vmatprep.subr.bf16.mxu0 0
    %7446 = vmatpush1.bf16.msra.mxu0 0
    %7447 = vmatprep.subr.bf16.mxu0 0
    %7448 = vmatpush1.bf16.msra.mxu0 0
    %7449 = vmatprep.subr.bf16.mxu0 0
    %7450 = vmatpush1.bf16.msra.mxu0 0
    %7451 = vmatprep.subr.bf16.mxu0 0
    %7452 = vmatpush1.bf16.msra.mxu0 0
    %7453 = vmatprep.subr.bf16.mxu0 0
    %7454 = vmatpush1.bf16.msra.mxu0 0
    %7455 = vmatprep.mubr.bf16.mxu0 0
    %7456 = vmatmul.mubr.bf16.gmra.mrb[0].mxu0 %v6496
    %v7457 = vpop.f32.mrb[0].mxu0
    %v7458 = vadd.f32 %v7421, %v7457
    %v7459 = vpop.f32.mrb[0].mxu0
    %v7460 = vpop.f32.mrb[0].mxu0
    %v7461 = vadd.f32 %v7421, %v7460
    %v7462 = vpop.f32.mrb[0].mxu0
    %7463 = vdwg.mxu0
    %v7464 = vpack.c.bf16 %v7461, %v7458
    %7465 = vrot.lane.b32.xlu0 %v6667, 64
    %v7466 = vpop.permute.xlu0 %7465
    %7467 = vrot.lane.b32.xlu0 %v6668, 64
    %v7468 = vpop.permute.xlu0 %7467
    %7469 = vrot.lane.b32.xlu0 %v6669, 64
    %v7470 = vpop.permute.xlu0 %7469
    %7471 = vrot.lane.b32.xlu0 %v6670, 64
    %v7472 = vpop.permute.xlu0 %7471
    %7473 = vrot.lane.b32.xlu0 %v6671, 64
    %v7474 = vpop.permute.xlu0 %7473
    %7475 = vrot.lane.b32.xlu0 %v6672, 64
    %v7476 = vpop.permute.xlu0 %7475
    %7477 = vrot.lane.b32.xlu0 %v6673, 64
    %v7478 = vpop.permute.xlu0 %7477
    %7479 = vrot.lane.b32.xlu0 %v6674, 64
    %v7480 = vpop.permute.xlu0 %7479
    %7489 = vrot.lane.b32.xlu0 %v6633, 64
    %v7490 = vpop.permute.xlu0 %7489
    %7492 = vmatprep.subr.bf16.mxu0 0
    %7493 = vmatpush1.bf16.msra.mxu0 %v7466
    %7494 = vmatprep.subr.bf16.mxu0 0
    %7495 = vmatpush1.bf16.msra.mxu0 %v7468
    %7496 = vmatprep.subr.bf16.mxu0 0
    %7497 = vmatpush1.bf16.msra.mxu0 %v7470
    %7498 = vmatprep.subr.bf16.mxu0 0
    %7499 = vmatpush1.bf16.msra.mxu0 %v7472
    %7500 = vmatprep.subr.bf16.mxu0 0
    %7501 = vmatpush1.bf16.msra.mxu0 %v7474
    %7502 = vmatprep.subr.bf16.mxu0 0
    %7503 = vmatpush1.bf16.msra.mxu0 %v7476
    %7504 = vmatprep.subr.bf16.mxu0 0
    %7505 = vmatpush1.bf16.msra.mxu0 %v7478
    %7506 = vmatprep.subr.bf16.mxu0 0
    %7507 = vmatpush1.bf16.msra.mxu0 %v7480
    %7508 = vmatprep.subr.bf16.mxu0 0
    %7509 = vmatpush1.bf16.msra.mxu0 0
    %7510 = vmatprep.subr.bf16.mxu0 0
    %7511 = vmatpush1.bf16.msra.mxu0 0
    %7512 = vmatprep.subr.bf16.mxu0 0
    %7513 = vmatpush1.bf16.msra.mxu0 0
    %7514 = vmatprep.subr.bf16.mxu0 0
    %7515 = vmatpush1.bf16.msra.mxu0 0
    %7516 = vmatprep.subr.bf16.mxu0 0
    %7517 = vmatpush1.bf16.msra.mxu0 0
    %7518 = vmatprep.subr.bf16.mxu0 0
    %7519 = vmatpush1.bf16.msra.mxu0 0
    %7520 = vmatprep.subr.bf16.mxu0 0
    %7521 = vmatpush1.bf16.msra.mxu0 0
    %7522 = vmatprep.subr.bf16.mxu0 0
    %7523 = vmatpush1.bf16.msra.mxu0 0
    %7524 = vmatprep.mubr.bf16.mxu0 0
    %7525 = vmatmul.mubr.bf16.gmra.mrb[0].mxu0 %v6496
    %v7526 = vpop.f32.mrb[0].mxu0
    %v7527 = vadd.f32 %v7490, %v7526
    %v7528 = vpop.f32.mrb[0].mxu0
    %v7529 = vpop.f32.mrb[0].mxu0
    %v7530 = vadd.f32 %v7490, %v7529
    %v7531 = vpop.f32.mrb[0].mxu0
    %7532 = vdwg.mxu0
    %v7533 = vpack.c.bf16 %v7530, %v7527
    %7534 = vrot.lane.b32.xlu0 %v6780, 64
    %v7535 = vpop.permute.xlu0 %7534
    %7536 = vrot.lane.b32.xlu0 %v6781, 64
    %v7537 = vpop.permute.xlu0 %7536
    %7538 = vrot.lane.b32.xlu0 %v6782, 64
    %v7539 = vpop.permute.xlu0 %7538
    %7540 = vrot.lane.b32.xlu0 %v6783, 64
    %v7541 = vpop.permute.xlu0 %7540
    %7542 = vrot.lane.b32.xlu0 %v6784, 64
    %v7543 = vpop.permute.xlu0 %7542
    %7544 = vrot.lane.b32.xlu0 %v6785, 64
    %v7545 = vpop.permute.xlu0 %7544
    %7546 = vrot.lane.b32.xlu0 %v6786, 64
    %v7547 = vpop.permute.xlu0 %7546
    %7548 = vrot.lane.b32.xlu0 %v6787, 64
    %v7549 = vpop.permute.xlu0 %7548
    %7558 = vrot.lane.b32.xlu0 %v6746, 64
    %v7559 = vpop.permute.xlu0 %7558
    %7561 = vmatprep.subr.bf16.mxu0 0
    %7562 = vmatpush1.bf16.msra.mxu0 %v7535
    %7563 = vmatprep.subr.bf16.mxu0 0
    %7564 = vmatpush1.bf16.msra.mxu0 %v7537
    %7565 = vmatprep.subr.bf16.mxu0 0
    %7566 = vmatpush1.bf16.msra.mxu0 %v7539
    %7567 = vmatprep.subr.bf16.mxu0 0
    %7568 = vmatpush1.bf16.msra.mxu0 %v7541
    %7569 = vmatprep.subr.bf16.mxu0 0
    %7570 = vmatpush1.bf16.msra.mxu0 %v7543
    %7571 = vmatprep.subr.bf16.mxu0 0
    %7572 = vmatpush1.bf16.msra.mxu0 %v7545
    %7573 = vmatprep.subr.bf16.mxu0 0
    %7574 = vmatpush1.bf16.msra.mxu0 %v7547
    %7575 = vmatprep.subr.bf16.mxu0 0
    %7576 = vmatpush1.bf16.msra.mxu0 %v7549
    %7577 = vmatprep.subr.bf16.mxu0 0
    %7578 = vmatpush1.bf16.msra.mxu0 0
    %7579 = vmatprep.subr.bf16.mxu0 0
    %7580 = vmatpush1.bf16.msra.mxu0 0
    %7581 = vmatprep.subr.bf16.mxu0 0
    %7582 = vmatpush1.bf16.msra.mxu0 0
    %7583 = vmatprep.subr.bf16.mxu0 0
    %7584 = vmatpush1.bf16.msra.mxu0 0
    %7585 = vmatprep.subr.bf16.mxu0 0
    %7586 = vmatpush1.bf16.msra.mxu0 0
    %7587 = vmatprep.subr.bf16.mxu0 0
    %7588 = vmatpush1.bf16.msra.mxu0 0
    %7589 = vmatprep.subr.bf16.mxu0 0
    %7590 = vmatpush1.bf16.msra.mxu0 0
    %7591 = vmatprep.subr.bf16.mxu0 0
    %7592 = vmatpush1.bf16.msra.mxu0 0
    %7593 = vmatprep.mubr.bf16.mxu0 0
    %7594 = vmatmul.mubr.bf16.gmra.mrb[0].mxu0 %v6496
    %v7595 = vpop.f32.mrb[0].mxu0
    %v7596 = vadd.f32 %v7559, %v7595
    %v7597 = vpop.f32.mrb[0].mxu0
    %v7598 = vpop.f32.mrb[0].mxu0
    %v7599 = vadd.f32 %v7559, %v7598
    %v7600 = vpop.f32.mrb[0].mxu0
    %7601 = vdwg.mxu0
    %v7602 = vpack.c.bf16 %v7599, %v7596
    %v7604 = vsel %vm533, %v7464, 0
    %v7607 = vsel %vm533, %v7533, 0
    %7609 = vmatprep.subr.bf16.mxu0 0
    %7610 = vmatpush1.bf16.xpose.msra.mxu0 %v7607
    %7611 = vmatprep.subr.bf16.mxu0 0
    %7612 = vmatpush1.bf16.xpose.msra.mxu0 0
    %7613 = vmatprep.subr.bf16.mxu0 0
    %7614 = vmatpush1.bf16.xpose.msra.mxu0 0
    %7615 = vmatprep.subr.bf16.mxu0 0
    %7616 = vmatpush1.bf16.xpose.msra.mxu0 0
    %7617 = vmatprep.subr.bf16.mxu0 0
    %7618 = vmatpush1.bf16.xpose.msra.mxu0 0
    %7619 = vmatprep.subr.bf16.mxu0 0
    %7620 = vmatpush1.bf16.xpose.msra.mxu0 0
    %7621 = vmatprep.subr.bf16.mxu0 0
    %7622 = vmatpush1.bf16.xpose.msra.mxu0 0
    %7623 = vmatprep.subr.bf16.mxu0 0
    %7624 = vmatpush1.bf16.xpose.msra.mxu0 0
    %7625 = vmatprep.subr.bf16.mxu0 0
    %7626 = vmatpush1.bf16.xpose.msra.mxu0 0
    %7627 = vmatprep.subr.bf16.mxu0 0
    %7628 = vmatpush1.bf16.xpose.msra.mxu0 0
    %7629 = vmatprep.subr.bf16.mxu0 0
    %7630 = vmatpush1.bf16.xpose.msra.mxu0 0
    %7631 = vmatprep.subr.bf16.mxu0 0
    %7632 = vmatpush1.bf16.xpose.msra.mxu0 0
    %7633 = vmatprep.subr.bf16.mxu0 0
    %7634 = vmatpush1.bf16.xpose.msra.mxu0 0
    %7635 = vmatprep.subr.bf16.mxu0 0
    %7636 = vmatpush1.bf16.xpose.msra.mxu0 0
    %7637 = vmatprep.subr.bf16.mxu0 0
    %7638 = vmatpush1.bf16.xpose.msra.mxu0 0
    %7639 = vmatprep.subr.bf16.mxu0 0
    %7640 = vmatpush1.bf16.xpose.msra.mxu0 0
    %7641 = vmatprep.mubr.bf16.mxu0 0
    %7642 = vmatmul.mubr.bf16.gmra.mrb[0].mxu0 %v7604
    %v7643 = vpop.f32.mrb[0].mxu0
    %v7644 = vadd.f32 %v189, %v7643
    %v7645 = vpop.f32.mrb[0].mxu0
    %v7646 = vpop.f32.mrb[0].mxu0
    %v7647 = vadd.f32 %v190, %v7646
    %v7648 = vpop.f32.mrb[0].mxu0
    %7649 = vdwg.mxu0
    %v7650 = vsel %vm581, %v7644, -inf
    %7651 = vmax.xlane.f32.xlu0 %v7650
    %v7652 = vpop.xlane.xlu0 %7651
    %v7653 = vsel %vm581, %v7647, -inf
    %7654 = vmax.xlane.f32.xlu0 %v7653
    %v7655 = vpop.xlane.xlu0 %7654
    %v7656 = vsub.f32 %v7644, %v7652
    %v7657 = vsub.f32 %v7647, %v7655
    %v7658 = vmul.f32 %v7656, 1.442695
    %v7659 = vpow.pop %v7658
    %v7660 = vmul.f32 %v7657, 1.442695
    %v7661 = vpow.pop %v7660
    %v7662 = vsel %vm581, %v7659, 0.0
    %7663 = vadd.xlane.f32.xlu0 %v7662
    %v7664 = vpop.xlane.xlu0 %7663
    %v7665 = vsel %vm581, %v7661, 0.0
    %7666 = vadd.xlane.f32.xlu0 %v7665
    %v7667 = vpop.xlane.xlu0 %7666
    %v7668 = vrcp.pop %v7664
    %v7669 = vrcp.pop %v7667
    %v7670 = vmul.f32 %v7659, %v7668
    %v7671 = vmul.f32 %v7661, %v7669
    %v7672 = vpack.c.bf16 %v7671, %v7670
    %v7674 = vsel %vm581, %v7672, 0
    %7676 = vmatprep.subr.bf16.mxu0 0
    %7677 = vmatpush1.bf16.msra.mxu0 %v7602
    %7678 = vmatprep.subr.bf16.mxu0 0
    %7679 = vmatpush1.bf16.msra.mxu0 0
    %7680 = vmatprep.subr.bf16.mxu0 0
    %7681 = vmatpush1.bf16.msra.mxu0 0
    %7682 = vmatprep.subr.bf16.mxu0 0
    %7683 = vmatpush1.bf16.msra.mxu0 0
    %7684 = vmatprep.subr.bf16.mxu0 0
    %7685 = vmatpush1.bf16.msra.mxu0 0
    %7686 = vmatprep.subr.bf16.mxu0 0
    %7687 = vmatpush1.bf16.msra.mxu0 0
    %7688 = vmatprep.subr.bf16.mxu0 0
    %7689 = vmatpush1.bf16.msra.mxu0 0
    %7690 = vmatprep.subr.bf16.mxu0 0
    %7691 = vmatpush1.bf16.msra.mxu0 0
    %7692 = vmatprep.subr.bf16.mxu0 0
    %7693 = vmatpush1.bf16.msra.mxu0 0
    %7694 = vmatprep.subr.bf16.mxu0 0
    %7695 = vmatpush1.bf16.msra.mxu0 0
    %7696 = vmatprep.subr.bf16.mxu0 0
    %7697 = vmatpush1.bf16.msra.mxu0 0
    %7698 = vmatprep.subr.bf16.mxu0 0
    %7699 = vmatpush1.bf16.msra.mxu0 0
    %7700 = vmatprep.subr.bf16.mxu0 0
    %7701 = vmatpush1.bf16.msra.mxu0 0
    %7702 = vmatprep.subr.bf16.mxu0 0
    %7703 = vmatpush1.bf16.msra.mxu0 0
    %7704 = vmatprep.subr.bf16.mxu0 0
    %7705 = vmatpush1.bf16.msra.mxu0 0
    %7706 = vmatprep.subr.bf16.mxu0 0
    %7707 = vmatpush1.bf16.msra.mxu0 0
    %7708 = vmatprep.mubr.bf16.mxu0 0
    %7709 = vmatmul.mubr.bf16.gmra.mrb[0].mxu0 %v7674
    %v7710 = vpop.f32.mrb[0].mxu0
    %v7711 = vadd.f32 0.0, %v7710
    %v7712 = vpop.f32.mrb[0].mxu0
    %v7713 = vpop.f32.mrb[0].mxu0
    %v7714 = vadd.f32 0.0, %v7713
    %v7715 = vpop.f32.mrb[0].mxu0
    %7716 = vdwg.mxu0
    %v7717 = vpack.c.bf16 %v7714, %v7711
    %v7718 = vld [vmem:[%s6953 + $0x20] sm:$0xf]
    %v7719 = vld [vmem:[%s6953 + $0x24] sm:$0xf]
    %v7720 = vld [vmem:[%s6953 + $0x28] sm:$0xf]
    %v7721 = vld [vmem:[%s6953 + $0x2c] sm:$0xf]
    %v7726 = vunpack.c.l.b16 %v7718
    %v7727 = vunpack.c.l.b16 %v7719
    %v7728 = vunpack.c.l.b16 %v7720
    %v7729 = vunpack.c.l.b16 %v7721
    %v7730 = vpack.c.b16 %v7727, %v7726
    %v7731 = vpack.c.b16 %v7729, %v7728
    %v7735 = vsel %vm533, %v7717, 0
    %7737 = vmatprep.subr.bf16.mxu0 0
    %7738 = vmatpush1.bf16.msra.mxu0 %v7730
    %7739 = vmatprep.subr.bf16.mxu0 0
    %7740 = vmatpush1.bf16.msra.mxu0 %v7731
    %7741 = vmatprep.subr.bf16.mxu0 0
    %7742 = vmatpush1.bf16.msra.mxu0 0
    %7743 = vmatprep.subr.bf16.mxu0 0
    %7744 = vmatpush1.bf16.msra.mxu0 0
    %7745 = vmatprep.subr.bf16.mxu0 0
    %7746 = vmatpush1.bf16.msra.mxu0 0
    %7747 = vmatprep.subr.bf16.mxu0 0
    %7748 = vmatpush1.bf16.msra.mxu0 0
    %7749 = vmatprep.subr.bf16.mxu0 0
    %7750 = vmatpush1.bf16.msra.mxu0 0
    %7751 = vmatprep.subr.bf16.mxu0 0
    %7752 = vmatpush1.bf16.msra.mxu0 0
    %7753 = vmatprep.subr.bf16.mxu0 0
    %7754 = vmatpush1.bf16.msra.mxu0 0
    %7755 = vmatprep.subr.bf16.mxu0 0
    %7756 = vmatpush1.bf16.msra.mxu0 0
    %7757 = vmatprep.subr.bf16.mxu0 0
    %7758 = vmatpush1.bf16.msra.mxu0 0
    %7759 = vmatprep.subr.bf16.mxu0 0
    %7760 = vmatpush1.bf16.msra.mxu0 0
    %7761 = vmatprep.subr.bf16.mxu0 0
    %7762 = vmatpush1.bf16.msra.mxu0 0
    %7763 = vmatprep.subr.bf16.mxu0 0
    %7764 = vmatpush1.bf16.msra.mxu0 0
    %7765 = vmatprep.subr.bf16.mxu0 0
    %7766 = vmatpush1.bf16.msra.mxu0 0
    %7767 = vmatprep.subr.bf16.mxu0 0
    %7768 = vmatpush1.bf16.msra.mxu0 0
    %7769 = vmatprep.mubr.bf16.mxu0 0
    %7770 = vmatmul.mubr.bf16.gmra.mrb[0].mxu0 %v7735
    %v7771 = vpop.f32.mrb[0].mxu0
    %v7772 = vadd.f32 0.0, %v7771
    %v7773 = vpop.f32.mrb[0].mxu0
    %v7774 = vpop.f32.mrb[0].mxu0
    %v7775 = vadd.f32 0.0, %v7774
    %v7776 = vpop.f32.mrb[0].mxu0
    %7777 = vdwg.mxu0
    %v7778 = vadd.f32 %v7390, %v7772
    %v7779 = vadd.f32 %v7393, %v7775
    %7780 = vrot.lane.b32.xlu0 %v6554, 32
    %v7781 = vpop.permute.xlu0 %7780
    %7782 = vrot.lane.b32.xlu0 %v6555, 32
    %v7783 = vpop.permute.xlu0 %7782
    %7784 = vrot.lane.b32.xlu0 %v6556, 32
    %v7785 = vpop.permute.xlu0 %7784
    %7786 = vrot.lane.b32.xlu0 %v6557, 32
    %v7787 = vpop.permute.xlu0 %7786
    %7788 = vrot.lane.b32.xlu0 %v6558, 32
    %v7789 = vpop.permute.xlu0 %7788
    %7790 = vrot.lane.b32.xlu0 %v6559, 32
    %v7791 = vpop.permute.xlu0 %7790
    %7792 = vrot.lane.b32.xlu0 %v6560, 32
    %v7793 = vpop.permute.xlu0 %7792
    %7794 = vrot.lane.b32.xlu0 %v6561, 32
    %v7795 = vpop.permute.xlu0 %7794
    %7804 = vrot.lane.b32.xlu0 %v6520, 32
    %v7805 = vpop.permute.xlu0 %7804
    %7807 = vmatprep.subr.bf16.mxu0 0
    %7808 = vmatpush1.bf16.msra.mxu0 %v7781
    %7809 = vmatprep.subr.bf16.mxu0 0
    %7810 = vmatpush1.bf16.msra.mxu0 %v7783
    %7811 = vmatprep.subr.bf16.mxu0 0
    %7812 = vmatpush1.bf16.msra.mxu0 %v7785
    %7813 = vmatprep.subr.bf16.mxu0 0
    %7814 = vmatpush1.bf16.msra.mxu0 %v7787
    %7815 = vmatprep.subr.bf16.mxu0 0
    %7816 = vmatpush1.bf16.msra.mxu0 %v7789
    %7817 = vmatprep.subr.bf16.mxu0 0
    %7818 = vmatpush1.bf16.msra.mxu0 %v7791
    %7819 = vmatprep.subr.bf16.mxu0 0
    %7820 = vmatpush1.bf16.msra.mxu0 %v7793
    %7821 = vmatprep.subr.bf16.mxu0 0
    %7822 = vmatpush1.bf16.msra.mxu0 %v7795
    %7823 = vmatprep.subr.bf16.mxu0 0
    %7824 = vmatpush1.bf16.msra.mxu0 0
    %7825 = vmatprep.subr.bf16.mxu0 0
    %7826 = vmatpush1.bf16.msra.mxu0 0
    %7827 = vmatprep.subr.bf16.mxu0 0
    %7828 = vmatpush1.bf16.msra.mxu0 0
    %7829 = vmatprep.subr.bf16.mxu0 0
    %7830 = vmatpush1.bf16.msra.mxu0 0
    %7831 = vmatprep.subr.bf16.mxu0 0
    %7832 = vmatpush1.bf16.msra.mxu0 0
    %7833 = vmatprep.subr.bf16.mxu0 0
    %7834 = vmatpush1.bf16.msra.mxu0 0
    %7835 = vmatprep.subr.bf16.mxu0 0
    %7836 = vmatpush1.bf16.msra.mxu0 0
    %7837 = vmatprep.subr.bf16.mxu0 0
    %7838 = vmatpush1.bf16.msra.mxu0 0
    %7839 = vmatprep.mubr.bf16.mxu0 0
    %7840 = vmatmul.mubr.bf16.gmra.mrb[0].mxu0 %v6496
    %v7841 = vpop.f32.mrb[0].mxu0
    %v7842 = vadd.f32 %v7805, %v7841
    %v7843 = vpop.f32.mrb[0].mxu0
    %v7844 = vpop.f32.mrb[0].mxu0
    %v7845 = vadd.f32 %v7805, %v7844
    %v7846 = vpop.f32.mrb[0].mxu0
    %7847 = vdwg.mxu0
    %v7848 = vpack.c.bf16 %v7845, %v7842
    %7849 = vrot.lane.b32.xlu0 %v6667, 32
    %v7850 = vpop.permute.xlu0 %7849
    %7851 = vrot.lane.b32.xlu0 %v6668, 32
    %v7852 = vpop.permute.xlu0 %7851
    %7853 = vrot.lane.b32.xlu0 %v6669, 32
    %v7854 = vpop.permute.xlu0 %7853
    %7855 = vrot.lane.b32.xlu0 %v6670, 32
    %v7856 = vpop.permute.xlu0 %7855
    %7857 = vrot.lane.b32.xlu0 %v6671, 32
    %v7858 = vpop.permute.xlu0 %7857
    %7859 = vrot.lane.b32.xlu0 %v6672, 32
    %v7860 = vpop.permute.xlu0 %7859
    %7861 = vrot.lane.b32.xlu0 %v6673, 32
    %v7862 = vpop.permute.xlu0 %7861
    %7863 = vrot.lane.b32.xlu0 %v6674, 32
    %v7864 = vpop.permute.xlu0 %7863
    %7873 = vrot.lane.b32.xlu0 %v6633, 32
    %v7874 = vpop.permute.xlu0 %7873
    %7876 = vmatprep.subr.bf16.mxu0 0
    %7877 = vmatpush1.bf16.msra.mxu0 %v7850
    %7878 = vmatprep.subr.bf16.mxu0 0
    %7879 = vmatpush1.bf16.msra.mxu0 %v7852
    %7880 = vmatprep.subr.bf16.mxu0 0
    %7881 = vmatpush1.bf16.msra.mxu0 %v7854
    %7882 = vmatprep.subr.bf16.mxu0 0
    %7883 = vmatpush1.bf16.msra.mxu0 %v7856
    %7884 = vmatprep.subr.bf16.mxu0 0
    %7885 = vmatpush1.bf16.msra.mxu0 %v7858
    %7886 = vmatprep.subr.bf16.mxu0 0
    %7887 = vmatpush1.bf16.msra.mxu0 %v7860
    %7888 = vmatprep.subr.bf16.mxu0 0
    %7889 = vmatpush1.bf16.msra.mxu0 %v7862
    %7890 = vmatprep.subr.bf16.mxu0 0
    %7891 = vmatpush1.bf16.msra.mxu0 %v7864
    %7892 = vmatprep.subr.bf16.mxu0 0
    %7893 = vmatpush1.bf16.msra.mxu0 0
    %7894 = vmatprep.subr.bf16.mxu0 0
    %7895 = vmatpush1.bf16.msra.mxu0 0
    %7896 = vmatprep.subr.bf16.mxu0 0
    %7897 = vmatpush1.bf16.msra.mxu0 0
    %7898 = vmatprep.subr.bf16.mxu0 0
    %7899 = vmatpush1.bf16.msra.mxu0 0
    %7900 = vmatprep.subr.bf16.mxu0 0
    %7901 = vmatpush1.bf16.msra.mxu0 0
    %7902 = vmatprep.subr.bf16.mxu0 0
    %7903 = vmatpush1.bf16.msra.mxu0 0
    %7904 = vmatprep.subr.bf16.mxu0 0
    %7905 = vmatpush1.bf16.msra.mxu0 0
    %7906 = vmatprep.subr.bf16.mxu0 0
    %7907 = vmatpush1.bf16.msra.mxu0 0
    %7908 = vmatprep.mubr.bf16.mxu0 0
    %7909 = vmatmul.mubr.bf16.gmra.mrb[0].mxu0 %v6496
    %v7910 = vpop.f32.mrb[0].mxu0
    %v7911 = vadd.f32 %v7874, %v7910
    %v7912 = vpop.f32.mrb[0].mxu0
    %v7913 = vpop.f32.mrb[0].mxu0
    %v7914 = vadd.f32 %v7874, %v7913
    %v7915 = vpop.f32.mrb[0].mxu0
    %7916 = vdwg.mxu0
    %v7917 = vpack.c.bf16 %v7914, %v7911
    %7918 = vrot.lane.b32.xlu0 %v6780, 32
    %v7919 = vpop.permute.xlu0 %7918
    %7920 = vrot.lane.b32.xlu0 %v6781, 32
    %v7921 = vpop.permute.xlu0 %7920
    %7922 = vrot.lane.b32.xlu0 %v6782, 32
    %v7923 = vpop.permute.xlu0 %7922
    %7924 = vrot.lane.b32.xlu0 %v6783, 32
    %v7925 = vpop.permute.xlu0 %7924
    %7926 = vrot.lane.b32.xlu0 %v6784, 32
    %v7927 = vpop.permute.xlu0 %7926
    %7928 = vrot.lane.b32.xlu0 %v6785, 32
    %v7929 = vpop.permute.xlu0 %7928
    %7930 = vrot.lane.b32.xlu0 %v6786, 32
    %v7931 = vpop.permute.xlu0 %7930
    %7932 = vrot.lane.b32.xlu0 %v6787, 32
    %v7933 = vpop.permute.xlu0 %7932
    %7942 = vrot.lane.b32.xlu0 %v6746, 32
    %v7943 = vpop.permute.xlu0 %7942
    %7945 = vmatprep.subr.bf16.mxu0 0
    %7946 = vmatpush1.bf16.msra.mxu0 %v7919
    %7947 = vmatprep.subr.bf16.mxu0 0
    %7948 = vmatpush1.bf16.msra.mxu0 %v7921
    %7949 = vmatprep.subr.bf16.mxu0 0
    %7950 = vmatpush1.bf16.msra.mxu0 %v7923
    %7951 = vmatprep.subr.bf16.mxu0 0
    %7952 = vmatpush1.bf16.msra.mxu0 %v7925
    %7953 = vmatprep.subr.bf16.mxu0 0
    %7954 = vmatpush1.bf16.msra.mxu0 %v7927
    %7955 = vmatprep.subr.bf16.mxu0 0
    %7956 = vmatpush1.bf16.msra.mxu0 %v7929
    %7957 = vmatprep.subr.bf16.mxu0 0
    %7958 = vmatpush1.bf16.msra.mxu0 %v7931
    %7959 = vmatprep.subr.bf16.mxu0 0
    %7960 = vmatpush1.bf16.msra.mxu0 %v7933
    %7961 = vmatprep.subr.bf16.mxu0 0
    %7962 = vmatpush1.bf16.msra.mxu0 0
    %7963 = vmatprep.subr.bf16.mxu0 0
    %7964 = vmatpush1.bf16.msra.mxu0 0
    %7965 = vmatprep.subr.bf16.mxu0 0
    %7966 = vmatpush1.bf16.msra.mxu0 0
    %7967 = vmatprep.subr.bf16.mxu0 0
    %7968 = vmatpush1.bf16.msra.mxu0 0
    %7969 = vmatprep.subr.bf16.mxu0 0
    %7970 = vmatpush1.bf16.msra.mxu0 0
    %7971 = vmatprep.subr.bf16.mxu0 0
    %7972 = vmatpush1.bf16.msra.mxu0 0
    %7973 = vmatprep.subr.bf16.mxu0 0
    %7974 = vmatpush1.bf16.msra.mxu0 0
    %7975 = vmatprep.subr.bf16.mxu0 0
    %7976 = vmatpush1.bf16.msra.mxu0 0
    %7977 = vmatprep.mubr.bf16.mxu0 0
    %7978 = vmatmul.mubr.bf16.gmra.mrb[0].mxu0 %v6496
    %v7979 = vpop.f32.mrb[0].mxu0
    %v7980 = vadd.f32 %v7943, %v7979
    %v7981 = vpop.f32.mrb[0].mxu0
    %v7982 = vpop.f32.mrb[0].mxu0
    %v7983 = vadd.f32 %v7943, %v7982
    %v7984 = vpop.f32.mrb[0].mxu0
    %7985 = vdwg.mxu0
    %v7986 = vpack.c.bf16 %v7983, %v7980
    %v7988 = vsel %vm533, %v7848, 0
    %v7991 = vsel %vm533, %v7917, 0
    %7993 = vmatprep.subr.bf16.mxu0 0
    %7994 = vmatpush1.bf16.xpose.msra.mxu0 %v7991
    %7995 = vmatprep.subr.bf16.mxu0 0
    %7996 = vmatpush1.bf16.xpose.msra.mxu0 0
    %7997 = vmatprep.subr.bf16.mxu0 0
    %7998 = vmatpush1.bf16.xpose.msra.mxu0 0
    %7999 = vmatprep.subr.bf16.mxu0 0
    %8000 = vmatpush1.bf16.xpose.msra.mxu0 0
    %8001 = vmatprep.subr.bf16.mxu0 0
    %8002 = vmatpush1.bf16.xpose.msra.mxu0 0
    %8003 = vmatprep.subr.bf16.mxu0 0
    %8004 = vmatpush1.bf16.xpose.msra.mxu0 0
    %8005 = vmatprep.subr.bf16.mxu0 0
    %8006 = vmatpush1.bf16.xpose.msra.mxu0 0
    %8007 = vmatprep.subr.bf16.mxu0 0
    %8008 = vmatpush1.bf16.xpose.msra.mxu0 0
    %8009 = vmatprep.subr.bf16.mxu0 0
    %8010 = vmatpush1.bf16.xpose.msra.mxu0 0
    %8011 = vmatprep.subr.bf16.mxu0 0
    %8012 = vmatpush1.bf16.xpose.msra.mxu0 0
    %8013 = vmatprep.subr.bf16.mxu0 0
    %8014 = vmatpush1.bf16.xpose.msra.mxu0 0
    %8015 = vmatprep.subr.bf16.mxu0 0
    %8016 = vmatpush1.bf16.xpose.msra.mxu0 0
    %8017 = vmatprep.subr.bf16.mxu0 0
    %8018 = vmatpush1.bf16.xpose.msra.mxu0 0
    %8019 = vmatprep.subr.bf16.mxu0 0
    %8020 = vmatpush1.bf16.xpose.msra.mxu0 0
    %8021 = vmatprep.subr.bf16.mxu0 0
    %8022 = vmatpush1.bf16.xpose.msra.mxu0 0
    %8023 = vmatprep.subr.bf16.mxu0 0
    %8024 = vmatpush1.bf16.xpose.msra.mxu0 0
    %8025 = vmatprep.mubr.bf16.mxu0 0
    %8026 = vmatmul.mubr.bf16.gmra.mrb[0].mxu0 %v7988
    %v8027 = vpop.f32.mrb[0].mxu0
    %v8028 = vadd.f32 %v189, %v8027
    %v8029 = vpop.f32.mrb[0].mxu0
    %v8030 = vpop.f32.mrb[0].mxu0
    %v8031 = vadd.f32 %v190, %v8030
    %v8032 = vpop.f32.mrb[0].mxu0
    %8033 = vdwg.mxu0
    %v8034 = vsel %vm581, %v8028, -inf
    %8035 = vmax.xlane.f32.xlu0 %v8034
    %v8036 = vpop.xlane.xlu0 %8035
    %v8037 = vsel %vm581, %v8031, -inf
    %8038 = vmax.xlane.f32.xlu0 %v8037
    %v8039 = vpop.xlane.xlu0 %8038
    %v8040 = vsub.f32 %v8028, %v8036
    %v8041 = vsub.f32 %v8031, %v8039
    %v8042 = vmul.f32 %v8040, 1.442695
    %v8043 = vpow.pop %v8042
    %v8044 = vmul.f32 %v8041, 1.442695
    %v8045 = vpow.pop %v8044
    %v8046 = vsel %vm581, %v8043, 0.0
    %8047 = vadd.xlane.f32.xlu0 %v8046
    %v8048 = vpop.xlane.xlu0 %8047
    %v8049 = vsel %vm581, %v8045, 0.0
    %8050 = vadd.xlane.f32.xlu0 %v8049
    %v8051 = vpop.xlane.xlu0 %8050
    %v8052 = vrcp.pop %v8048
    %v8053 = vrcp.pop %v8051
    %v8054 = vmul.f32 %v8043, %v8052
    %v8055 = vmul.f32 %v8045, %v8053
    %v8056 = vpack.c.bf16 %v8055, %v8054
    %v8058 = vsel %vm581, %v8056, 0
    %8060 = vmatprep.subr.bf16.mxu0 0
    %8061 = vmatpush1.bf16.msra.mxu0 %v7986
    %8062 = vmatprep.subr.bf16.mxu0 0
    %8063 = vmatpush1.bf16.msra.mxu0 0
    %8064 = vmatprep.subr.bf16.mxu0 0
    %8065 = vmatpush1.bf16.msra.mxu0 0
    %8066 = vmatprep.subr.bf16.mxu0 0
    %8067 = vmatpush1.bf16.msra.mxu0 0
    %8068 = vmatprep.subr.bf16.mxu0 0
    %8069 = vmatpush1.bf16.msra.mxu0 0
    %8070 = vmatprep.subr.bf16.mxu0 0
    %8071 = vmatpush1.bf16.msra.mxu0 0
    %8072 = vmatprep.subr.bf16.mxu0 0
    %8073 = vmatpush1.bf16.msra.mxu0 0
    %8074 = vmatprep.subr.bf16.mxu0 0
    %8075 = vmatpush1.bf16.msra.mxu0 0
    %8076 = vmatprep.subr.bf16.mxu0 0
    %8077 = vmatpush1.bf16.msra.mxu0 0
    %8078 = vmatprep.subr.bf16.mxu0 0
    %8079 = vmatpush1.bf16.msra.mxu0 0
    %8080 = vmatprep.subr.bf16.mxu0 0
    %8081 = vmatpush1.bf16.msra.mxu0 0
    %8082 = vmatprep.subr.bf16.mxu0 0
    %8083 = vmatpush1.bf16.msra.mxu0 0
    %8084 = vmatprep.subr.bf16.mxu0 0
    %8085 = vmatpush1.bf16.msra.mxu0 0
    %8086 = vmatprep.subr.bf16.mxu0 0
    %8087 = vmatpush1.bf16.msra.mxu0 0
    %8088 = vmatprep.subr.bf16.mxu0 0
    %8089 = vmatpush1.bf16.msra.mxu0 0
    %8090 = vmatprep.subr.bf16.mxu0 0
    %8091 = vmatpush1.bf16.msra.mxu0 0
    %8092 = vmatprep.mubr.bf16.mxu0 0
    %8093 = vmatmul.mubr.bf16.gmra.mrb[0].mxu0 %v8058
    %v8094 = vpop.f32.mrb[0].mxu0
    %v8095 = vadd.f32 0.0, %v8094
    %v8096 = vpop.f32.mrb[0].mxu0
    %v8097 = vpop.f32.mrb[0].mxu0
    %v8098 = vadd.f32 0.0, %v8097
    %v8099 = vpop.f32.mrb[0].mxu0
    %8100 = vdwg.mxu0
    %v8101 = vpack.c.bf16 %v8098, %v8095
    %v8102 = vld [vmem:[%s6953 + $0x30] sm:$0xf]
    %v8103 = vld [vmem:[%s6953 + $0x34] sm:$0xf]
    %v8104 = vld [vmem:[%s6953 + $0x38] sm:$0xf]
    %v8105 = vld [vmem:[%s6953 + $0x3c] sm:$0xf]
    %v8110 = vunpack.c.l.b16 %v8102
    %v8111 = vunpack.c.l.b16 %v8103
    %v8112 = vunpack.c.l.b16 %v8104
    %v8113 = vunpack.c.l.b16 %v8105
    %v8114 = vpack.c.b16 %v8111, %v8110
    %v8115 = vpack.c.b16 %v8113, %v8112
    %v8119 = vsel %vm533, %v8101, 0
    %8121 = vmatprep.subr.bf16.mxu0 0
    %8122 = vmatpush1.bf16.msra.mxu0 %v8114
    %8123 = vmatprep.subr.bf16.mxu0 0
    %8124 = vmatpush1.bf16.msra.mxu0 %v8115
    %8125 = vmatprep.subr.bf16.mxu0 0
    %8126 = vmatpush1.bf16.msra.mxu0 0
    %8127 = vmatprep.subr.bf16.mxu0 0
    %8128 = vmatpush1.bf16.msra.mxu0 0
    %8129 = vmatprep.subr.bf16.mxu0 0
    %8130 = vmatpush1.bf16.msra.mxu0 0
    %8131 = vmatprep.subr.bf16.mxu0 0
    %8132 = vmatpush1.bf16.msra.mxu0 0
    %8133 = vmatprep.subr.bf16.mxu0 0
    %8134 = vmatpush1.bf16.msra.mxu0 0
    %8135 = vmatprep.subr.bf16.mxu0 0
    %8136 = vmatpush1.bf16.msra.mxu0 0
    %8137 = vmatprep.subr.bf16.mxu0 0
    %8138 = vmatpush1.bf16.msra.mxu0 0
    %8139 = vmatprep.subr.bf16.mxu0 0
    %8140 = vmatpush1.bf16.msra.mxu0 0
    %8141 = vmatprep.subr.bf16.mxu0 0
    %8142 = vmatpush1.bf16.msra.mxu0 0
    %8143 = vmatprep.subr.bf16.mxu0 0
    %8144 = vmatpush1.bf16.msra.mxu0 0
    %8145 = vmatprep.subr.bf16.mxu0 0
    %8146 = vmatpush1.bf16.msra.mxu0 0
    %8147 = vmatprep.subr.bf16.mxu0 0
    %8148 = vmatpush1.bf16.msra.mxu0 0
    %8149 = vmatprep.subr.bf16.mxu0 0
    %8150 = vmatpush1.bf16.msra.mxu0 0
    %8151 = vmatprep.subr.bf16.mxu0 0
    %8152 = vmatpush1.bf16.msra.mxu0 0
    %8153 = vmatprep.mubr.bf16.mxu0 0
    %8154 = vmatmul.mubr.bf16.gmra.mrb[0].mxu0 %v8119
    %v8155 = vpop.f32.mrb[0].mxu0
    %v8156 = vadd.f32 0.0, %v8155
    %v8157 = vpop.f32.mrb[0].mxu0
    %v8158 = vpop.f32.mrb[0].mxu0
    %v8159 = vadd.f32 0.0, %v8158
    %v8160 = vpop.f32.mrb[0].mxu0
    %8161 = vdwg.mxu0
    %v8162 = vadd.f32 %v7778, %v8156
    %v8163 = vadd.f32 %v7779, %v8159
    %s8164 = scalar_lea.vmem %s4, 3
    %v8165 = vld [vmem:[%s8164] sm:$0x1]
    %v8167 = vlaneseq
    %v8168 = vshrl.u32 %v8167, 7
    %v8169 = vsub.s32 0, %v8168
    %v8170 = vrot.slane %v8165, %v8169
    %v8172 = vadd.f32 %v8162, %v8170
    %v8173 = vadd.f32 %v8163, %v8170
    %v8174 = vadd.f32 %v6494, %v8172
    %v8175 = vadd.f32 %v6495, %v8173
    %s8176 = scalar_lea.vmem %s5, 3
    %v8177 = vld [vmem:[%s8176] sm:$0x1]
    %s8178 = scalar_lea.vmem %s6, 3
    %v8179 = vld [vmem:[%s8178] sm:$0x1]
    %8180 = vadd.xlane.f32.xlu0 %v8174
    %v8181 = vpop.xlane.xlu0 %8180
    %8182 = vadd.xlane.f32.xlu0 %v8175
    %v8183 = vpop.xlane.xlu0 %8182
    %v8184 = vmul.f32 %v8181, %v1877
    %v8185 = vmul.f32 %v8183, %v1877
    %v8186 = vsub.f32 %v8174, %v8184
    %v8187 = vsub.f32 %v8175, %v8185
    %v8188 = vmul.f32 %v8186, %v8186
    %v8189 = vmul.f32 %v8187, %v8187
    %8190 = vadd.xlane.f32.xlu0 %v8188
    %v8191 = vpop.xlane.xlu0 %8190
    %8192 = vadd.xlane.f32.xlu0 %v8189
    %v8193 = vpop.xlane.xlu0 %8192
    %v8194 = vmul.f32 %v8191, %v1877
    %v8195 = vmul.f32 %v8193, %v1877
    %v8196 = vadd.f32 %v8194, 1e-05
    %v8197 = vadd.f32 %v8195, 1e-05
    %v8198 = vrsqrt.pop %v8196
    %v8199 = vrsqrt.pop %v8197
    %v8200 = vmul.f32 %v8186, %v8198
    %v8201 = vmul.f32 %v8187, %v8199
    %v8203 = vlaneseq
    %v8204 = vshrl.u32 %v8203, 7
    %v8205 = vsub.s32 0, %v8204
    %v8206 = vrot.slane %v8177, %v8205
    %v8208 = vmul.f32 %v8200, %v8206
    %v8209 = vmul.f32 %v8201, %v8206
    %v8211 = vlaneseq
    %v8212 = vshrl.u32 %v8211, 7
    %v8213 = vsub.s32 0, %v8212
    %v8214 = vrot.slane %v8179, %v8213
    %v8216 = vadd.f32 %v8208, %v8214
    %v8217 = vadd.f32 %v8209, %v8214
    %v8218 = vpack.c.bf16 %v8217, %v8216
    %s8219 = scalar_lea.vmem [#allocation9], 384
    %v8220 = vld [vmem:[%s8219] sm:$0xff]
    %v8221 = vld [vmem:[%s8219 + $0x8] sm:$0xff]
    %v8222 = vld [vmem:[%s8219 + $0x10] sm:$0xff]
    %v8223 = vld [vmem:[%s8219 + $0x18] sm:$0xff]
    %v8224 = vld [vmem:[%s8219 + $0x20] sm:$0xff]
    %v8225 = vld [vmem:[%s8219 + $0x28] sm:$0xff]
    %v8226 = vld [vmem:[%s8219 + $0x30] sm:$0xff]
    %v8227 = vld [vmem:[%s8219 + $0x38] sm:$0xff]
    %v8228 = vld [vmem:[%s8219 + $0x40] sm:$0xff]
    %v8229 = vld [vmem:[%s8219 + $0x48] sm:$0xff]
    %v8230 = vld [vmem:[%s8219 + $0x50] sm:$0xff]
    %v8231 = vld [vmem:[%s8219 + $0x58] sm:$0xff]
    %v8232 = vld [vmem:[%s8219 + $0x60] sm:$0xff]
    %v8233 = vld [vmem:[%s8219 + $0x68] sm:$0xff]
    %v8234 = vld [vmem:[%s8219 + $0x70] sm:$0xff]
    %v8235 = vld [vmem:[%s8219 + $0x78] sm:$0xff]
    %s8236 = scalar_lea.vmem %s8, 6
    %v8237 = vld [vmem:[%s8236] sm:$0x3]
    %v8239 = vlaneseq
    %v8240 = vshrl.u32 %v8239, 7
    %v8241 = vsub.s32 0, %v8240
    %v8242 = vrot.slane %v8237, %v8241
    %v8243 = vlaneseq
    %v8244 = vshrl.u32 %v8243, 7
    %v8245 = vsub.s32 1, %v8244
    %v8246 = vrot.slane %v8237, %v8245
    %v8265 = vunpack.c.l.b16 %v8220
    %v8266 = vunpack.c.h.b16 %v8220
    %v8267 = vunpack.c.l.b16 %v8221
    %v8268 = vunpack.c.h.b16 %v8221
    %v8269 = vunpack.c.l.b16 %v8222
    %v8270 = vunpack.c.h.b16 %v8222
    %v8271 = vunpack.c.l.b16 %v8223
    %v8272 = vunpack.c.h.b16 %v8223
    %v8273 = vunpack.c.l.b16 %v8224
    %v8274 = vunpack.c.h.b16 %v8224
    %v8275 = vunpack.c.l.b16 %v8225
    %v8276 = vunpack.c.h.b16 %v8225
    %v8277 = vunpack.c.l.b16 %v8226
    %v8278 = vunpack.c.h.b16 %v8226
    %v8279 = vunpack.c.l.b16 %v8227
    %v8280 = vunpack.c.h.b16 %v8227
    %v8281 = vunpack.c.l.b16 %v8228
    %v8282 = vunpack.c.h.b16 %v8228
    %v8283 = vunpack.c.l.b16 %v8229
    %v8284 = vunpack.c.h.b16 %v8229
    %v8285 = vunpack.c.l.b16 %v8230
    %v8286 = vunpack.c.h.b16 %v8230
    %v8287 = vunpack.c.l.b16 %v8231
    %v8288 = vunpack.c.h.b16 %v8231
    %v8289 = vunpack.c.l.b16 %v8232
    %v8290 = vunpack.c.h.b16 %v8232
    %v8291 = vunpack.c.l.b16 %v8233
    %v8292 = vunpack.c.h.b16 %v8233
    %v8293 = vunpack.c.l.b16 %v8234
    %v8294 = vunpack.c.h.b16 %v8234
    %v8295 = vunpack.c.l.b16 %v8235
    %v8296 = vunpack.c.h.b16 %v8235
    %v8297 = vpack.c.b16 %v8267, %v8265
    %v8298 = vpack.c.b16 %v8268, %v8266
    %v8299 = vpack.c.b16 %v8271, %v8269
    %v8300 = vpack.c.b16 %v8272, %v8270
    %v8301 = vpack.c.b16 %v8275, %v8273
    %v8302 = vpack.c.b16 %v8276, %v8274
    %v8303 = vpack.c.b16 %v8279, %v8277
    %v8304 = vpack.c.b16 %v8280, %v8278
    %v8305 = vpack.c.b16 %v8283, %v8281
    %v8306 = vpack.c.b16 %v8284, %v8282
    %v8307 = vpack.c.b16 %v8287, %v8285
    %v8308 = vpack.c.b16 %v8288, %v8286
    %v8309 = vpack.c.b16 %v8291, %v8289
    %v8310 = vpack.c.b16 %v8292, %v8290
    %v8311 = vpack.c.b16 %v8295, %v8293
    %v8312 = vpack.c.b16 %v8296, %v8294
    %8329 = vmatprep.subr.bf16.mxu0 %v8298
    %8330 = vmatpush1.bf16.msra.mxu0 %v8297
    %8331 = vmatprep.subr.bf16.mxu0 %v8300
    %8332 = vmatpush1.bf16.msra.mxu0 %v8299
    %8333 = vmatprep.subr.bf16.mxu0 %v8302
    %8334 = vmatpush1.bf16.msra.mxu0 %v8301
    %8335 = vmatprep.subr.bf16.mxu0 %v8304
    %8336 = vmatpush1.bf16.msra.mxu0 %v8303
    %8337 = vmatprep.subr.bf16.mxu0 %v8306
    %8338 = vmatpush1.bf16.msra.mxu0 %v8305
    %8339 = vmatprep.subr.bf16.mxu0 %v8308
    %8340 = vmatpush1.bf16.msra.mxu0 %v8307
    %8341 = vmatprep.subr.bf16.mxu0 %v8310
    %8342 = vmatpush1.bf16.msra.mxu0 %v8309
    %8343 = vmatprep.subr.bf16.mxu0 %v8312
    %8344 = vmatpush1.bf16.msra.mxu0 %v8311
    %8345 = vmatprep.subr.bf16.mxu0 0
    %8346 = vmatpush1.bf16.msra.mxu0 0
    %8347 = vmatprep.subr.bf16.mxu0 0
    %8348 = vmatpush1.bf16.msra.mxu0 0
    %8349 = vmatprep.subr.bf16.mxu0 0
    %8350 = vmatpush1.bf16.msra.mxu0 0
    %8351 = vmatprep.subr.bf16.mxu0 0
    %8352 = vmatpush1.bf16.msra.mxu0 0
    %8353 = vmatprep.subr.bf16.mxu0 0
    %8354 = vmatpush1.bf16.msra.mxu0 0
    %8355 = vmatprep.subr.bf16.mxu0 0
    %8356 = vmatpush1.bf16.msra.mxu0 0
    %8357 = vmatprep.subr.bf16.mxu0 0
    %8358 = vmatpush1.bf16.msra.mxu0 0
    %8359 = vmatprep.subr.bf16.mxu0 0
    %8360 = vmatpush1.bf16.msra.mxu0 0
    %8361 = vmatprep.mubr.bf16.mxu0 0
    %8362 = vmatmul.mubr.bf16.gmra.mrb[0].mxu0 %v8218
    %v8363 = vpop.f32.mrb[0].mxu0
    %v8364 = vadd.f32 %v8242, %v8363
    %v8365 = vpop.f32.mrb[0].mxu0
    %v8366 = vadd.f32 %v8246, %v8365
    %v8367 = vpop.f32.mrb[0].mxu0
    %v8368 = vadd.f32 %v8242, %v8367
    %v8369 = vpop.f32.mrb[0].mxu0
    %v8370 = vadd.f32 %v8246, %v8369
    %8371 = vdwg.mxu0
    %v8372 = vmax.f32 %v8364, 0.0
    %v8373 = vmax.f32 %v8366, 0.0
    %v8374 = vmax.f32 %v8368, 0.0
    %v8375 = vmax.f32 %v8370, 0.0
    %v8376 = vpack.c.bf16 %v8374, %v8372
    %v8377 = vpack.c.bf16 %v8375, %v8373
    %s8378 = scalar_lea.vmem [#allocation10], 384
    %v8379 = vld [vmem:[%s8378] sm:$0xf]
    %v8380 = vld [vmem:[%s8378 + $0x4] sm:$0xf]
    %v8381 = vld [vmem:[%s8378 + $0x8] sm:$0xf]
    %v8382 = vld [vmem:[%s8378 + $0xc] sm:$0xf]
    %v8383 = vld [vmem:[%s8378 + $0x10] sm:$0xf]
    %v8384 = vld [vmem:[%s8378 + $0x14] sm:$0xf]
    %v8385 = vld [vmem:[%s8378 + $0x18] sm:$0xf]
    %v8386 = vld [vmem:[%s8378 + $0x1c] sm:$0xf]
    %v8387 = vld [vmem:[%s8378 + $0x20] sm:$0xf]
    %v8388 = vld [vmem:[%s8378 + $0x24] sm:$0xf]
    %v8389 = vld [vmem:[%s8378 + $0x28] sm:$0xf]
    %v8390 = vld [vmem:[%s8378 + $0x2c] sm:$0xf]
    %v8391 = vld [vmem:[%s8378 + $0x30] sm:$0xf]
    %v8392 = vld [vmem:[%s8378 + $0x34] sm:$0xf]
    %v8393 = vld [vmem:[%s8378 + $0x38] sm:$0xf]
    %v8394 = vld [vmem:[%s8378 + $0x3c] sm:$0xf]
    %v8395 = vld [vmem:[%s8378 + $0x40] sm:$0xf]
    %v8396 = vld [vmem:[%s8378 + $0x44] sm:$0xf]
    %v8397 = vld [vmem:[%s8378 + $0x48] sm:$0xf]
    %v8398 = vld [vmem:[%s8378 + $0x4c] sm:$0xf]
    %v8399 = vld [vmem:[%s8378 + $0x50] sm:$0xf]
    %v8400 = vld [vmem:[%s8378 + $0x54] sm:$0xf]
    %v8401 = vld [vmem:[%s8378 + $0x58] sm:$0xf]
    %v8402 = vld [vmem:[%s8378 + $0x5c] sm:$0xf]
    %v8403 = vld [vmem:[%s8378 + $0x60] sm:$0xf]
    %v8404 = vld [vmem:[%s8378 + $0x64] sm:$0xf]
    %v8405 = vld [vmem:[%s8378 + $0x68] sm:$0xf]
    %v8406 = vld [vmem:[%s8378 + $0x6c] sm:$0xf]
    %v8407 = vld [vmem:[%s8378 + $0x70] sm:$0xf]
    %v8408 = vld [vmem:[%s8378 + $0x74] sm:$0xf]
    %v8409 = vld [vmem:[%s8378 + $0x78] sm:$0xf]
    %v8410 = vld [vmem:[%s8378 + $0x7c] sm:$0xf]
    %s8411 = scalar_lea.vmem %s10, 3
    %v8412 = vld [vmem:[%s8411] sm:$0x1]
    %v8414 = vlaneseq
    %v8415 = vshrl.u32 %v8414, 7
    %v8416 = vsub.s32 0, %v8415
    %v8417 = vrot.slane %v8412, %v8416
    %v8451 = vunpack.c.l.b16 %v8379
    %v8452 = vunpack.c.l.b16 %v8380
    %v8453 = vunpack.c.l.b16 %v8381
    %v8454 = vunpack.c.l.b16 %v8382
    %v8455 = vunpack.c.l.b16 %v8383
    %v8456 = vunpack.c.l.b16 %v8384
    %v8457 = vunpack.c.l.b16 %v8385
    %v8458 = vunpack.c.l.b16 %v8386
    %v8459 = vunpack.c.l.b16 %v8387
    %v8460 = vunpack.c.l.b16 %v8388
    %v8461 = vunpack.c.l.b16 %v8389
    %v8462 = vunpack.c.l.b16 %v8390
    %v8463 = vunpack.c.l.b16 %v8391
    %v8464 = vunpack.c.l.b16 %v8392
    %v8465 = vunpack.c.l.b16 %v8393
    %v8466 = vunpack.c.l.b16 %v8394
    %v8467 = vunpack.c.l.b16 %v8395
    %v8468 = vunpack.c.l.b16 %v8396
    %v8469 = vunpack.c.l.b16 %v8397
    %v8470 = vunpack.c.l.b16 %v8398
    %v8471 = vunpack.c.l.b16 %v8399
    %v8472 = vunpack.c.l.b16 %v8400
    %v8473 = vunpack.c.l.b16 %v8401
    %v8474 = vunpack.c.l.b16 %v8402
    %v8475 = vunpack.c.l.b16 %v8403
    %v8476 = vunpack.c.l.b16 %v8404
    %v8477 = vunpack.c.l.b16 %v8405
    %v8478 = vunpack.c.l.b16 %v8406
    %v8479 = vunpack.c.l.b16 %v8407
    %v8480 = vunpack.c.l.b16 %v8408
    %v8481 = vunpack.c.l.b16 %v8409
    %v8482 = vunpack.c.l.b16 %v8410
    %v8483 = vpack.c.b16 %v8452, %v8451
    %v8484 = vpack.c.b16 %v8454, %v8453
    %v8485 = vpack.c.b16 %v8456, %v8455
    %v8486 = vpack.c.b16 %v8458, %v8457
    %v8487 = vpack.c.b16 %v8460, %v8459
    %v8488 = vpack.c.b16 %v8462, %v8461
    %v8489 = vpack.c.b16 %v8464, %v8463
    %v8490 = vpack.c.b16 %v8466, %v8465
    %v8491 = vpack.c.b16 %v8468, %v8467
    %v8492 = vpack.c.b16 %v8470, %v8469
    %v8493 = vpack.c.b16 %v8472, %v8471
    %v8494 = vpack.c.b16 %v8474, %v8473
    %v8495 = vpack.c.b16 %v8476, %v8475
    %v8496 = vpack.c.b16 %v8478, %v8477
    %v8497 = vpack.c.b16 %v8480, %v8479
    %v8498 = vpack.c.b16 %v8482, %v8481
    %8515 = vmatprep.subr.bf16.mxu0 0
    %8516 = vmatpush1.bf16.msra.mxu0 %v8483
    %8517 = vmatprep.subr.bf16.mxu0 0
    %8518 = vmatpush1.bf16.msra.mxu0 %v8484
    %8519 = vmatprep.subr.bf16.mxu0 0
    %8520 = vmatpush1.bf16.msra.mxu0 %v8485
    %8521 = vmatprep.subr.bf16.mxu0 0
    %8522 = vmatpush1.bf16.msra.mxu0 %v8486
    %8523 = vmatprep.subr.bf16.mxu0 0
    %8524 = vmatpush1.bf16.msra.mxu0 %v8487
    %8525 = vmatprep.subr.bf16.mxu0 0
    %8526 = vmatpush1.bf16.msra.mxu0 %v8488
    %8527 = vmatprep.subr.bf16.mxu0 0
    %8528 = vmatpush1.bf16.msra.mxu0 %v8489
    %8529 = vmatprep.subr.bf16.mxu0 0
    %8530 = vmatpush1.bf16.msra.mxu0 %v8490
    %8531 = vmatprep.subr.bf16.mxu0 0
    %8532 = vmatpush1.bf16.msra.mxu0 %v8491
    %8533 = vmatprep.subr.bf16.mxu0 0
    %8534 = vmatpush1.bf16.msra.mxu0 %v8492
    %8535 = vmatprep.subr.bf16.mxu0 0
    %8536 = vmatpush1.bf16.msra.mxu0 %v8493
    %8537 = vmatprep.subr.bf16.mxu0 0
    %8538 = vmatpush1.bf16.msra.mxu0 %v8494
    %8539 = vmatprep.subr.bf16.mxu0 0
    %8540 = vmatpush1.bf16.msra.mxu0 %v8495
    %8541 = vmatprep.subr.bf16.mxu0 0
    %8542 = vmatpush1.bf16.msra.mxu0 %v8496
    %8543 = vmatprep.subr.bf16.mxu0 0
    %8544 = vmatpush1.bf16.msra.mxu0 %v8497
    %8545 = vmatprep.subr.bf16.mxu0 0
    %8546 = vmatpush1.bf16.msra.mxu0 %v8498
    %8547 = vmatprep.mubr.bf16.mxu0 %v8377
    %8548 = vmatmul.mubr.bf16.gmra.mrb[0].mxu0 %v8376
    %v8549 = vpop.f32.mrb[0].mxu0
    %v8550 = vadd.f32 %v8417, %v8549
    %v8551 = vpop.f32.mrb[0].mxu0
    %v8552 = vpop.f32.mrb[0].mxu0
    %v8553 = vadd.f32 %v8417, %v8552
    %v8554 = vpop.f32.mrb[0].mxu0
    %8555 = vdwg.mxu0
    %v8556 = vadd.f32 %v8216, %v8550
    %v8557 = vadd.f32 %v8217, %v8553
    %s8558 = scalar_lea.vmem %s11, 3
    %v8559 = vld [vmem:[%s8558] sm:$0x1]
    %s8560 = scalar_lea.vmem %s12, 3
    %v8561 = vld [vmem:[%s8560] sm:$0x1]
    %8562 = vadd.xlane.f32.xlu0 %v8556
    %v8563 = vpop.xlane.xlu0 %8562
    %8564 = vadd.xlane.f32.xlu0 %v8557
    %v8565 = vpop.xlane.xlu0 %8564
    %v8566 = vmul.f32 %v8563, %v1877
    %v8567 = vmul.f32 %v8565, %v1877
    %v8568 = vsub.f32 %v8556, %v8566
    %v8569 = vsub.f32 %v8557, %v8567
    %v8570 = vmul.f32 %v8568, %v8568
    %v8571 = vmul.f32 %v8569, %v8569
    %8572 = vadd.xlane.f32.xlu0 %v8570
    %v8573 = vpop.xlane.xlu0 %8572
    %8574 = vadd.xlane.f32.xlu0 %v8571
    %v8575 = vpop.xlane.xlu0 %8574
    %v8576 = vmul.f32 %v8573, %v1877
    %v8577 = vmul.f32 %v8575, %v1877
    %v8578 = vadd.f32 %v8576, 1e-05
    %v8579 = vadd.f32 %v8577, 1e-05
    %v8580 = vrsqrt.pop %v8578
    %v8581 = vrsqrt.pop %v8579
    %v8582 = vmul.f32 %v8568, %v8580
    %v8583 = vmul.f32 %v8569, %v8581
    %v8585 = vlaneseq
    %v8586 = vshrl.u32 %v8585, 7
    %v8587 = vsub.s32 0, %v8586
    %v8588 = vrot.slane %v8559, %v8587
    %v8590 = vmul.f32 %v8582, %v8588
    %v8591 = vmul.f32 %v8583, %v8588
    %v8593 = vlaneseq
    %v8594 = vshrl.u32 %v8593, 7
    %v8595 = vsub.s32 0, %v8594
    %v8596 = vrot.slane %v8561, %v8595
    %v8598 = vadd.f32 %v8590, %v8596
    %v8599 = vadd.f32 %v8591, %v8596
    %v8600 = vpack.c.bf16 %v8599, %v8598
    %v8601 = vld [vmem:[#allocation12] sm:$0xf]
    %v8602 = vld [vmem:[#allocation12 + $0x4] sm:$0xf]
    %v8603 = vld [vmem:[#allocation12 + $0x8] sm:$0xf]
    %v8604 = vld [vmem:[#allocation12 + $0xc] sm:$0xf]
    %v8605 = vld [vmem:[#allocation12 + $0x10] sm:$0xf]
    %v8606 = vld [vmem:[#allocation12 + $0x14] sm:$0xf]
    %v8607 = vld [vmem:[#allocation12 + $0x18] sm:$0xf]
    %v8608 = vld [vmem:[#allocation12 + $0x1c] sm:$0xf]
    %v8609 = vld [vmem:[#allocation12 + $0x20] sm:$0xf]
    %v8610 = vld [vmem:[#allocation12 + $0x24] sm:$0xf]
    %v8611 = vld [vmem:[#allocation12 + $0x28] sm:$0xf]
    %v8612 = vld [vmem:[#allocation12 + $0x2c] sm:$0xf]
    %v8613 = vld [vmem:[#allocation12 + $0x30] sm:$0xf]
    %v8614 = vld [vmem:[#allocation12 + $0x34] sm:$0xf]
    %v8615 = vld [vmem:[#allocation12 + $0x38] sm:$0xf]
    %v8616 = vld [vmem:[#allocation12 + $0x3c] sm:$0xf]
    %v8617 = vld [vmem:[%s14] sm:$0x1]
    %v8619 = vlaneseq
    %v8620 = vshrl.u32 %v8619, 7
    %v8621 = vsub.s32 0, %v8620
    %v8622 = vrot.slane %v8617, %v8621
    %v8640 = vunpack.c.l.b16 %v8601
    %v8641 = vunpack.c.l.b16 %v8602
    %v8642 = vunpack.c.l.b16 %v8603
    %v8643 = vunpack.c.l.b16 %v8604
    %v8644 = vunpack.c.l.b16 %v8605
    %v8645 = vunpack.c.l.b16 %v8606
    %v8646 = vunpack.c.l.b16 %v8607
    %v8647 = vunpack.c.l.b16 %v8608
    %v8648 = vunpack.c.l.b16 %v8609
    %v8649 = vunpack.c.l.b16 %v8610
    %v8650 = vunpack.c.l.b16 %v8611
    %v8651 = vunpack.c.l.b16 %v8612
    %v8652 = vunpack.c.l.b16 %v8613
    %v8653 = vunpack.c.l.b16 %v8614
    %v8654 = vunpack.c.l.b16 %v8615
    %v8655 = vunpack.c.l.b16 %v8616
    %v8656 = vpack.c.b16 %v8641, %v8640
    %v8657 = vpack.c.b16 %v8643, %v8642
    %v8658 = vpack.c.b16 %v8645, %v8644
    %v8659 = vpack.c.b16 %v8647, %v8646
    %v8660 = vpack.c.b16 %v8649, %v8648
    %v8661 = vpack.c.b16 %v8651, %v8650
    %v8662 = vpack.c.b16 %v8653, %v8652
    %v8663 = vpack.c.b16 %v8655, %v8654
    %8672 = vmatprep.subr.bf16.mxu0 0
    %8673 = vmatpush1.bf16.msra.mxu0 %v8656
    %8674 = vmatprep.subr.bf16.mxu0 0
    %8675 = vmatpush1.bf16.msra.mxu0 %v8657
    %8676 = vmatprep.subr.bf16.mxu0 0
    %8677 = vmatpush1.bf16.msra.mxu0 %v8658
    %8678 = vmatprep.subr.bf16.mxu0 0
    %8679 = vmatpush1.bf16.msra.mxu0 %v8659
    %8680 = vmatprep.subr.bf16.mxu0 0
    %8681 = vmatpush1.bf16.msra.mxu0 %v8660
    %8682 = vmatprep.subr.bf16.mxu0 0
    %8683 = vmatpush1.bf16.msra.mxu0 %v8661
    %8684 = vmatprep.subr.bf16.mxu0 0
    %8685 = vmatpush1.bf16.msra.mxu0 %v8662
    %8686 = vmatprep.subr.bf16.mxu0 0
    %8687 = vmatpush1.bf16.msra.mxu0 %v8663
    %8688 = vmatprep.subr.bf16.mxu0 0
    %8689 = vmatpush1.bf16.msra.mxu0 0
    %8690 = vmatprep.subr.bf16.mxu0 0
    %8691 = vmatpush1.bf16.msra.mxu0 0
    %8692 = vmatprep.subr.bf16.mxu0 0
    %8693 = vmatpush1.bf16.msra.mxu0 0
    %8694 = vmatprep.subr.bf16.mxu0 0
    %8695 = vmatpush1.bf16.msra.mxu0 0
    %8696 = vmatprep.subr.bf16.mxu0 0
    %8697 = vmatpush1.bf16.msra.mxu0 0
    %8698 = vmatprep.subr.bf16.mxu0 0
    %8699 = vmatpush1.bf16.msra.mxu0 0
    %8700 = vmatprep.subr.bf16.mxu0 0
    %8701 = vmatpush1.bf16.msra.mxu0 0
    %8702 = vmatprep.subr.bf16.mxu0 0
    %8703 = vmatpush1.bf16.msra.mxu0 0
    %8704 = vmatprep.mubr.bf16.mxu0 0
    %8705 = vmatmul.mubr.bf16.gmra.mrb[0].mxu0 %v8600
    %v8706 = vpop.f32.mrb[0].mxu0
    %v8707 = vadd.f32 %v8622, %v8706
    %v8708 = vpop.f32.mrb[0].mxu0
    %v8709 = vpop.f32.mrb[0].mxu0
    %v8710 = vadd.f32 %v8622, %v8709
    %v8711 = vpop.f32.mrb[0].mxu0
    %8712 = vdwg.mxu0
    %8713 = vst [vmem:[%s15] sm:$0xff] %v8707
    %8714 = vst [vmem:[%s15 + $0x8] sm:$0xff] %v8710
    // Predicated region
    $region90: #{forward.1} parent=1 // pred_check
      _
    $region91: #{forward.1} parent=1 // pred_check_branch
      %8716 = sbr.rel (0) target = $region93
    $region92: #{forward.1} parent=1 // pred_region
      _
    $region93: #{forward.1} parent=1 // pred_fallthru
      _
    // Predicated region
    $region94: #{forward.1} parent=1 // pred_check
      _
    $region95: #{forward.1} parent=1 // pred_check_branch
      %8718 = sbr.rel (0) target = $region97
    $region96: #{forward.1} parent=1 // pred_region
      _
    $region97: #{forward.1} parent=1 // pred_fallthru
      _
    %8719 = vsyncpa [#allocation3], 1
    %8720 = vsyncpa [#allocation5], 1
    %8721 = vsyncpa [#allocation8], 1
    %8722 = vsyncpa [#allocation11], 1

</llo_original>
